<compile_context>
chip_gen: v7x
topology: tpu7x:2x2x1
jax: 0.10.0
libtpu: 0.0.40
codegen_flags: <defaults>
</compile_context>

<pallas_src>
import random

import jax
import jax.numpy as jnp
from jax.experimental import pallas as pl
from jax.experimental.pallas import tpu as pltpu

# ---------------- config (small synthetic sizes) ----------------
SRC_VOCAB = 16
TRG_VOCAB = 16      # decoder.output_dim
VOCAB_PAD = 128     # lane-dense padded vocab for logits / in-kernel argmax
ENC_EMB = 32
DEC_EMB = 32
HID = 32            # encoder.hid_dim == decoder.dec_hid_dim (unidirectional)
ATTN = 32
SRC_LEN = 8
TRG_LEN = 8
BATCH = 2
DEC_STEPS = TRG_LEN - 1


# ---------------- fused encoder + decoder kernel (grid-less) ----------------
def _seq2seq_kernel(tf_ref,                                   # SMEM: (T,) int32 teacher-forcing flags
                    src_ref, temb_ref,                        # [S,B,E], [T,B,E]
                    enc_wih_ref, enc_whh_ref, enc_b_ref,      # LSTM (gate order i,f,o,g)
                    wa_e_ref, wa_h_t_ref, ba_t_ref,           # attention weights
                    vblk_ref, expand_ref, summat_ref,         # precomputed attention selectors
                    wih_e_ref, wih_c_ref, whh_ref, bih_ref, bhh_ref,   # GRU
                    wout_h_ref, wout_c_ref, wout_e_ref, bout_ref,      # output projection (padded)
                    demb_ref,                                 # padded decoder embedding table
                    out_ref):                                 # [T-1, B, VOCAB_PAD]
    f32 = jnp.float32

    # ---------- encoder: unrolled LSTM scan (split dots, fused i/f/o sigmoid) ----------
    enc_wih = enc_wih_ref[...]
    enc_whh = enc_whh_ref[...]
    enc_b = enc_b_ref[...]
    wa_e = wa_e_ref[...]

    h = jnp.zeros((BATCH, HID), f32)
    c = jnp.zeros((BATCH, HID), f32)
    hs = []
    for t in range(SRC_LEN):                                   # S=8, trace-time unrolled
        x = src_ref[t]                                         # [B, E]
        gates = (jnp.dot(x, enc_wih, preferred_element_type=f32)
                 + jnp.dot(h, enc_whh, preferred_element_type=f32)
                 + enc_b)                                      # [B, 4H], gates = (i, f, o, g)
        ifo = jax.nn.sigmoid(gates[:, :3 * HID])               # one EUP push for i, f, o
        g = jnp.tanh(gates[:, 3 * HID:])
        i_g = ifo[:, :HID]
        f_g = ifo[:, HID:2 * HID]
        o_g = ifo[:, 2 * HID:]
        c = f_g * c + i_g * g
        h = o_g * jnp.tanh(c)
        hs.append(h)
    # TODO(synk): the LSTM cell state is computed but never fed to the decoder (the
    # reference Seq2Seq ignores `cell`), so it is dropped here.

    # one-time epilogue: lane-dense encoder states + hoisted enc @ Wa_e projection
    enc_flat = jnp.concatenate(hs, axis=1)                     # [B, S*H]
    encpart = jnp.concatenate(
        [jnp.dot(hs[t], wa_e, preferred_element_type=f32) for t in range(SRC_LEN)],
        axis=1)                                                # [B, S*A]

    # ---------- decoder weights: load once, resident across all steps ----------
    wa_h_t = wa_h_t_ref[...]     # [H, S*A]  (wa_h tiled along lanes: fuses the s-broadcast)
    ba_t = ba_t_ref[...]         # [1, S*A]
    vblk = vblk_ref[...]         # [S*A, S]  block-structured v -> all scores in one dot
    expand = expand_ref[...]     # [S, S*H]  alpha[b,s] -> alpha repeated over the H lanes of block s
    summat = summat_ref[...]     # [S*H, H]  segment-sum over the S blocks
    wih_e = wih_e_ref[...]
    wih_c = wih_c_ref[...]
    whh = whh_ref[...]
    bih = bih_ref[...]
    bhh = bhh_ref[...]
    wout_h = wout_h_ref[...]
    wout_c = wout_c_ref[...]
    wout_e = wout_e_ref[...]
    bout = bout_ref[...]
    demb = demb_ref[...]

    lane = jax.lax.broadcasted_iota(jnp.int32, (BATCH, VOCAB_PAD), 1)
    valid = lane < TRG_VOCAB
    neg_big = jnp.float32(-1e30)

    hid = h                      # final encoder hidden state
    emb_prev = None              # greedy-token embedding from the previous step
    for step in range(DEC_STEPS):                              # 7 steps, trace-time unrolled
        temb_t = temb_ref[step]                                # [B, E] teacher embedding dec_emb[trg[step]]
        if step == 0:
            emb = temb_t                                       # PyTorch: input = trg[0] (always)
        else:
            wt = (tf_ref[step] > 0).astype(f32)                # teacher-forcing coin from SMEM
            emb = wt * temb_t + (1.0 - wt) * emb_prev

        # ----- vectorized Bahdanau attention (no per-source-position loops) -----
        hid_part = jnp.dot(hid, wa_h_t, preferred_element_type=f32) + ba_t     # [B, S*A]
        e_all = jnp.tanh(encpart + hid_part)                                    # one EUP push
        scores = jnp.dot(e_all, vblk, preferred_element_type=f32)               # [B, S]
        m = jnp.max(scores, axis=-1, keepdims=True)
        pexp = jnp.exp(scores - m)
        alpha = pexp * (1.0 / jnp.sum(pexp, axis=-1, keepdims=True))            # [B, S]
        alpha_exp = jnp.dot(alpha, expand, preferred_element_type=f32)          # [B, S*H]
        context = jnp.dot(alpha_exp * enc_flat, summat,
                          preferred_element_type=f32)                           # [B, H]

        # ----- GRU cell, x = [emb ; context] via split dots; fused r/z sigmoid -----
        gi = (jnp.dot(emb, wih_e, preferred_element_type=f32)
              + jnp.dot(context, wih_c, preferred_element_type=f32) + bih)      # [B, 3H]
        gh = jnp.dot(hid, whh, preferred_element_type=f32) + bhh                # [B, 3H]
        rz = jax.nn.sigmoid(gi[:, :2 * HID] + gh[:, :2 * HID])                  # one EUP push
        r = rz[:, :HID]
        z = rz[:, HID:]
        n = jnp.tanh(gi[:, 2 * HID:] + r * gh[:, 2 * HID:])
        hid = (1.0 - z) * n + z * hid

        # ----- output projection over [h ; context ; emb] (split dots, 128-lane padded) -----
        logits = (jnp.dot(hid, wout_h, preferred_element_type=f32)
                  + jnp.dot(context, wout_c, preferred_element_type=f32)
                  + jnp.dot(emb, wout_e, preferred_element_type=f32)
                  + bout)                                                        # [B, VOCAB_PAD]
        out_ref[step] = logits                                  # padded lanes are exact zeros

        # ----- greedy token -> embedding for the next step (one-hot matmul) -----
        # TODO(synk): ties resolve to the lowest index (torch.argmax first-occurrence
        # behavior); not guaranteed bit-identical for exact floating-point ties.
        if step + 1 < DEC_STEPS:                                # last step's argmax is never used
            masked = jnp.where(valid, logits, neg_big)          # exclude padded vocab lanes
            mmax = jnp.max(masked, axis=-1, keepdims=True)
            top1 = jnp.min(jnp.where(masked == mmax, lane, VOCAB_PAD),
                           axis=-1, keepdims=True)              # [B, 1]
            onehot = (lane == top1).astype(f32)                 # [B, VOCAB_PAD]
            emb_prev = jnp.dot(onehot, demb, preferred_element_type=f32)         # [B, E]


def _fused_forward(tf_mask, src_emb, teacher_emb, p):
    vmem = pltpu.MemorySpace.VMEM
    smem = pltpu.MemorySpace.SMEM
    return pl.pallas_call(
        _seq2seq_kernel,
        in_specs=([pl.BlockSpec(memory_space=smem)]
                  + [pl.BlockSpec(memory_space=vmem)] * 21),
        out_specs=pl.BlockSpec(memory_space=vmem),
        out_shape=jax.ShapeDtypeStruct((DEC_STEPS, BATCH, VOCAB_PAD), jnp.float32),
    )(tf_mask, src_emb, teacher_emb,
      p['enc_wih'], p['enc_whh'], p['enc_b'],
      p['wa_e'], p['wa_h_tiled'], p['ba_tiled'],
      p['v_block'], p['expand_mat'], p['sum_mat'],
      p['wih_e'], p['wih_c'], p['whh'], p['bih'], p['bhh'],
      p['wout_h_pad'], p['wout_c_pad'], p['wout_e_pad'], p['bout_pad'],
      p['dec_emb_pad'])


# ---------------- Seq2Seq.forward ----------------
@jax.jit
def _seq2seq_core(params, src, trg, tf_mask):
    src_emb = params['enc_emb'][src]        # [S, B, E] token gather (XLA glue)
    teacher_emb = params['dec_emb'][trg]    # [T, B, E] token gather (XLA glue)
    logits_pad = _fused_forward(tf_mask, src_emb, teacher_emb, params)
    logits = logits_pad[:, :, :TRG_VOCAB]                              # drop lane padding (zeros)
    zeros0 = jnp.zeros((1, trg.shape[1], TRG_VOCAB), jnp.float32)      # outputs[0] stays zero
    return jnp.concatenate([zeros0, logits], axis=0)


def seq2seq_forward(params, src, trg, teacher_forcing_ratio=0.5):
    trg_len = trg.shape[0]
    # TODO(synk): teacher forcing uses host-side random.random(); the coin flips are
    # precomputed here in the same call order as the reference loop and passed as an
    # int mask so the whole forward can be jitted. Step 0 ignores tf_mask[0] and always
    # teacher-forces trg[0], matching the reference.
    flips = [1] + [int(random.random() < teacher_forcing_ratio) for _ in range(1, trg_len)]
    tf_mask = jnp.asarray(flips, dtype=jnp.int32)
    return _seq2seq_core(params, src, trg, tf_mask)


# ---------------- deterministic parameter init (+ one-time precomputation) ----------------
def init_params(key):
    ks = jax.random.split(key, 15)
    s = 0.1
    p = {}
    p['enc_emb'] = s * jax.random.normal(ks[0], (SRC_VOCAB, ENC_EMB), jnp.float32)
    # encoder LSTM weights, gate columns laid out (i, f, o, g) so the kernel can fuse
    # the three sigmoid gates into a single EUP push
    p['enc_wih'] = s * jax.random.normal(ks[1], (ENC_EMB, 4 * HID), jnp.float32)
    p['enc_whh'] = s * jax.random.normal(ks[2], (HID, 4 * HID), jnp.float32)
    p['enc_b']   = s * jax.random.normal(ks[3], (1, 4 * HID), jnp.float32)
    p['dec_emb'] = s * jax.random.normal(ks[4], (TRG_VOCAB, DEC_EMB), jnp.float32)
    wa_h = s * jax.random.normal(ks[5], (HID, ATTN), jnp.float32)
    p['wa_e'] = s * jax.random.normal(ks[6], (HID, ATTN), jnp.float32)
    ba = s * jax.random.normal(ks[7], (1, ATTN), jnp.float32)
    v = s * jax.random.normal(ks[8], (1, ATTN), jnp.float32)
    wih = s * jax.random.normal(ks[9], (DEC_EMB + HID, 3 * HID), jnp.float32)
    p['whh'] = s * jax.random.normal(ks[10], (HID, 3 * HID), jnp.float32)
    p['bih'] = s * jax.random.normal(ks[11], (1, 3 * HID), jnp.float32)
    p['bhh'] = s * jax.random.normal(ks[12], (1, 3 * HID), jnp.float32)
    wout = s * jax.random.normal(ks[13], (2 * HID + DEC_EMB, TRG_VOCAB), jnp.float32)
    bout = s * jax.random.normal(ks[14], (1, TRG_VOCAB), jnp.float32)

    # ---- one-time host-side precomputation (kept out of the jitted forward) ----
    eye_s = jnp.eye(SRC_LEN, dtype=jnp.float32)
    # attention: tiled hidden projection and selector matrices so each decode step's
    # attention is a handful of dots + one tanh + one lane softmax
    p['wa_h_tiled'] = jnp.tile(wa_h, (1, SRC_LEN))                               # [H, S*A]
    p['ba_tiled']   = jnp.tile(ba, (1, SRC_LEN))                                 # [1, S*A]
    p['v_block']    = jnp.kron(eye_s, v.reshape(ATTN, 1))                        # [S*A, S]
    p['expand_mat'] = jnp.kron(eye_s, jnp.ones((1, HID), jnp.float32))           # [S, S*H]
    p['sum_mat']    = jnp.kron(jnp.ones((SRC_LEN, 1), jnp.float32),
                               jnp.eye(HID, dtype=jnp.float32))                  # [S*H, H]
    # GRU input weight split so no [emb ; context] concat is needed in-kernel
    p['wih_e'] = wih[:DEC_EMB]
    p['wih_c'] = wih[DEC_EMB:]
    # output projection split over [h ; context ; emb], zero-padded to 128 lanes
    p['wout_h_pad'] = jnp.zeros((HID, VOCAB_PAD), jnp.float32).at[:, :TRG_VOCAB].set(wout[:HID])
    p['wout_c_pad'] = jnp.zeros((HID, VOCAB_PAD), jnp.float32).at[:, :TRG_VOCAB].set(wout[HID:2 * HID])
    p['wout_e_pad'] = jnp.zeros((DEC_EMB, VOCAB_PAD), jnp.float32).at[:, :TRG_VOCAB].set(wout[2 * HID:])
    p['bout_pad']   = jnp.zeros((1, VOCAB_PAD), jnp.float32).at[:, :TRG_VOCAB].set(bout)
    p['dec_emb_pad'] = jnp.zeros((VOCAB_PAD, DEC_EMB), jnp.float32).at[:TRG_VOCAB, :].set(p['dec_emb'])
    return p


if __name__ == "__main__":
    key = jax.random.PRNGKey(0)
    kp, ksrc, ktrg = jax.random.split(key, 3)
    params = init_params(kp)
    src = jax.random.randint(ksrc, (SRC_LEN, BATCH), 0, SRC_VOCAB, dtype=jnp.int32)
    trg = jax.random.randint(ktrg, (TRG_LEN, BATCH), 0, TRG_VOCAB, dtype=jnp.int32)

    random.seed(0)  # deterministic teacher-forcing decisions
    out = seq2seq_forward(params, src, trg, teacher_forcing_ratio=0.5)
    out = jax.block_until_ready(out)
    assert out.shape == (TRG_LEN, BATCH, TRG_VOCAB)
    assert bool(jnp.all(out[0] == 0.0))  # outputs[0] stays zero, as in the reference
    print("KERNEL_OK")
</pallas_src>

<mosaic_0001>
module attributes {stable_mosaic.version = 11 : i64} {
  func.func @_seq2seq_kernel(%arg0: memref<8xi32, #tpu.memory_space<smem>>, %arg1: memref<8x2x32xf32, #tpu.memory_space<vmem>>, %arg2: memref<8x2x32xf32, #tpu.memory_space<vmem>>, %arg3: memref<32x128xf32, #tpu.memory_space<vmem>>, %arg4: memref<32x128xf32, #tpu.memory_space<vmem>>, %arg5: memref<1x128xf32, #tpu.memory_space<vmem>>, %arg6: memref<32x32xf32, #tpu.memory_space<vmem>>, %arg7: memref<32x256xf32, #tpu.memory_space<vmem>>, %arg8: memref<1x256xf32, #tpu.memory_space<vmem>>, %arg9: memref<256x8xf32, #tpu.memory_space<vmem>>, %arg10: memref<8x256xf32, #tpu.memory_space<vmem>>, %arg11: memref<256x32xf32, #tpu.memory_space<vmem>>, %arg12: memref<32x96xf32, #tpu.memory_space<vmem>>, %arg13: memref<32x96xf32, #tpu.memory_space<vmem>>, %arg14: memref<32x96xf32, #tpu.memory_space<vmem>>, %arg15: memref<1x96xf32, #tpu.memory_space<vmem>>, %arg16: memref<1x96xf32, #tpu.memory_space<vmem>>, %arg17: memref<32x128xf32, #tpu.memory_space<vmem>>, %arg18: memref<32x128xf32, #tpu.memory_space<vmem>>, %arg19: memref<32x128xf32, #tpu.memory_space<vmem>>, %arg20: memref<1x128xf32, #tpu.memory_space<vmem>>, %arg21: memref<128x32xf32, #tpu.memory_space<vmem>>, %arg22: memref<7x2x128xf32, #tpu.memory_space<vmem>>) attributes {dimension_semantics = [], scalar_prefetch = 0 : i64, scratch_operands = 0 : i64, tpu.core_type = #tpu.core_type<tc>} {
    %c0 = arith.constant 0 : index
    %c0_0 = arith.constant 0 : index
    %0 = vector.load %arg3[%c0, %c0_0] : memref<32x128xf32, #tpu.memory_space<vmem>>, vector<32x128xf32>
    %c0_1 = arith.constant 0 : index
    %c0_2 = arith.constant 0 : index
    %1 = vector.load %arg4[%c0_1, %c0_2] : memref<32x128xf32, #tpu.memory_space<vmem>>, vector<32x128xf32>
    %c0_3 = arith.constant 0 : index
    %c0_4 = arith.constant 0 : index
    %2 = vector.load %arg5[%c0_3, %c0_4] : memref<1x128xf32, #tpu.memory_space<vmem>>, vector<1x128xf32>
    %c0_5 = arith.constant 0 : index
    %c0_6 = arith.constant 0 : index
    %3 = vector.load %arg6[%c0_5, %c0_6] : memref<32x32xf32, #tpu.memory_space<vmem>>, vector<32x32xf32>
    %cst = arith.constant 0.000000e+00 : f32
    %4 = vector.broadcast %cst : f32 to vector<2x32xf32>
    %cst_7 = arith.constant 0.000000e+00 : f32
    %5 = vector.broadcast %cst_7 : f32 to vector<2x32xf32>
    %c0_8 = arith.constant 0 : index
    %c0_9 = arith.constant 0 : index
    %c0_10 = arith.constant 0 : index
    %6 = vector.load %arg1[%c0_8, %c0_9, %c0_10] : memref<8x2x32xf32, #tpu.memory_space<vmem>>, vector<1x2x32xf32>
    %7 = vector.shape_cast %6 : vector<1x2x32xf32> to vector<2x32xf32>
    %cst_11 = arith.constant dense<0.000000e+00> : vector<2x128xf32>
    %8 = tpu.matmul %7, %0, %cst_11 {dimension_numbers = #tpu.dot_dimension_numbers<[1], [0], [0], [1], [0, 0, 1, 1], [], []>} : vector<2x32xf32>, vector<32x128xf32>, vector<2x128xf32> -> vector<2x128xf32>
    %cst_12 = arith.constant dense<0.000000e+00> : vector<2x128xf32>
    %9 = tpu.matmul %4, %1, %cst_12 {dimension_numbers = #tpu.dot_dimension_numbers<[1], [0], [0], [1], [0, 0, 1, 1], [], []>} : vector<2x32xf32>, vector<32x128xf32>, vector<2x128xf32> -> vector<2x128xf32>
    %10 = arith.addf %8, %9 : vector<2x128xf32>
    %11 = vector.broadcast %2 : vector<1x128xf32> to vector<2x128xf32>
    %12 = arith.addf %10, %11 : vector<2x128xf32>
    %13 = vector.extract_strided_slice %12 {offsets = [0, 0], sizes = [2, 96], strides = [1, 1]} : vector<2x128xf32> to vector<2x96xf32>
    %14 = arith.negf %13 : vector<2x96xf32>
    %15 = math.exp %14 : vector<2x96xf32>
    %cst_13 = arith.constant 1.000000e+00 : f32
    %16 = vector.broadcast %cst_13 : f32 to vector<2x96xf32>
    %17 = arith.addf %16, %15 : vector<2x96xf32>
    %18 = arith.divf %16, %17 : vector<2x96xf32>
    %19 = vector.extract_strided_slice %12 {offsets = [0, 96], sizes = [2, 32], strides = [1, 1]} : vector<2x128xf32> to vector<2x32xf32>
    %20 = math.tanh %19 : vector<2x32xf32>
    %21 = vector.extract_strided_slice %18 {offsets = [0, 0], sizes = [2, 32], strides = [1, 1]} : vector<2x96xf32> to vector<2x32xf32>
    %22 = vector.extract_strided_slice %18 {offsets = [0, 32], sizes = [2, 32], strides = [1, 1]} : vector<2x96xf32> to vector<2x32xf32>
    %23 = vector.extract_strided_slice %18 {offsets = [0, 64], sizes = [2, 32], strides = [1, 1]} : vector<2x96xf32> to vector<2x32xf32>
    %24 = arith.mulf %22, %5 : vector<2x32xf32>
    %25 = arith.mulf %21, %20 : vector<2x32xf32>
    %26 = arith.addf %24, %25 : vector<2x32xf32>
    %27 = math.tanh %26 : vector<2x32xf32>
    %28 = arith.mulf %23, %27 : vector<2x32xf32>
    %c1 = arith.constant 1 : index
    %c0_14 = arith.constant 0 : index
    %c0_15 = arith.constant 0 : index
    %29 = vector.load %arg1[%c1, %c0_14, %c0_15] : memref<8x2x32xf32, #tpu.memory_space<vmem>>, vector<1x2x32xf32>
    %30 = vector.shape_cast %29 : vector<1x2x32xf32> to vector<2x32xf32>
    %cst_16 = arith.constant dense<0.000000e+00> : vector<2x128xf32>
    %31 = tpu.matmul %30, %0, %cst_16 {dimension_numbers = #tpu.dot_dimension_numbers<[1], [0], [0], [1], [0, 0, 1, 1], [], []>} : vector<2x32xf32>, vector<32x128xf32>, vector<2x128xf32> -> vector<2x128xf32>
    %cst_17 = arith.constant dense<0.000000e+00> : vector<2x128xf32>
    %32 = tpu.matmul %28, %1, %cst_17 {dimension_numbers = #tpu.dot_dimension_numbers<[1], [0], [0], [1], [0, 0, 1, 1], [], []>} : vector<2x32xf32>, vector<32x128xf32>, vector<2x128xf32> -> vector<2x128xf32>
    %33 = arith.addf %31, %32 : vector<2x128xf32>
    %34 = vector.broadcast %2 : vector<1x128xf32> to vector<2x128xf32>
    %35 = arith.addf %33, %34 : vector<2x128xf32>
    %36 = vector.extract_strided_slice %35 {offsets = [0, 0], sizes = [2, 96], strides = [1, 1]} : vector<2x128xf32> to vector<2x96xf32>
    %37 = arith.negf %36 : vector<2x96xf32>
    %38 = math.exp %37 : vector<2x96xf32>
    %cst_18 = arith.constant 1.000000e+00 : f32
    %39 = vector.broadcast %cst_18 : f32 to vector<2x96xf32>
    %40 = arith.addf %39, %38 : vector<2x96xf32>
    %41 = arith.divf %39, %40 : vector<2x96xf32>
    %42 = vector.extract_strided_slice %35 {offsets = [0, 96], sizes = [2, 32], strides = [1, 1]} : vector<2x128xf32> to vector<2x32xf32>
    %43 = math.tanh %42 : vector<2x32xf32>
    %44 = vector.extract_strided_slice %41 {offsets = [0, 0], sizes = [2, 32], strides = [1, 1]} : vector<2x96xf32> to vector<2x32xf32>
    %45 = vector.extract_strided_slice %41 {offsets = [0, 32], sizes = [2, 32], strides = [1, 1]} : vector<2x96xf32> to vector<2x32xf32>
    %46 = vector.extract_strided_slice %41 {offsets = [0, 64], sizes = [2, 32], strides = [1, 1]} : vector<2x96xf32> to vector<2x32xf32>
    %47 = arith.mulf %45, %26 : vector<2x32xf32>
    %48 = arith.mulf %44, %43 : vector<2x32xf32>
    %49 = arith.addf %47, %48 : vector<2x32xf32>
    %50 = math.tanh %49 : vector<2x32xf32>
    %51 = arith.mulf %46, %50 : vector<2x32xf32>
    %c2 = arith.constant 2 : index
    %c0_19 = arith.constant 0 : index
    %c0_20 = arith.constant 0 : index
    %52 = vector.load %arg1[%c2, %c0_19, %c0_20] : memref<8x2x32xf32, #tpu.memory_space<vmem>>, vector<1x2x32xf32>
    %53 = vector.shape_cast %52 : vector<1x2x32xf32> to vector<2x32xf32>
    %cst_21 = arith.constant dense<0.000000e+00> : vector<2x128xf32>
    %54 = tpu.matmul %53, %0, %cst_21 {dimension_numbers = #tpu.dot_dimension_numbers<[1], [0], [0], [1], [0, 0, 1, 1], [], []>} : vector<2x32xf32>, vector<32x128xf32>, vector<2x128xf32> -> vector<2x128xf32>
    %cst_22 = arith.constant dense<0.000000e+00> : vector<2x128xf32>
    %55 = tpu.matmul %51, %1, %cst_22 {dimension_numbers = #tpu.dot_dimension_numbers<[1], [0], [0], [1], [0, 0, 1, 1], [], []>} : vector<2x32xf32>, vector<32x128xf32>, vector<2x128xf32> -> vector<2x128xf32>
    %56 = arith.addf %54, %55 : vector<2x128xf32>
    %57 = vector.broadcast %2 : vector<1x128xf32> to vector<2x128xf32>
    %58 = arith.addf %56, %57 : vector<2x128xf32>
    %59 = vector.extract_strided_slice %58 {offsets = [0, 0], sizes = [2, 96], strides = [1, 1]} : vector<2x128xf32> to vector<2x96xf32>
    %60 = arith.negf %59 : vector<2x96xf32>
    %61 = math.exp %60 : vector<2x96xf32>
    %cst_23 = arith.constant 1.000000e+00 : f32
    %62 = vector.broadcast %cst_23 : f32 to vector<2x96xf32>
    %63 = arith.addf %62, %61 : vector<2x96xf32>
    %64 = arith.divf %62, %63 : vector<2x96xf32>
    %65 = vector.extract_strided_slice %58 {offsets = [0, 96], sizes = [2, 32], strides = [1, 1]} : vector<2x128xf32> to vector<2x32xf32>
    %66 = math.tanh %65 : vector<2x32xf32>
    %67 = vector.extract_strided_slice %64 {offsets = [0, 0], sizes = [2, 32], strides = [1, 1]} : vector<2x96xf32> to vector<2x32xf32>
    %68 = vector.extract_strided_slice %64 {offsets = [0, 32], sizes = [2, 32], strides = [1, 1]} : vector<2x96xf32> to vector<2x32xf32>
    %69 = vector.extract_strided_slice %64 {offsets = [0, 64], sizes = [2, 32], strides = [1, 1]} : vector<2x96xf32> to vector<2x32xf32>
    %70 = arith.mulf %68, %49 : vector<2x32xf32>
    %71 = arith.mulf %67, %66 : vector<2x32xf32>
    %72 = arith.addf %70, %71 : vector<2x32xf32>
    %73 = math.tanh %72 : vector<2x32xf32>
    %74 = arith.mulf %69, %73 : vector<2x32xf32>
    %c3 = arith.constant 3 : index
    %c0_24 = arith.constant 0 : index
    %c0_25 = arith.constant 0 : index
    %75 = vector.load %arg1[%c3, %c0_24, %c0_25] : memref<8x2x32xf32, #tpu.memory_space<vmem>>, vector<1x2x32xf32>
    %76 = vector.shape_cast %75 : vector<1x2x32xf32> to vector<2x32xf32>
    %cst_26 = arith.constant dense<0.000000e+00> : vector<2x128xf32>
    %77 = tpu.matmul %76, %0, %cst_26 {dimension_numbers = #tpu.dot_dimension_numbers<[1], [0], [0], [1], [0, 0, 1, 1], [], []>} : vector<2x32xf32>, vector<32x128xf32>, vector<2x128xf32> -> vector<2x128xf32>
    %cst_27 = arith.constant dense<0.000000e+00> : vector<2x128xf32>
    %78 = tpu.matmul %74, %1, %cst_27 {dimension_numbers = #tpu.dot_dimension_numbers<[1], [0], [0], [1], [0, 0, 1, 1], [], []>} : vector<2x32xf32>, vector<32x128xf32>, vector<2x128xf32> -> vector<2x128xf32>
    %79 = arith.addf %77, %78 : vector<2x128xf32>
    %80 = vector.broadcast %2 : vector<1x128xf32> to vector<2x128xf32>
    %81 = arith.addf %79, %80 : vector<2x128xf32>
    %82 = vector.extract_strided_slice %81 {offsets = [0, 0], sizes = [2, 96], strides = [1, 1]} : vector<2x128xf32> to vector<2x96xf32>
    %83 = arith.negf %82 : vector<2x96xf32>
    %84 = math.exp %83 : vector<2x96xf32>
    %cst_28 = arith.constant 1.000000e+00 : f32
    %85 = vector.broadcast %cst_28 : f32 to vector<2x96xf32>
    %86 = arith.addf %85, %84 : vector<2x96xf32>
    %87 = arith.divf %85, %86 : vector<2x96xf32>
    %88 = vector.extract_strided_slice %81 {offsets = [0, 96], sizes = [2, 32], strides = [1, 1]} : vector<2x128xf32> to vector<2x32xf32>
    %89 = math.tanh %88 : vector<2x32xf32>
    %90 = vector.extract_strided_slice %87 {offsets = [0, 0], sizes = [2, 32], strides = [1, 1]} : vector<2x96xf32> to vector<2x32xf32>
    %91 = vector.extract_strided_slice %87 {offsets = [0, 32], sizes = [2, 32], strides = [1, 1]} : vector<2x96xf32> to vector<2x32xf32>
    %92 = vector.extract_strided_slice %87 {offsets = [0, 64], sizes = [2, 32], strides = [1, 1]} : vector<2x96xf32> to vector<2x32xf32>
    %93 = arith.mulf %91, %72 : vector<2x32xf32>
    %94 = arith.mulf %90, %89 : vector<2x32xf32>
    %95 = arith.addf %93, %94 : vector<2x32xf32>
    %96 = math.tanh %95 : vector<2x32xf32>
    %97 = arith.mulf %92, %96 : vector<2x32xf32>
    %c4 = arith.constant 4 : index
    %c0_29 = arith.constant 0 : index
    %c0_30 = arith.constant 0 : index
    %98 = vector.load %arg1[%c4, %c0_29, %c0_30] : memref<8x2x32xf32, #tpu.memory_space<vmem>>, vector<1x2x32xf32>
    %99 = vector.shape_cast %98 : vector<1x2x32xf32> to vector<2x32xf32>
    %cst_31 = arith.constant dense<0.000000e+00> : vector<2x128xf32>
    %100 = tpu.matmul %99, %0, %cst_31 {dimension_numbers = #tpu.dot_dimension_numbers<[1], [0], [0], [1], [0, 0, 1, 1], [], []>} : vector<2x32xf32>, vector<32x128xf32>, vector<2x128xf32> -> vector<2x128xf32>
    %cst_32 = arith.constant dense<0.000000e+00> : vector<2x128xf32>
    %101 = tpu.matmul %97, %1, %cst_32 {dimension_numbers = #tpu.dot_dimension_numbers<[1], [0], [0], [1], [0, 0, 1, 1], [], []>} : vector<2x32xf32>, vector<32x128xf32>, vector<2x128xf32> -> vector<2x128xf32>
    %102 = arith.addf %100, %101 : vector<2x128xf32>
    %103 = vector.broadcast %2 : vector<1x128xf32> to vector<2x128xf32>
    %104 = arith.addf %102, %103 : vector<2x128xf32>
    %105 = vector.extract_strided_slice %104 {offsets = [0, 0], sizes = [2, 96], strides = [1, 1]} : vector<2x128xf32> to vector<2x96xf32>
    %106 = arith.negf %105 : vector<2x96xf32>
    %107 = math.exp %106 : vector<2x96xf32>
    %cst_33 = arith.constant 1.000000e+00 : f32
    %108 = vector.broadcast %cst_33 : f32 to vector<2x96xf32>
    %109 = arith.addf %108, %107 : vector<2x96xf32>
    %110 = arith.divf %108, %109 : vector<2x96xf32>
    %111 = vector.extract_strided_slice %104 {offsets = [0, 96], sizes = [2, 32], strides = [1, 1]} : vector<2x128xf32> to vector<2x32xf32>
    %112 = math.tanh %111 : vector<2x32xf32>
    %113 = vector.extract_strided_slice %110 {offsets = [0, 0], sizes = [2, 32], strides = [1, 1]} : vector<2x96xf32> to vector<2x32xf32>
    %114 = vector.extract_strided_slice %110 {offsets = [0, 32], sizes = [2, 32], strides = [1, 1]} : vector<2x96xf32> to vector<2x32xf32>
    %115 = vector.extract_strided_slice %110 {offsets = [0, 64], sizes = [2, 32], strides = [1, 1]} : vector<2x96xf32> to vector<2x32xf32>
    %116 = arith.mulf %114, %95 : vector<2x32xf32>
    %117 = arith.mulf %113, %112 : vector<2x32xf32>
    %118 = arith.addf %116, %117 : vector<2x32xf32>
    %119 = math.tanh %118 : vector<2x32xf32>
    %120 = arith.mulf %115, %119 : vector<2x32xf32>
    %c5 = arith.constant 5 : index
    %c0_34 = arith.constant 0 : index
    %c0_35 = arith.constant 0 : index
    %121 = vector.load %arg1[%c5, %c0_34, %c0_35] : memref<8x2x32xf32, #tpu.memory_space<vmem>>, vector<1x2x32xf32>
    %122 = vector.shape_cast %121 : vector<1x2x32xf32> to vector<2x32xf32>
    %cst_36 = arith.constant dense<0.000000e+00> : vector<2x128xf32>
    %123 = tpu.matmul %122, %0, %cst_36 {dimension_numbers = #tpu.dot_dimension_numbers<[1], [0], [0], [1], [0, 0, 1, 1], [], []>} : vector<2x32xf32>, vector<32x128xf32>, vector<2x128xf32> -> vector<2x128xf32>
    %cst_37 = arith.constant dense<0.000000e+00> : vector<2x128xf32>
    %124 = tpu.matmul %120, %1, %cst_37 {dimension_numbers = #tpu.dot_dimension_numbers<[1], [0], [0], [1], [0, 0, 1, 1], [], []>} : vector<2x32xf32>, vector<32x128xf32>, vector<2x128xf32> -> vector<2x128xf32>
    %125 = arith.addf %123, %124 : vector<2x128xf32>
    %126 = vector.broadcast %2 : vector<1x128xf32> to vector<2x128xf32>
    %127 = arith.addf %125, %126 : vector<2x128xf32>
    %128 = vector.extract_strided_slice %127 {offsets = [0, 0], sizes = [2, 96], strides = [1, 1]} : vector<2x128xf32> to vector<2x96xf32>
    %129 = arith.negf %128 : vector<2x96xf32>
    %130 = math.exp %129 : vector<2x96xf32>
    %cst_38 = arith.constant 1.000000e+00 : f32
    %131 = vector.broadcast %cst_38 : f32 to vector<2x96xf32>
    %132 = arith.addf %131, %130 : vector<2x96xf32>
    %133 = arith.divf %131, %132 : vector<2x96xf32>
    %134 = vector.extract_strided_slice %127 {offsets = [0, 96], sizes = [2, 32], strides = [1, 1]} : vector<2x128xf32> to vector<2x32xf32>
    %135 = math.tanh %134 : vector<2x32xf32>
    %136 = vector.extract_strided_slice %133 {offsets = [0, 0], sizes = [2, 32], strides = [1, 1]} : vector<2x96xf32> to vector<2x32xf32>
    %137 = vector.extract_strided_slice %133 {offsets = [0, 32], sizes = [2, 32], strides = [1, 1]} : vector<2x96xf32> to vector<2x32xf32>
    %138 = vector.extract_strided_slice %133 {offsets = [0, 64], sizes = [2, 32], strides = [1, 1]} : vector<2x96xf32> to vector<2x32xf32>
    %139 = arith.mulf %137, %118 : vector<2x32xf32>
    %140 = arith.mulf %136, %135 : vector<2x32xf32>
    %141 = arith.addf %139, %140 : vector<2x32xf32>
    %142 = math.tanh %141 : vector<2x32xf32>
    %143 = arith.mulf %138, %142 : vector<2x32xf32>
    %c6 = arith.constant 6 : index
    %c0_39 = arith.constant 0 : index
    %c0_40 = arith.constant 0 : index
    %144 = vector.load %arg1[%c6, %c0_39, %c0_40] : memref<8x2x32xf32, #tpu.memory_space<vmem>>, vector<1x2x32xf32>
    %145 = vector.shape_cast %144 : vector<1x2x32xf32> to vector<2x32xf32>
    %cst_41 = arith.constant dense<0.000000e+00> : vector<2x128xf32>
    %146 = tpu.matmul %145, %0, %cst_41 {dimension_numbers = #tpu.dot_dimension_numbers<[1], [0], [0], [1], [0, 0, 1, 1], [], []>} : vector<2x32xf32>, vector<32x128xf32>, vector<2x128xf32> -> vector<2x128xf32>
    %cst_42 = arith.constant dense<0.000000e+00> : vector<2x128xf32>
    %147 = tpu.matmul %143, %1, %cst_42 {dimension_numbers = #tpu.dot_dimension_numbers<[1], [0], [0], [1], [0, 0, 1, 1], [], []>} : vector<2x32xf32>, vector<32x128xf32>, vector<2x128xf32> -> vector<2x128xf32>
    %148 = arith.addf %146, %147 : vector<2x128xf32>
    %149 = vector.broadcast %2 : vector<1x128xf32> to vector<2x128xf32>
    %150 = arith.addf %148, %149 : vector<2x128xf32>
    %151 = vector.extract_strided_slice %150 {offsets = [0, 0], sizes = [2, 96], strides = [1, 1]} : vector<2x128xf32> to vector<2x96xf32>
    %152 = arith.negf %151 : vector<2x96xf32>
    %153 = math.exp %152 : vector<2x96xf32>
    %cst_43 = arith.constant 1.000000e+00 : f32
    %154 = vector.broadcast %cst_43 : f32 to vector<2x96xf32>
    %155 = arith.addf %154, %153 : vector<2x96xf32>
    %156 = arith.divf %154, %155 : vector<2x96xf32>
    %157 = vector.extract_strided_slice %150 {offsets = [0, 96], sizes = [2, 32], strides = [1, 1]} : vector<2x128xf32> to vector<2x32xf32>
    %158 = math.tanh %157 : vector<2x32xf32>
    %159 = vector.extract_strided_slice %156 {offsets = [0, 0], sizes = [2, 32], strides = [1, 1]} : vector<2x96xf32> to vector<2x32xf32>
    %160 = vector.extract_strided_slice %156 {offsets = [0, 32], sizes = [2, 32], strides = [1, 1]} : vector<2x96xf32> to vector<2x32xf32>
    %161 = vector.extract_strided_slice %156 {offsets = [0, 64], sizes = [2, 32], strides = [1, 1]} : vector<2x96xf32> to vector<2x32xf32>
    %162 = arith.mulf %160, %141 : vector<2x32xf32>
    %163 = arith.mulf %159, %158 : vector<2x32xf32>
    %164 = arith.addf %162, %163 : vector<2x32xf32>
    %165 = math.tanh %164 : vector<2x32xf32>
    %166 = arith.mulf %161, %165 : vector<2x32xf32>
    %c7 = arith.constant 7 : index
    %c0_44 = arith.constant 0 : index
    %c0_45 = arith.constant 0 : index
    %167 = vector.load %arg1[%c7, %c0_44, %c0_45] : memref<8x2x32xf32, #tpu.memory_space<vmem>>, vector<1x2x32xf32>
    %168 = vector.shape_cast %167 : vector<1x2x32xf32> to vector<2x32xf32>
    %cst_46 = arith.constant dense<0.000000e+00> : vector<2x128xf32>
    %169 = tpu.matmul %168, %0, %cst_46 {dimension_numbers = #tpu.dot_dimension_numbers<[1], [0], [0], [1], [0, 0, 1, 1], [], []>} : vector<2x32xf32>, vector<32x128xf32>, vector<2x128xf32> -> vector<2x128xf32>
    %cst_47 = arith.constant dense<0.000000e+00> : vector<2x128xf32>
    %170 = tpu.matmul %166, %1, %cst_47 {dimension_numbers = #tpu.dot_dimension_numbers<[1], [0], [0], [1], [0, 0, 1, 1], [], []>} : vector<2x32xf32>, vector<32x128xf32>, vector<2x128xf32> -> vector<2x128xf32>
    %171 = arith.addf %169, %170 : vector<2x128xf32>
    %172 = vector.broadcast %2 : vector<1x128xf32> to vector<2x128xf32>
    %173 = arith.addf %171, %172 : vector<2x128xf32>
    %174 = vector.extract_strided_slice %173 {offsets = [0, 0], sizes = [2, 96], strides = [1, 1]} : vector<2x128xf32> to vector<2x96xf32>
    %175 = arith.negf %174 : vector<2x96xf32>
    %176 = math.exp %175 : vector<2x96xf32>
    %cst_48 = arith.constant 1.000000e+00 : f32
    %177 = vector.broadcast %cst_48 : f32 to vector<2x96xf32>
    %178 = arith.addf %177, %176 : vector<2x96xf32>
    %179 = arith.divf %177, %178 : vector<2x96xf32>
    %180 = vector.extract_strided_slice %173 {offsets = [0, 96], sizes = [2, 32], strides = [1, 1]} : vector<2x128xf32> to vector<2x32xf32>
    %181 = math.tanh %180 : vector<2x32xf32>
    %182 = vector.extract_strided_slice %179 {offsets = [0, 0], sizes = [2, 32], strides = [1, 1]} : vector<2x96xf32> to vector<2x32xf32>
    %183 = vector.extract_strided_slice %179 {offsets = [0, 32], sizes = [2, 32], strides = [1, 1]} : vector<2x96xf32> to vector<2x32xf32>
    %184 = vector.extract_strided_slice %179 {offsets = [0, 64], sizes = [2, 32], strides = [1, 1]} : vector<2x96xf32> to vector<2x32xf32>
    %185 = arith.mulf %183, %164 : vector<2x32xf32>
    %186 = arith.mulf %182, %181 : vector<2x32xf32>
    %187 = arith.addf %185, %186 : vector<2x32xf32>
    %188 = math.tanh %187 : vector<2x32xf32>
    %189 = arith.mulf %184, %188 : vector<2x32xf32>
    %190 = tpu.concatenate %28, %51, %74, %97, %120, %143, %166, %189 in 1 : vector<2x32xf32>, vector<2x32xf32>, vector<2x32xf32>, vector<2x32xf32>, vector<2x32xf32>, vector<2x32xf32>, vector<2x32xf32>, vector<2x32xf32> -> vector<2x256xf32>
    %cst_49 = arith.constant dense<0.000000e+00> : vector<2x32xf32>
    %191 = tpu.matmul %28, %3, %cst_49 {dimension_numbers = #tpu.dot_dimension_numbers<[1], [0], [0], [1], [0, 0, 1, 1], [], []>} : vector<2x32xf32>, vector<32x32xf32>, vector<2x32xf32> -> vector<2x32xf32>
    %cst_50 = arith.constant dense<0.000000e+00> : vector<2x32xf32>
    %192 = tpu.matmul %51, %3, %cst_50 {dimension_numbers = #tpu.dot_dimension_numbers<[1], [0], [0], [1], [0, 0, 1, 1], [], []>} : vector<2x32xf32>, vector<32x32xf32>, vector<2x32xf32> -> vector<2x32xf32>
    %cst_51 = arith.constant dense<0.000000e+00> : vector<2x32xf32>
    %193 = tpu.matmul %74, %3, %cst_51 {dimension_numbers = #tpu.dot_dimension_numbers<[1], [0], [0], [1], [0, 0, 1, 1], [], []>} : vector<2x32xf32>, vector<32x32xf32>, vector<2x32xf32> -> vector<2x32xf32>
    %cst_52 = arith.constant dense<0.000000e+00> : vector<2x32xf32>
    %194 = tpu.matmul %97, %3, %cst_52 {dimension_numbers = #tpu.dot_dimension_numbers<[1], [0], [0], [1], [0, 0, 1, 1], [], []>} : vector<2x32xf32>, vector<32x32xf32>, vector<2x32xf32> -> vector<2x32xf32>
    %cst_53 = arith.constant dense<0.000000e+00> : vector<2x32xf32>
    %195 = tpu.matmul %120, %3, %cst_53 {dimension_numbers = #tpu.dot_dimension_numbers<[1], [0], [0], [1], [0, 0, 1, 1], [], []>} : vector<2x32xf32>, vector<32x32xf32>, vector<2x32xf32> -> vector<2x32xf32>
    %cst_54 = arith.constant dense<0.000000e+00> : vector<2x32xf32>
    %196 = tpu.matmul %143, %3, %cst_54 {dimension_numbers = #tpu.dot_dimension_numbers<[1], [0], [0], [1], [0, 0, 1, 1], [], []>} : vector<2x32xf32>, vector<32x32xf32>, vector<2x32xf32> -> vector<2x32xf32>
    %cst_55 = arith.constant dense<0.000000e+00> : vector<2x32xf32>
    %197 = tpu.matmul %166, %3, %cst_55 {dimension_numbers = #tpu.dot_dimension_numbers<[1], [0], [0], [1], [0, 0, 1, 1], [], []>} : vector<2x32xf32>, vector<32x32xf32>, vector<2x32xf32> -> vector<2x32xf32>
    %cst_56 = arith.constant dense<0.000000e+00> : vector<2x32xf32>
    %198 = tpu.matmul %189, %3, %cst_56 {dimension_numbers = #tpu.dot_dimension_numbers<[1], [0], [0], [1], [0, 0, 1, 1], [], []>} : vector<2x32xf32>, vector<32x32xf32>, vector<2x32xf32> -> vector<2x32xf32>
    %199 = tpu.concatenate %191, %192, %193, %194, %195, %196, %197, %198 in 1 : vector<2x32xf32>, vector<2x32xf32>, vector<2x32xf32>, vector<2x32xf32>, vector<2x32xf32>, vector<2x32xf32>, vector<2x32xf32>, vector<2x32xf32> -> vector<2x256xf32>
    %c0_57 = arith.constant 0 : index
    %c0_58 = arith.constant 0 : index
    %200 = vector.load %arg7[%c0_57, %c0_58] : memref<32x256xf32, #tpu.memory_space<vmem>>, vector<32x256xf32>
    %c0_59 = arith.constant 0 : index
    %c0_60 = arith.constant 0 : index
    %201 = vector.load %arg8[%c0_59, %c0_60] : memref<1x256xf32, #tpu.memory_space<vmem>>, vector<1x256xf32>
    %c0_61 = arith.constant 0 : index
    %c0_62 = arith.constant 0 : index
    %202 = vector.load %arg9[%c0_61, %c0_62] : memref<256x8xf32, #tpu.memory_space<vmem>>, vector<256x8xf32>
    %c0_63 = arith.constant 0 : index
    %c0_64 = arith.constant 0 : index
    %203 = vector.load %arg10[%c0_63, %c0_64] : memref<8x256xf32, #tpu.memory_space<vmem>>, vector<8x256xf32>
    %c0_65 = arith.constant 0 : index
    %c0_66 = arith.constant 0 : index
    %204 = vector.load %arg11[%c0_65, %c0_66] : memref<256x32xf32, #tpu.memory_space<vmem>>, vector<256x32xf32>
    %c0_67 = arith.constant 0 : index
    %c0_68 = arith.constant 0 : index
    %205 = vector.load %arg12[%c0_67, %c0_68] : memref<32x96xf32, #tpu.memory_space<vmem>>, vector<32x96xf32>
    %c0_69 = arith.constant 0 : index
    %c0_70 = arith.constant 0 : index
    %206 = vector.load %arg13[%c0_69, %c0_70] : memref<32x96xf32, #tpu.memory_space<vmem>>, vector<32x96xf32>
    %c0_71 = arith.constant 0 : index
    %c0_72 = arith.constant 0 : index
    %207 = vector.load %arg14[%c0_71, %c0_72] : memref<32x96xf32, #tpu.memory_space<vmem>>, vector<32x96xf32>
    %c0_73 = arith.constant 0 : index
    %c0_74 = arith.constant 0 : index
    %208 = vector.load %arg15[%c0_73, %c0_74] : memref<1x96xf32, #tpu.memory_space<vmem>>, vector<1x96xf32>
    %c0_75 = arith.constant 0 : index
    %c0_76 = arith.constant 0 : index
    %209 = vector.load %arg16[%c0_75, %c0_76] : memref<1x96xf32, #tpu.memory_space<vmem>>, vector<1x96xf32>
    %c0_77 = arith.constant 0 : index
    %c0_78 = arith.constant 0 : index
    %210 = vector.load %arg17[%c0_77, %c0_78] : memref<32x128xf32, #tpu.memory_space<vmem>>, vector<32x128xf32>
    %c0_79 = arith.constant 0 : index
    %c0_80 = arith.constant 0 : index
    %211 = vector.load %arg18[%c0_79, %c0_80] : memref<32x128xf32, #tpu.memory_space<vmem>>, vector<32x128xf32>
    %c0_81 = arith.constant 0 : index
    %c0_82 = arith.constant 0 : index
    %212 = vector.load %arg19[%c0_81, %c0_82] : memref<32x128xf32, #tpu.memory_space<vmem>>, vector<32x128xf32>
    %c0_83 = arith.constant 0 : index
    %c0_84 = arith.constant 0 : index
    %213 = vector.load %arg20[%c0_83, %c0_84] : memref<1x128xf32, #tpu.memory_space<vmem>>, vector<1x128xf32>
    %c0_85 = arith.constant 0 : index
    %c0_86 = arith.constant 0 : index
    %214 = vector.load %arg21[%c0_85, %c0_86] : memref<128x32xf32, #tpu.memory_space<vmem>>, vector<128x32xf32>
    %215 = tpu.iota {dimensions = array<i32: 1>} : vector<2x128xi32>
    %c16_i32 = arith.constant 16 : i32
    %216 = vector.broadcast %c16_i32 : i32 to vector<2x128xi32>
    %217 = arith.cmpi slt, %215, %216 : vector<2x128xi32>
    %c0_87 = arith.constant 0 : index
    %c0_88 = arith.constant 0 : index
    %c0_89 = arith.constant 0 : index
    %218 = vector.load %arg2[%c0_87, %c0_88, %c0_89] : memref<8x2x32xf32, #tpu.memory_space<vmem>>, vector<1x2x32xf32>
    %219 = vector.shape_cast %218 : vector<1x2x32xf32> to vector<2x32xf32>
    %cst_90 = arith.constant dense<0.000000e+00> : vector<2x256xf32>
    %220 = tpu.matmul %189, %200, %cst_90 {dimension_numbers = #tpu.dot_dimension_numbers<[1], [0], [0], [1], [0, 0, 1, 1], [], []>} : vector<2x32xf32>, vector<32x256xf32>, vector<2x256xf32> -> vector<2x256xf32>
    %221 = vector.broadcast %201 : vector<1x256xf32> to vector<2x256xf32>
    %222 = arith.addf %220, %221 : vector<2x256xf32>
    %223 = arith.addf %199, %222 : vector<2x256xf32>
    %224 = math.tanh %223 : vector<2x256xf32>
    %cst_91 = arith.constant dense<0.000000e+00> : vector<2x8xf32>
    %225 = tpu.matmul %224, %202, %cst_91 {dimension_numbers = #tpu.dot_dimension_numbers<[1], [0], [0], [1], [0, 0, 1, 1], [], []>} : vector<2x256xf32>, vector<256x8xf32>, vector<2x8xf32> -> vector<2x8xf32>
    %cst_92 = arith.constant dense<0xFF800000> : vector<2xf32>
    %226 = vector.multi_reduction <maximumf>, %225, %cst_92 [1] : vector<2x8xf32> to vector<2xf32>
    %227 = vector.shape_cast %226 : vector<2xf32> to vector<2x1xf32>
    %228 = vector.broadcast %227 : vector<2x1xf32> to vector<2x8xf32>
    %229 = arith.subf %225, %228 : vector<2x8xf32>
    %230 = math.exp %229 : vector<2x8xf32>
    %cst_93 = arith.constant dense<0.000000e+00> : vector<2xf32>
    %231 = vector.multi_reduction <add>, %230, %cst_93 [1] : vector<2x8xf32> to vector<2xf32>
    %232 = vector.shape_cast %231 : vector<2xf32> to vector<2x1xf32>
    %cst_94 = arith.constant 1.000000e+00 : f32
    %233 = vector.broadcast %cst_94 : f32 to vector<2x1xf32>
    %234 = arith.divf %233, %232 : vector<2x1xf32>
    %235 = vector.broadcast %234 : vector<2x1xf32> to vector<2x8xf32>
    %236 = arith.mulf %230, %235 : vector<2x8xf32>
    %cst_95 = arith.constant dense<0.000000e+00> : vector<2x256xf32>
    %237 = tpu.matmul %236, %203, %cst_95 {dimension_numbers = #tpu.dot_dimension_numbers<[1], [0], [0], [1], [0, 0, 1, 1], [], []>} : vector<2x8xf32>, vector<8x256xf32>, vector<2x256xf32> -> vector<2x256xf32>
    %238 = arith.mulf %237, %190 : vector<2x256xf32>
    %cst_96 = arith.constant dense<0.000000e+00> : vector<2x32xf32>
    %239 = tpu.matmul %238, %204, %cst_96 {dimension_numbers = #tpu.dot_dimension_numbers<[1], [0], [0], [1], [0, 0, 1, 1], [], []>} : vector<2x256xf32>, vector<256x32xf32>, vector<2x32xf32> -> vector<2x32xf32>
    %cst_97 = arith.constant dense<0.000000e+00> : vector<2x96xf32>
    %240 = tpu.matmul %219, %205, %cst_97 {dimension_numbers = #tpu.dot_dimension_numbers<[1], [0], [0], [1], [0, 0, 1, 1], [], []>} : vector<2x32xf32>, vector<32x96xf32>, vector<2x96xf32> -> vector<2x96xf32>
    %cst_98 = arith.constant dense<0.000000e+00> : vector<2x96xf32>
    %241 = tpu.matmul %239, %206, %cst_98 {dimension_numbers = #tpu.dot_dimension_numbers<[1], [0], [0], [1], [0, 0, 1, 1], [], []>} : vector<2x32xf32>, vector<32x96xf32>, vector<2x96xf32> -> vector<2x96xf32>
    %242 = arith.addf %240, %241 : vector<2x96xf32>
    %243 = vector.broadcast %208 : vector<1x96xf32> to vector<2x96xf32>
    %244 = arith.addf %242, %243 : vector<2x96xf32>
    %cst_99 = arith.constant dense<0.000000e+00> : vector<2x96xf32>
    %245 = tpu.matmul %189, %207, %cst_99 {dimension_numbers = #tpu.dot_dimension_numbers<[1], [0], [0], [1], [0, 0, 1, 1], [], []>} : vector<2x32xf32>, vector<32x96xf32>, vector<2x96xf32> -> vector<2x96xf32>
    %246 = vector.broadcast %209 : vector<1x96xf32> to vector<2x96xf32>
    %247 = arith.addf %245, %246 : vector<2x96xf32>
    %248 = vector.extract_strided_slice %244 {offsets = [0, 0], sizes = [2, 64], strides = [1, 1]} : vector<2x96xf32> to vector<2x64xf32>
    %249 = vector.extract_strided_slice %247 {offsets = [0, 0], sizes = [2, 64], strides = [1, 1]} : vector<2x96xf32> to vector<2x64xf32>
    %250 = arith.addf %248, %249 : vector<2x64xf32>
    %251 = arith.negf %250 : vector<2x64xf32>
    %252 = math.exp %251 : vector<2x64xf32>
    %cst_100 = arith.constant 1.000000e+00 : f32
    %253 = vector.broadcast %cst_100 : f32 to vector<2x64xf32>
    %254 = arith.addf %253, %252 : vector<2x64xf32>
    %255 = arith.divf %253, %254 : vector<2x64xf32>
    %256 = vector.extract_strided_slice %255 {offsets = [0, 0], sizes = [2, 32], strides = [1, 1]} : vector<2x64xf32> to vector<2x32xf32>
    %257 = vector.extract_strided_slice %255 {offsets = [0, 32], sizes = [2, 32], strides = [1, 1]} : vector<2x64xf32> to vector<2x32xf32>
    %258 = vector.extract_strided_slice %244 {offsets = [0, 64], sizes = [2, 32], strides = [1, 1]} : vector<2x96xf32> to vector<2x32xf32>
    %259 = vector.extract_strided_slice %247 {offsets = [0, 64], sizes = [2, 32], strides = [1, 1]} : vector<2x96xf32> to vector<2x32xf32>
    %260 = arith.mulf %256, %259 : vector<2x32xf32>
    %261 = arith.addf %258, %260 : vector<2x32xf32>
    %262 = math.tanh %261 : vector<2x32xf32>
    %cst_101 = arith.constant 1.000000e+00 : f32
    %263 = vector.broadcast %cst_101 : f32 to vector<2x32xf32>
    %264 = arith.subf %263, %257 : vector<2x32xf32>
    %265 = arith.mulf %264, %262 : vector<2x32xf32>
    %266 = arith.mulf %257, %189 : vector<2x32xf32>
    %267 = arith.addf %265, %266 : vector<2x32xf32>
    %cst_102 = arith.constant dense<0.000000e+00> : vector<2x128xf32>
    %268 = tpu.matmul %267, %210, %cst_102 {dimension_numbers = #tpu.dot_dimension_numbers<[1], [0], [0], [1], [0, 0, 1, 1], [], []>} : vector<2x32xf32>, vector<32x128xf32>, vector<2x128xf32> -> vector<2x128xf32>
    %cst_103 = arith.constant dense<0.000000e+00> : vector<2x128xf32>
    %269 = tpu.matmul %239, %211, %cst_103 {dimension_numbers = #tpu.dot_dimension_numbers<[1], [0], [0], [1], [0, 0, 1, 1], [], []>} : vector<2x32xf32>, vector<32x128xf32>, vector<2x128xf32> -> vector<2x128xf32>
    %270 = arith.addf %268, %269 : vector<2x128xf32>
    %cst_104 = arith.constant dense<0.000000e+00> : vector<2x128xf32>
    %271 = tpu.matmul %219, %212, %cst_104 {dimension_numbers = #tpu.dot_dimension_numbers<[1], [0], [0], [1], [0, 0, 1, 1], [], []>} : vector<2x32xf32>, vector<32x128xf32>, vector<2x128xf32> -> vector<2x128xf32>
    %272 = arith.addf %270, %271 : vector<2x128xf32>
    %273 = vector.broadcast %213 : vector<1x128xf32> to vector<2x128xf32>
    %274 = arith.addf %272, %273 : vector<2x128xf32>
    %c0_105 = arith.constant 0 : index
    %c0_106 = arith.constant 0 : index
    %c0_107 = arith.constant 0 : index
    %275 = vector.load %arg22[%c0_105, %c0_106, %c0_107] : memref<7x2x128xf32, #tpu.memory_space<vmem>>, vector<1x2x128xf32>
    %276 = vector.shape_cast %275 : vector<1x2x128xf32> to vector<2x128xf32>
    %277 = vector.shape_cast %274 : vector<2x128xf32> to vector<1x2x128xf32>
    tpu.vector_store %arg22[%c0_105, %c0_106, %c0_107], %277 {strides = array<i32>} : memref<7x2x128xf32, #tpu.memory_space<vmem>>, vector<1x2x128xf32>,
    %cst_108 = arith.constant -1.000000e+30 : f32
    %278 = vector.broadcast %cst_108 : f32 to vector<2x128xf32>
    %279 = arith.select %217, %274, %278 : vector<2x128xi1>, vector<2x128xf32>
    %cst_109 = arith.constant dense<0xFF800000> : vector<2xf32>
    %280 = vector.multi_reduction <maximumf>, %279, %cst_109 [1] : vector<2x128xf32> to vector<2xf32>
    %281 = vector.shape_cast %280 : vector<2xf32> to vector<2x1xf32>
    %282 = vector.broadcast %281 : vector<2x1xf32> to vector<2x128xf32>
    %283 = arith.cmpf oeq, %279, %282 : vector<2x128xf32>
    %c128_i32 = arith.constant 128 : i32
    %284 = vector.broadcast %c128_i32 : i32 to vector<2x128xi32>
    %285 = arith.select %283, %215, %284 : vector<2x128xi1>, vector<2x128xi32>
    %cst_110 = arith.constant dense<2147483647> : vector<2xi32>
    %286 = vector.multi_reduction <minsi>, %285, %cst_110 [1] : vector<2x128xi32> to vector<2xi32>
    %287 = vector.shape_cast %286 : vector<2xi32> to vector<2x1xi32>
    %288 = vector.broadcast %287 : vector<2x1xi32> to vector<2x128xi32>
    %289 = arith.cmpi eq, %215, %288 : vector<2x128xi32>
    %290 = arith.extui %289 : vector<2x128xi1> to vector<2x128xi32>
    %291 = arith.sitofp %290 : vector<2x128xi32> to vector<2x128xf32>
    %cst_111 = arith.constant dense<0.000000e+00> : vector<2x32xf32>
    %292 = tpu.matmul %291, %214, %cst_111 {dimension_numbers = #tpu.dot_dimension_numbers<[1], [0], [0], [1], [0, 0, 1, 1], [], []>} : vector<2x128xf32>, vector<128x32xf32>, vector<2x32xf32> -> vector<2x32xf32>
    %c1_112 = arith.constant 1 : index
    %c0_113 = arith.constant 0 : index
    %c0_114 = arith.constant 0 : index
    %293 = vector.load %arg2[%c1_112, %c0_113, %c0_114] : memref<8x2x32xf32, #tpu.memory_space<vmem>>, vector<1x2x32xf32>
    %294 = vector.shape_cast %293 : vector<1x2x32xf32> to vector<2x32xf32>
    %c1_115 = arith.constant 1 : index
    %295 = memref.load %arg0[%c1_115] : memref<8xi32, #tpu.memory_space<smem>>
    %c0_i32 = arith.constant 0 : i32
    %296 = arith.cmpi sgt, %295, %c0_i32 : i32
    %297 = arith.extui %296 : i1 to i32
    %298 = arith.sitofp %297 : i32 to f32
    %299 = vector.broadcast %298 : f32 to vector<2x32xf32>
    %300 = arith.mulf %299, %294 : vector<2x32xf32>
    %cst_116 = arith.constant 1.000000e+00 : f32
    %301 = arith.subf %cst_116, %298 : f32
    %302 = vector.broadcast %301 : f32 to vector<2x32xf32>
    %303 = arith.mulf %302, %292 : vector<2x32xf32>
    %304 = arith.addf %300, %303 : vector<2x32xf32>
    %cst_117 = arith.constant dense<0.000000e+00> : vector<2x256xf32>
    %305 = tpu.matmul %267, %200, %cst_117 {dimension_numbers = #tpu.dot_dimension_numbers<[1], [0], [0], [1], [0, 0, 1, 1], [], []>} : vector<2x32xf32>, vector<32x256xf32>, vector<2x256xf32> -> vector<2x256xf32>
    %306 = vector.broadcast %201 : vector<1x256xf32> to vector<2x256xf32>
    %307 = arith.addf %305, %306 : vector<2x256xf32>
    %308 = arith.addf %199, %307 : vector<2x256xf32>
    %309 = math.tanh %308 : vector<2x256xf32>
    %cst_118 = arith.constant dense<0.000000e+00> : vector<2x8xf32>
    %310 = tpu.matmul %309, %202, %cst_118 {dimension_numbers = #tpu.dot_dimension_numbers<[1], [0], [0], [1], [0, 0, 1, 1], [], []>} : vector<2x256xf32>, vector<256x8xf32>, vector<2x8xf32> -> vector<2x8xf32>
    %cst_119 = arith.constant dense<0xFF800000> : vector<2xf32>
    %311 = vector.multi_reduction <maximumf>, %310, %cst_119 [1] : vector<2x8xf32> to vector<2xf32>
    %312 = vector.shape_cast %311 : vector<2xf32> to vector<2x1xf32>
    %313 = vector.broadcast %312 : vector<2x1xf32> to vector<2x8xf32>
    %314 = arith.subf %310, %313 : vector<2x8xf32>
    %315 = math.exp %314 : vector<2x8xf32>
    %cst_120 = arith.constant dense<0.000000e+00> : vector<2xf32>
    %316 = vector.multi_reduction <add>, %315, %cst_120 [1] : vector<2x8xf32> to vector<2xf32>
    %317 = vector.shape_cast %316 : vector<2xf32> to vector<2x1xf32>
    %cst_121 = arith.constant 1.000000e+00 : f32
    %318 = vector.broadcast %cst_121 : f32 to vector<2x1xf32>
    %319 = arith.divf %318, %317 : vector<2x1xf32>
    %320 = vector.broadcast %319 : vector<2x1xf32> to vector<2x8xf32>
    %321 = arith.mulf %315, %320 : vector<2x8xf32>
    %cst_122 = arith.constant dense<0.000000e+00> : vector<2x256xf32>
    %322 = tpu.matmul %321, %203, %cst_122 {dimension_numbers = #tpu.dot_dimension_numbers<[1], [0], [0], [1], [0, 0, 1, 1], [], []>} : vector<2x8xf32>, vector<8x256xf32>, vector<2x256xf32> -> vector<2x256xf32>
    %323 = arith.mulf %322, %190 : vector<2x256xf32>
    %cst_123 = arith.constant dense<0.000000e+00> : vector<2x32xf32>
    %324 = tpu.matmul %323, %204, %cst_123 {dimension_numbers = #tpu.dot_dimension_numbers<[1], [0], [0], [1], [0, 0, 1, 1], [], []>} : vector<2x256xf32>, vector<256x32xf32>, vector<2x32xf32> -> vector<2x32xf32>
    %cst_124 = arith.constant dense<0.000000e+00> : vector<2x96xf32>
    %325 = tpu.matmul %304, %205, %cst_124 {dimension_numbers = #tpu.dot_dimension_numbers<[1], [0], [0], [1], [0, 0, 1, 1], [], []>} : vector<2x32xf32>, vector<32x96xf32>, vector<2x96xf32> -> vector<2x96xf32>
    %cst_125 = arith.constant dense<0.000000e+00> : vector<2x96xf32>
    %326 = tpu.matmul %324, %206, %cst_125 {dimension_numbers = #tpu.dot_dimension_numbers<[1], [0], [0], [1], [0, 0, 1, 1], [], []>} : vector<2x32xf32>, vector<32x96xf32>, vector<2x96xf32> -> vector<2x96xf32>
    %327 = arith.addf %325, %326 : vector<2x96xf32>
    %328 = vector.broadcast %208 : vector<1x96xf32> to vector<2x96xf32>
    %329 = arith.addf %327, %328 : vector<2x96xf32>
    %cst_126 = arith.constant dense<0.000000e+00> : vector<2x96xf32>
    %330 = tpu.matmul %267, %207, %cst_126 {dimension_numbers = #tpu.dot_dimension_numbers<[1], [0], [0], [1], [0, 0, 1, 1], [], []>} : vector<2x32xf32>, vector<32x96xf32>, vector<2x96xf32> -> vector<2x96xf32>
    %331 = vector.broadcast %209 : vector<1x96xf32> to vector<2x96xf32>
    %332 = arith.addf %330, %331 : vector<2x96xf32>
    %333 = vector.extract_strided_slice %329 {offsets = [0, 0], sizes = [2, 64], strides = [1, 1]} : vector<2x96xf32> to vector<2x64xf32>
    %334 = vector.extract_strided_slice %332 {offsets = [0, 0], sizes = [2, 64], strides = [1, 1]} : vector<2x96xf32> to vector<2x64xf32>
    %335 = arith.addf %333, %334 : vector<2x64xf32>
    %336 = arith.negf %335 : vector<2x64xf32>
    %337 = math.exp %336 : vector<2x64xf32>
    %cst_127 = arith.constant 1.000000e+00 : f32
    %338 = vector.broadcast %cst_127 : f32 to vector<2x64xf32>
    %339 = arith.addf %338, %337 : vector<2x64xf32>
    %340 = arith.divf %338, %339 : vector<2x64xf32>
    %341 = vector.extract_strided_slice %340 {offsets = [0, 0], sizes = [2, 32], strides = [1, 1]} : vector<2x64xf32> to vector<2x32xf32>
    %342 = vector.extract_strided_slice %340 {offsets = [0, 32], sizes = [2, 32], strides = [1, 1]} : vector<2x64xf32> to vector<2x32xf32>
    %343 = vector.extract_strided_slice %329 {offsets = [0, 64], sizes = [2, 32], strides = [1, 1]} : vector<2x96xf32> to vector<2x32xf32>
    %344 = vector.extract_strided_slice %332 {offsets = [0, 64], sizes = [2, 32], strides = [1, 1]} : vector<2x96xf32> to vector<2x32xf32>
    %345 = arith.mulf %341, %344 : vector<2x32xf32>
    %346 = arith.addf %343, %345 : vector<2x32xf32>
    %347 = math.tanh %346 : vector<2x32xf32>
    %cst_128 = arith.constant 1.000000e+00 : f32
    %348 = vector.broadcast %cst_128 : f32 to vector<2x32xf32>
    %349 = arith.subf %348, %342 : vector<2x32xf32>
    %350 = arith.mulf %349, %347 : vector<2x32xf32>
    %351 = arith.mulf %342, %267 : vector<2x32xf32>
    %352 = arith.addf %350, %351 : vector<2x32xf32>
    %cst_129 = arith.constant dense<0.000000e+00> : vector<2x128xf32>
    %353 = tpu.matmul %352, %210, %cst_129 {dimension_numbers = #tpu.dot_dimension_numbers<[1], [0], [0], [1], [0, 0, 1, 1], [], []>} : vector<2x32xf32>, vector<32x128xf32>, vector<2x128xf32> -> vector<2x128xf32>
    %cst_130 = arith.constant dense<0.000000e+00> : vector<2x128xf32>
    %354 = tpu.matmul %324, %211, %cst_130 {dimension_numbers = #tpu.dot_dimension_numbers<[1], [0], [0], [1], [0, 0, 1, 1], [], []>} : vector<2x32xf32>, vector<32x128xf32>, vector<2x128xf32> -> vector<2x128xf32>
    %355 = arith.addf %353, %354 : vector<2x128xf32>
    %cst_131 = arith.constant dense<0.000000e+00> : vector<2x128xf32>
    %356 = tpu.matmul %304, %212, %cst_131 {dimension_numbers = #tpu.dot_dimension_numbers<[1], [0], [0], [1], [0, 0, 1, 1], [], []>} : vector<2x32xf32>, vector<32x128xf32>, vector<2x128xf32> -> vector<2x128xf32>
    %357 = arith.addf %355, %356 : vector<2x128xf32>
    %358 = vector.broadcast %213 : vector<1x128xf32> to vector<2x128xf32>
    %359 = arith.addf %357, %358 : vector<2x128xf32>
    %c1_132 = arith.constant 1 : index
    %c0_133 = arith.constant 0 : index
    %c0_134 = arith.constant 0 : index
    %360 = vector.load %arg22[%c1_132, %c0_133, %c0_134] : memref<7x2x128xf32, #tpu.memory_space<vmem>>, vector<1x2x128xf32>
    %361 = vector.shape_cast %360 : vector<1x2x128xf32> to vector<2x128xf32>
    %362 = vector.shape_cast %359 : vector<2x128xf32> to vector<1x2x128xf32>
    tpu.vector_store %arg22[%c1_132, %c0_133, %c0_134], %362 {strides = array<i32>} : memref<7x2x128xf32, #tpu.memory_space<vmem>>, vector<1x2x128xf32>,
    %cst_135 = arith.constant -1.000000e+30 : f32
    %363 = vector.broadcast %cst_135 : f32 to vector<2x128xf32>
    %364 = arith.select %217, %359, %363 : vector<2x128xi1>, vector<2x128xf32>
    %cst_136 = arith.constant dense<0xFF800000> : vector<2xf32>
    %365 = vector.multi_reduction <maximumf>, %364, %cst_136 [1] : vector<2x128xf32> to vector<2xf32>
    %366 = vector.shape_cast %365 : vector<2xf32> to vector<2x1xf32>
    %367 = vector.broadcast %366 : vector<2x1xf32> to vector<2x128xf32>
    %368 = arith.cmpf oeq, %364, %367 : vector<2x128xf32>
    %c128_i32_137 = arith.constant 128 : i32
    %369 = vector.broadcast %c128_i32_137 : i32 to vector<2x128xi32>
    %370 = arith.select %368, %215, %369 : vector<2x128xi1>, vector<2x128xi32>
    %cst_138 = arith.constant dense<2147483647> : vector<2xi32>
    %371 = vector.multi_reduction <minsi>, %370, %cst_138 [1] : vector<2x128xi32> to vector<2xi32>
    %372 = vector.shape_cast %371 : vector<2xi32> to vector<2x1xi32>
    %373 = vector.broadcast %372 : vector<2x1xi32> to vector<2x128xi32>
    %374 = arith.cmpi eq, %215, %373 : vector<2x128xi32>
    %375 = arith.extui %374 : vector<2x128xi1> to vector<2x128xi32>
    %376 = arith.sitofp %375 : vector<2x128xi32> to vector<2x128xf32>
    %cst_139 = arith.constant dense<0.000000e+00> : vector<2x32xf32>
    %377 = tpu.matmul %376, %214, %cst_139 {dimension_numbers = #tpu.dot_dimension_numbers<[1], [0], [0], [1], [0, 0, 1, 1], [], []>} : vector<2x128xf32>, vector<128x32xf32>, vector<2x32xf32> -> vector<2x32xf32>
    %c2_140 = arith.constant 2 : index
    %c0_141 = arith.constant 0 : index
    %c0_142 = arith.constant 0 : index
    %378 = vector.load %arg2[%c2_140, %c0_141, %c0_142] : memref<8x2x32xf32, #tpu.memory_space<vmem>>, vector<1x2x32xf32>
    %379 = vector.shape_cast %378 : vector<1x2x32xf32> to vector<2x32xf32>
    %c2_143 = arith.constant 2 : index
    %380 = memref.load %arg0[%c2_143] : memref<8xi32, #tpu.memory_space<smem>>
    %c0_i32_144 = arith.constant 0 : i32
    %381 = arith.cmpi sgt, %380, %c0_i32_144 : i32
    %382 = arith.extui %381 : i1 to i32
    %383 = arith.sitofp %382 : i32 to f32
    %384 = vector.broadcast %383 : f32 to vector<2x32xf32>
    %385 = arith.mulf %384, %379 : vector<2x32xf32>
    %cst_145 = arith.constant 1.000000e+00 : f32
    %386 = arith.subf %cst_145, %383 : f32
    %387 = vector.broadcast %386 : f32 to vector<2x32xf32>
    %388 = arith.mulf %387, %377 : vector<2x32xf32>
    %389 = arith.addf %385, %388 : vector<2x32xf32>
    %cst_146 = arith.constant dense<0.000000e+00> : vector<2x256xf32>
    %390 = tpu.matmul %352, %200, %cst_146 {dimension_numbers = #tpu.dot_dimension_numbers<[1], [0], [0], [1], [0, 0, 1, 1], [], []>} : vector<2x32xf32>, vector<32x256xf32>, vector<2x256xf32> -> vector<2x256xf32>
    %391 = vector.broadcast %201 : vector<1x256xf32> to vector<2x256xf32>
    %392 = arith.addf %390, %391 : vector<2x256xf32>
    %393 = arith.addf %199, %392 : vector<2x256xf32>
    %394 = math.tanh %393 : vector<2x256xf32>
    %cst_147 = arith.constant dense<0.000000e+00> : vector<2x8xf32>
    %395 = tpu.matmul %394, %202, %cst_147 {dimension_numbers = #tpu.dot_dimension_numbers<[1], [0], [0], [1], [0, 0, 1, 1], [], []>} : vector<2x256xf32>, vector<256x8xf32>, vector<2x8xf32> -> vector<2x8xf32>
    %cst_148 = arith.constant dense<0xFF800000> : vector<2xf32>
    %396 = vector.multi_reduction <maximumf>, %395, %cst_148 [1] : vector<2x8xf32> to vector<2xf32>
    %397 = vector.shape_cast %396 : vector<2xf32> to vector<2x1xf32>
    %398 = vector.broadcast %397 : vector<2x1xf32> to vector<2x8xf32>
    %399 = arith.subf %395, %398 : vector<2x8xf32>
    %400 = math.exp %399 : vector<2x8xf32>
    %cst_149 = arith.constant dense<0.000000e+00> : vector<2xf32>
    %401 = vector.multi_reduction <add>, %400, %cst_149 [1] : vector<2x8xf32> to vector<2xf32>
    %402 = vector.shape_cast %401 : vector<2xf32> to vector<2x1xf32>
    %cst_150 = arith.constant 1.000000e+00 : f32
    %403 = vector.broadcast %cst_150 : f32 to vector<2x1xf32>
    %404 = arith.divf %403, %402 : vector<2x1xf32>
    %405 = vector.broadcast %404 : vector<2x1xf32> to vector<2x8xf32>
    %406 = arith.mulf %400, %405 : vector<2x8xf32>
    %cst_151 = arith.constant dense<0.000000e+00> : vector<2x256xf32>
    %407 = tpu.matmul %406, %203, %cst_151 {dimension_numbers = #tpu.dot_dimension_numbers<[1], [0], [0], [1], [0, 0, 1, 1], [], []>} : vector<2x8xf32>, vector<8x256xf32>, vector<2x256xf32> -> vector<2x256xf32>
    %408 = arith.mulf %407, %190 : vector<2x256xf32>
    %cst_152 = arith.constant dense<0.000000e+00> : vector<2x32xf32>
    %409 = tpu.matmul %408, %204, %cst_152 {dimension_numbers = #tpu.dot_dimension_numbers<[1], [0], [0], [1], [0, 0, 1, 1], [], []>} : vector<2x256xf32>, vector<256x32xf32>, vector<2x32xf32> -> vector<2x32xf32>
    %cst_153 = arith.constant dense<0.000000e+00> : vector<2x96xf32>
    %410 = tpu.matmul %389, %205, %cst_153 {dimension_numbers = #tpu.dot_dimension_numbers<[1], [0], [0], [1], [0, 0, 1, 1], [], []>} : vector<2x32xf32>, vector<32x96xf32>, vector<2x96xf32> -> vector<2x96xf32>
    %cst_154 = arith.constant dense<0.000000e+00> : vector<2x96xf32>
    %411 = tpu.matmul %409, %206, %cst_154 {dimension_numbers = #tpu.dot_dimension_numbers<[1], [0], [0], [1], [0, 0, 1, 1], [], []>} : vector<2x32xf32>, vector<32x96xf32>, vector<2x96xf32> -> vector<2x96xf32>
    %412 = arith.addf %410, %411 : vector<2x96xf32>
    %413 = vector.broadcast %208 : vector<1x96xf32> to vector<2x96xf32>
    %414 = arith.addf %412, %413 : vector<2x96xf32>
    %cst_155 = arith.constant dense<0.000000e+00> : vector<2x96xf32>
    %415 = tpu.matmul %352, %207, %cst_155 {dimension_numbers = #tpu.dot_dimension_numbers<[1], [0], [0], [1], [0, 0, 1, 1], [], []>} : vector<2x32xf32>, vector<32x96xf32>, vector<2x96xf32> -> vector<2x96xf32>
    %416 = vector.broadcast %209 : vector<1x96xf32> to vector<2x96xf32>
    %417 = arith.addf %415, %416 : vector<2x96xf32>
    %418 = vector.extract_strided_slice %414 {offsets = [0, 0], sizes = [2, 64], strides = [1, 1]} : vector<2x96xf32> to vector<2x64xf32>
    %419 = vector.extract_strided_slice %417 {offsets = [0, 0], sizes = [2, 64], strides = [1, 1]} : vector<2x96xf32> to vector<2x64xf32>
    %420 = arith.addf %418, %419 : vector<2x64xf32>
    %421 = arith.negf %420 : vector<2x64xf32>
    %422 = math.exp %421 : vector<2x64xf32>
    %cst_156 = arith.constant 1.000000e+00 : f32
    %423 = vector.broadcast %cst_156 : f32 to vector<2x64xf32>
    %424 = arith.addf %423, %422 : vector<2x64xf32>
    %425 = arith.divf %423, %424 : vector<2x64xf32>
    %426 = vector.extract_strided_slice %425 {offsets = [0, 0], sizes = [2, 32], strides = [1, 1]} : vector<2x64xf32> to vector<2x32xf32>
    %427 = vector.extract_strided_slice %425 {offsets = [0, 32], sizes = [2, 32], strides = [1, 1]} : vector<2x64xf32> to vector<2x32xf32>
    %428 = vector.extract_strided_slice %414 {offsets = [0, 64], sizes = [2, 32], strides = [1, 1]} : vector<2x96xf32> to vector<2x32xf32>
    %429 = vector.extract_strided_slice %417 {offsets = [0, 64], sizes = [2, 32], strides = [1, 1]} : vector<2x96xf32> to vector<2x32xf32>
    %430 = arith.mulf %426, %429 : vector<2x32xf32>
    %431 = arith.addf %428, %430 : vector<2x32xf32>
    %432 = math.tanh %431 : vector<2x32xf32>
    %cst_157 = arith.constant 1.000000e+00 : f32
    %433 = vector.broadcast %cst_157 : f32 to vector<2x32xf32>
    %434 = arith.subf %433, %427 : vector<2x32xf32>
    %435 = arith.mulf %434, %432 : vector<2x32xf32>
    %436 = arith.mulf %427, %352 : vector<2x32xf32>
    %437 = arith.addf %435, %436 : vector<2x32xf32>
    %cst_158 = arith.constant dense<0.000000e+00> : vector<2x128xf32>
    %438 = tpu.matmul %437, %210, %cst_158 {dimension_numbers = #tpu.dot_dimension_numbers<[1], [0], [0], [1], [0, 0, 1, 1], [], []>} : vector<2x32xf32>, vector<32x128xf32>, vector<2x128xf32> -> vector<2x128xf32>
    %cst_159 = arith.constant dense<0.000000e+00> : vector<2x128xf32>
    %439 = tpu.matmul %409, %211, %cst_159 {dimension_numbers = #tpu.dot_dimension_numbers<[1], [0], [0], [1], [0, 0, 1, 1], [], []>} : vector<2x32xf32>, vector<32x128xf32>, vector<2x128xf32> -> vector<2x128xf32>
    %440 = arith.addf %438, %439 : vector<2x128xf32>
    %cst_160 = arith.constant dense<0.000000e+00> : vector<2x128xf32>
    %441 = tpu.matmul %389, %212, %cst_160 {dimension_numbers = #tpu.dot_dimension_numbers<[1], [0], [0], [1], [0, 0, 1, 1], [], []>} : vector<2x32xf32>, vector<32x128xf32>, vector<2x128xf32> -> vector<2x128xf32>
    %442 = arith.addf %440, %441 : vector<2x128xf32>
    %443 = vector.broadcast %213 : vector<1x128xf32> to vector<2x128xf32>
    %444 = arith.addf %442, %443 : vector<2x128xf32>
    %c2_161 = arith.constant 2 : index
    %c0_162 = arith.constant 0 : index
    %c0_163 = arith.constant 0 : index
    %445 = vector.load %arg22[%c2_161, %c0_162, %c0_163] : memref<7x2x128xf32, #tpu.memory_space<vmem>>, vector<1x2x128xf32>
    %446 = vector.shape_cast %445 : vector<1x2x128xf32> to vector<2x128xf32>
    %447 = vector.shape_cast %444 : vector<2x128xf32> to vector<1x2x128xf32>
    tpu.vector_store %arg22[%c2_161, %c0_162, %c0_163], %447 {strides = array<i32>} : memref<7x2x128xf32, #tpu.memory_space<vmem>>, vector<1x2x128xf32>,
    %cst_164 = arith.constant -1.000000e+30 : f32
    %448 = vector.broadcast %cst_164 : f32 to vector<2x128xf32>
    %449 = arith.select %217, %444, %448 : vector<2x128xi1>, vector<2x128xf32>
    %cst_165 = arith.constant dense<0xFF800000> : vector<2xf32>
    %450 = vector.multi_reduction <maximumf>, %449, %cst_165 [1] : vector<2x128xf32> to vector<2xf32>
    %451 = vector.shape_cast %450 : vector<2xf32> to vector<2x1xf32>
    %452 = vector.broadcast %451 : vector<2x1xf32> to vector<2x128xf32>
    %453 = arith.cmpf oeq, %449, %452 : vector<2x128xf32>
    %c128_i32_166 = arith.constant 128 : i32
    %454 = vector.broadcast %c128_i32_166 : i32 to vector<2x128xi32>
    %455 = arith.select %453, %215, %454 : vector<2x128xi1>, vector<2x128xi32>
    %cst_167 = arith.constant dense<2147483647> : vector<2xi32>
    %456 = vector.multi_reduction <minsi>, %455, %cst_167 [1] : vector<2x128xi32> to vector<2xi32>
    %457 = vector.shape_cast %456 : vector<2xi32> to vector<2x1xi32>
    %458 = vector.broadcast %457 : vector<2x1xi32> to vector<2x128xi32>
    %459 = arith.cmpi eq, %215, %458 : vector<2x128xi32>
    %460 = arith.extui %459 : vector<2x128xi1> to vector<2x128xi32>
    %461 = arith.sitofp %460 : vector<2x128xi32> to vector<2x128xf32>
    %cst_168 = arith.constant dense<0.000000e+00> : vector<2x32xf32>
    %462 = tpu.matmul %461, %214, %cst_168 {dimension_numbers = #tpu.dot_dimension_numbers<[1], [0], [0], [1], [0, 0, 1, 1], [], []>} : vector<2x128xf32>, vector<128x32xf32>, vector<2x32xf32> -> vector<2x32xf32>
    %c3_169 = arith.constant 3 : index
    %c0_170 = arith.constant 0 : index
    %c0_171 = arith.constant 0 : index
    %463 = vector.load %arg2[%c3_169, %c0_170, %c0_171] : memref<8x2x32xf32, #tpu.memory_space<vmem>>, vector<1x2x32xf32>
    %464 = vector.shape_cast %463 : vector<1x2x32xf32> to vector<2x32xf32>
    %c3_172 = arith.constant 3 : index
    %465 = memref.load %arg0[%c3_172] : memref<8xi32, #tpu.memory_space<smem>>
    %c0_i32_173 = arith.constant 0 : i32
    %466 = arith.cmpi sgt, %465, %c0_i32_173 : i32
    %467 = arith.extui %466 : i1 to i32
    %468 = arith.sitofp %467 : i32 to f32
    %469 = vector.broadcast %468 : f32 to vector<2x32xf32>
    %470 = arith.mulf %469, %464 : vector<2x32xf32>
    %cst_174 = arith.constant 1.000000e+00 : f32
    %471 = arith.subf %cst_174, %468 : f32
    %472 = vector.broadcast %471 : f32 to vector<2x32xf32>
    %473 = arith.mulf %472, %462 : vector<2x32xf32>
    %474 = arith.addf %470, %473 : vector<2x32xf32>
    %cst_175 = arith.constant dense<0.000000e+00> : vector<2x256xf32>
    %475 = tpu.matmul %437, %200, %cst_175 {dimension_numbers = #tpu.dot_dimension_numbers<[1], [0], [0], [1], [0, 0, 1, 1], [], []>} : vector<2x32xf32>, vector<32x256xf32>, vector<2x256xf32> -> vector<2x256xf32>
    %476 = vector.broadcast %201 : vector<1x256xf32> to vector<2x256xf32>
    %477 = arith.addf %475, %476 : vector<2x256xf32>
    %478 = arith.addf %199, %477 : vector<2x256xf32>
    %479 = math.tanh %478 : vector<2x256xf32>
    %cst_176 = arith.constant dense<0.000000e+00> : vector<2x8xf32>
    %480 = tpu.matmul %479, %202, %cst_176 {dimension_numbers = #tpu.dot_dimension_numbers<[1], [0], [0], [1], [0, 0, 1, 1], [], []>} : vector<2x256xf32>, vector<256x8xf32>, vector<2x8xf32> -> vector<2x8xf32>
    %cst_177 = arith.constant dense<0xFF800000> : vector<2xf32>
    %481 = vector.multi_reduction <maximumf>, %480, %cst_177 [1] : vector<2x8xf32> to vector<2xf32>
    %482 = vector.shape_cast %481 : vector<2xf32> to vector<2x1xf32>
    %483 = vector.broadcast %482 : vector<2x1xf32> to vector<2x8xf32>
    %484 = arith.subf %480, %483 : vector<2x8xf32>
    %485 = math.exp %484 : vector<2x8xf32>
    %cst_178 = arith.constant dense<0.000000e+00> : vector<2xf32>
    %486 = vector.multi_reduction <add>, %485, %cst_178 [1] : vector<2x8xf32> to vector<2xf32>
    %487 = vector.shape_cast %486 : vector<2xf32> to vector<2x1xf32>
    %cst_179 = arith.constant 1.000000e+00 : f32
    %488 = vector.broadcast %cst_179 : f32 to vector<2x1xf32>
    %489 = arith.divf %488, %487 : vector<2x1xf32>
    %490 = vector.broadcast %489 : vector<2x1xf32> to vector<2x8xf32>
    %491 = arith.mulf %485, %490 : vector<2x8xf32>
    %cst_180 = arith.constant dense<0.000000e+00> : vector<2x256xf32>
    %492 = tpu.matmul %491, %203, %cst_180 {dimension_numbers = #tpu.dot_dimension_numbers<[1], [0], [0], [1], [0, 0, 1, 1], [], []>} : vector<2x8xf32>, vector<8x256xf32>, vector<2x256xf32> -> vector<2x256xf32>
    %493 = arith.mulf %492, %190 : vector<2x256xf32>
    %cst_181 = arith.constant dense<0.000000e+00> : vector<2x32xf32>
    %494 = tpu.matmul %493, %204, %cst_181 {dimension_numbers = #tpu.dot_dimension_numbers<[1], [0], [0], [1], [0, 0, 1, 1], [], []>} : vector<2x256xf32>, vector<256x32xf32>, vector<2x32xf32> -> vector<2x32xf32>
    %cst_182 = arith.constant dense<0.000000e+00> : vector<2x96xf32>
    %495 = tpu.matmul %474, %205, %cst_182 {dimension_numbers = #tpu.dot_dimension_numbers<[1], [0], [0], [1], [0, 0, 1, 1], [], []>} : vector<2x32xf32>, vector<32x96xf32>, vector<2x96xf32> -> vector<2x96xf32>
    %cst_183 = arith.constant dense<0.000000e+00> : vector<2x96xf32>
    %496 = tpu.matmul %494, %206, %cst_183 {dimension_numbers = #tpu.dot_dimension_numbers<[1], [0], [0], [1], [0, 0, 1, 1], [], []>} : vector<2x32xf32>, vector<32x96xf32>, vector<2x96xf32> -> vector<2x96xf32>
    %497 = arith.addf %495, %496 : vector<2x96xf32>
    %498 = vector.broadcast %208 : vector<1x96xf32> to vector<2x96xf32>
    %499 = arith.addf %497, %498 : vector<2x96xf32>
    %cst_184 = arith.constant dense<0.000000e+00> : vector<2x96xf32>
    %500 = tpu.matmul %437, %207, %cst_184 {dimension_numbers = #tpu.dot_dimension_numbers<[1], [0], [0], [1], [0, 0, 1, 1], [], []>} : vector<2x32xf32>, vector<32x96xf32>, vector<2x96xf32> -> vector<2x96xf32>
    %501 = vector.broadcast %209 : vector<1x96xf32> to vector<2x96xf32>
    %502 = arith.addf %500, %501 : vector<2x96xf32>
    %503 = vector.extract_strided_slice %499 {offsets = [0, 0], sizes = [2, 64], strides = [1, 1]} : vector<2x96xf32> to vector<2x64xf32>
    %504 = vector.extract_strided_slice %502 {offsets = [0, 0], sizes = [2, 64], strides = [1, 1]} : vector<2x96xf32> to vector<2x64xf32>
    %505 = arith.addf %503, %504 : vector<2x64xf32>
    %506 = arith.negf %505 : vector<2x64xf32>
    %507 = math.exp %506 : vector<2x64xf32>
    %cst_185 = arith.constant 1.000000e+00 : f32
    %508 = vector.broadcast %cst_185 : f32 to vector<2x64xf32>
    %509 = arith.addf %508, %507 : vector<2x64xf32>
    %510 = arith.divf %508, %509 : vector<2x64xf32>
    %511 = vector.extract_strided_slice %510 {offsets = [0, 0], sizes = [2, 32], strides = [1, 1]} : vector<2x64xf32> to vector<2x32xf32>
    %512 = vector.extract_strided_slice %510 {offsets = [0, 32], sizes = [2, 32], strides = [1, 1]} : vector<2x64xf32> to vector<2x32xf32>
    %513 = vector.extract_strided_slice %499 {offsets = [0, 64], sizes = [2, 32], strides = [1, 1]} : vector<2x96xf32> to vector<2x32xf32>
    %514 = vector.extract_strided_slice %502 {offsets = [0, 64], sizes = [2, 32], strides = [1, 1]} : vector<2x96xf32> to vector<2x32xf32>
    %515 = arith.mulf %511, %514 : vector<2x32xf32>
    %516 = arith.addf %513, %515 : vector<2x32xf32>
    %517 = math.tanh %516 : vector<2x32xf32>
    %cst_186 = arith.constant 1.000000e+00 : f32
    %518 = vector.broadcast %cst_186 : f32 to vector<2x32xf32>
    %519 = arith.subf %518, %512 : vector<2x32xf32>
    %520 = arith.mulf %519, %517 : vector<2x32xf32>
    %521 = arith.mulf %512, %437 : vector<2x32xf32>
    %522 = arith.addf %520, %521 : vector<2x32xf32>
    %cst_187 = arith.constant dense<0.000000e+00> : vector<2x128xf32>
    %523 = tpu.matmul %522, %210, %cst_187 {dimension_numbers = #tpu.dot_dimension_numbers<[1], [0], [0], [1], [0, 0, 1, 1], [], []>} : vector<2x32xf32>, vector<32x128xf32>, vector<2x128xf32> -> vector<2x128xf32>
    %cst_188 = arith.constant dense<0.000000e+00> : vector<2x128xf32>
    %524 = tpu.matmul %494, %211, %cst_188 {dimension_numbers = #tpu.dot_dimension_numbers<[1], [0], [0], [1], [0, 0, 1, 1], [], []>} : vector<2x32xf32>, vector<32x128xf32>, vector<2x128xf32> -> vector<2x128xf32>
    %525 = arith.addf %523, %524 : vector<2x128xf32>
    %cst_189 = arith.constant dense<0.000000e+00> : vector<2x128xf32>
    %526 = tpu.matmul %474, %212, %cst_189 {dimension_numbers = #tpu.dot_dimension_numbers<[1], [0], [0], [1], [0, 0, 1, 1], [], []>} : vector<2x32xf32>, vector<32x128xf32>, vector<2x128xf32> -> vector<2x128xf32>
    %527 = arith.addf %525, %526 : vector<2x128xf32>
    %528 = vector.broadcast %213 : vector<1x128xf32> to vector<2x128xf32>
    %529 = arith.addf %527, %528 : vector<2x128xf32>
    %c3_190 = arith.constant 3 : index
    %c0_191 = arith.constant 0 : index
    %c0_192 = arith.constant 0 : index
    %530 = vector.load %arg22[%c3_190, %c0_191, %c0_192] : memref<7x2x128xf32, #tpu.memory_space<vmem>>, vector<1x2x128xf32>
    %531 = vector.shape_cast %530 : vector<1x2x128xf32> to vector<2x128xf32>
    %532 = vector.shape_cast %529 : vector<2x128xf32> to vector<1x2x128xf32>
    tpu.vector_store %arg22[%c3_190, %c0_191, %c0_192], %532 {strides = array<i32>} : memref<7x2x128xf32, #tpu.memory_space<vmem>>, vector<1x2x128xf32>,
    %cst_193 = arith.constant -1.000000e+30 : f32
    %533 = vector.broadcast %cst_193 : f32 to vector<2x128xf32>
    %534 = arith.select %217, %529, %533 : vector<2x128xi1>, vector<2x128xf32>
    %cst_194 = arith.constant dense<0xFF800000> : vector<2xf32>
    %535 = vector.multi_reduction <maximumf>, %534, %cst_194 [1] : vector<2x128xf32> to vector<2xf32>
    %536 = vector.shape_cast %535 : vector<2xf32> to vector<2x1xf32>
    %537 = vector.broadcast %536 : vector<2x1xf32> to vector<2x128xf32>
    %538 = arith.cmpf oeq, %534, %537 : vector<2x128xf32>
    %c128_i32_195 = arith.constant 128 : i32
    %539 = vector.broadcast %c128_i32_195 : i32 to vector<2x128xi32>
    %540 = arith.select %538, %215, %539 : vector<2x128xi1>, vector<2x128xi32>
    %cst_196 = arith.constant dense<2147483647> : vector<2xi32>
    %541 = vector.multi_reduction <minsi>, %540, %cst_196 [1] : vector<2x128xi32> to vector<2xi32>
    %542 = vector.shape_cast %541 : vector<2xi32> to vector<2x1xi32>
    %543 = vector.broadcast %542 : vector<2x1xi32> to vector<2x128xi32>
    %544 = arith.cmpi eq, %215, %543 : vector<2x128xi32>
    %545 = arith.extui %544 : vector<2x128xi1> to vector<2x128xi32>
    %546 = arith.sitofp %545 : vector<2x128xi32> to vector<2x128xf32>
    %cst_197 = arith.constant dense<0.000000e+00> : vector<2x32xf32>
    %547 = tpu.matmul %546, %214, %cst_197 {dimension_numbers = #tpu.dot_dimension_numbers<[1], [0], [0], [1], [0, 0, 1, 1], [], []>} : vector<2x128xf32>, vector<128x32xf32>, vector<2x32xf32> -> vector<2x32xf32>
    %c4_198 = arith.constant 4 : index
    %c0_199 = arith.constant 0 : index
    %c0_200 = arith.constant 0 : index
    %548 = vector.load %arg2[%c4_198, %c0_199, %c0_200] : memref<8x2x32xf32, #tpu.memory_space<vmem>>, vector<1x2x32xf32>
    %549 = vector.shape_cast %548 : vector<1x2x32xf32> to vector<2x32xf32>
    %c4_201 = arith.constant 4 : index
    %550 = memref.load %arg0[%c4_201] : memref<8xi32, #tpu.memory_space<smem>>
    %c0_i32_202 = arith.constant 0 : i32
    %551 = arith.cmpi sgt, %550, %c0_i32_202 : i32
    %552 = arith.extui %551 : i1 to i32
    %553 = arith.sitofp %552 : i32 to f32
    %554 = vector.broadcast %553 : f32 to vector<2x32xf32>
    %555 = arith.mulf %554, %549 : vector<2x32xf32>
    %cst_203 = arith.constant 1.000000e+00 : f32
    %556 = arith.subf %cst_203, %553 : f32
    %557 = vector.broadcast %556 : f32 to vector<2x32xf32>
    %558 = arith.mulf %557, %547 : vector<2x32xf32>
    %559 = arith.addf %555, %558 : vector<2x32xf32>
    %cst_204 = arith.constant dense<0.000000e+00> : vector<2x256xf32>
    %560 = tpu.matmul %522, %200, %cst_204 {dimension_numbers = #tpu.dot_dimension_numbers<[1], [0], [0], [1], [0, 0, 1, 1], [], []>} : vector<2x32xf32>, vector<32x256xf32>, vector<2x256xf32> -> vector<2x256xf32>
    %561 = vector.broadcast %201 : vector<1x256xf32> to vector<2x256xf32>
    %562 = arith.addf %560, %561 : vector<2x256xf32>
    %563 = arith.addf %199, %562 : vector<2x256xf32>
    %564 = math.tanh %563 : vector<2x256xf32>
    %cst_205 = arith.constant dense<0.000000e+00> : vector<2x8xf32>
    %565 = tpu.matmul %564, %202, %cst_205 {dimension_numbers = #tpu.dot_dimension_numbers<[1], [0], [0], [1], [0, 0, 1, 1], [], []>} : vector<2x256xf32>, vector<256x8xf32>, vector<2x8xf32> -> vector<2x8xf32>
    %cst_206 = arith.constant dense<0xFF800000> : vector<2xf32>
    %566 = vector.multi_reduction <maximumf>, %565, %cst_206 [1] : vector<2x8xf32> to vector<2xf32>
    %567 = vector.shape_cast %566 : vector<2xf32> to vector<2x1xf32>
    %568 = vector.broadcast %567 : vector<2x1xf32> to vector<2x8xf32>
    %569 = arith.subf %565, %568 : vector<2x8xf32>
    %570 = math.exp %569 : vector<2x8xf32>
    %cst_207 = arith.constant dense<0.000000e+00> : vector<2xf32>
    %571 = vector.multi_reduction <add>, %570, %cst_207 [1] : vector<2x8xf32> to vector<2xf32>
    %572 = vector.shape_cast %571 : vector<2xf32> to vector<2x1xf32>
    %cst_208 = arith.constant 1.000000e+00 : f32
    %573 = vector.broadcast %cst_208 : f32 to vector<2x1xf32>
    %574 = arith.divf %573, %572 : vector<2x1xf32>
    %575 = vector.broadcast %574 : vector<2x1xf32> to vector<2x8xf32>
    %576 = arith.mulf %570, %575 : vector<2x8xf32>
    %cst_209 = arith.constant dense<0.000000e+00> : vector<2x256xf32>
    %577 = tpu.matmul %576, %203, %cst_209 {dimension_numbers = #tpu.dot_dimension_numbers<[1], [0], [0], [1], [0, 0, 1, 1], [], []>} : vector<2x8xf32>, vector<8x256xf32>, vector<2x256xf32> -> vector<2x256xf32>
    %578 = arith.mulf %577, %190 : vector<2x256xf32>
    %cst_210 = arith.constant dense<0.000000e+00> : vector<2x32xf32>
    %579 = tpu.matmul %578, %204, %cst_210 {dimension_numbers = #tpu.dot_dimension_numbers<[1], [0], [0], [1], [0, 0, 1, 1], [], []>} : vector<2x256xf32>, vector<256x32xf32>, vector<2x32xf32> -> vector<2x32xf32>
    %cst_211 = arith.constant dense<0.000000e+00> : vector<2x96xf32>
    %580 = tpu.matmul %559, %205, %cst_211 {dimension_numbers = #tpu.dot_dimension_numbers<[1], [0], [0], [1], [0, 0, 1, 1], [], []>} : vector<2x32xf32>, vector<32x96xf32>, vector<2x96xf32> -> vector<2x96xf32>
    %cst_212 = arith.constant dense<0.000000e+00> : vector<2x96xf32>
    %581 = tpu.matmul %579, %206, %cst_212 {dimension_numbers = #tpu.dot_dimension_numbers<[1], [0], [0], [1], [0, 0, 1, 1], [], []>} : vector<2x32xf32>, vector<32x96xf32>, vector<2x96xf32> -> vector<2x96xf32>
    %582 = arith.addf %580, %581 : vector<2x96xf32>
    %583 = vector.broadcast %208 : vector<1x96xf32> to vector<2x96xf32>
    %584 = arith.addf %582, %583 : vector<2x96xf32>
    %cst_213 = arith.constant dense<0.000000e+00> : vector<2x96xf32>
    %585 = tpu.matmul %522, %207, %cst_213 {dimension_numbers = #tpu.dot_dimension_numbers<[1], [0], [0], [1], [0, 0, 1, 1], [], []>} : vector<2x32xf32>, vector<32x96xf32>, vector<2x96xf32> -> vector<2x96xf32>
    %586 = vector.broadcast %209 : vector<1x96xf32> to vector<2x96xf32>
    %587 = arith.addf %585, %586 : vector<2x96xf32>
    %588 = vector.extract_strided_slice %584 {offsets = [0, 0], sizes = [2, 64], strides = [1, 1]} : vector<2x96xf32> to vector<2x64xf32>
    %589 = vector.extract_strided_slice %587 {offsets = [0, 0], sizes = [2, 64], strides = [1, 1]} : vector<2x96xf32> to vector<2x64xf32>
    %590 = arith.addf %588, %589 : vector<2x64xf32>
    %591 = arith.negf %590 : vector<2x64xf32>
    %592 = math.exp %591 : vector<2x64xf32>
    %cst_214 = arith.constant 1.000000e+00 : f32
    %593 = vector.broadcast %cst_214 : f32 to vector<2x64xf32>
    %594 = arith.addf %593, %592 : vector<2x64xf32>
    %595 = arith.divf %593, %594 : vector<2x64xf32>
    %596 = vector.extract_strided_slice %595 {offsets = [0, 0], sizes = [2, 32], strides = [1, 1]} : vector<2x64xf32> to vector<2x32xf32>
    %597 = vector.extract_strided_slice %595 {offsets = [0, 32], sizes = [2, 32], strides = [1, 1]} : vector<2x64xf32> to vector<2x32xf32>
    %598 = vector.extract_strided_slice %584 {offsets = [0, 64], sizes = [2, 32], strides = [1, 1]} : vector<2x96xf32> to vector<2x32xf32>
    %599 = vector.extract_strided_slice %587 {offsets = [0, 64], sizes = [2, 32], strides = [1, 1]} : vector<2x96xf32> to vector<2x32xf32>
    %600 = arith.mulf %596, %599 : vector<2x32xf32>
    %601 = arith.addf %598, %600 : vector<2x32xf32>
    %602 = math.tanh %601 : vector<2x32xf32>
    %cst_215 = arith.constant 1.000000e+00 : f32
    %603 = vector.broadcast %cst_215 : f32 to vector<2x32xf32>
    %604 = arith.subf %603, %597 : vector<2x32xf32>
    %605 = arith.mulf %604, %602 : vector<2x32xf32>
    %606 = arith.mulf %597, %522 : vector<2x32xf32>
    %607 = arith.addf %605, %606 : vector<2x32xf32>
    %cst_216 = arith.constant dense<0.000000e+00> : vector<2x128xf32>
    %608 = tpu.matmul %607, %210, %cst_216 {dimension_numbers = #tpu.dot_dimension_numbers<[1], [0], [0], [1], [0, 0, 1, 1], [], []>} : vector<2x32xf32>, vector<32x128xf32>, vector<2x128xf32> -> vector<2x128xf32>
    %cst_217 = arith.constant dense<0.000000e+00> : vector<2x128xf32>
    %609 = tpu.matmul %579, %211, %cst_217 {dimension_numbers = #tpu.dot_dimension_numbers<[1], [0], [0], [1], [0, 0, 1, 1], [], []>} : vector<2x32xf32>, vector<32x128xf32>, vector<2x128xf32> -> vector<2x128xf32>
    %610 = arith.addf %608, %609 : vector<2x128xf32>
    %cst_218 = arith.constant dense<0.000000e+00> : vector<2x128xf32>
    %611 = tpu.matmul %559, %212, %cst_218 {dimension_numbers = #tpu.dot_dimension_numbers<[1], [0], [0], [1], [0, 0, 1, 1], [], []>} : vector<2x32xf32>, vector<32x128xf32>, vector<2x128xf32> -> vector<2x128xf32>
    %612 = arith.addf %610, %611 : vector<2x128xf32>
    %613 = vector.broadcast %213 : vector<1x128xf32> to vector<2x128xf32>
    %614 = arith.addf %612, %613 : vector<2x128xf32>
    %c4_219 = arith.constant 4 : index
    %c0_220 = arith.constant 0 : index
    %c0_221 = arith.constant 0 : index
    %615 = vector.load %arg22[%c4_219, %c0_220, %c0_221] : memref<7x2x128xf32, #tpu.memory_space<vmem>>, vector<1x2x128xf32>
    %616 = vector.shape_cast %615 : vector<1x2x128xf32> to vector<2x128xf32>
    %617 = vector.shape_cast %614 : vector<2x128xf32> to vector<1x2x128xf32>
    tpu.vector_store %arg22[%c4_219, %c0_220, %c0_221], %617 {strides = array<i32>} : memref<7x2x128xf32, #tpu.memory_space<vmem>>, vector<1x2x128xf32>,
    %cst_222 = arith.constant -1.000000e+30 : f32
    %618 = vector.broadcast %cst_222 : f32 to vector<2x128xf32>
    %619 = arith.select %217, %614, %618 : vector<2x128xi1>, vector<2x128xf32>
    %cst_223 = arith.constant dense<0xFF800000> : vector<2xf32>
    %620 = vector.multi_reduction <maximumf>, %619, %cst_223 [1] : vector<2x128xf32> to vector<2xf32>
    %621 = vector.shape_cast %620 : vector<2xf32> to vector<2x1xf32>
    %622 = vector.broadcast %621 : vector<2x1xf32> to vector<2x128xf32>
    %623 = arith.cmpf oeq, %619, %622 : vector<2x128xf32>
    %c128_i32_224 = arith.constant 128 : i32
    %624 = vector.broadcast %c128_i32_224 : i32 to vector<2x128xi32>
    %625 = arith.select %623, %215, %624 : vector<2x128xi1>, vector<2x128xi32>
    %cst_225 = arith.constant dense<2147483647> : vector<2xi32>
    %626 = vector.multi_reduction <minsi>, %625, %cst_225 [1] : vector<2x128xi32> to vector<2xi32>
    %627 = vector.shape_cast %626 : vector<2xi32> to vector<2x1xi32>
    %628 = vector.broadcast %627 : vector<2x1xi32> to vector<2x128xi32>
    %629 = arith.cmpi eq, %215, %628 : vector<2x128xi32>
    %630 = arith.extui %629 : vector<2x128xi1> to vector<2x128xi32>
    %631 = arith.sitofp %630 : vector<2x128xi32> to vector<2x128xf32>
    %cst_226 = arith.constant dense<0.000000e+00> : vector<2x32xf32>
    %632 = tpu.matmul %631, %214, %cst_226 {dimension_numbers = #tpu.dot_dimension_numbers<[1], [0], [0], [1], [0, 0, 1, 1], [], []>} : vector<2x128xf32>, vector<128x32xf32>, vector<2x32xf32> -> vector<2x32xf32>
    %c5_227 = arith.constant 5 : index
    %c0_228 = arith.constant 0 : index
    %c0_229 = arith.constant 0 : index
    %633 = vector.load %arg2[%c5_227, %c0_228, %c0_229] : memref<8x2x32xf32, #tpu.memory_space<vmem>>, vector<1x2x32xf32>
    %634 = vector.shape_cast %633 : vector<1x2x32xf32> to vector<2x32xf32>
    %c5_230 = arith.constant 5 : index
    %635 = memref.load %arg0[%c5_230] : memref<8xi32, #tpu.memory_space<smem>>
    %c0_i32_231 = arith.constant 0 : i32
    %636 = arith.cmpi sgt, %635, %c0_i32_231 : i32
    %637 = arith.extui %636 : i1 to i32
    %638 = arith.sitofp %637 : i32 to f32
    %639 = vector.broadcast %638 : f32 to vector<2x32xf32>
    %640 = arith.mulf %639, %634 : vector<2x32xf32>
    %cst_232 = arith.constant 1.000000e+00 : f32
    %641 = arith.subf %cst_232, %638 : f32
    %642 = vector.broadcast %641 : f32 to vector<2x32xf32>
    %643 = arith.mulf %642, %632 : vector<2x32xf32>
    %644 = arith.addf %640, %643 : vector<2x32xf32>
    %cst_233 = arith.constant dense<0.000000e+00> : vector<2x256xf32>
    %645 = tpu.matmul %607, %200, %cst_233 {dimension_numbers = #tpu.dot_dimension_numbers<[1], [0], [0], [1], [0, 0, 1, 1], [], []>} : vector<2x32xf32>, vector<32x256xf32>, vector<2x256xf32> -> vector<2x256xf32>
    %646 = vector.broadcast %201 : vector<1x256xf32> to vector<2x256xf32>
    %647 = arith.addf %645, %646 : vector<2x256xf32>
    %648 = arith.addf %199, %647 : vector<2x256xf32>
    %649 = math.tanh %648 : vector<2x256xf32>
    %cst_234 = arith.constant dense<0.000000e+00> : vector<2x8xf32>
    %650 = tpu.matmul %649, %202, %cst_234 {dimension_numbers = #tpu.dot_dimension_numbers<[1], [0], [0], [1], [0, 0, 1, 1], [], []>} : vector<2x256xf32>, vector<256x8xf32>, vector<2x8xf32> -> vector<2x8xf32>
    %cst_235 = arith.constant dense<0xFF800000> : vector<2xf32>
    %651 = vector.multi_reduction <maximumf>, %650, %cst_235 [1] : vector<2x8xf32> to vector<2xf32>
    %652 = vector.shape_cast %651 : vector<2xf32> to vector<2x1xf32>
    %653 = vector.broadcast %652 : vector<2x1xf32> to vector<2x8xf32>
    %654 = arith.subf %650, %653 : vector<2x8xf32>
    %655 = math.exp %654 : vector<2x8xf32>
    %cst_236 = arith.constant dense<0.000000e+00> : vector<2xf32>
    %656 = vector.multi_reduction <add>, %655, %cst_236 [1] : vector<2x8xf32> to vector<2xf32>
    %657 = vector.shape_cast %656 : vector<2xf32> to vector<2x1xf32>
    %cst_237 = arith.constant 1.000000e+00 : f32
    %658 = vector.broadcast %cst_237 : f32 to vector<2x1xf32>
    %659 = arith.divf %658, %657 : vector<2x1xf32>
    %660 = vector.broadcast %659 : vector<2x1xf32> to vector<2x8xf32>
    %661 = arith.mulf %655, %660 : vector<2x8xf32>
    %cst_238 = arith.constant dense<0.000000e+00> : vector<2x256xf32>
    %662 = tpu.matmul %661, %203, %cst_238 {dimension_numbers = #tpu.dot_dimension_numbers<[1], [0], [0], [1], [0, 0, 1, 1], [], []>} : vector<2x8xf32>, vector<8x256xf32>, vector<2x256xf32> -> vector<2x256xf32>
    %663 = arith.mulf %662, %190 : vector<2x256xf32>
    %cst_239 = arith.constant dense<0.000000e+00> : vector<2x32xf32>
    %664 = tpu.matmul %663, %204, %cst_239 {dimension_numbers = #tpu.dot_dimension_numbers<[1], [0], [0], [1], [0, 0, 1, 1], [], []>} : vector<2x256xf32>, vector<256x32xf32>, vector<2x32xf32> -> vector<2x32xf32>
    %cst_240 = arith.constant dense<0.000000e+00> : vector<2x96xf32>
    %665 = tpu.matmul %644, %205, %cst_240 {dimension_numbers = #tpu.dot_dimension_numbers<[1], [0], [0], [1], [0, 0, 1, 1], [], []>} : vector<2x32xf32>, vector<32x96xf32>, vector<2x96xf32> -> vector<2x96xf32>
    %cst_241 = arith.constant dense<0.000000e+00> : vector<2x96xf32>
    %666 = tpu.matmul %664, %206, %cst_241 {dimension_numbers = #tpu.dot_dimension_numbers<[1], [0], [0], [1], [0, 0, 1, 1], [], []>} : vector<2x32xf32>, vector<32x96xf32>, vector<2x96xf32> -> vector<2x96xf32>
    %667 = arith.addf %665, %666 : vector<2x96xf32>
    %668 = vector.broadcast %208 : vector<1x96xf32> to vector<2x96xf32>
    %669 = arith.addf %667, %668 : vector<2x96xf32>
    %cst_242 = arith.constant dense<0.000000e+00> : vector<2x96xf32>
    %670 = tpu.matmul %607, %207, %cst_242 {dimension_numbers = #tpu.dot_dimension_numbers<[1], [0], [0], [1], [0, 0, 1, 1], [], []>} : vector<2x32xf32>, vector<32x96xf32>, vector<2x96xf32> -> vector<2x96xf32>
    %671 = vector.broadcast %209 : vector<1x96xf32> to vector<2x96xf32>
    %672 = arith.addf %670, %671 : vector<2x96xf32>
    %673 = vector.extract_strided_slice %669 {offsets = [0, 0], sizes = [2, 64], strides = [1, 1]} : vector<2x96xf32> to vector<2x64xf32>
    %674 = vector.extract_strided_slice %672 {offsets = [0, 0], sizes = [2, 64], strides = [1, 1]} : vector<2x96xf32> to vector<2x64xf32>
    %675 = arith.addf %673, %674 : vector<2x64xf32>
    %676 = arith.negf %675 : vector<2x64xf32>
    %677 = math.exp %676 : vector<2x64xf32>
    %cst_243 = arith.constant 1.000000e+00 : f32
    %678 = vector.broadcast %cst_243 : f32 to vector<2x64xf32>
    %679 = arith.addf %678, %677 : vector<2x64xf32>
    %680 = arith.divf %678, %679 : vector<2x64xf32>
    %681 = vector.extract_strided_slice %680 {offsets = [0, 0], sizes = [2, 32], strides = [1, 1]} : vector<2x64xf32> to vector<2x32xf32>
    %682 = vector.extract_strided_slice %680 {offsets = [0, 32], sizes = [2, 32], strides = [1, 1]} : vector<2x64xf32> to vector<2x32xf32>
    %683 = vector.extract_strided_slice %669 {offsets = [0, 64], sizes = [2, 32], strides = [1, 1]} : vector<2x96xf32> to vector<2x32xf32>
    %684 = vector.extract_strided_slice %672 {offsets = [0, 64], sizes = [2, 32], strides = [1, 1]} : vector<2x96xf32> to vector<2x32xf32>
    %685 = arith.mulf %681, %684 : vector<2x32xf32>
    %686 = arith.addf %683, %685 : vector<2x32xf32>
    %687 = math.tanh %686 : vector<2x32xf32>
    %cst_244 = arith.constant 1.000000e+00 : f32
    %688 = vector.broadcast %cst_244 : f32 to vector<2x32xf32>
    %689 = arith.subf %688, %682 : vector<2x32xf32>
    %690 = arith.mulf %689, %687 : vector<2x32xf32>
    %691 = arith.mulf %682, %607 : vector<2x32xf32>
    %692 = arith.addf %690, %691 : vector<2x32xf32>
    %cst_245 = arith.constant dense<0.000000e+00> : vector<2x128xf32>
    %693 = tpu.matmul %692, %210, %cst_245 {dimension_numbers = #tpu.dot_dimension_numbers<[1], [0], [0], [1], [0, 0, 1, 1], [], []>} : vector<2x32xf32>, vector<32x128xf32>, vector<2x128xf32> -> vector<2x128xf32>
    %cst_246 = arith.constant dense<0.000000e+00> : vector<2x128xf32>
    %694 = tpu.matmul %664, %211, %cst_246 {dimension_numbers = #tpu.dot_dimension_numbers<[1], [0], [0], [1], [0, 0, 1, 1], [], []>} : vector<2x32xf32>, vector<32x128xf32>, vector<2x128xf32> -> vector<2x128xf32>
    %695 = arith.addf %693, %694 : vector<2x128xf32>
    %cst_247 = arith.constant dense<0.000000e+00> : vector<2x128xf32>
    %696 = tpu.matmul %644, %212, %cst_247 {dimension_numbers = #tpu.dot_dimension_numbers<[1], [0], [0], [1], [0, 0, 1, 1], [], []>} : vector<2x32xf32>, vector<32x128xf32>, vector<2x128xf32> -> vector<2x128xf32>
    %697 = arith.addf %695, %696 : vector<2x128xf32>
    %698 = vector.broadcast %213 : vector<1x128xf32> to vector<2x128xf32>
    %699 = arith.addf %697, %698 : vector<2x128xf32>
    %c5_248 = arith.constant 5 : index
    %c0_249 = arith.constant 0 : index
    %c0_250 = arith.constant 0 : index
    %700 = vector.load %arg22[%c5_248, %c0_249, %c0_250] : memref<7x2x128xf32, #tpu.memory_space<vmem>>, vector<1x2x128xf32>
    %701 = vector.shape_cast %700 : vector<1x2x128xf32> to vector<2x128xf32>
    %702 = vector.shape_cast %699 : vector<2x128xf32> to vector<1x2x128xf32>
    tpu.vector_store %arg22[%c5_248, %c0_249, %c0_250], %702 {strides = array<i32>} : memref<7x2x128xf32, #tpu.memory_space<vmem>>, vector<1x2x128xf32>,
    %cst_251 = arith.constant -1.000000e+30 : f32
    %703 = vector.broadcast %cst_251 : f32 to vector<2x128xf32>
    %704 = arith.select %217, %699, %703 : vector<2x128xi1>, vector<2x128xf32>
    %cst_252 = arith.constant dense<0xFF800000> : vector<2xf32>
    %705 = vector.multi_reduction <maximumf>, %704, %cst_252 [1] : vector<2x128xf32> to vector<2xf32>
    %706 = vector.shape_cast %705 : vector<2xf32> to vector<2x1xf32>
    %707 = vector.broadcast %706 : vector<2x1xf32> to vector<2x128xf32>
    %708 = arith.cmpf oeq, %704, %707 : vector<2x128xf32>
    %c128_i32_253 = arith.constant 128 : i32
    %709 = vector.broadcast %c128_i32_253 : i32 to vector<2x128xi32>
    %710 = arith.select %708, %215, %709 : vector<2x128xi1>, vector<2x128xi32>
    %cst_254 = arith.constant dense<2147483647> : vector<2xi32>
    %711 = vector.multi_reduction <minsi>, %710, %cst_254 [1] : vector<2x128xi32> to vector<2xi32>
    %712 = vector.shape_cast %711 : vector<2xi32> to vector<2x1xi32>
    %713 = vector.broadcast %712 : vector<2x1xi32> to vector<2x128xi32>
    %714 = arith.cmpi eq, %215, %713 : vector<2x128xi32>
    %715 = arith.extui %714 : vector<2x128xi1> to vector<2x128xi32>
    %716 = arith.sitofp %715 : vector<2x128xi32> to vector<2x128xf32>
    %cst_255 = arith.constant dense<0.000000e+00> : vector<2x32xf32>
    %717 = tpu.matmul %716, %214, %cst_255 {dimension_numbers = #tpu.dot_dimension_numbers<[1], [0], [0], [1], [0, 0, 1, 1], [], []>} : vector<2x128xf32>, vector<128x32xf32>, vector<2x32xf32> -> vector<2x32xf32>
    %c6_256 = arith.constant 6 : index
    %c0_257 = arith.constant 0 : index
    %c0_258 = arith.constant 0 : index
    %718 = vector.load %arg2[%c6_256, %c0_257, %c0_258] : memref<8x2x32xf32, #tpu.memory_space<vmem>>, vector<1x2x32xf32>
    %719 = vector.shape_cast %718 : vector<1x2x32xf32> to vector<2x32xf32>
    %c6_259 = arith.constant 6 : index
    %720 = memref.load %arg0[%c6_259] : memref<8xi32, #tpu.memory_space<smem>>
    %c0_i32_260 = arith.constant 0 : i32
    %721 = arith.cmpi sgt, %720, %c0_i32_260 : i32
    %722 = arith.extui %721 : i1 to i32
    %723 = arith.sitofp %722 : i32 to f32
    %724 = vector.broadcast %723 : f32 to vector<2x32xf32>
    %725 = arith.mulf %724, %719 : vector<2x32xf32>
    %cst_261 = arith.constant 1.000000e+00 : f32
    %726 = arith.subf %cst_261, %723 : f32
    %727 = vector.broadcast %726 : f32 to vector<2x32xf32>
    %728 = arith.mulf %727, %717 : vector<2x32xf32>
    %729 = arith.addf %725, %728 : vector<2x32xf32>
    %cst_262 = arith.constant dense<0.000000e+00> : vector<2x256xf32>
    %730 = tpu.matmul %692, %200, %cst_262 {dimension_numbers = #tpu.dot_dimension_numbers<[1], [0], [0], [1], [0, 0, 1, 1], [], []>} : vector<2x32xf32>, vector<32x256xf32>, vector<2x256xf32> -> vector<2x256xf32>
    %731 = vector.broadcast %201 : vector<1x256xf32> to vector<2x256xf32>
    %732 = arith.addf %730, %731 : vector<2x256xf32>
    %733 = arith.addf %199, %732 : vector<2x256xf32>
    %734 = math.tanh %733 : vector<2x256xf32>
    %cst_263 = arith.constant dense<0.000000e+00> : vector<2x8xf32>
    %735 = tpu.matmul %734, %202, %cst_263 {dimension_numbers = #tpu.dot_dimension_numbers<[1], [0], [0], [1], [0, 0, 1, 1], [], []>} : vector<2x256xf32>, vector<256x8xf32>, vector<2x8xf32> -> vector<2x8xf32>
    %cst_264 = arith.constant dense<0xFF800000> : vector<2xf32>
    %736 = vector.multi_reduction <maximumf>, %735, %cst_264 [1] : vector<2x8xf32> to vector<2xf32>
    %737 = vector.shape_cast %736 : vector<2xf32> to vector<2x1xf32>
    %738 = vector.broadcast %737 : vector<2x1xf32> to vector<2x8xf32>
    %739 = arith.subf %735, %738 : vector<2x8xf32>
    %740 = math.exp %739 : vector<2x8xf32>
    %cst_265 = arith.constant dense<0.000000e+00> : vector<2xf32>
    %741 = vector.multi_reduction <add>, %740, %cst_265 [1] : vector<2x8xf32> to vector<2xf32>
    %742 = vector.shape_cast %741 : vector<2xf32> to vector<2x1xf32>
    %cst_266 = arith.constant 1.000000e+00 : f32
    %743 = vector.broadcast %cst_266 : f32 to vector<2x1xf32>
    %744 = arith.divf %743, %742 : vector<2x1xf32>
    %745 = vector.broadcast %744 : vector<2x1xf32> to vector<2x8xf32>
    %746 = arith.mulf %740, %745 : vector<2x8xf32>
    %cst_267 = arith.constant dense<0.000000e+00> : vector<2x256xf32>
    %747 = tpu.matmul %746, %203, %cst_267 {dimension_numbers = #tpu.dot_dimension_numbers<[1], [0], [0], [1], [0, 0, 1, 1], [], []>} : vector<2x8xf32>, vector<8x256xf32>, vector<2x256xf32> -> vector<2x256xf32>
    %748 = arith.mulf %747, %190 : vector<2x256xf32>
    %cst_268 = arith.constant dense<0.000000e+00> : vector<2x32xf32>
    %749 = tpu.matmul %748, %204, %cst_268 {dimension_numbers = #tpu.dot_dimension_numbers<[1], [0], [0], [1], [0, 0, 1, 1], [], []>} : vector<2x256xf32>, vector<256x32xf32>, vector<2x32xf32> -> vector<2x32xf32>
    %cst_269 = arith.constant dense<0.000000e+00> : vector<2x96xf32>
    %750 = tpu.matmul %729, %205, %cst_269 {dimension_numbers = #tpu.dot_dimension_numbers<[1], [0], [0], [1], [0, 0, 1, 1], [], []>} : vector<2x32xf32>, vector<32x96xf32>, vector<2x96xf32> -> vector<2x96xf32>
    %cst_270 = arith.constant dense<0.000000e+00> : vector<2x96xf32>
    %751 = tpu.matmul %749, %206, %cst_270 {dimension_numbers = #tpu.dot_dimension_numbers<[1], [0], [0], [1], [0, 0, 1, 1], [], []>} : vector<2x32xf32>, vector<32x96xf32>, vector<2x96xf32> -> vector<2x96xf32>
    %752 = arith.addf %750, %751 : vector<2x96xf32>
    %753 = vector.broadcast %208 : vector<1x96xf32> to vector<2x96xf32>
    %754 = arith.addf %752, %753 : vector<2x96xf32>
    %cst_271 = arith.constant dense<0.000000e+00> : vector<2x96xf32>
    %755 = tpu.matmul %692, %207, %cst_271 {dimension_numbers = #tpu.dot_dimension_numbers<[1], [0], [0], [1], [0, 0, 1, 1], [], []>} : vector<2x32xf32>, vector<32x96xf32>, vector<2x96xf32> -> vector<2x96xf32>
    %756 = vector.broadcast %209 : vector<1x96xf32> to vector<2x96xf32>
    %757 = arith.addf %755, %756 : vector<2x96xf32>
    %758 = vector.extract_strided_slice %754 {offsets = [0, 0], sizes = [2, 64], strides = [1, 1]} : vector<2x96xf32> to vector<2x64xf32>
    %759 = vector.extract_strided_slice %757 {offsets = [0, 0], sizes = [2, 64], strides = [1, 1]} : vector<2x96xf32> to vector<2x64xf32>
    %760 = arith.addf %758, %759 : vector<2x64xf32>
    %761 = arith.negf %760 : vector<2x64xf32>
    %762 = math.exp %761 : vector<2x64xf32>
    %cst_272 = arith.constant 1.000000e+00 : f32
    %763 = vector.broadcast %cst_272 : f32 to vector<2x64xf32>
    %764 = arith.addf %763, %762 : vector<2x64xf32>
    %765 = arith.divf %763, %764 : vector<2x64xf32>
    %766 = vector.extract_strided_slice %765 {offsets = [0, 0], sizes = [2, 32], strides = [1, 1]} : vector<2x64xf32> to vector<2x32xf32>
    %767 = vector.extract_strided_slice %765 {offsets = [0, 32], sizes = [2, 32], strides = [1, 1]} : vector<2x64xf32> to vector<2x32xf32>
    %768 = vector.extract_strided_slice %754 {offsets = [0, 64], sizes = [2, 32], strides = [1, 1]} : vector<2x96xf32> to vector<2x32xf32>
    %769 = vector.extract_strided_slice %757 {offsets = [0, 64], sizes = [2, 32], strides = [1, 1]} : vector<2x96xf32> to vector<2x32xf32>
    %770 = arith.mulf %766, %769 : vector<2x32xf32>
    %771 = arith.addf %768, %770 : vector<2x32xf32>
    %772 = math.tanh %771 : vector<2x32xf32>
    %cst_273 = arith.constant 1.000000e+00 : f32
    %773 = vector.broadcast %cst_273 : f32 to vector<2x32xf32>
    %774 = arith.subf %773, %767 : vector<2x32xf32>
    %775 = arith.mulf %774, %772 : vector<2x32xf32>
    %776 = arith.mulf %767, %692 : vector<2x32xf32>
    %777 = arith.addf %775, %776 : vector<2x32xf32>
    %cst_274 = arith.constant dense<0.000000e+00> : vector<2x128xf32>
    %778 = tpu.matmul %777, %210, %cst_274 {dimension_numbers = #tpu.dot_dimension_numbers<[1], [0], [0], [1], [0, 0, 1, 1], [], []>} : vector<2x32xf32>, vector<32x128xf32>, vector<2x128xf32> -> vector<2x128xf32>
    %cst_275 = arith.constant dense<0.000000e+00> : vector<2x128xf32>
    %779 = tpu.matmul %749, %211, %cst_275 {dimension_numbers = #tpu.dot_dimension_numbers<[1], [0], [0], [1], [0, 0, 1, 1], [], []>} : vector<2x32xf32>, vector<32x128xf32>, vector<2x128xf32> -> vector<2x128xf32>
    %780 = arith.addf %778, %779 : vector<2x128xf32>
    %cst_276 = arith.constant dense<0.000000e+00> : vector<2x128xf32>
    %781 = tpu.matmul %729, %212, %cst_276 {dimension_numbers = #tpu.dot_dimension_numbers<[1], [0], [0], [1], [0, 0, 1, 1], [], []>} : vector<2x32xf32>, vector<32x128xf32>, vector<2x128xf32> -> vector<2x128xf32>
    %782 = arith.addf %780, %781 : vector<2x128xf32>
    %783 = vector.broadcast %213 : vector<1x128xf32> to vector<2x128xf32>
    %784 = arith.addf %782, %783 : vector<2x128xf32>
    %c6_277 = arith.constant 6 : index
    %c0_278 = arith.constant 0 : index
    %c0_279 = arith.constant 0 : index
    %785 = vector.load %arg22[%c6_277, %c0_278, %c0_279] : memref<7x2x128xf32, #tpu.memory_space<vmem>>, vector<1x2x128xf32>
    %786 = vector.shape_cast %785 : vector<1x2x128xf32> to vector<2x128xf32>
    %787 = vector.shape_cast %784 : vector<2x128xf32> to vector<1x2x128xf32>
    tpu.vector_store %arg22[%c6_277, %c0_278, %c0_279], %787 {strides = array<i32>} : memref<7x2x128xf32, #tpu.memory_space<vmem>>, vector<1x2x128xf32>,
    return
  }
}

</mosaic_0001>

<llo_original>
// kernel: _seq2seq_core.1
$region0: #{_seq2seq_core.1}
  #allocation0 [shape = 'u32[]', space=smem, size = 0x4, offset = 0x4, fixed_abs, tag = 'smem constant byte address 0x4 - core index']
  #allocation1 [shape = 'u32[144,128]{1,0:T(1,128)}', space=vmem, size = 0x12000, scoped, tag = 'internal scratch']
  %s0 = inlined_call_operand.vmem [shape: s32[8], index: 0, kind: input, shape index: {}]
  %s1 = inlined_call_operand.vmem [shape: f32[8,2,32], index: 1, kind: input, shape index: {}]
  %s2 = inlined_call_operand.vmem [shape: f32[8,2,32], index: 2, kind: input, shape index: {}]
  %s3 = inlined_call_operand.vmem [shape: f32[32,128], index: 3, kind: input, shape index: {}]
  %s4 = inlined_call_operand.vmem [shape: f32[32,128], index: 4, kind: input, shape index: {}]
  %s5 = inlined_call_operand.vmem [shape: f32[1,128], index: 5, kind: input, shape index: {}]
  %s6 = inlined_call_operand.vmem [shape: f32[32,32], index: 6, kind: input, shape index: {}]
  %s7 = inlined_call_operand.vmem [shape: f32[32,256], index: 7, kind: input, shape index: {}]
  %s8 = inlined_call_operand.vmem [shape: f32[1,256], index: 8, kind: input, shape index: {}]
  %s9 = inlined_call_operand.vmem [shape: f32[256,8], index: 9, kind: input, shape index: {}]
  %s10 = inlined_call_operand.vmem [shape: f32[8,256], index: 10, kind: input, shape index: {}]
  %s11 = inlined_call_operand.vmem [shape: f32[256,32], index: 11, kind: input, shape index: {}]
  %s12 = inlined_call_operand.vmem [shape: f32[32,96], index: 12, kind: input, shape index: {}]
  %s13 = inlined_call_operand.vmem [shape: f32[32,96], index: 13, kind: input, shape index: {}]
  %s14 = inlined_call_operand.vmem [shape: f32[32,96], index: 14, kind: input, shape index: {}]
  %s15 = inlined_call_operand.vmem [shape: f32[1,96], index: 15, kind: input, shape index: {}]
  %s16 = inlined_call_operand.vmem [shape: f32[1,96], index: 16, kind: input, shape index: {}]
  %s17 = inlined_call_operand.vmem [shape: f32[32,128], index: 17, kind: input, shape index: {}]
  %s18 = inlined_call_operand.vmem [shape: f32[32,128], index: 18, kind: input, shape index: {}]
  %s19 = inlined_call_operand.vmem [shape: f32[32,128], index: 19, kind: input, shape index: {}]
  %s20 = inlined_call_operand.vmem [shape: f32[1,128], index: 20, kind: input, shape index: {}]
  %s21 = inlined_call_operand.vmem [shape: f32[128,32], index: 21, kind: input, shape index: {}]
  %s22 = inlined_call_operand.vmem [shape: f32[7,2,128], index: 22, kind: output, shape index: {}]
  %s23 = sld [smem:[#allocation0]]
  $region102: #{_seq2seq_core.1} parent=0
    _
  %s25 = ssub.s32 1, %s23
  %s26 = scalar_select 0, %s25, %s23
  $region1: #{_seq2seq_core.1} parent=0
    #allocation2 [shape = 'u8[512]{0}', space=smem, size = 0x200, scoped, tag = 'input window, operand 0, single buffered']
    #allocation3 [shape = 's32[1]{0}', space=sflag, size = 0x4, scoped, tag = 'scoped memory for _seq2seq_core.1']
    %27 = vsyncpa [#allocation3], 0
    // Predicated region
    $region2: #{_seq2seq_core.1} parent=1 // pred_check
      _
    $region3: #{_seq2seq_core.1} parent=1 // pred_check_branch
      %29 = sbr.rel (0) target = $region5
    $region4: #{_seq2seq_core.1} parent=1 // pred_region
      %s31 = ssub.s32 16, 16
      %32 = vsyncadd [#allocation3], %s31
      %s34 = sshll.u32 %s0, 4
      %s35 = int_to_ptr.vmem [resolvable:$true] %s34
      %37 = dma.vmem_to_smem %s35, 16, [#allocation2], [#allocation3]
    $region5: #{_seq2seq_core.1} parent=1 // pred_fallthru
      _
    // Predicated region
    $region6: #{_seq2seq_core.1} parent=1 // pred_check
      _
    $region7: #{_seq2seq_core.1} parent=1 // pred_check_branch
      %39 = sbr.rel (0) target = $region9
    $region8: #{_seq2seq_core.1} parent=1 // pred_region
      _
    $region9: #{_seq2seq_core.1} parent=1 // pred_fallthru
      _
    // Predicated region
    $region10: #{_seq2seq_core.1} parent=1 // pred_check
      _
    $region11: #{_seq2seq_core.1} parent=1 // pred_check_branch
      %41 = sbr.rel (0) target = $region13
    $region12: #{_seq2seq_core.1} parent=1 // pred_region
      _
    $region13: #{_seq2seq_core.1} parent=1 // pred_fallthru
      _
    // Predicated region
    $region14: #{_seq2seq_core.1} parent=1 // pred_check
      _
    $region15: #{_seq2seq_core.1} parent=1 // pred_check_branch
      %43 = sbr.rel (0) target = $region17
    $region16: #{_seq2seq_core.1} parent=1 // pred_region
      _
    $region17: #{_seq2seq_core.1} parent=1 // pred_fallthru
      _
    // Predicated region
    $region18: #{_seq2seq_core.1} parent=1 // pred_check
      _
    $region19: #{_seq2seq_core.1} parent=1 // pred_check_branch
      %45 = sbr.rel (0) target = $region21
    $region20: #{_seq2seq_core.1} parent=1 // pred_region
      _
    $region21: #{_seq2seq_core.1} parent=1 // pred_fallthru
      _
    // Predicated region
    $region22: #{_seq2seq_core.1} parent=1 // pred_check
      _
    $region23: #{_seq2seq_core.1} parent=1 // pred_check_branch
      %47 = sbr.rel (0) target = $region25
    $region24: #{_seq2seq_core.1} parent=1 // pred_region
      _
    $region25: #{_seq2seq_core.1} parent=1 // pred_fallthru
      _
    // Predicated region
    $region26: #{_seq2seq_core.1} parent=1 // pred_check
      _
    $region27: #{_seq2seq_core.1} parent=1 // pred_check_branch
      %49 = sbr.rel (0) target = $region29
    $region28: #{_seq2seq_core.1} parent=1 // pred_region
      _
    $region29: #{_seq2seq_core.1} parent=1 // pred_fallthru
      _
    // Predicated region
    $region30: #{_seq2seq_core.1} parent=1 // pred_check
      _
    $region31: #{_seq2seq_core.1} parent=1 // pred_check_branch
      %51 = sbr.rel (0) target = $region33
    $region32: #{_seq2seq_core.1} parent=1 // pred_region
      _
    $region33: #{_seq2seq_core.1} parent=1 // pred_fallthru
      _
    // Predicated region
    $region34: #{_seq2seq_core.1} parent=1 // pred_check
      _
    $region35: #{_seq2seq_core.1} parent=1 // pred_check_branch
      %53 = sbr.rel (0) target = $region37
    $region36: #{_seq2seq_core.1} parent=1 // pred_region
      _
    $region37: #{_seq2seq_core.1} parent=1 // pred_fallthru
      _
    // Predicated region
    $region38: #{_seq2seq_core.1} parent=1 // pred_check
      _
    $region39: #{_seq2seq_core.1} parent=1 // pred_check_branch
      %55 = sbr.rel (0) target = $region41
    $region40: #{_seq2seq_core.1} parent=1 // pred_region
      _
    $region41: #{_seq2seq_core.1} parent=1 // pred_fallthru
      _
    // Predicated region
    $region42: #{_seq2seq_core.1} parent=1 // pred_check
      _
    $region43: #{_seq2seq_core.1} parent=1 // pred_check_branch
      %57 = sbr.rel (0) target = $region45
    $region44: #{_seq2seq_core.1} parent=1 // pred_region
      _
    $region45: #{_seq2seq_core.1} parent=1 // pred_fallthru
      _
    // Predicated region
    $region46: #{_seq2seq_core.1} parent=1 // pred_check
      _
    $region47: #{_seq2seq_core.1} parent=1 // pred_check_branch
      %59 = sbr.rel (0) target = $region49
    $region48: #{_seq2seq_core.1} parent=1 // pred_region
      _
    $region49: #{_seq2seq_core.1} parent=1 // pred_fallthru
      _
    // Predicated region
    $region50: #{_seq2seq_core.1} parent=1 // pred_check
      _
    $region51: #{_seq2seq_core.1} parent=1 // pred_check_branch
      %61 = sbr.rel (0) target = $region53
    $region52: #{_seq2seq_core.1} parent=1 // pred_region
      _
    $region53: #{_seq2seq_core.1} parent=1 // pred_fallthru
      _
    // Predicated region
    $region54: #{_seq2seq_core.1} parent=1 // pred_check
      _
    $region55: #{_seq2seq_core.1} parent=1 // pred_check_branch
      %63 = sbr.rel (0) target = $region57
    $region56: #{_seq2seq_core.1} parent=1 // pred_region
      _
    $region57: #{_seq2seq_core.1} parent=1 // pred_fallthru
      _
    // Predicated region
    $region58: #{_seq2seq_core.1} parent=1 // pred_check
      _
    $region59: #{_seq2seq_core.1} parent=1 // pred_check_branch
      %65 = sbr.rel (0) target = $region61
    $region60: #{_seq2seq_core.1} parent=1 // pred_region
      _
    $region61: #{_seq2seq_core.1} parent=1 // pred_fallthru
      _
    // Predicated region
    $region62: #{_seq2seq_core.1} parent=1 // pred_check
      _
    $region63: #{_seq2seq_core.1} parent=1 // pred_check_branch
      %67 = sbr.rel (0) target = $region65
    $region64: #{_seq2seq_core.1} parent=1 // pred_region
      _
    $region65: #{_seq2seq_core.1} parent=1 // pred_fallthru
      _
    // Predicated region
    $region66: #{_seq2seq_core.1} parent=1 // pred_check
      _
    $region67: #{_seq2seq_core.1} parent=1 // pred_check_branch
      %69 = sbr.rel (0) target = $region69
    $region68: #{_seq2seq_core.1} parent=1 // pred_region
      _
    $region69: #{_seq2seq_core.1} parent=1 // pred_fallthru
      _
    // Predicated region
    $region70: #{_seq2seq_core.1} parent=1 // pred_check
      _
    $region71: #{_seq2seq_core.1} parent=1 // pred_check_branch
      %71 = sbr.rel (0) target = $region73
    $region72: #{_seq2seq_core.1} parent=1 // pred_region
      _
    $region73: #{_seq2seq_core.1} parent=1 // pred_fallthru
      _
    // Predicated region
    $region74: #{_seq2seq_core.1} parent=1 // pred_check
      _
    $region75: #{_seq2seq_core.1} parent=1 // pred_check_branch
      %73 = sbr.rel (0) target = $region77
    $region76: #{_seq2seq_core.1} parent=1 // pred_region
      _
    $region77: #{_seq2seq_core.1} parent=1 // pred_fallthru
      _
    // Predicated region
    $region78: #{_seq2seq_core.1} parent=1 // pred_check
      _
    $region79: #{_seq2seq_core.1} parent=1 // pred_check_branch
      %75 = sbr.rel (0) target = $region81
    $region80: #{_seq2seq_core.1} parent=1 // pred_region
      _
    $region81: #{_seq2seq_core.1} parent=1 // pred_fallthru
      _
    // Predicated region
    $region82: #{_seq2seq_core.1} parent=1 // pred_check
      _
    $region83: #{_seq2seq_core.1} parent=1 // pred_check_branch
      %77 = sbr.rel (0) target = $region85
    $region84: #{_seq2seq_core.1} parent=1 // pred_region
      _
    $region85: #{_seq2seq_core.1} parent=1 // pred_fallthru
      _
    // Predicated region
    $region86: #{_seq2seq_core.1} parent=1 // pred_check
      _
    $region87: #{_seq2seq_core.1} parent=1 // pred_check_branch
      %79 = sbr.rel (0) target = $region89
    $region88: #{_seq2seq_core.1} parent=1 // pred_region
      _
    $region89: #{_seq2seq_core.1} parent=1 // pred_fallthru
      _
    // Predicated region
    $region90: #{_seq2seq_core.1} parent=1 // pred_check
      _
    $region91: #{_seq2seq_core.1} parent=1 // pred_check_branch
      %81 = sbr.rel (0) target = $region93
    $region92: #{_seq2seq_core.1} parent=1 // pred_region
      %82 = dma.done [#allocation3], 16
    $region93: #{_seq2seq_core.1} parent=1 // pred_fallthru
      _
    %83 = sfence
    %v84 = vld [vmem:[%s3] sm:$0xff]
    %v85 = vld [vmem:[%s3 + $0x8] sm:$0xff]
    %v86 = vld [vmem:[%s3 + $0x10] sm:$0xff]
    %v87 = vld [vmem:[%s3 + $0x18] sm:$0xff]
    %v88 = vld [vmem:[%s4] sm:$0xff]
    %v89 = vld [vmem:[%s4 + $0x8] sm:$0xff]
    %v90 = vld [vmem:[%s4 + $0x10] sm:$0xff]
    %v91 = vld [vmem:[%s4 + $0x18] sm:$0xff]
    %v92 = vld [vmem:[%s5] sm:$0x1]
    %v93 = vld [vmem:[%s6] sm:$0xff]
    %v94 = vld [vmem:[%s6 + $0x8] sm:$0xff]
    %v95 = vld [vmem:[%s6 + $0x10] sm:$0xff]
    %v96 = vld [vmem:[%s6 + $0x18] sm:$0xff]
    %v97 = vld [vmem:[%s1] sm:$0x3]
    %vm98 = vcmask 261120
    %v100 = vsel %vm98, 0.0, 0
    %102 = vmatprep.subr.mxu0 0.0
    %103 = vmatpush1.msra.mxu0 %v88
    %104 = vmatprep.subr.mxu0 0.0
    %105 = vmatpush1.msra.mxu0 %v89
    %106 = vmatprep.subr.mxu0 0.0
    %107 = vmatpush1.msra.mxu0 %v90
    %108 = vmatprep.subr.mxu0 0.0
    %109 = vmatpush1.msra.mxu0 %v91
    %110 = vmatprep.subr.mxu0 0.0
    %111 = vmatpush1.msra.mxu0 0.0
    %112 = vmatprep.subr.mxu0 0.0
    %113 = vmatpush1.msra.mxu0 0.0
    %114 = vmatprep.subr.mxu0 0.0
    %115 = vmatpush1.msra.mxu0 0.0
    %116 = vmatprep.subr.mxu0 0.0
    %117 = vmatpush1.msra.mxu0 0.0
    %118 = vmatprep.subr.mxu0 0.0
    %119 = vmatpush1.msra.mxu0 0.0
    %120 = vmatprep.subr.mxu0 0.0
    %121 = vmatpush1.msra.mxu0 0.0
    %122 = vmatprep.subr.mxu0 0.0
    %123 = vmatpush1.msra.mxu0 0.0
    %124 = vmatprep.subr.mxu0 0.0
    %125 = vmatpush1.msra.mxu0 0.0
    %126 = vmatprep.subr.mxu0 0.0
    %127 = vmatpush1.msra.mxu0 0.0
    %128 = vmatprep.subr.mxu0 0.0
    %129 = vmatpush1.msra.mxu0 0.0
    %130 = vmatprep.subr.mxu0 0.0
    %131 = vmatpush1.msra.mxu0 0.0
    %132 = vmatprep.subr.mxu0 0.0
    %133 = vmatpush1.msra.mxu0 0.0
    %134 = vmatprep.subr.mxu0 0.0
    %135 = vmatpush1.msra.mxu0 0.0
    %136 = vmatprep.subr.mxu0 0.0
    %137 = vmatpush1.msra.mxu0 0.0
    %138 = vmatprep.subr.mxu0 0.0
    %139 = vmatpush1.msra.mxu0 0.0
    %140 = vmatprep.subr.mxu0 0.0
    %141 = vmatpush1.msra.mxu0 0.0
    %142 = vmatprep.subr.mxu0 0.0
    %143 = vmatpush1.msra.mxu0 0.0
    %144 = vmatprep.subr.mxu0 0.0
    %145 = vmatpush1.msra.mxu0 0.0
    %146 = vmatprep.subr.mxu0 0.0
    %147 = vmatpush1.msra.mxu0 0.0
    %148 = vmatprep.subr.mxu0 0.0
    %149 = vmatpush1.msra.mxu0 0.0
    %150 = vmatprep.subr.mxu0 0.0
    %151 = vmatpush1.msra.mxu0 0.0
    %152 = vmatprep.subr.mxu0 0.0
    %153 = vmatpush1.msra.mxu0 0.0
    %154 = vmatprep.subr.mxu0 0.0
    %155 = vmatpush1.msra.mxu0 0.0
    %156 = vmatprep.subr.mxu0 0.0
    %157 = vmatpush1.msra.mxu0 0.0
    %158 = vmatprep.subr.mxu0 0.0
    %159 = vmatpush1.msra.mxu0 0.0
    %160 = vmatprep.subr.mxu0 0.0
    %161 = vmatpush1.msra.mxu0 0.0
    %162 = vmatprep.subr.mxu0 0.0
    %163 = vmatpush1.msra.mxu0 0.0
    %164 = vmatprep.subr.mxu0 0.0
    %165 = vmatpush1.msra.mxu0 0.0
    %166 = vmatprep.mubr.f32.mxu0 0.0
    %167 = vmatmul.mubr.f32.gmra.mrb[0].mxu0 %v100
    %v168 = vpop.f32.mrb[0].mxu0
    %v169 = vadd.f32 0.0, %v168
    %v170 = vpop.f32.mrb[0].mxu0
    %171 = vdwg.mxu0
    %v173 = vsel %vm98, %v97, 0
    %175 = vmatprep.subr.mxu0 0.0
    %176 = vmatpush1.msra.mxu0 %v84
    %177 = vmatprep.subr.mxu0 0.0
    %178 = vmatpush1.msra.mxu0 %v85
    %179 = vmatprep.subr.mxu0 0.0
    %180 = vmatpush1.msra.mxu0 %v86
    %181 = vmatprep.subr.mxu0 0.0
    %182 = vmatpush1.msra.mxu0 %v87
    %183 = vmatprep.subr.mxu0 0.0
    %184 = vmatpush1.msra.mxu0 0.0
    %185 = vmatprep.subr.mxu0 0.0
    %186 = vmatpush1.msra.mxu0 0.0
    %187 = vmatprep.subr.mxu0 0.0
    %188 = vmatpush1.msra.mxu0 0.0
    %189 = vmatprep.subr.mxu0 0.0
    %190 = vmatpush1.msra.mxu0 0.0
    %191 = vmatprep.subr.mxu0 0.0
    %192 = vmatpush1.msra.mxu0 0.0
    %193 = vmatprep.subr.mxu0 0.0
    %194 = vmatpush1.msra.mxu0 0.0
    %195 = vmatprep.subr.mxu0 0.0
    %196 = vmatpush1.msra.mxu0 0.0
    %197 = vmatprep.subr.mxu0 0.0
    %198 = vmatpush1.msra.mxu0 0.0
    %199 = vmatprep.subr.mxu0 0.0
    %200 = vmatpush1.msra.mxu0 0.0
    %201 = vmatprep.subr.mxu0 0.0
    %202 = vmatpush1.msra.mxu0 0.0
    %203 = vmatprep.subr.mxu0 0.0
    %204 = vmatpush1.msra.mxu0 0.0
    %205 = vmatprep.subr.mxu0 0.0
    %206 = vmatpush1.msra.mxu0 0.0
    %207 = vmatprep.subr.mxu0 0.0
    %208 = vmatpush1.msra.mxu0 0.0
    %209 = vmatprep.subr.mxu0 0.0
    %210 = vmatpush1.msra.mxu0 0.0
    %211 = vmatprep.subr.mxu0 0.0
    %212 = vmatpush1.msra.mxu0 0.0
    %213 = vmatprep.subr.mxu0 0.0
    %214 = vmatpush1.msra.mxu0 0.0
    %215 = vmatprep.subr.mxu0 0.0
    %216 = vmatpush1.msra.mxu0 0.0
    %217 = vmatprep.subr.mxu0 0.0
    %218 = vmatpush1.msra.mxu0 0.0
    %219 = vmatprep.subr.mxu0 0.0
    %220 = vmatpush1.msra.mxu0 0.0
    %221 = vmatprep.subr.mxu0 0.0
    %222 = vmatpush1.msra.mxu0 0.0
    %223 = vmatprep.subr.mxu0 0.0
    %224 = vmatpush1.msra.mxu0 0.0
    %225 = vmatprep.subr.mxu0 0.0
    %226 = vmatpush1.msra.mxu0 0.0
    %227 = vmatprep.subr.mxu0 0.0
    %228 = vmatpush1.msra.mxu0 0.0
    %229 = vmatprep.subr.mxu0 0.0
    %230 = vmatpush1.msra.mxu0 0.0
    %231 = vmatprep.subr.mxu0 0.0
    %232 = vmatpush1.msra.mxu0 0.0
    %233 = vmatprep.subr.mxu0 0.0
    %234 = vmatpush1.msra.mxu0 0.0
    %235 = vmatprep.subr.mxu0 0.0
    %236 = vmatpush1.msra.mxu0 0.0
    %237 = vmatprep.subr.mxu0 0.0
    %238 = vmatpush1.msra.mxu0 0.0
    %239 = vmatprep.mubr.f32.mxu0 0.0
    %240 = vmatmul.mubr.f32.gmra.mrb[0].mxu0 %v173
    %v241 = vpop.f32.mrb[0].mxu0
    %v242 = vadd.f32 %v169, %v241
    %v243 = vpop.f32.mrb[0].mxu0
    %244 = vdwg.mxu0
    %v246 = vlaneseq
    %v247 = vshrl.u32 %v246, 7
    %v248 = vsub.s32 0, %v247
    %v249 = vrot.slane %v92, %v248
    %v251 = vadd.f32 %v242, %v249
    %v252 = vxor.u32 %v251, 2147483648
    %v253 = vmul.f32 %v252, 1.442695
    %v254 = vpow.pop %v253
    %v255 = vadd.f32 %v254, 1.0
    %v256 = vrcp.pop %v255
    %v257 = vmul.f32 1.0, %v256
    %v258 = vtanh.pop %v251
    %v259 = vmul.f32 %v257, 0.0
    %261 = vrot.lane.b32.xlu0 %v258, 32
    %v262 = vpop.permute.xlu0 %261
    %v264 = vmul.f32 %v257, %v262
    %266 = vrot.lane.b32.xlu0 %v264, 32
    %v267 = vpop.permute.xlu0 %266
    %v269 = vadd.f32 %v259, %v267
    %v270 = vtanh.pop %v269
    %272 = vrot.lane.b32.xlu0 %v270, 32
    %v273 = vpop.permute.xlu0 %272
    %v275 = vmul.f32 %v257, %v273
    %s276 = scalar_lea.vmem %s1, 2
    %v277 = vld [vmem:[%s276] sm:$0x3]
    %279 = vrot.lane.b32.xlu0 %v275, 64
    %v280 = vpop.permute.xlu0 %279
    %v281 = vsel %vm98, %v280, 0
    %283 = vmatprep.subr.mxu0 0.0
    %284 = vmatpush1.msra.mxu0 %v88
    %285 = vmatprep.subr.mxu0 0.0
    %286 = vmatpush1.msra.mxu0 %v89
    %287 = vmatprep.subr.mxu0 0.0
    %288 = vmatpush1.msra.mxu0 %v90
    %289 = vmatprep.subr.mxu0 0.0
    %290 = vmatpush1.msra.mxu0 %v91
    %291 = vmatprep.subr.mxu0 0.0
    %292 = vmatpush1.msra.mxu0 0.0
    %293 = vmatprep.subr.mxu0 0.0
    %294 = vmatpush1.msra.mxu0 0.0
    %295 = vmatprep.subr.mxu0 0.0
    %296 = vmatpush1.msra.mxu0 0.0
    %297 = vmatprep.subr.mxu0 0.0
    %298 = vmatpush1.msra.mxu0 0.0
    %299 = vmatprep.subr.mxu0 0.0
    %300 = vmatpush1.msra.mxu0 0.0
    %301 = vmatprep.subr.mxu0 0.0
    %302 = vmatpush1.msra.mxu0 0.0
    %303 = vmatprep.subr.mxu0 0.0
    %304 = vmatpush1.msra.mxu0 0.0
    %305 = vmatprep.subr.mxu0 0.0
    %306 = vmatpush1.msra.mxu0 0.0
    %307 = vmatprep.subr.mxu0 0.0
    %308 = vmatpush1.msra.mxu0 0.0
    %309 = vmatprep.subr.mxu0 0.0
    %310 = vmatpush1.msra.mxu0 0.0
    %311 = vmatprep.subr.mxu0 0.0
    %312 = vmatpush1.msra.mxu0 0.0
    %313 = vmatprep.subr.mxu0 0.0
    %314 = vmatpush1.msra.mxu0 0.0
    %315 = vmatprep.subr.mxu0 0.0
    %316 = vmatpush1.msra.mxu0 0.0
    %317 = vmatprep.subr.mxu0 0.0
    %318 = vmatpush1.msra.mxu0 0.0
    %319 = vmatprep.subr.mxu0 0.0
    %320 = vmatpush1.msra.mxu0 0.0
    %321 = vmatprep.subr.mxu0 0.0
    %322 = vmatpush1.msra.mxu0 0.0
    %323 = vmatprep.subr.mxu0 0.0
    %324 = vmatpush1.msra.mxu0 0.0
    %325 = vmatprep.subr.mxu0 0.0
    %326 = vmatpush1.msra.mxu0 0.0
    %327 = vmatprep.subr.mxu0 0.0
    %328 = vmatpush1.msra.mxu0 0.0
    %329 = vmatprep.subr.mxu0 0.0
    %330 = vmatpush1.msra.mxu0 0.0
    %331 = vmatprep.subr.mxu0 0.0
    %332 = vmatpush1.msra.mxu0 0.0
    %333 = vmatprep.subr.mxu0 0.0
    %334 = vmatpush1.msra.mxu0 0.0
    %335 = vmatprep.subr.mxu0 0.0
    %336 = vmatpush1.msra.mxu0 0.0
    %337 = vmatprep.subr.mxu0 0.0
    %338 = vmatpush1.msra.mxu0 0.0
    %339 = vmatprep.subr.mxu0 0.0
    %340 = vmatpush1.msra.mxu0 0.0
    %341 = vmatprep.subr.mxu0 0.0
    %342 = vmatpush1.msra.mxu0 0.0
    %343 = vmatprep.subr.mxu0 0.0
    %344 = vmatpush1.msra.mxu0 0.0
    %345 = vmatprep.subr.mxu0 0.0
    %346 = vmatpush1.msra.mxu0 0.0
    %347 = vmatprep.mubr.f32.mxu0 0.0
    %348 = vmatmul.mubr.f32.gmra.mrb[0].mxu0 %v281
    %v349 = vpop.f32.mrb[0].mxu0
    %v350 = vadd.f32 0.0, %v349
    %v351 = vpop.f32.mrb[0].mxu0
    %352 = vdwg.mxu0
    %v354 = vsel %vm98, %v277, 0
    %356 = vmatprep.subr.mxu0 0.0
    %357 = vmatpush1.msra.mxu0 %v84
    %358 = vmatprep.subr.mxu0 0.0
    %359 = vmatpush1.msra.mxu0 %v85
    %360 = vmatprep.subr.mxu0 0.0
    %361 = vmatpush1.msra.mxu0 %v86
    %362 = vmatprep.subr.mxu0 0.0
    %363 = vmatpush1.msra.mxu0 %v87
    %364 = vmatprep.subr.mxu0 0.0
    %365 = vmatpush1.msra.mxu0 0.0
    %366 = vmatprep.subr.mxu0 0.0
    %367 = vmatpush1.msra.mxu0 0.0
    %368 = vmatprep.subr.mxu0 0.0
    %369 = vmatpush1.msra.mxu0 0.0
    %370 = vmatprep.subr.mxu0 0.0
    %371 = vmatpush1.msra.mxu0 0.0
    %372 = vmatprep.subr.mxu0 0.0
    %373 = vmatpush1.msra.mxu0 0.0
    %374 = vmatprep.subr.mxu0 0.0
    %375 = vmatpush1.msra.mxu0 0.0
    %376 = vmatprep.subr.mxu0 0.0
    %377 = vmatpush1.msra.mxu0 0.0
    %378 = vmatprep.subr.mxu0 0.0
    %379 = vmatpush1.msra.mxu0 0.0
    %380 = vmatprep.subr.mxu0 0.0
    %381 = vmatpush1.msra.mxu0 0.0
    %382 = vmatprep.subr.mxu0 0.0
    %383 = vmatpush1.msra.mxu0 0.0
    %384 = vmatprep.subr.mxu0 0.0
    %385 = vmatpush1.msra.mxu0 0.0
    %386 = vmatprep.subr.mxu0 0.0
    %387 = vmatpush1.msra.mxu0 0.0
    %388 = vmatprep.subr.mxu0 0.0
    %389 = vmatpush1.msra.mxu0 0.0
    %390 = vmatprep.subr.mxu0 0.0
    %391 = vmatpush1.msra.mxu0 0.0
    %392 = vmatprep.subr.mxu0 0.0
    %393 = vmatpush1.msra.mxu0 0.0
    %394 = vmatprep.subr.mxu0 0.0
    %395 = vmatpush1.msra.mxu0 0.0
    %396 = vmatprep.subr.mxu0 0.0
    %397 = vmatpush1.msra.mxu0 0.0
    %398 = vmatprep.subr.mxu0 0.0
    %399 = vmatpush1.msra.mxu0 0.0
    %400 = vmatprep.subr.mxu0 0.0
    %401 = vmatpush1.msra.mxu0 0.0
    %402 = vmatprep.subr.mxu0 0.0
    %403 = vmatpush1.msra.mxu0 0.0
    %404 = vmatprep.subr.mxu0 0.0
    %405 = vmatpush1.msra.mxu0 0.0
    %406 = vmatprep.subr.mxu0 0.0
    %407 = vmatpush1.msra.mxu0 0.0
    %408 = vmatprep.subr.mxu0 0.0
    %409 = vmatpush1.msra.mxu0 0.0
    %410 = vmatprep.subr.mxu0 0.0
    %411 = vmatpush1.msra.mxu0 0.0
    %412 = vmatprep.subr.mxu0 0.0
    %413 = vmatpush1.msra.mxu0 0.0
    %414 = vmatprep.subr.mxu0 0.0
    %415 = vmatpush1.msra.mxu0 0.0
    %416 = vmatprep.subr.mxu0 0.0
    %417 = vmatpush1.msra.mxu0 0.0
    %418 = vmatprep.subr.mxu0 0.0
    %419 = vmatpush1.msra.mxu0 0.0
    %420 = vmatprep.mubr.f32.mxu0 0.0
    %421 = vmatmul.mubr.f32.gmra.mrb[0].mxu0 %v354
    %v422 = vpop.f32.mrb[0].mxu0
    %v423 = vadd.f32 %v350, %v422
    %v424 = vpop.f32.mrb[0].mxu0
    %425 = vdwg.mxu0
    %v426 = vadd.f32 %v423, %v249
    %v427 = vxor.u32 %v426, 2147483648
    %v428 = vmul.f32 %v427, 1.442695
    %v429 = vpow.pop %v428
    %v430 = vadd.f32 %v429, 1.0
    %v431 = vrcp.pop %v430
    %v432 = vmul.f32 1.0, %v431
    %v433 = vtanh.pop %v426
    %v434 = vmul.f32 %v432, %v269
    %436 = vrot.lane.b32.xlu0 %v433, 32
    %v437 = vpop.permute.xlu0 %436
    %v439 = vmul.f32 %v432, %v437
    %441 = vrot.lane.b32.xlu0 %v439, 32
    %v442 = vpop.permute.xlu0 %441
    %v444 = vadd.f32 %v434, %v442
    %v445 = vtanh.pop %v444
    %447 = vrot.lane.b32.xlu0 %v445, 32
    %v448 = vpop.permute.xlu0 %447
    %v450 = vmul.f32 %v432, %v448
    %s451 = scalar_lea.vmem %s1, 4
    %v452 = vld [vmem:[%s451] sm:$0x3]
    %454 = vrot.lane.b32.xlu0 %v450, 64
    %v455 = vpop.permute.xlu0 %454
    %v456 = vsel %vm98, %v455, 0
    %458 = vmatprep.subr.mxu0 0.0
    %459 = vmatpush1.msra.mxu0 %v88
    %460 = vmatprep.subr.mxu0 0.0
    %461 = vmatpush1.msra.mxu0 %v89
    %462 = vmatprep.subr.mxu0 0.0
    %463 = vmatpush1.msra.mxu0 %v90
    %464 = vmatprep.subr.mxu0 0.0
    %465 = vmatpush1.msra.mxu0 %v91
    %466 = vmatprep.subr.mxu0 0.0
    %467 = vmatpush1.msra.mxu0 0.0
    %468 = vmatprep.subr.mxu0 0.0
    %469 = vmatpush1.msra.mxu0 0.0
    %470 = vmatprep.subr.mxu0 0.0
    %471 = vmatpush1.msra.mxu0 0.0
    %472 = vmatprep.subr.mxu0 0.0
    %473 = vmatpush1.msra.mxu0 0.0
    %474 = vmatprep.subr.mxu0 0.0
    %475 = vmatpush1.msra.mxu0 0.0
    %476 = vmatprep.subr.mxu0 0.0
    %477 = vmatpush1.msra.mxu0 0.0
    %478 = vmatprep.subr.mxu0 0.0
    %479 = vmatpush1.msra.mxu0 0.0
    %480 = vmatprep.subr.mxu0 0.0
    %481 = vmatpush1.msra.mxu0 0.0
    %482 = vmatprep.subr.mxu0 0.0
    %483 = vmatpush1.msra.mxu0 0.0
    %484 = vmatprep.subr.mxu0 0.0
    %485 = vmatpush1.msra.mxu0 0.0
    %486 = vmatprep.subr.mxu0 0.0
    %487 = vmatpush1.msra.mxu0 0.0
    %488 = vmatprep.subr.mxu0 0.0
    %489 = vmatpush1.msra.mxu0 0.0
    %490 = vmatprep.subr.mxu0 0.0
    %491 = vmatpush1.msra.mxu0 0.0
    %492 = vmatprep.subr.mxu0 0.0
    %493 = vmatpush1.msra.mxu0 0.0
    %494 = vmatprep.subr.mxu0 0.0
    %495 = vmatpush1.msra.mxu0 0.0
    %496 = vmatprep.subr.mxu0 0.0
    %497 = vmatpush1.msra.mxu0 0.0
    %498 = vmatprep.subr.mxu0 0.0
    %499 = vmatpush1.msra.mxu0 0.0
    %500 = vmatprep.subr.mxu0 0.0
    %501 = vmatpush1.msra.mxu0 0.0
    %502 = vmatprep.subr.mxu0 0.0
    %503 = vmatpush1.msra.mxu0 0.0
    %504 = vmatprep.subr.mxu0 0.0
    %505 = vmatpush1.msra.mxu0 0.0
    %506 = vmatprep.subr.mxu0 0.0
    %507 = vmatpush1.msra.mxu0 0.0
    %508 = vmatprep.subr.mxu0 0.0
    %509 = vmatpush1.msra.mxu0 0.0
    %510 = vmatprep.subr.mxu0 0.0
    %511 = vmatpush1.msra.mxu0 0.0
    %512 = vmatprep.subr.mxu0 0.0
    %513 = vmatpush1.msra.mxu0 0.0
    %514 = vmatprep.subr.mxu0 0.0
    %515 = vmatpush1.msra.mxu0 0.0
    %516 = vmatprep.subr.mxu0 0.0
    %517 = vmatpush1.msra.mxu0 0.0
    %518 = vmatprep.subr.mxu0 0.0
    %519 = vmatpush1.msra.mxu0 0.0
    %520 = vmatprep.subr.mxu0 0.0
    %521 = vmatpush1.msra.mxu0 0.0
    %522 = vmatprep.mubr.f32.mxu0 0.0
    %523 = vmatmul.mubr.f32.gmra.mrb[0].mxu0 %v456
    %v524 = vpop.f32.mrb[0].mxu0
    %v525 = vadd.f32 0.0, %v524
    %v526 = vpop.f32.mrb[0].mxu0
    %527 = vdwg.mxu0
    %v529 = vsel %vm98, %v452, 0
    %531 = vmatprep.subr.mxu0 0.0
    %532 = vmatpush1.msra.mxu0 %v84
    %533 = vmatprep.subr.mxu0 0.0
    %534 = vmatpush1.msra.mxu0 %v85
    %535 = vmatprep.subr.mxu0 0.0
    %536 = vmatpush1.msra.mxu0 %v86
    %537 = vmatprep.subr.mxu0 0.0
    %538 = vmatpush1.msra.mxu0 %v87
    %539 = vmatprep.subr.mxu0 0.0
    %540 = vmatpush1.msra.mxu0 0.0
    %541 = vmatprep.subr.mxu0 0.0
    %542 = vmatpush1.msra.mxu0 0.0
    %543 = vmatprep.subr.mxu0 0.0
    %544 = vmatpush1.msra.mxu0 0.0
    %545 = vmatprep.subr.mxu0 0.0
    %546 = vmatpush1.msra.mxu0 0.0
    %547 = vmatprep.subr.mxu0 0.0
    %548 = vmatpush1.msra.mxu0 0.0
    %549 = vmatprep.subr.mxu0 0.0
    %550 = vmatpush1.msra.mxu0 0.0
    %551 = vmatprep.subr.mxu0 0.0
    %552 = vmatpush1.msra.mxu0 0.0
    %553 = vmatprep.subr.mxu0 0.0
    %554 = vmatpush1.msra.mxu0 0.0
    %555 = vmatprep.subr.mxu0 0.0
    %556 = vmatpush1.msra.mxu0 0.0
    %557 = vmatprep.subr.mxu0 0.0
    %558 = vmatpush1.msra.mxu0 0.0
    %559 = vmatprep.subr.mxu0 0.0
    %560 = vmatpush1.msra.mxu0 0.0
    %561 = vmatprep.subr.mxu0 0.0
    %562 = vmatpush1.msra.mxu0 0.0
    %563 = vmatprep.subr.mxu0 0.0
    %564 = vmatpush1.msra.mxu0 0.0
    %565 = vmatprep.subr.mxu0 0.0
    %566 = vmatpush1.msra.mxu0 0.0
    %567 = vmatprep.subr.mxu0 0.0
    %568 = vmatpush1.msra.mxu0 0.0
    %569 = vmatprep.subr.mxu0 0.0
    %570 = vmatpush1.msra.mxu0 0.0
    %571 = vmatprep.subr.mxu0 0.0
    %572 = vmatpush1.msra.mxu0 0.0
    %573 = vmatprep.subr.mxu0 0.0
    %574 = vmatpush1.msra.mxu0 0.0
    %575 = vmatprep.subr.mxu0 0.0
    %576 = vmatpush1.msra.mxu0 0.0
    %577 = vmatprep.subr.mxu0 0.0
    %578 = vmatpush1.msra.mxu0 0.0
    %579 = vmatprep.subr.mxu0 0.0
    %580 = vmatpush1.msra.mxu0 0.0
    %581 = vmatprep.subr.mxu0 0.0
    %582 = vmatpush1.msra.mxu0 0.0
    %583 = vmatprep.subr.mxu0 0.0
    %584 = vmatpush1.msra.mxu0 0.0
    %585 = vmatprep.subr.mxu0 0.0
    %586 = vmatpush1.msra.mxu0 0.0
    %587 = vmatprep.subr.mxu0 0.0
    %588 = vmatpush1.msra.mxu0 0.0
    %589 = vmatprep.subr.mxu0 0.0
    %590 = vmatpush1.msra.mxu0 0.0
    %591 = vmatprep.subr.mxu0 0.0
    %592 = vmatpush1.msra.mxu0 0.0
    %593 = vmatprep.subr.mxu0 0.0
    %594 = vmatpush1.msra.mxu0 0.0
    %595 = vmatprep.mubr.f32.mxu0 0.0
    %596 = vmatmul.mubr.f32.gmra.mrb[0].mxu0 %v529
    %v597 = vpop.f32.mrb[0].mxu0
    %v598 = vadd.f32 %v525, %v597
    %v599 = vpop.f32.mrb[0].mxu0
    %600 = vdwg.mxu0
    %v601 = vadd.f32 %v598, %v249
    %v602 = vxor.u32 %v601, 2147483648
    %v603 = vmul.f32 %v602, 1.442695
    %v604 = vpow.pop %v603
    %v605 = vadd.f32 %v604, 1.0
    %v606 = vrcp.pop %v605
    %v607 = vmul.f32 1.0, %v606
    %v608 = vtanh.pop %v601
    %v609 = vmul.f32 %v607, %v444
    %611 = vrot.lane.b32.xlu0 %v608, 32
    %v612 = vpop.permute.xlu0 %611
    %v614 = vmul.f32 %v607, %v612
    %616 = vrot.lane.b32.xlu0 %v614, 32
    %v617 = vpop.permute.xlu0 %616
    %v619 = vadd.f32 %v609, %v617
    %v620 = vtanh.pop %v619
    %622 = vrot.lane.b32.xlu0 %v620, 32
    %v623 = vpop.permute.xlu0 %622
    %v625 = vmul.f32 %v607, %v623
    %s626 = scalar_lea.vmem %s1, 6
    %v627 = vld [vmem:[%s626] sm:$0x3]
    %629 = vrot.lane.b32.xlu0 %v625, 64
    %v630 = vpop.permute.xlu0 %629
    %v631 = vsel %vm98, %v630, 0
    %633 = vmatprep.subr.mxu0 0.0
    %634 = vmatpush1.msra.mxu0 %v88
    %635 = vmatprep.subr.mxu0 0.0
    %636 = vmatpush1.msra.mxu0 %v89
    %637 = vmatprep.subr.mxu0 0.0
    %638 = vmatpush1.msra.mxu0 %v90
    %639 = vmatprep.subr.mxu0 0.0
    %640 = vmatpush1.msra.mxu0 %v91
    %641 = vmatprep.subr.mxu0 0.0
    %642 = vmatpush1.msra.mxu0 0.0
    %643 = vmatprep.subr.mxu0 0.0
    %644 = vmatpush1.msra.mxu0 0.0
    %645 = vmatprep.subr.mxu0 0.0
    %646 = vmatpush1.msra.mxu0 0.0
    %647 = vmatprep.subr.mxu0 0.0
    %648 = vmatpush1.msra.mxu0 0.0
    %649 = vmatprep.subr.mxu0 0.0
    %650 = vmatpush1.msra.mxu0 0.0
    %651 = vmatprep.subr.mxu0 0.0
    %652 = vmatpush1.msra.mxu0 0.0
    %653 = vmatprep.subr.mxu0 0.0
    %654 = vmatpush1.msra.mxu0 0.0
    %655 = vmatprep.subr.mxu0 0.0
    %656 = vmatpush1.msra.mxu0 0.0
    %657 = vmatprep.subr.mxu0 0.0
    %658 = vmatpush1.msra.mxu0 0.0
    %659 = vmatprep.subr.mxu0 0.0
    %660 = vmatpush1.msra.mxu0 0.0
    %661 = vmatprep.subr.mxu0 0.0
    %662 = vmatpush1.msra.mxu0 0.0
    %663 = vmatprep.subr.mxu0 0.0
    %664 = vmatpush1.msra.mxu0 0.0
    %665 = vmatprep.subr.mxu0 0.0
    %666 = vmatpush1.msra.mxu0 0.0
    %667 = vmatprep.subr.mxu0 0.0
    %668 = vmatpush1.msra.mxu0 0.0
    %669 = vmatprep.subr.mxu0 0.0
    %670 = vmatpush1.msra.mxu0 0.0
    %671 = vmatprep.subr.mxu0 0.0
    %672 = vmatpush1.msra.mxu0 0.0
    %673 = vmatprep.subr.mxu0 0.0
    %674 = vmatpush1.msra.mxu0 0.0
    %675 = vmatprep.subr.mxu0 0.0
    %676 = vmatpush1.msra.mxu0 0.0
    %677 = vmatprep.subr.mxu0 0.0
    %678 = vmatpush1.msra.mxu0 0.0
    %679 = vmatprep.subr.mxu0 0.0
    %680 = vmatpush1.msra.mxu0 0.0
    %681 = vmatprep.subr.mxu0 0.0
    %682 = vmatpush1.msra.mxu0 0.0
    %683 = vmatprep.subr.mxu0 0.0
    %684 = vmatpush1.msra.mxu0 0.0
    %685 = vmatprep.subr.mxu0 0.0
    %686 = vmatpush1.msra.mxu0 0.0
    %687 = vmatprep.subr.mxu0 0.0
    %688 = vmatpush1.msra.mxu0 0.0
    %689 = vmatprep.subr.mxu0 0.0
    %690 = vmatpush1.msra.mxu0 0.0
    %691 = vmatprep.subr.mxu0 0.0
    %692 = vmatpush1.msra.mxu0 0.0
    %693 = vmatprep.subr.mxu0 0.0
    %694 = vmatpush1.msra.mxu0 0.0
    %695 = vmatprep.subr.mxu0 0.0
    %696 = vmatpush1.msra.mxu0 0.0
    %697 = vmatprep.mubr.f32.mxu0 0.0
    %698 = vmatmul.mubr.f32.gmra.mrb[0].mxu0 %v631
    %v699 = vpop.f32.mrb[0].mxu0
    %v700 = vadd.f32 0.0, %v699
    %v701 = vpop.f32.mrb[0].mxu0
    %702 = vdwg.mxu0
    %v704 = vsel %vm98, %v627, 0
    %706 = vmatprep.subr.mxu0 0.0
    %707 = vmatpush1.msra.mxu0 %v84
    %708 = vmatprep.subr.mxu0 0.0
    %709 = vmatpush1.msra.mxu0 %v85
    %710 = vmatprep.subr.mxu0 0.0
    %711 = vmatpush1.msra.mxu0 %v86
    %712 = vmatprep.subr.mxu0 0.0
    %713 = vmatpush1.msra.mxu0 %v87
    %714 = vmatprep.subr.mxu0 0.0
    %715 = vmatpush1.msra.mxu0 0.0
    %716 = vmatprep.subr.mxu0 0.0
    %717 = vmatpush1.msra.mxu0 0.0
    %718 = vmatprep.subr.mxu0 0.0
    %719 = vmatpush1.msra.mxu0 0.0
    %720 = vmatprep.subr.mxu0 0.0
    %721 = vmatpush1.msra.mxu0 0.0
    %722 = vmatprep.subr.mxu0 0.0
    %723 = vmatpush1.msra.mxu0 0.0
    %724 = vmatprep.subr.mxu0 0.0
    %725 = vmatpush1.msra.mxu0 0.0
    %726 = vmatprep.subr.mxu0 0.0
    %727 = vmatpush1.msra.mxu0 0.0
    %728 = vmatprep.subr.mxu0 0.0
    %729 = vmatpush1.msra.mxu0 0.0
    %730 = vmatprep.subr.mxu0 0.0
    %731 = vmatpush1.msra.mxu0 0.0
    %732 = vmatprep.subr.mxu0 0.0
    %733 = vmatpush1.msra.mxu0 0.0
    %734 = vmatprep.subr.mxu0 0.0
    %735 = vmatpush1.msra.mxu0 0.0
    %736 = vmatprep.subr.mxu0 0.0
    %737 = vmatpush1.msra.mxu0 0.0
    %738 = vmatprep.subr.mxu0 0.0
    %739 = vmatpush1.msra.mxu0 0.0
    %740 = vmatprep.subr.mxu0 0.0
    %741 = vmatpush1.msra.mxu0 0.0
    %742 = vmatprep.subr.mxu0 0.0
    %743 = vmatpush1.msra.mxu0 0.0
    %744 = vmatprep.subr.mxu0 0.0
    %745 = vmatpush1.msra.mxu0 0.0
    %746 = vmatprep.subr.mxu0 0.0
    %747 = vmatpush1.msra.mxu0 0.0
    %748 = vmatprep.subr.mxu0 0.0
    %749 = vmatpush1.msra.mxu0 0.0
    %750 = vmatprep.subr.mxu0 0.0
    %751 = vmatpush1.msra.mxu0 0.0
    %752 = vmatprep.subr.mxu0 0.0
    %753 = vmatpush1.msra.mxu0 0.0
    %754 = vmatprep.subr.mxu0 0.0
    %755 = vmatpush1.msra.mxu0 0.0
    %756 = vmatprep.subr.mxu0 0.0
    %757 = vmatpush1.msra.mxu0 0.0
    %758 = vmatprep.subr.mxu0 0.0
    %759 = vmatpush1.msra.mxu0 0.0
    %760 = vmatprep.subr.mxu0 0.0
    %761 = vmatpush1.msra.mxu0 0.0
    %762 = vmatprep.subr.mxu0 0.0
    %763 = vmatpush1.msra.mxu0 0.0
    %764 = vmatprep.subr.mxu0 0.0
    %765 = vmatpush1.msra.mxu0 0.0
    %766 = vmatprep.subr.mxu0 0.0
    %767 = vmatpush1.msra.mxu0 0.0
    %768 = vmatprep.subr.mxu0 0.0
    %769 = vmatpush1.msra.mxu0 0.0
    %770 = vmatprep.mubr.f32.mxu0 0.0
    %771 = vmatmul.mubr.f32.gmra.mrb[0].mxu0 %v704
    %v772 = vpop.f32.mrb[0].mxu0
    %v773 = vadd.f32 %v700, %v772
    %v774 = vpop.f32.mrb[0].mxu0
    %775 = vdwg.mxu0
    %v776 = vadd.f32 %v773, %v249
    %v777 = vxor.u32 %v776, 2147483648
    %v778 = vmul.f32 %v777, 1.442695
    %v779 = vpow.pop %v778
    %v780 = vadd.f32 %v779, 1.0
    %v781 = vrcp.pop %v780
    %v782 = vmul.f32 1.0, %v781
    %v783 = vtanh.pop %v776
    %v784 = vmul.f32 %v782, %v619
    %786 = vrot.lane.b32.xlu0 %v783, 32
    %v787 = vpop.permute.xlu0 %786
    %v789 = vmul.f32 %v782, %v787
    %791 = vrot.lane.b32.xlu0 %v789, 32
    %v792 = vpop.permute.xlu0 %791
    %v794 = vadd.f32 %v784, %v792
    %v795 = vtanh.pop %v794
    %797 = vrot.lane.b32.xlu0 %v795, 32
    %v798 = vpop.permute.xlu0 %797
    %v800 = vmul.f32 %v782, %v798
    %s801 = scalar_lea.vmem %s1, 8
    %v802 = vld [vmem:[%s801] sm:$0x3]
    %804 = vrot.lane.b32.xlu0 %v800, 64
    %v805 = vpop.permute.xlu0 %804
    %v806 = vsel %vm98, %v805, 0
    %808 = vmatprep.subr.mxu0 0.0
    %809 = vmatpush1.msra.mxu0 %v88
    %810 = vmatprep.subr.mxu0 0.0
    %811 = vmatpush1.msra.mxu0 %v89
    %812 = vmatprep.subr.mxu0 0.0
    %813 = vmatpush1.msra.mxu0 %v90
    %814 = vmatprep.subr.mxu0 0.0
    %815 = vmatpush1.msra.mxu0 %v91
    %816 = vmatprep.subr.mxu0 0.0
    %817 = vmatpush1.msra.mxu0 0.0
    %818 = vmatprep.subr.mxu0 0.0
    %819 = vmatpush1.msra.mxu0 0.0
    %820 = vmatprep.subr.mxu0 0.0
    %821 = vmatpush1.msra.mxu0 0.0
    %822 = vmatprep.subr.mxu0 0.0
    %823 = vmatpush1.msra.mxu0 0.0
    %824 = vmatprep.subr.mxu0 0.0
    %825 = vmatpush1.msra.mxu0 0.0
    %826 = vmatprep.subr.mxu0 0.0
    %827 = vmatpush1.msra.mxu0 0.0
    %828 = vmatprep.subr.mxu0 0.0
    %829 = vmatpush1.msra.mxu0 0.0
    %830 = vmatprep.subr.mxu0 0.0
    %831 = vmatpush1.msra.mxu0 0.0
    %832 = vmatprep.subr.mxu0 0.0
    %833 = vmatpush1.msra.mxu0 0.0
    %834 = vmatprep.subr.mxu0 0.0
    %835 = vmatpush1.msra.mxu0 0.0
    %836 = vmatprep.subr.mxu0 0.0
    %837 = vmatpush1.msra.mxu0 0.0
    %838 = vmatprep.subr.mxu0 0.0
    %839 = vmatpush1.msra.mxu0 0.0
    %840 = vmatprep.subr.mxu0 0.0
    %841 = vmatpush1.msra.mxu0 0.0
    %842 = vmatprep.subr.mxu0 0.0
    %843 = vmatpush1.msra.mxu0 0.0
    %844 = vmatprep.subr.mxu0 0.0
    %845 = vmatpush1.msra.mxu0 0.0
    %846 = vmatprep.subr.mxu0 0.0
    %847 = vmatpush1.msra.mxu0 0.0
    %848 = vmatprep.subr.mxu0 0.0
    %849 = vmatpush1.msra.mxu0 0.0
    %850 = vmatprep.subr.mxu0 0.0
    %851 = vmatpush1.msra.mxu0 0.0
    %852 = vmatprep.subr.mxu0 0.0
    %853 = vmatpush1.msra.mxu0 0.0
    %854 = vmatprep.subr.mxu0 0.0
    %855 = vmatpush1.msra.mxu0 0.0
    %856 = vmatprep.subr.mxu0 0.0
    %857 = vmatpush1.msra.mxu0 0.0
    %858 = vmatprep.subr.mxu0 0.0
    %859 = vmatpush1.msra.mxu0 0.0
    %860 = vmatprep.subr.mxu0 0.0
    %861 = vmatpush1.msra.mxu0 0.0
    %862 = vmatprep.subr.mxu0 0.0
    %863 = vmatpush1.msra.mxu0 0.0
    %864 = vmatprep.subr.mxu0 0.0
    %865 = vmatpush1.msra.mxu0 0.0
    %866 = vmatprep.subr.mxu0 0.0
    %867 = vmatpush1.msra.mxu0 0.0
    %868 = vmatprep.subr.mxu0 0.0
    %869 = vmatpush1.msra.mxu0 0.0
    %870 = vmatprep.subr.mxu0 0.0
    %871 = vmatpush1.msra.mxu0 0.0
    %872 = vmatprep.mubr.f32.mxu0 0.0
    %873 = vmatmul.mubr.f32.gmra.mrb[0].mxu0 %v806
    %v874 = vpop.f32.mrb[0].mxu0
    %v875 = vadd.f32 0.0, %v874
    %v876 = vpop.f32.mrb[0].mxu0
    %877 = vdwg.mxu0
    %v879 = vsel %vm98, %v802, 0
    %881 = vmatprep.subr.mxu0 0.0
    %882 = vmatpush1.msra.mxu0 %v84
    %883 = vmatprep.subr.mxu0 0.0
    %884 = vmatpush1.msra.mxu0 %v85
    %885 = vmatprep.subr.mxu0 0.0
    %886 = vmatpush1.msra.mxu0 %v86
    %887 = vmatprep.subr.mxu0 0.0
    %888 = vmatpush1.msra.mxu0 %v87
    %889 = vmatprep.subr.mxu0 0.0
    %890 = vmatpush1.msra.mxu0 0.0
    %891 = vmatprep.subr.mxu0 0.0
    %892 = vmatpush1.msra.mxu0 0.0
    %893 = vmatprep.subr.mxu0 0.0
    %894 = vmatpush1.msra.mxu0 0.0
    %895 = vmatprep.subr.mxu0 0.0
    %896 = vmatpush1.msra.mxu0 0.0
    %897 = vmatprep.subr.mxu0 0.0
    %898 = vmatpush1.msra.mxu0 0.0
    %899 = vmatprep.subr.mxu0 0.0
    %900 = vmatpush1.msra.mxu0 0.0
    %901 = vmatprep.subr.mxu0 0.0
    %902 = vmatpush1.msra.mxu0 0.0
    %903 = vmatprep.subr.mxu0 0.0
    %904 = vmatpush1.msra.mxu0 0.0
    %905 = vmatprep.subr.mxu0 0.0
    %906 = vmatpush1.msra.mxu0 0.0
    %907 = vmatprep.subr.mxu0 0.0
    %908 = vmatpush1.msra.mxu0 0.0
    %909 = vmatprep.subr.mxu0 0.0
    %910 = vmatpush1.msra.mxu0 0.0
    %911 = vmatprep.subr.mxu0 0.0
    %912 = vmatpush1.msra.mxu0 0.0
    %913 = vmatprep.subr.mxu0 0.0
    %914 = vmatpush1.msra.mxu0 0.0
    %915 = vmatprep.subr.mxu0 0.0
    %916 = vmatpush1.msra.mxu0 0.0
    %917 = vmatprep.subr.mxu0 0.0
    %918 = vmatpush1.msra.mxu0 0.0
    %919 = vmatprep.subr.mxu0 0.0
    %920 = vmatpush1.msra.mxu0 0.0
    %921 = vmatprep.subr.mxu0 0.0
    %922 = vmatpush1.msra.mxu0 0.0
    %923 = vmatprep.subr.mxu0 0.0
    %924 = vmatpush1.msra.mxu0 0.0
    %925 = vmatprep.subr.mxu0 0.0
    %926 = vmatpush1.msra.mxu0 0.0
    %927 = vmatprep.subr.mxu0 0.0
    %928 = vmatpush1.msra.mxu0 0.0
    %929 = vmatprep.subr.mxu0 0.0
    %930 = vmatpush1.msra.mxu0 0.0
    %931 = vmatprep.subr.mxu0 0.0
    %932 = vmatpush1.msra.mxu0 0.0
    %933 = vmatprep.subr.mxu0 0.0
    %934 = vmatpush1.msra.mxu0 0.0
    %935 = vmatprep.subr.mxu0 0.0
    %936 = vmatpush1.msra.mxu0 0.0
    %937 = vmatprep.subr.mxu0 0.0
    %938 = vmatpush1.msra.mxu0 0.0
    %939 = vmatprep.subr.mxu0 0.0
    %940 = vmatpush1.msra.mxu0 0.0
    %941 = vmatprep.subr.mxu0 0.0
    %942 = vmatpush1.msra.mxu0 0.0
    %943 = vmatprep.subr.mxu0 0.0
    %944 = vmatpush1.msra.mxu0 0.0
    %945 = vmatprep.mubr.f32.mxu0 0.0
    %946 = vmatmul.mubr.f32.gmra.mrb[0].mxu0 %v879
    %v947 = vpop.f32.mrb[0].mxu0
    %v948 = vadd.f32 %v875, %v947
    %v949 = vpop.f32.mrb[0].mxu0
    %950 = vdwg.mxu0
    %v951 = vadd.f32 %v948, %v249
    %v952 = vxor.u32 %v951, 2147483648
    %v953 = vmul.f32 %v952, 1.442695
    %v954 = vpow.pop %v953
    %v955 = vadd.f32 %v954, 1.0
    %v956 = vrcp.pop %v955
    %v957 = vmul.f32 1.0, %v956
    %v958 = vtanh.pop %v951
    %v959 = vmul.f32 %v957, %v794
    %961 = vrot.lane.b32.xlu0 %v958, 32
    %v962 = vpop.permute.xlu0 %961
    %v964 = vmul.f32 %v957, %v962
    %966 = vrot.lane.b32.xlu0 %v964, 32
    %v967 = vpop.permute.xlu0 %966
    %v969 = vadd.f32 %v959, %v967
    %v970 = vtanh.pop %v969
    %972 = vrot.lane.b32.xlu0 %v970, 32
    %v973 = vpop.permute.xlu0 %972
    %v975 = vmul.f32 %v957, %v973
    %s976 = scalar_lea.vmem %s1, 10
    %v977 = vld [vmem:[%s976] sm:$0x3]
    %979 = vrot.lane.b32.xlu0 %v975, 64
    %v980 = vpop.permute.xlu0 %979
    %v981 = vsel %vm98, %v980, 0
    %983 = vmatprep.subr.mxu0 0.0
    %984 = vmatpush1.msra.mxu0 %v88
    %985 = vmatprep.subr.mxu0 0.0
    %986 = vmatpush1.msra.mxu0 %v89
    %987 = vmatprep.subr.mxu0 0.0
    %988 = vmatpush1.msra.mxu0 %v90
    %989 = vmatprep.subr.mxu0 0.0
    %990 = vmatpush1.msra.mxu0 %v91
    %991 = vmatprep.subr.mxu0 0.0
    %992 = vmatpush1.msra.mxu0 0.0
    %993 = vmatprep.subr.mxu0 0.0
    %994 = vmatpush1.msra.mxu0 0.0
    %995 = vmatprep.subr.mxu0 0.0
    %996 = vmatpush1.msra.mxu0 0.0
    %997 = vmatprep.subr.mxu0 0.0
    %998 = vmatpush1.msra.mxu0 0.0
    %999 = vmatprep.subr.mxu0 0.0
    %1000 = vmatpush1.msra.mxu0 0.0
    %1001 = vmatprep.subr.mxu0 0.0
    %1002 = vmatpush1.msra.mxu0 0.0
    %1003 = vmatprep.subr.mxu0 0.0
    %1004 = vmatpush1.msra.mxu0 0.0
    %1005 = vmatprep.subr.mxu0 0.0
    %1006 = vmatpush1.msra.mxu0 0.0
    %1007 = vmatprep.subr.mxu0 0.0
    %1008 = vmatpush1.msra.mxu0 0.0
    %1009 = vmatprep.subr.mxu0 0.0
    %1010 = vmatpush1.msra.mxu0 0.0
    %1011 = vmatprep.subr.mxu0 0.0
    %1012 = vmatpush1.msra.mxu0 0.0
    %1013 = vmatprep.subr.mxu0 0.0
    %1014 = vmatpush1.msra.mxu0 0.0
    %1015 = vmatprep.subr.mxu0 0.0
    %1016 = vmatpush1.msra.mxu0 0.0
    %1017 = vmatprep.subr.mxu0 0.0
    %1018 = vmatpush1.msra.mxu0 0.0
    %1019 = vmatprep.subr.mxu0 0.0
    %1020 = vmatpush1.msra.mxu0 0.0
    %1021 = vmatprep.subr.mxu0 0.0
    %1022 = vmatpush1.msra.mxu0 0.0
    %1023 = vmatprep.subr.mxu0 0.0
    %1024 = vmatpush1.msra.mxu0 0.0
    %1025 = vmatprep.subr.mxu0 0.0
    %1026 = vmatpush1.msra.mxu0 0.0
    %1027 = vmatprep.subr.mxu0 0.0
    %1028 = vmatpush1.msra.mxu0 0.0
    %1029 = vmatprep.subr.mxu0 0.0
    %1030 = vmatpush1.msra.mxu0 0.0
    %1031 = vmatprep.subr.mxu0 0.0
    %1032 = vmatpush1.msra.mxu0 0.0
    %1033 = vmatprep.subr.mxu0 0.0
    %1034 = vmatpush1.msra.mxu0 0.0
    %1035 = vmatprep.subr.mxu0 0.0
    %1036 = vmatpush1.msra.mxu0 0.0
    %1037 = vmatprep.subr.mxu0 0.0
    %1038 = vmatpush1.msra.mxu0 0.0
    %1039 = vmatprep.subr.mxu0 0.0
    %1040 = vmatpush1.msra.mxu0 0.0
    %1041 = vmatprep.subr.mxu0 0.0
    %1042 = vmatpush1.msra.mxu0 0.0
    %1043 = vmatprep.subr.mxu0 0.0
    %1044 = vmatpush1.msra.mxu0 0.0
    %1045 = vmatprep.subr.mxu0 0.0
    %1046 = vmatpush1.msra.mxu0 0.0
    %1047 = vmatprep.mubr.f32.mxu0 0.0
    %1048 = vmatmul.mubr.f32.gmra.mrb[0].mxu0 %v981
    %v1049 = vpop.f32.mrb[0].mxu0
    %v1050 = vadd.f32 0.0, %v1049
    %v1051 = vpop.f32.mrb[0].mxu0
    %1052 = vdwg.mxu0
    %v1054 = vsel %vm98, %v977, 0
    %1056 = vmatprep.subr.mxu0 0.0
    %1057 = vmatpush1.msra.mxu0 %v84
    %1058 = vmatprep.subr.mxu0 0.0
    %1059 = vmatpush1.msra.mxu0 %v85
    %1060 = vmatprep.subr.mxu0 0.0
    %1061 = vmatpush1.msra.mxu0 %v86
    %1062 = vmatprep.subr.mxu0 0.0
    %1063 = vmatpush1.msra.mxu0 %v87
    %1064 = vmatprep.subr.mxu0 0.0
    %1065 = vmatpush1.msra.mxu0 0.0
    %1066 = vmatprep.subr.mxu0 0.0
    %1067 = vmatpush1.msra.mxu0 0.0
    %1068 = vmatprep.subr.mxu0 0.0
    %1069 = vmatpush1.msra.mxu0 0.0
    %1070 = vmatprep.subr.mxu0 0.0
    %1071 = vmatpush1.msra.mxu0 0.0
    %1072 = vmatprep.subr.mxu0 0.0
    %1073 = vmatpush1.msra.mxu0 0.0
    %1074 = vmatprep.subr.mxu0 0.0
    %1075 = vmatpush1.msra.mxu0 0.0
    %1076 = vmatprep.subr.mxu0 0.0
    %1077 = vmatpush1.msra.mxu0 0.0
    %1078 = vmatprep.subr.mxu0 0.0
    %1079 = vmatpush1.msra.mxu0 0.0
    %1080 = vmatprep.subr.mxu0 0.0
    %1081 = vmatpush1.msra.mxu0 0.0
    %1082 = vmatprep.subr.mxu0 0.0
    %1083 = vmatpush1.msra.mxu0 0.0
    %1084 = vmatprep.subr.mxu0 0.0
    %1085 = vmatpush1.msra.mxu0 0.0
    %1086 = vmatprep.subr.mxu0 0.0
    %1087 = vmatpush1.msra.mxu0 0.0
    %1088 = vmatprep.subr.mxu0 0.0
    %1089 = vmatpush1.msra.mxu0 0.0
    %1090 = vmatprep.subr.mxu0 0.0
    %1091 = vmatpush1.msra.mxu0 0.0
    %1092 = vmatprep.subr.mxu0 0.0
    %1093 = vmatpush1.msra.mxu0 0.0
    %1094 = vmatprep.subr.mxu0 0.0
    %1095 = vmatpush1.msra.mxu0 0.0
    %1096 = vmatprep.subr.mxu0 0.0
    %1097 = vmatpush1.msra.mxu0 0.0
    %1098 = vmatprep.subr.mxu0 0.0
    %1099 = vmatpush1.msra.mxu0 0.0
    %1100 = vmatprep.subr.mxu0 0.0
    %1101 = vmatpush1.msra.mxu0 0.0
    %1102 = vmatprep.subr.mxu0 0.0
    %1103 = vmatpush1.msra.mxu0 0.0
    %1104 = vmatprep.subr.mxu0 0.0
    %1105 = vmatpush1.msra.mxu0 0.0
    %1106 = vmatprep.subr.mxu0 0.0
    %1107 = vmatpush1.msra.mxu0 0.0
    %1108 = vmatprep.subr.mxu0 0.0
    %1109 = vmatpush1.msra.mxu0 0.0
    %1110 = vmatprep.subr.mxu0 0.0
    %1111 = vmatpush1.msra.mxu0 0.0
    %1112 = vmatprep.subr.mxu0 0.0
    %1113 = vmatpush1.msra.mxu0 0.0
    %1114 = vmatprep.subr.mxu0 0.0
    %1115 = vmatpush1.msra.mxu0 0.0
    %1116 = vmatprep.subr.mxu0 0.0
    %1117 = vmatpush1.msra.mxu0 0.0
    %1118 = vmatprep.subr.mxu0 0.0
    %1119 = vmatpush1.msra.mxu0 0.0
    %1120 = vmatprep.mubr.f32.mxu0 0.0
    %1121 = vmatmul.mubr.f32.gmra.mrb[0].mxu0 %v1054
    %v1122 = vpop.f32.mrb[0].mxu0
    %v1123 = vadd.f32 %v1050, %v1122
    %v1124 = vpop.f32.mrb[0].mxu0
    %1125 = vdwg.mxu0
    %v1126 = vadd.f32 %v1123, %v249
    %v1127 = vxor.u32 %v1126, 2147483648
    %v1128 = vmul.f32 %v1127, 1.442695
    %v1129 = vpow.pop %v1128
    %v1130 = vadd.f32 %v1129, 1.0
    %v1131 = vrcp.pop %v1130
    %v1132 = vmul.f32 1.0, %v1131
    %v1133 = vtanh.pop %v1126
    %v1134 = vmul.f32 %v1132, %v969
    %1136 = vrot.lane.b32.xlu0 %v1133, 32
    %v1137 = vpop.permute.xlu0 %1136
    %v1139 = vmul.f32 %v1132, %v1137
    %1141 = vrot.lane.b32.xlu0 %v1139, 32
    %v1142 = vpop.permute.xlu0 %1141
    %v1144 = vadd.f32 %v1134, %v1142
    %v1145 = vtanh.pop %v1144
    %1147 = vrot.lane.b32.xlu0 %v1145, 32
    %v1148 = vpop.permute.xlu0 %1147
    %v1150 = vmul.f32 %v1132, %v1148
    %s1151 = scalar_lea.vmem %s1, 12
    %v1152 = vld [vmem:[%s1151] sm:$0x3]
    %1154 = vrot.lane.b32.xlu0 %v1150, 64
    %v1155 = vpop.permute.xlu0 %1154
    %v1156 = vsel %vm98, %v1155, 0
    %1158 = vmatprep.subr.mxu0 0.0
    %1159 = vmatpush1.msra.mxu0 %v88
    %1160 = vmatprep.subr.mxu0 0.0
    %1161 = vmatpush1.msra.mxu0 %v89
    %1162 = vmatprep.subr.mxu0 0.0
    %1163 = vmatpush1.msra.mxu0 %v90
    %1164 = vmatprep.subr.mxu0 0.0
    %1165 = vmatpush1.msra.mxu0 %v91
    %1166 = vmatprep.subr.mxu0 0.0
    %1167 = vmatpush1.msra.mxu0 0.0
    %1168 = vmatprep.subr.mxu0 0.0
    %1169 = vmatpush1.msra.mxu0 0.0
    %1170 = vmatprep.subr.mxu0 0.0
    %1171 = vmatpush1.msra.mxu0 0.0
    %1172 = vmatprep.subr.mxu0 0.0
    %1173 = vmatpush1.msra.mxu0 0.0
    %1174 = vmatprep.subr.mxu0 0.0
    %1175 = vmatpush1.msra.mxu0 0.0
    %1176 = vmatprep.subr.mxu0 0.0
    %1177 = vmatpush1.msra.mxu0 0.0
    %1178 = vmatprep.subr.mxu0 0.0
    %1179 = vmatpush1.msra.mxu0 0.0
    %1180 = vmatprep.subr.mxu0 0.0
    %1181 = vmatpush1.msra.mxu0 0.0
    %1182 = vmatprep.subr.mxu0 0.0
    %1183 = vmatpush1.msra.mxu0 0.0
    %1184 = vmatprep.subr.mxu0 0.0
    %1185 = vmatpush1.msra.mxu0 0.0
    %1186 = vmatprep.subr.mxu0 0.0
    %1187 = vmatpush1.msra.mxu0 0.0
    %1188 = vmatprep.subr.mxu0 0.0
    %1189 = vmatpush1.msra.mxu0 0.0
    %1190 = vmatprep.subr.mxu0 0.0
    %1191 = vmatpush1.msra.mxu0 0.0
    %1192 = vmatprep.subr.mxu0 0.0
    %1193 = vmatpush1.msra.mxu0 0.0
    %1194 = vmatprep.subr.mxu0 0.0
    %1195 = vmatpush1.msra.mxu0 0.0
    %1196 = vmatprep.subr.mxu0 0.0
    %1197 = vmatpush1.msra.mxu0 0.0
    %1198 = vmatprep.subr.mxu0 0.0
    %1199 = vmatpush1.msra.mxu0 0.0
    %1200 = vmatprep.subr.mxu0 0.0
    %1201 = vmatpush1.msra.mxu0 0.0
    %1202 = vmatprep.subr.mxu0 0.0
    %1203 = vmatpush1.msra.mxu0 0.0
    %1204 = vmatprep.subr.mxu0 0.0
    %1205 = vmatpush1.msra.mxu0 0.0
    %1206 = vmatprep.subr.mxu0 0.0
    %1207 = vmatpush1.msra.mxu0 0.0
    %1208 = vmatprep.subr.mxu0 0.0
    %1209 = vmatpush1.msra.mxu0 0.0
    %1210 = vmatprep.subr.mxu0 0.0
    %1211 = vmatpush1.msra.mxu0 0.0
    %1212 = vmatprep.subr.mxu0 0.0
    %1213 = vmatpush1.msra.mxu0 0.0
    %1214 = vmatprep.subr.mxu0 0.0
    %1215 = vmatpush1.msra.mxu0 0.0
    %1216 = vmatprep.subr.mxu0 0.0
    %1217 = vmatpush1.msra.mxu0 0.0
    %1218 = vmatprep.subr.mxu0 0.0
    %1219 = vmatpush1.msra.mxu0 0.0
    %1220 = vmatprep.subr.mxu0 0.0
    %1221 = vmatpush1.msra.mxu0 0.0
    %1222 = vmatprep.mubr.f32.mxu0 0.0
    %1223 = vmatmul.mubr.f32.gmra.mrb[0].mxu0 %v1156
    %v1224 = vpop.f32.mrb[0].mxu0
    %v1225 = vadd.f32 0.0, %v1224
    %v1226 = vpop.f32.mrb[0].mxu0
    %1227 = vdwg.mxu0
    %v1229 = vsel %vm98, %v1152, 0
    %1231 = vmatprep.subr.mxu0 0.0
    %1232 = vmatpush1.msra.mxu0 %v84
    %1233 = vmatprep.subr.mxu0 0.0
    %1234 = vmatpush1.msra.mxu0 %v85
    %1235 = vmatprep.subr.mxu0 0.0
    %1236 = vmatpush1.msra.mxu0 %v86
    %1237 = vmatprep.subr.mxu0 0.0
    %1238 = vmatpush1.msra.mxu0 %v87
    %1239 = vmatprep.subr.mxu0 0.0
    %1240 = vmatpush1.msra.mxu0 0.0
    %1241 = vmatprep.subr.mxu0 0.0
    %1242 = vmatpush1.msra.mxu0 0.0
    %1243 = vmatprep.subr.mxu0 0.0
    %1244 = vmatpush1.msra.mxu0 0.0
    %1245 = vmatprep.subr.mxu0 0.0
    %1246 = vmatpush1.msra.mxu0 0.0
    %1247 = vmatprep.subr.mxu0 0.0
    %1248 = vmatpush1.msra.mxu0 0.0
    %1249 = vmatprep.subr.mxu0 0.0
    %1250 = vmatpush1.msra.mxu0 0.0
    %1251 = vmatprep.subr.mxu0 0.0
    %1252 = vmatpush1.msra.mxu0 0.0
    %1253 = vmatprep.subr.mxu0 0.0
    %1254 = vmatpush1.msra.mxu0 0.0
    %1255 = vmatprep.subr.mxu0 0.0
    %1256 = vmatpush1.msra.mxu0 0.0
    %1257 = vmatprep.subr.mxu0 0.0
    %1258 = vmatpush1.msra.mxu0 0.0
    %1259 = vmatprep.subr.mxu0 0.0
    %1260 = vmatpush1.msra.mxu0 0.0
    %1261 = vmatprep.subr.mxu0 0.0
    %1262 = vmatpush1.msra.mxu0 0.0
    %1263 = vmatprep.subr.mxu0 0.0
    %1264 = vmatpush1.msra.mxu0 0.0
    %1265 = vmatprep.subr.mxu0 0.0
    %1266 = vmatpush1.msra.mxu0 0.0
    %1267 = vmatprep.subr.mxu0 0.0
    %1268 = vmatpush1.msra.mxu0 0.0
    %1269 = vmatprep.subr.mxu0 0.0
    %1270 = vmatpush1.msra.mxu0 0.0
    %1271 = vmatprep.subr.mxu0 0.0
    %1272 = vmatpush1.msra.mxu0 0.0
    %1273 = vmatprep.subr.mxu0 0.0
    %1274 = vmatpush1.msra.mxu0 0.0
    %1275 = vmatprep.subr.mxu0 0.0
    %1276 = vmatpush1.msra.mxu0 0.0
    %1277 = vmatprep.subr.mxu0 0.0
    %1278 = vmatpush1.msra.mxu0 0.0
    %1279 = vmatprep.subr.mxu0 0.0
    %1280 = vmatpush1.msra.mxu0 0.0
    %1281 = vmatprep.subr.mxu0 0.0
    %1282 = vmatpush1.msra.mxu0 0.0
    %1283 = vmatprep.subr.mxu0 0.0
    %1284 = vmatpush1.msra.mxu0 0.0
    %1285 = vmatprep.subr.mxu0 0.0
    %1286 = vmatpush1.msra.mxu0 0.0
    %1287 = vmatprep.subr.mxu0 0.0
    %1288 = vmatpush1.msra.mxu0 0.0
    %1289 = vmatprep.subr.mxu0 0.0
    %1290 = vmatpush1.msra.mxu0 0.0
    %1291 = vmatprep.subr.mxu0 0.0
    %1292 = vmatpush1.msra.mxu0 0.0
    %1293 = vmatprep.subr.mxu0 0.0
    %1294 = vmatpush1.msra.mxu0 0.0
    %1295 = vmatprep.mubr.f32.mxu0 0.0
    %1296 = vmatmul.mubr.f32.gmra.mrb[0].mxu0 %v1229
    %v1297 = vpop.f32.mrb[0].mxu0
    %v1298 = vadd.f32 %v1225, %v1297
    %v1299 = vpop.f32.mrb[0].mxu0
    %1300 = vdwg.mxu0
    %v1301 = vadd.f32 %v1298, %v249
    %v1302 = vxor.u32 %v1301, 2147483648
    %v1303 = vmul.f32 %v1302, 1.442695
    %v1304 = vpow.pop %v1303
    %v1305 = vadd.f32 %v1304, 1.0
    %v1306 = vrcp.pop %v1305
    %v1307 = vmul.f32 1.0, %v1306
    %v1308 = vtanh.pop %v1301
    %v1309 = vmul.f32 %v1307, %v1144
    %1311 = vrot.lane.b32.xlu0 %v1308, 32
    %v1312 = vpop.permute.xlu0 %1311
    %v1314 = vmul.f32 %v1307, %v1312
    %1316 = vrot.lane.b32.xlu0 %v1314, 32
    %v1317 = vpop.permute.xlu0 %1316
    %v1319 = vadd.f32 %v1309, %v1317
    %v1320 = vtanh.pop %v1319
    %1322 = vrot.lane.b32.xlu0 %v1320, 32
    %v1323 = vpop.permute.xlu0 %1322
    %v1325 = vmul.f32 %v1307, %v1323
    %s1326 = scalar_lea.vmem %s1, 14
    %v1327 = vld [vmem:[%s1326] sm:$0x3]
    %1329 = vrot.lane.b32.xlu0 %v1325, 64
    %v1330 = vpop.permute.xlu0 %1329
    %v1331 = vsel %vm98, %v1330, 0
    %1333 = vmatprep.subr.mxu0 0.0
    %1334 = vmatpush1.msra.mxu0 %v88
    %1335 = vmatprep.subr.mxu0 0.0
    %1336 = vmatpush1.msra.mxu0 %v89
    %1337 = vmatprep.subr.mxu0 0.0
    %1338 = vmatpush1.msra.mxu0 %v90
    %1339 = vmatprep.subr.mxu0 0.0
    %1340 = vmatpush1.msra.mxu0 %v91
    %1341 = vmatprep.subr.mxu0 0.0
    %1342 = vmatpush1.msra.mxu0 0.0
    %1343 = vmatprep.subr.mxu0 0.0
    %1344 = vmatpush1.msra.mxu0 0.0
    %1345 = vmatprep.subr.mxu0 0.0
    %1346 = vmatpush1.msra.mxu0 0.0
    %1347 = vmatprep.subr.mxu0 0.0
    %1348 = vmatpush1.msra.mxu0 0.0
    %1349 = vmatprep.subr.mxu0 0.0
    %1350 = vmatpush1.msra.mxu0 0.0
    %1351 = vmatprep.subr.mxu0 0.0
    %1352 = vmatpush1.msra.mxu0 0.0
    %1353 = vmatprep.subr.mxu0 0.0
    %1354 = vmatpush1.msra.mxu0 0.0
    %1355 = vmatprep.subr.mxu0 0.0
    %1356 = vmatpush1.msra.mxu0 0.0
    %1357 = vmatprep.subr.mxu0 0.0
    %1358 = vmatpush1.msra.mxu0 0.0
    %1359 = vmatprep.subr.mxu0 0.0
    %1360 = vmatpush1.msra.mxu0 0.0
    %1361 = vmatprep.subr.mxu0 0.0
    %1362 = vmatpush1.msra.mxu0 0.0
    %1363 = vmatprep.subr.mxu0 0.0
    %1364 = vmatpush1.msra.mxu0 0.0
    %1365 = vmatprep.subr.mxu0 0.0
    %1366 = vmatpush1.msra.mxu0 0.0
    %1367 = vmatprep.subr.mxu0 0.0
    %1368 = vmatpush1.msra.mxu0 0.0
    %1369 = vmatprep.subr.mxu0 0.0
    %1370 = vmatpush1.msra.mxu0 0.0
    %1371 = vmatprep.subr.mxu0 0.0
    %1372 = vmatpush1.msra.mxu0 0.0
    %1373 = vmatprep.subr.mxu0 0.0
    %1374 = vmatpush1.msra.mxu0 0.0
    %1375 = vmatprep.subr.mxu0 0.0
    %1376 = vmatpush1.msra.mxu0 0.0
    %1377 = vmatprep.subr.mxu0 0.0
    %1378 = vmatpush1.msra.mxu0 0.0
    %1379 = vmatprep.subr.mxu0 0.0
    %1380 = vmatpush1.msra.mxu0 0.0
    %1381 = vmatprep.subr.mxu0 0.0
    %1382 = vmatpush1.msra.mxu0 0.0
    %1383 = vmatprep.subr.mxu0 0.0
    %1384 = vmatpush1.msra.mxu0 0.0
    %1385 = vmatprep.subr.mxu0 0.0
    %1386 = vmatpush1.msra.mxu0 0.0
    %1387 = vmatprep.subr.mxu0 0.0
    %1388 = vmatpush1.msra.mxu0 0.0
    %1389 = vmatprep.subr.mxu0 0.0
    %1390 = vmatpush1.msra.mxu0 0.0
    %1391 = vmatprep.subr.mxu0 0.0
    %1392 = vmatpush1.msra.mxu0 0.0
    %1393 = vmatprep.subr.mxu0 0.0
    %1394 = vmatpush1.msra.mxu0 0.0
    %1395 = vmatprep.subr.mxu0 0.0
    %1396 = vmatpush1.msra.mxu0 0.0
    %1397 = vmatprep.mubr.f32.mxu0 0.0
    %1398 = vmatmul.mubr.f32.gmra.mrb[0].mxu0 %v1331
    %v1399 = vpop.f32.mrb[0].mxu0
    %v1400 = vadd.f32 0.0, %v1399
    %v1401 = vpop.f32.mrb[0].mxu0
    %1402 = vdwg.mxu0
    %v1404 = vsel %vm98, %v1327, 0
    %1406 = vmatprep.subr.mxu0 0.0
    %1407 = vmatpush1.msra.mxu0 %v84
    %1408 = vmatprep.subr.mxu0 0.0
    %1409 = vmatpush1.msra.mxu0 %v85
    %1410 = vmatprep.subr.mxu0 0.0
    %1411 = vmatpush1.msra.mxu0 %v86
    %1412 = vmatprep.subr.mxu0 0.0
    %1413 = vmatpush1.msra.mxu0 %v87
    %1414 = vmatprep.subr.mxu0 0.0
    %1415 = vmatpush1.msra.mxu0 0.0
    %1416 = vmatprep.subr.mxu0 0.0
    %1417 = vmatpush1.msra.mxu0 0.0
    %1418 = vmatprep.subr.mxu0 0.0
    %1419 = vmatpush1.msra.mxu0 0.0
    %1420 = vmatprep.subr.mxu0 0.0
    %1421 = vmatpush1.msra.mxu0 0.0
    %1422 = vmatprep.subr.mxu0 0.0
    %1423 = vmatpush1.msra.mxu0 0.0
    %1424 = vmatprep.subr.mxu0 0.0
    %1425 = vmatpush1.msra.mxu0 0.0
    %1426 = vmatprep.subr.mxu0 0.0
    %1427 = vmatpush1.msra.mxu0 0.0
    %1428 = vmatprep.subr.mxu0 0.0
    %1429 = vmatpush1.msra.mxu0 0.0
    %1430 = vmatprep.subr.mxu0 0.0
    %1431 = vmatpush1.msra.mxu0 0.0
    %1432 = vmatprep.subr.mxu0 0.0
    %1433 = vmatpush1.msra.mxu0 0.0
    %1434 = vmatprep.subr.mxu0 0.0
    %1435 = vmatpush1.msra.mxu0 0.0
    %1436 = vmatprep.subr.mxu0 0.0
    %1437 = vmatpush1.msra.mxu0 0.0
    %1438 = vmatprep.subr.mxu0 0.0
    %1439 = vmatpush1.msra.mxu0 0.0
    %1440 = vmatprep.subr.mxu0 0.0
    %1441 = vmatpush1.msra.mxu0 0.0
    %1442 = vmatprep.subr.mxu0 0.0
    %1443 = vmatpush1.msra.mxu0 0.0
    %1444 = vmatprep.subr.mxu0 0.0
    %1445 = vmatpush1.msra.mxu0 0.0
    %1446 = vmatprep.subr.mxu0 0.0
    %1447 = vmatpush1.msra.mxu0 0.0
    %1448 = vmatprep.subr.mxu0 0.0
    %1449 = vmatpush1.msra.mxu0 0.0
    %1450 = vmatprep.subr.mxu0 0.0
    %1451 = vmatpush1.msra.mxu0 0.0
    %1452 = vmatprep.subr.mxu0 0.0
    %1453 = vmatpush1.msra.mxu0 0.0
    %1454 = vmatprep.subr.mxu0 0.0
    %1455 = vmatpush1.msra.mxu0 0.0
    %1456 = vmatprep.subr.mxu0 0.0
    %1457 = vmatpush1.msra.mxu0 0.0
    %1458 = vmatprep.subr.mxu0 0.0
    %1459 = vmatpush1.msra.mxu0 0.0
    %1460 = vmatprep.subr.mxu0 0.0
    %1461 = vmatpush1.msra.mxu0 0.0
    %1462 = vmatprep.subr.mxu0 0.0
    %1463 = vmatpush1.msra.mxu0 0.0
    %1464 = vmatprep.subr.mxu0 0.0
    %1465 = vmatpush1.msra.mxu0 0.0
    %1466 = vmatprep.subr.mxu0 0.0
    %1467 = vmatpush1.msra.mxu0 0.0
    %1468 = vmatprep.subr.mxu0 0.0
    %1469 = vmatpush1.msra.mxu0 0.0
    %1470 = vmatprep.mubr.f32.mxu0 0.0
    %1471 = vmatmul.mubr.f32.gmra.mrb[0].mxu0 %v1404
    %v1472 = vpop.f32.mrb[0].mxu0
    %v1473 = vadd.f32 %v1400, %v1472
    %v1474 = vpop.f32.mrb[0].mxu0
    %1475 = vdwg.mxu0
    %v1476 = vadd.f32 %v1473, %v249
    %v1477 = vxor.u32 %v1476, 2147483648
    %v1478 = vmul.f32 %v1477, 1.442695
    %v1479 = vpow.pop %v1478
    %v1480 = vadd.f32 %v1479, 1.0
    %v1481 = vrcp.pop %v1480
    %v1482 = vmul.f32 1.0, %v1481
    %v1483 = vtanh.pop %v1476
    %v1484 = vmul.f32 %v1482, %v1319
    %1486 = vrot.lane.b32.xlu0 %v1483, 32
    %v1487 = vpop.permute.xlu0 %1486
    %v1489 = vmul.f32 %v1482, %v1487
    %1491 = vrot.lane.b32.xlu0 %v1489, 32
    %v1492 = vpop.permute.xlu0 %1491
    %v1494 = vadd.f32 %v1484, %v1492
    %v1495 = vtanh.pop %v1494
    %1497 = vrot.lane.b32.xlu0 %v1495, 32
    %v1498 = vpop.permute.xlu0 %1497
    %v1500 = vmul.f32 %v1482, %v1498
    %1502 = vrot.lane.b32.xlu0 %v450, 96
    %v1503 = vpop.permute.xlu0 %1502
    %1505 = vrot.lane.b32.xlu0 %v800, 32
    %v1506 = vpop.permute.xlu0 %1505
    %1509 = vrot.lane.b32.xlu0 %v1150, 96
    %v1510 = vpop.permute.xlu0 %1509
    %1513 = vrot.lane.b32.xlu0 %v1500, 32
    %v1514 = vpop.permute.xlu0 %1513
    %v1516 = vsel %vm98, %v280, %v1503
    %vm1517 = vcmask 523264
    %v1518 = vsel %vm1517, %v1516, %v625
    %vm1519 = vcmask 785408
    %v1520 = vsel %vm1519, %v1518, %v1506
    %v1521 = vsel %vm98, %v980, %v1510
    %v1522 = vsel %vm1517, %v1521, %v1325
    %v1523 = vsel %vm1519, %v1522, %v1514
    %1524 = vmatprep.subr.mxu0 0.0
    %1525 = vmatpush1.msra.mxu0 %v93
    %1526 = vmatprep.subr.mxu0 0.0
    %1527 = vmatpush1.msra.mxu0 %v94
    %1528 = vmatprep.subr.mxu0 0.0
    %1529 = vmatpush1.msra.mxu0 %v95
    %1530 = vmatprep.subr.mxu0 0.0
    %1531 = vmatpush1.msra.mxu0 %v96
    %1532 = vmatprep.subr.mxu0 0.0
    %1533 = vmatpush1.msra.mxu0 0.0
    %1534 = vmatprep.subr.mxu0 0.0
    %1535 = vmatpush1.msra.mxu0 0.0
    %1536 = vmatprep.subr.mxu0 0.0
    %1537 = vmatpush1.msra.mxu0 0.0
    %1538 = vmatprep.subr.mxu0 0.0
    %1539 = vmatpush1.msra.mxu0 0.0
    %1540 = vmatprep.subr.mxu0 0.0
    %1541 = vmatpush1.msra.mxu0 0.0
    %1542 = vmatprep.subr.mxu0 0.0
    %1543 = vmatpush1.msra.mxu0 0.0
    %1544 = vmatprep.subr.mxu0 0.0
    %1545 = vmatpush1.msra.mxu0 0.0
    %1546 = vmatprep.subr.mxu0 0.0
    %1547 = vmatpush1.msra.mxu0 0.0
    %1548 = vmatprep.subr.mxu0 0.0
    %1549 = vmatpush1.msra.mxu0 0.0
    %1550 = vmatprep.subr.mxu0 0.0
    %1551 = vmatpush1.msra.mxu0 0.0
    %1552 = vmatprep.subr.mxu0 0.0
    %1553 = vmatpush1.msra.mxu0 0.0
    %1554 = vmatprep.subr.mxu0 0.0
    %1555 = vmatpush1.msra.mxu0 0.0
    %1556 = vmatprep.subr.mxu0 0.0
    %1557 = vmatpush1.msra.mxu0 0.0
    %1558 = vmatprep.subr.mxu0 0.0
    %1559 = vmatpush1.msra.mxu0 0.0
    %1560 = vmatprep.subr.mxu0 0.0
    %1561 = vmatpush1.msra.mxu0 0.0
    %1562 = vmatprep.subr.mxu0 0.0
    %1563 = vmatpush1.msra.mxu0 0.0
    %1564 = vmatprep.subr.mxu0 0.0
    %1565 = vmatpush1.msra.mxu0 0.0
    %1566 = vmatprep.subr.mxu0 0.0
    %1567 = vmatpush1.msra.mxu0 0.0
    %1568 = vmatprep.subr.mxu0 0.0
    %1569 = vmatpush1.msra.mxu0 0.0
    %1570 = vmatprep.subr.mxu0 0.0
    %1571 = vmatpush1.msra.mxu0 0.0
    %1572 = vmatprep.subr.mxu0 0.0
    %1573 = vmatpush1.msra.mxu0 0.0
    %1574 = vmatprep.subr.mxu0 0.0
    %1575 = vmatpush1.msra.mxu0 0.0
    %1576 = vmatprep.subr.mxu0 0.0
    %1577 = vmatpush1.msra.mxu0 0.0
    %1578 = vmatprep.subr.mxu0 0.0
    %1579 = vmatpush1.msra.mxu0 0.0
    %1580 = vmatprep.subr.mxu0 0.0
    %1581 = vmatpush1.msra.mxu0 0.0
    %1582 = vmatprep.subr.mxu0 0.0
    %1583 = vmatpush1.msra.mxu0 0.0
    %1584 = vmatprep.subr.mxu0 0.0
    %1585 = vmatpush1.msra.mxu0 0.0
    %1586 = vmatprep.subr.mxu0 0.0
    %1587 = vmatpush1.msra.mxu0 0.0
    %1588 = vmatprep.mubr.f32.mxu0 0.0
    %1589 = vmatmul.mubr.f32.gmra.mrb[0].mxu0 %v281
    %v1590 = vpop.f32.mrb[0].mxu0
    %v1591 = vadd.f32 0.0, %v1590
    %v1592 = vpop.f32.mrb[0].mxu0
    %1593 = vdwg.mxu0
    %1594 = vmatprep.subr.mxu0 0.0
    %1595 = vmatpush1.msra.mxu0 %v93
    %1596 = vmatprep.subr.mxu0 0.0
    %1597 = vmatpush1.msra.mxu0 %v94
    %1598 = vmatprep.subr.mxu0 0.0
    %1599 = vmatpush1.msra.mxu0 %v95
    %1600 = vmatprep.subr.mxu0 0.0
    %1601 = vmatpush1.msra.mxu0 %v96
    %1602 = vmatprep.subr.mxu0 0.0
    %1603 = vmatpush1.msra.mxu0 0.0
    %1604 = vmatprep.subr.mxu0 0.0
    %1605 = vmatpush1.msra.mxu0 0.0
    %1606 = vmatprep.subr.mxu0 0.0
    %1607 = vmatpush1.msra.mxu0 0.0
    %1608 = vmatprep.subr.mxu0 0.0
    %1609 = vmatpush1.msra.mxu0 0.0
    %1610 = vmatprep.subr.mxu0 0.0
    %1611 = vmatpush1.msra.mxu0 0.0
    %1612 = vmatprep.subr.mxu0 0.0
    %1613 = vmatpush1.msra.mxu0 0.0
    %1614 = vmatprep.subr.mxu0 0.0
    %1615 = vmatpush1.msra.mxu0 0.0
    %1616 = vmatprep.subr.mxu0 0.0
    %1617 = vmatpush1.msra.mxu0 0.0
    %1618 = vmatprep.subr.mxu0 0.0
    %1619 = vmatpush1.msra.mxu0 0.0
    %1620 = vmatprep.subr.mxu0 0.0
    %1621 = vmatpush1.msra.mxu0 0.0
    %1622 = vmatprep.subr.mxu0 0.0
    %1623 = vmatpush1.msra.mxu0 0.0
    %1624 = vmatprep.subr.mxu0 0.0
    %1625 = vmatpush1.msra.mxu0 0.0
    %1626 = vmatprep.subr.mxu0 0.0
    %1627 = vmatpush1.msra.mxu0 0.0
    %1628 = vmatprep.subr.mxu0 0.0
    %1629 = vmatpush1.msra.mxu0 0.0
    %1630 = vmatprep.subr.mxu0 0.0
    %1631 = vmatpush1.msra.mxu0 0.0
    %1632 = vmatprep.subr.mxu0 0.0
    %1633 = vmatpush1.msra.mxu0 0.0
    %1634 = vmatprep.subr.mxu0 0.0
    %1635 = vmatpush1.msra.mxu0 0.0
    %1636 = vmatprep.subr.mxu0 0.0
    %1637 = vmatpush1.msra.mxu0 0.0
    %1638 = vmatprep.subr.mxu0 0.0
    %1639 = vmatpush1.msra.mxu0 0.0
    %1640 = vmatprep.subr.mxu0 0.0
    %1641 = vmatpush1.msra.mxu0 0.0
    %1642 = vmatprep.subr.mxu0 0.0
    %1643 = vmatpush1.msra.mxu0 0.0
    %1644 = vmatprep.subr.mxu0 0.0
    %1645 = vmatpush1.msra.mxu0 0.0
    %1646 = vmatprep.subr.mxu0 0.0
    %1647 = vmatpush1.msra.mxu0 0.0
    %1648 = vmatprep.subr.mxu0 0.0
    %1649 = vmatpush1.msra.mxu0 0.0
    %1650 = vmatprep.subr.mxu0 0.0
    %1651 = vmatpush1.msra.mxu0 0.0
    %1652 = vmatprep.subr.mxu0 0.0
    %1653 = vmatpush1.msra.mxu0 0.0
    %1654 = vmatprep.subr.mxu0 0.0
    %1655 = vmatpush1.msra.mxu0 0.0
    %1656 = vmatprep.subr.mxu0 0.0
    %1657 = vmatpush1.msra.mxu0 0.0
    %1658 = vmatprep.mubr.f32.mxu0 0.0
    %1659 = vmatmul.mubr.f32.gmra.mrb[0].mxu0 %v456
    %v1660 = vpop.f32.mrb[0].mxu0
    %v1661 = vadd.f32 0.0, %v1660
    %v1662 = vpop.f32.mrb[0].mxu0
    %1663 = vdwg.mxu0
    %1664 = vmatprep.subr.mxu0 0.0
    %1665 = vmatpush1.msra.mxu0 %v93
    %1666 = vmatprep.subr.mxu0 0.0
    %1667 = vmatpush1.msra.mxu0 %v94
    %1668 = vmatprep.subr.mxu0 0.0
    %1669 = vmatpush1.msra.mxu0 %v95
    %1670 = vmatprep.subr.mxu0 0.0
    %1671 = vmatpush1.msra.mxu0 %v96
    %1672 = vmatprep.subr.mxu0 0.0
    %1673 = vmatpush1.msra.mxu0 0.0
    %1674 = vmatprep.subr.mxu0 0.0
    %1675 = vmatpush1.msra.mxu0 0.0
    %1676 = vmatprep.subr.mxu0 0.0
    %1677 = vmatpush1.msra.mxu0 0.0
    %1678 = vmatprep.subr.mxu0 0.0
    %1679 = vmatpush1.msra.mxu0 0.0
    %1680 = vmatprep.subr.mxu0 0.0
    %1681 = vmatpush1.msra.mxu0 0.0
    %1682 = vmatprep.subr.mxu0 0.0
    %1683 = vmatpush1.msra.mxu0 0.0
    %1684 = vmatprep.subr.mxu0 0.0
    %1685 = vmatpush1.msra.mxu0 0.0
    %1686 = vmatprep.subr.mxu0 0.0
    %1687 = vmatpush1.msra.mxu0 0.0
    %1688 = vmatprep.subr.mxu0 0.0
    %1689 = vmatpush1.msra.mxu0 0.0
    %1690 = vmatprep.subr.mxu0 0.0
    %1691 = vmatpush1.msra.mxu0 0.0
    %1692 = vmatprep.subr.mxu0 0.0
    %1693 = vmatpush1.msra.mxu0 0.0
    %1694 = vmatprep.subr.mxu0 0.0
    %1695 = vmatpush1.msra.mxu0 0.0
    %1696 = vmatprep.subr.mxu0 0.0
    %1697 = vmatpush1.msra.mxu0 0.0
    %1698 = vmatprep.subr.mxu0 0.0
    %1699 = vmatpush1.msra.mxu0 0.0
    %1700 = vmatprep.subr.mxu0 0.0
    %1701 = vmatpush1.msra.mxu0 0.0
    %1702 = vmatprep.subr.mxu0 0.0
    %1703 = vmatpush1.msra.mxu0 0.0
    %1704 = vmatprep.subr.mxu0 0.0
    %1705 = vmatpush1.msra.mxu0 0.0
    %1706 = vmatprep.subr.mxu0 0.0
    %1707 = vmatpush1.msra.mxu0 0.0
    %1708 = vmatprep.subr.mxu0 0.0
    %1709 = vmatpush1.msra.mxu0 0.0
    %1710 = vmatprep.subr.mxu0 0.0
    %1711 = vmatpush1.msra.mxu0 0.0
    %1712 = vmatprep.subr.mxu0 0.0
    %1713 = vmatpush1.msra.mxu0 0.0
    %1714 = vmatprep.subr.mxu0 0.0
    %1715 = vmatpush1.msra.mxu0 0.0
    %1716 = vmatprep.subr.mxu0 0.0
    %1717 = vmatpush1.msra.mxu0 0.0
    %1718 = vmatprep.subr.mxu0 0.0
    %1719 = vmatpush1.msra.mxu0 0.0
    %1720 = vmatprep.subr.mxu0 0.0
    %1721 = vmatpush1.msra.mxu0 0.0
    %1722 = vmatprep.subr.mxu0 0.0
    %1723 = vmatpush1.msra.mxu0 0.0
    %1724 = vmatprep.subr.mxu0 0.0
    %1725 = vmatpush1.msra.mxu0 0.0
    %1726 = vmatprep.subr.mxu0 0.0
    %1727 = vmatpush1.msra.mxu0 0.0
    %1728 = vmatprep.mubr.f32.mxu0 0.0
    %1729 = vmatmul.mubr.f32.gmra.mrb[0].mxu0 %v631
    %v1730 = vpop.f32.mrb[0].mxu0
    %v1731 = vadd.f32 0.0, %v1730
    %v1732 = vpop.f32.mrb[0].mxu0
    %1733 = vdwg.mxu0
    %1734 = vmatprep.subr.mxu0 0.0
    %1735 = vmatpush1.msra.mxu0 %v93
    %1736 = vmatprep.subr.mxu0 0.0
    %1737 = vmatpush1.msra.mxu0 %v94
    %1738 = vmatprep.subr.mxu0 0.0
    %1739 = vmatpush1.msra.mxu0 %v95
    %1740 = vmatprep.subr.mxu0 0.0
    %1741 = vmatpush1.msra.mxu0 %v96
    %1742 = vmatprep.subr.mxu0 0.0
    %1743 = vmatpush1.msra.mxu0 0.0
    %1744 = vmatprep.subr.mxu0 0.0
    %1745 = vmatpush1.msra.mxu0 0.0
    %1746 = vmatprep.subr.mxu0 0.0
    %1747 = vmatpush1.msra.mxu0 0.0
    %1748 = vmatprep.subr.mxu0 0.0
    %1749 = vmatpush1.msra.mxu0 0.0
    %1750 = vmatprep.subr.mxu0 0.0
    %1751 = vmatpush1.msra.mxu0 0.0
    %1752 = vmatprep.subr.mxu0 0.0
    %1753 = vmatpush1.msra.mxu0 0.0
    %1754 = vmatprep.subr.mxu0 0.0
    %1755 = vmatpush1.msra.mxu0 0.0
    %1756 = vmatprep.subr.mxu0 0.0
    %1757 = vmatpush1.msra.mxu0 0.0
    %1758 = vmatprep.subr.mxu0 0.0
    %1759 = vmatpush1.msra.mxu0 0.0
    %1760 = vmatprep.subr.mxu0 0.0
    %1761 = vmatpush1.msra.mxu0 0.0
    %1762 = vmatprep.subr.mxu0 0.0
    %1763 = vmatpush1.msra.mxu0 0.0
    %1764 = vmatprep.subr.mxu0 0.0
    %1765 = vmatpush1.msra.mxu0 0.0
    %1766 = vmatprep.subr.mxu0 0.0
    %1767 = vmatpush1.msra.mxu0 0.0
    %1768 = vmatprep.subr.mxu0 0.0
    %1769 = vmatpush1.msra.mxu0 0.0
    %1770 = vmatprep.subr.mxu0 0.0
    %1771 = vmatpush1.msra.mxu0 0.0
    %1772 = vmatprep.subr.mxu0 0.0
    %1773 = vmatpush1.msra.mxu0 0.0
    %1774 = vmatprep.subr.mxu0 0.0
    %1775 = vmatpush1.msra.mxu0 0.0
    %1776 = vmatprep.subr.mxu0 0.0
    %1777 = vmatpush1.msra.mxu0 0.0
    %1778 = vmatprep.subr.mxu0 0.0
    %1779 = vmatpush1.msra.mxu0 0.0
    %1780 = vmatprep.subr.mxu0 0.0
    %1781 = vmatpush1.msra.mxu0 0.0
    %1782 = vmatprep.subr.mxu0 0.0
    %1783 = vmatpush1.msra.mxu0 0.0
    %1784 = vmatprep.subr.mxu0 0.0
    %1785 = vmatpush1.msra.mxu0 0.0
    %1786 = vmatprep.subr.mxu0 0.0
    %1787 = vmatpush1.msra.mxu0 0.0
    %1788 = vmatprep.subr.mxu0 0.0
    %1789 = vmatpush1.msra.mxu0 0.0
    %1790 = vmatprep.subr.mxu0 0.0
    %1791 = vmatpush1.msra.mxu0 0.0
    %1792 = vmatprep.subr.mxu0 0.0
    %1793 = vmatpush1.msra.mxu0 0.0
    %1794 = vmatprep.subr.mxu0 0.0
    %1795 = vmatpush1.msra.mxu0 0.0
    %1796 = vmatprep.subr.mxu0 0.0
    %1797 = vmatpush1.msra.mxu0 0.0
    %1798 = vmatprep.mubr.f32.mxu0 0.0
    %1799 = vmatmul.mubr.f32.gmra.mrb[0].mxu0 %v806
    %v1800 = vpop.f32.mrb[0].mxu0
    %v1801 = vadd.f32 0.0, %v1800
    %v1802 = vpop.f32.mrb[0].mxu0
    %1803 = vdwg.mxu0
    %1804 = vmatprep.subr.mxu0 0.0
    %1805 = vmatpush1.msra.mxu0 %v93
    %1806 = vmatprep.subr.mxu0 0.0
    %1807 = vmatpush1.msra.mxu0 %v94
    %1808 = vmatprep.subr.mxu0 0.0
    %1809 = vmatpush1.msra.mxu0 %v95
    %1810 = vmatprep.subr.mxu0 0.0
    %1811 = vmatpush1.msra.mxu0 %v96
    %1812 = vmatprep.subr.mxu0 0.0
    %1813 = vmatpush1.msra.mxu0 0.0
    %1814 = vmatprep.subr.mxu0 0.0
    %1815 = vmatpush1.msra.mxu0 0.0
    %1816 = vmatprep.subr.mxu0 0.0
    %1817 = vmatpush1.msra.mxu0 0.0
    %1818 = vmatprep.subr.mxu0 0.0
    %1819 = vmatpush1.msra.mxu0 0.0
    %1820 = vmatprep.subr.mxu0 0.0
    %1821 = vmatpush1.msra.mxu0 0.0
    %1822 = vmatprep.subr.mxu0 0.0
    %1823 = vmatpush1.msra.mxu0 0.0
    %1824 = vmatprep.subr.mxu0 0.0
    %1825 = vmatpush1.msra.mxu0 0.0
    %1826 = vmatprep.subr.mxu0 0.0
    %1827 = vmatpush1.msra.mxu0 0.0
    %1828 = vmatprep.subr.mxu0 0.0
    %1829 = vmatpush1.msra.mxu0 0.0
    %1830 = vmatprep.subr.mxu0 0.0
    %1831 = vmatpush1.msra.mxu0 0.0
    %1832 = vmatprep.subr.mxu0 0.0
    %1833 = vmatpush1.msra.mxu0 0.0
    %1834 = vmatprep.subr.mxu0 0.0
    %1835 = vmatpush1.msra.mxu0 0.0
    %1836 = vmatprep.subr.mxu0 0.0
    %1837 = vmatpush1.msra.mxu0 0.0
    %1838 = vmatprep.subr.mxu0 0.0
    %1839 = vmatpush1.msra.mxu0 0.0
    %1840 = vmatprep.subr.mxu0 0.0
    %1841 = vmatpush1.msra.mxu0 0.0
    %1842 = vmatprep.subr.mxu0 0.0
    %1843 = vmatpush1.msra.mxu0 0.0
    %1844 = vmatprep.subr.mxu0 0.0
    %1845 = vmatpush1.msra.mxu0 0.0
    %1846 = vmatprep.subr.mxu0 0.0
    %1847 = vmatpush1.msra.mxu0 0.0
    %1848 = vmatprep.subr.mxu0 0.0
    %1849 = vmatpush1.msra.mxu0 0.0
    %1850 = vmatprep.subr.mxu0 0.0
    %1851 = vmatpush1.msra.mxu0 0.0
    %1852 = vmatprep.subr.mxu0 0.0
    %1853 = vmatpush1.msra.mxu0 0.0
    %1854 = vmatprep.subr.mxu0 0.0
    %1855 = vmatpush1.msra.mxu0 0.0
    %1856 = vmatprep.subr.mxu0 0.0
    %1857 = vmatpush1.msra.mxu0 0.0
    %1858 = vmatprep.subr.mxu0 0.0
    %1859 = vmatpush1.msra.mxu0 0.0
    %1860 = vmatprep.subr.mxu0 0.0
    %1861 = vmatpush1.msra.mxu0 0.0
    %1862 = vmatprep.subr.mxu0 0.0
    %1863 = vmatpush1.msra.mxu0 0.0
    %1864 = vmatprep.subr.mxu0 0.0
    %1865 = vmatpush1.msra.mxu0 0.0
    %1866 = vmatprep.subr.mxu0 0.0
    %1867 = vmatpush1.msra.mxu0 0.0
    %1868 = vmatprep.mubr.f32.mxu0 0.0
    %1869 = vmatmul.mubr.f32.gmra.mrb[0].mxu0 %v981
    %v1870 = vpop.f32.mrb[0].mxu0
    %v1871 = vadd.f32 0.0, %v1870
    %v1872 = vpop.f32.mrb[0].mxu0
    %1873 = vdwg.mxu0
    %1874 = vmatprep.subr.mxu0 0.0
    %1875 = vmatpush1.msra.mxu0 %v93
    %1876 = vmatprep.subr.mxu0 0.0
    %1877 = vmatpush1.msra.mxu0 %v94
    %1878 = vmatprep.subr.mxu0 0.0
    %1879 = vmatpush1.msra.mxu0 %v95
    %1880 = vmatprep.subr.mxu0 0.0
    %1881 = vmatpush1.msra.mxu0 %v96
    %1882 = vmatprep.subr.mxu0 0.0
    %1883 = vmatpush1.msra.mxu0 0.0
    %1884 = vmatprep.subr.mxu0 0.0
    %1885 = vmatpush1.msra.mxu0 0.0
    %1886 = vmatprep.subr.mxu0 0.0
    %1887 = vmatpush1.msra.mxu0 0.0
    %1888 = vmatprep.subr.mxu0 0.0
    %1889 = vmatpush1.msra.mxu0 0.0
    %1890 = vmatprep.subr.mxu0 0.0
    %1891 = vmatpush1.msra.mxu0 0.0
    %1892 = vmatprep.subr.mxu0 0.0
    %1893 = vmatpush1.msra.mxu0 0.0
    %1894 = vmatprep.subr.mxu0 0.0
    %1895 = vmatpush1.msra.mxu0 0.0
    %1896 = vmatprep.subr.mxu0 0.0
    %1897 = vmatpush1.msra.mxu0 0.0
    %1898 = vmatprep.subr.mxu0 0.0
    %1899 = vmatpush1.msra.mxu0 0.0
    %1900 = vmatprep.subr.mxu0 0.0
    %1901 = vmatpush1.msra.mxu0 0.0
    %1902 = vmatprep.subr.mxu0 0.0
    %1903 = vmatpush1.msra.mxu0 0.0
    %1904 = vmatprep.subr.mxu0 0.0
    %1905 = vmatpush1.msra.mxu0 0.0
    %1906 = vmatprep.subr.mxu0 0.0
    %1907 = vmatpush1.msra.mxu0 0.0
    %1908 = vmatprep.subr.mxu0 0.0
    %1909 = vmatpush1.msra.mxu0 0.0
    %1910 = vmatprep.subr.mxu0 0.0
    %1911 = vmatpush1.msra.mxu0 0.0
    %1912 = vmatprep.subr.mxu0 0.0
    %1913 = vmatpush1.msra.mxu0 0.0
    %1914 = vmatprep.subr.mxu0 0.0
    %1915 = vmatpush1.msra.mxu0 0.0
    %1916 = vmatprep.subr.mxu0 0.0
    %1917 = vmatpush1.msra.mxu0 0.0
    %1918 = vmatprep.subr.mxu0 0.0
    %1919 = vmatpush1.msra.mxu0 0.0
    %1920 = vmatprep.subr.mxu0 0.0
    %1921 = vmatpush1.msra.mxu0 0.0
    %1922 = vmatprep.subr.mxu0 0.0
    %1923 = vmatpush1.msra.mxu0 0.0
    %1924 = vmatprep.subr.mxu0 0.0
    %1925 = vmatpush1.msra.mxu0 0.0
    %1926 = vmatprep.subr.mxu0 0.0
    %1927 = vmatpush1.msra.mxu0 0.0
    %1928 = vmatprep.subr.mxu0 0.0
    %1929 = vmatpush1.msra.mxu0 0.0
    %1930 = vmatprep.subr.mxu0 0.0
    %1931 = vmatpush1.msra.mxu0 0.0
    %1932 = vmatprep.subr.mxu0 0.0
    %1933 = vmatpush1.msra.mxu0 0.0
    %1934 = vmatprep.subr.mxu0 0.0
    %1935 = vmatpush1.msra.mxu0 0.0
    %1936 = vmatprep.subr.mxu0 0.0
    %1937 = vmatpush1.msra.mxu0 0.0
    %1938 = vmatprep.mubr.f32.mxu0 0.0
    %1939 = vmatmul.mubr.f32.gmra.mrb[0].mxu0 %v1156
    %v1940 = vpop.f32.mrb[0].mxu0
    %v1941 = vadd.f32 0.0, %v1940
    %v1942 = vpop.f32.mrb[0].mxu0
    %1943 = vdwg.mxu0
    %1944 = vmatprep.subr.mxu0 0.0
    %1945 = vmatpush1.msra.mxu0 %v93
    %1946 = vmatprep.subr.mxu0 0.0
    %1947 = vmatpush1.msra.mxu0 %v94
    %1948 = vmatprep.subr.mxu0 0.0
    %1949 = vmatpush1.msra.mxu0 %v95
    %1950 = vmatprep.subr.mxu0 0.0
    %1951 = vmatpush1.msra.mxu0 %v96
    %1952 = vmatprep.subr.mxu0 0.0
    %1953 = vmatpush1.msra.mxu0 0.0
    %1954 = vmatprep.subr.mxu0 0.0
    %1955 = vmatpush1.msra.mxu0 0.0
    %1956 = vmatprep.subr.mxu0 0.0
    %1957 = vmatpush1.msra.mxu0 0.0
    %1958 = vmatprep.subr.mxu0 0.0
    %1959 = vmatpush1.msra.mxu0 0.0
    %1960 = vmatprep.subr.mxu0 0.0
    %1961 = vmatpush1.msra.mxu0 0.0
    %1962 = vmatprep.subr.mxu0 0.0
    %1963 = vmatpush1.msra.mxu0 0.0
    %1964 = vmatprep.subr.mxu0 0.0
    %1965 = vmatpush1.msra.mxu0 0.0
    %1966 = vmatprep.subr.mxu0 0.0
    %1967 = vmatpush1.msra.mxu0 0.0
    %1968 = vmatprep.subr.mxu0 0.0
    %1969 = vmatpush1.msra.mxu0 0.0
    %1970 = vmatprep.subr.mxu0 0.0
    %1971 = vmatpush1.msra.mxu0 0.0
    %1972 = vmatprep.subr.mxu0 0.0
    %1973 = vmatpush1.msra.mxu0 0.0
    %1974 = vmatprep.subr.mxu0 0.0
    %1975 = vmatpush1.msra.mxu0 0.0
    %1976 = vmatprep.subr.mxu0 0.0
    %1977 = vmatpush1.msra.mxu0 0.0
    %1978 = vmatprep.subr.mxu0 0.0
    %1979 = vmatpush1.msra.mxu0 0.0
    %1980 = vmatprep.subr.mxu0 0.0
    %1981 = vmatpush1.msra.mxu0 0.0
    %1982 = vmatprep.subr.mxu0 0.0
    %1983 = vmatpush1.msra.mxu0 0.0
    %1984 = vmatprep.subr.mxu0 0.0
    %1985 = vmatpush1.msra.mxu0 0.0
    %1986 = vmatprep.subr.mxu0 0.0
    %1987 = vmatpush1.msra.mxu0 0.0
    %1988 = vmatprep.subr.mxu0 0.0
    %1989 = vmatpush1.msra.mxu0 0.0
    %1990 = vmatprep.subr.mxu0 0.0
    %1991 = vmatpush1.msra.mxu0 0.0
    %1992 = vmatprep.subr.mxu0 0.0
    %1993 = vmatpush1.msra.mxu0 0.0
    %1994 = vmatprep.subr.mxu0 0.0
    %1995 = vmatpush1.msra.mxu0 0.0
    %1996 = vmatprep.subr.mxu0 0.0
    %1997 = vmatpush1.msra.mxu0 0.0
    %1998 = vmatprep.subr.mxu0 0.0
    %1999 = vmatpush1.msra.mxu0 0.0
    %2000 = vmatprep.subr.mxu0 0.0
    %2001 = vmatpush1.msra.mxu0 0.0
    %2002 = vmatprep.subr.mxu0 0.0
    %2003 = vmatpush1.msra.mxu0 0.0
    %2004 = vmatprep.subr.mxu0 0.0
    %2005 = vmatpush1.msra.mxu0 0.0
    %2006 = vmatprep.subr.mxu0 0.0
    %2007 = vmatpush1.msra.mxu0 0.0
    %2008 = vmatprep.mubr.f32.mxu0 0.0
    %2009 = vmatmul.mubr.f32.gmra.mrb[0].mxu0 %v1331
    %v2010 = vpop.f32.mrb[0].mxu0
    %v2011 = vadd.f32 0.0, %v2010
    %v2012 = vpop.f32.mrb[0].mxu0
    %2013 = vdwg.mxu0
    %2014 = vrot.lane.b32.xlu0 %v1500, 64
    %v2015 = vpop.permute.xlu0 %2014
    %v2016 = vsel %vm98, %v2015, 0
    %2018 = vmatprep.subr.mxu0 0.0
    %2019 = vmatpush1.msra.mxu0 %v93
    %2020 = vmatprep.subr.mxu0 0.0
    %2021 = vmatpush1.msra.mxu0 %v94
    %2022 = vmatprep.subr.mxu0 0.0
    %2023 = vmatpush1.msra.mxu0 %v95
    %2024 = vmatprep.subr.mxu0 0.0
    %2025 = vmatpush1.msra.mxu0 %v96
    %2026 = vmatprep.subr.mxu0 0.0
    %2027 = vmatpush1.msra.mxu0 0.0
    %2028 = vmatprep.subr.mxu0 0.0
    %2029 = vmatpush1.msra.mxu0 0.0
    %2030 = vmatprep.subr.mxu0 0.0
    %2031 = vmatpush1.msra.mxu0 0.0
    %2032 = vmatprep.subr.mxu0 0.0
    %2033 = vmatpush1.msra.mxu0 0.0
    %2034 = vmatprep.subr.mxu0 0.0
    %2035 = vmatpush1.msra.mxu0 0.0
    %2036 = vmatprep.subr.mxu0 0.0
    %2037 = vmatpush1.msra.mxu0 0.0
    %2038 = vmatprep.subr.mxu0 0.0
    %2039 = vmatpush1.msra.mxu0 0.0
    %2040 = vmatprep.subr.mxu0 0.0
    %2041 = vmatpush1.msra.mxu0 0.0
    %2042 = vmatprep.subr.mxu0 0.0
    %2043 = vmatpush1.msra.mxu0 0.0
    %2044 = vmatprep.subr.mxu0 0.0
    %2045 = vmatpush1.msra.mxu0 0.0
    %2046 = vmatprep.subr.mxu0 0.0
    %2047 = vmatpush1.msra.mxu0 0.0
    %2048 = vmatprep.subr.mxu0 0.0
    %2049 = vmatpush1.msra.mxu0 0.0
    %2050 = vmatprep.subr.mxu0 0.0
    %2051 = vmatpush1.msra.mxu0 0.0
    %2052 = vmatprep.subr.mxu0 0.0
    %2053 = vmatpush1.msra.mxu0 0.0
    %2054 = vmatprep.subr.mxu0 0.0
    %2055 = vmatpush1.msra.mxu0 0.0
    %2056 = vmatprep.subr.mxu0 0.0
    %2057 = vmatpush1.msra.mxu0 0.0
    %2058 = vmatprep.subr.mxu0 0.0
    %2059 = vmatpush1.msra.mxu0 0.0
    %2060 = vmatprep.subr.mxu0 0.0
    %2061 = vmatpush1.msra.mxu0 0.0
    %2062 = vmatprep.subr.mxu0 0.0
    %2063 = vmatpush1.msra.mxu0 0.0
    %2064 = vmatprep.subr.mxu0 0.0
    %2065 = vmatpush1.msra.mxu0 0.0
    %2066 = vmatprep.subr.mxu0 0.0
    %2067 = vmatpush1.msra.mxu0 0.0
    %2068 = vmatprep.subr.mxu0 0.0
    %2069 = vmatpush1.msra.mxu0 0.0
    %2070 = vmatprep.subr.mxu0 0.0
    %2071 = vmatpush1.msra.mxu0 0.0
    %2072 = vmatprep.subr.mxu0 0.0
    %2073 = vmatpush1.msra.mxu0 0.0
    %2074 = vmatprep.subr.mxu0 0.0
    %2075 = vmatpush1.msra.mxu0 0.0
    %2076 = vmatprep.subr.mxu0 0.0
    %2077 = vmatpush1.msra.mxu0 0.0
    %2078 = vmatprep.subr.mxu0 0.0
    %2079 = vmatpush1.msra.mxu0 0.0
    %2080 = vmatprep.subr.mxu0 0.0
    %2081 = vmatpush1.msra.mxu0 0.0
    %2082 = vmatprep.mubr.f32.mxu0 0.0
    %2083 = vmatmul.mubr.f32.gmra.mrb[0].mxu0 %v2016
    %v2084 = vpop.f32.mrb[0].mxu0
    %v2085 = vadd.f32 0.0, %v2084
    %v2086 = vpop.f32.mrb[0].mxu0
    %2087 = vdwg.mxu0
    %2089 = vrot.lane.b32.xlu0 %v1661, 32
    %v2090 = vpop.permute.xlu0 %2089
    %2093 = vrot.lane.b32.xlu0 %v1731, 64
    %v2094 = vpop.permute.xlu0 %2093
    %2097 = vrot.lane.b32.xlu0 %v1801, 96
    %v2098 = vpop.permute.xlu0 %2097
    %2101 = vrot.lane.b32.xlu0 %v1941, 32
    %v2102 = vpop.permute.xlu0 %2101
    %2105 = vrot.lane.b32.xlu0 %v2011, 64
    %v2106 = vpop.permute.xlu0 %2105
    %2109 = vrot.lane.b32.xlu0 %v2085, 96
    %v2110 = vpop.permute.xlu0 %2109
    %v2112 = vsel %vm98, %v1591, %v2090
    %v2113 = vsel %vm1517, %v2112, %v2094
    %v2114 = vsel %vm1519, %v2113, %v2098
    %v2115 = vsel %vm98, %v1871, %v2102
    %v2116 = vsel %vm1517, %v2115, %v2106
    %v2117 = vsel %vm1519, %v2116, %v2110
    %v2118 = vld [vmem:[%s7] sm:$0xff]
    %v2119 = vld [vmem:[%s7 + $0x8] sm:$0xff]
    %v2120 = vld [vmem:[%s7 + $0x10] sm:$0xff]
    %v2121 = vld [vmem:[%s7 + $0x18] sm:$0xff]
    %v2122 = vld [vmem:[%s7 + $0x20] sm:$0xff]
    %v2123 = vld [vmem:[%s7 + $0x28] sm:$0xff]
    %v2124 = vld [vmem:[%s7 + $0x30] sm:$0xff]
    %v2125 = vld [vmem:[%s7 + $0x38] sm:$0xff]
    %v2126 = vld [vmem:[%s8] sm:$0x3]
    %v2127 = vld [vmem:[%s9] sm:$0xff]
    %v2128 = vld [vmem:[%s9 + $0x8] sm:$0xff]
    %v2129 = vld [vmem:[%s9 + $0x10] sm:$0xff]
    %v2130 = vld [vmem:[%s9 + $0x18] sm:$0xff]
    %v2131 = vld [vmem:[%s9 + $0x20] sm:$0xff]
    %v2132 = vld [vmem:[%s9 + $0x28] sm:$0xff]
    %v2133 = vld [vmem:[%s9 + $0x30] sm:$0xff]
    %v2134 = vld [vmem:[%s9 + $0x38] sm:$0xff]
    %v2135 = vld [vmem:[%s9 + $0x40] sm:$0xff]
    %v2136 = vld [vmem:[%s9 + $0x48] sm:$0xff]
    %v2137 = vld [vmem:[%s9 + $0x50] sm:$0xff]
    %v2138 = vld [vmem:[%s9 + $0x58] sm:$0xff]
    %v2139 = vld [vmem:[%s9 + $0x60] sm:$0xff]
    %v2140 = vld [vmem:[%s9 + $0x68] sm:$0xff]
    %v2141 = vld [vmem:[%s9 + $0x70] sm:$0xff]
    %v2142 = vld [vmem:[%s9 + $0x78] sm:$0xff]
    %v2143 = vld [vmem:[%s9 + $0x80] sm:$0xff]
    %v2144 = vld [vmem:[%s9 + $0x88] sm:$0xff]
    %v2145 = vld [vmem:[%s9 + $0x90] sm:$0xff]
    %v2146 = vld [vmem:[%s9 + $0x98] sm:$0xff]
    %v2147 = vld [vmem:[%s9 + $0xa0] sm:$0xff]
    %v2148 = vld [vmem:[%s9 + $0xa8] sm:$0xff]
    %v2149 = vld [vmem:[%s9 + $0xb0] sm:$0xff]
    %v2150 = vld [vmem:[%s9 + $0xb8] sm:$0xff]
    %v2151 = vld [vmem:[%s9 + $0xc0] sm:$0xff]
    %v2152 = vld [vmem:[%s9 + $0xc8] sm:$0xff]
    %v2153 = vld [vmem:[%s9 + $0xd0] sm:$0xff]
    %v2154 = vld [vmem:[%s9 + $0xd8] sm:$0xff]
    %v2155 = vld [vmem:[%s9 + $0xe0] sm:$0xff]
    %v2156 = vld [vmem:[%s9 + $0xe8] sm:$0xff]
    %v2157 = vld [vmem:[%s9 + $0xf0] sm:$0xff]
    %v2158 = vld [vmem:[%s9 + $0xf8] sm:$0xff]
    %v2159 = vld [vmem:[%s10] sm:$0xff]
    %v2160 = vld [vmem:[%s10 + $0x8] sm:$0xff]
    %v2161 = vld [vmem:[%s11] sm:$0xff]
    %v2162 = vld [vmem:[%s11 + $0x8] sm:$0xff]
    %v2163 = vld [vmem:[%s11 + $0x10] sm:$0xff]
    %v2164 = vld [vmem:[%s11 + $0x18] sm:$0xff]
    %v2165 = vld [vmem:[%s11 + $0x20] sm:$0xff]
    %v2166 = vld [vmem:[%s11 + $0x28] sm:$0xff]
    %v2167 = vld [vmem:[%s11 + $0x30] sm:$0xff]
    %v2168 = vld [vmem:[%s11 + $0x38] sm:$0xff]
    %v2169 = vld [vmem:[%s11 + $0x40] sm:$0xff]
    %v2170 = vld [vmem:[%s11 + $0x48] sm:$0xff]
    %v2171 = vld [vmem:[%s11 + $0x50] sm:$0xff]
    %v2172 = vld [vmem:[%s11 + $0x58] sm:$0xff]
    %v2173 = vld [vmem:[%s11 + $0x60] sm:$0xff]
    %v2174 = vld [vmem:[%s11 + $0x68] sm:$0xff]
    %v2175 = vld [vmem:[%s11 + $0x70] sm:$0xff]
    %v2176 = vld [vmem:[%s11 + $0x78] sm:$0xff]
    %v2177 = vld [vmem:[%s11 + $0x80] sm:$0xff]
    %v2178 = vld [vmem:[%s11 + $0x88] sm:$0xff]
    %v2179 = vld [vmem:[%s11 + $0x90] sm:$0xff]
    %v2180 = vld [vmem:[%s11 + $0x98] sm:$0xff]
    %v2181 = vld [vmem:[%s11 + $0xa0] sm:$0xff]
    %v2182 = vld [vmem:[%s11 + $0xa8] sm:$0xff]
    %v2183 = vld [vmem:[%s11 + $0xb0] sm:$0xff]
    %v2184 = vld [vmem:[%s11 + $0xb8] sm:$0xff]
    %v2185 = vld [vmem:[%s11 + $0xc0] sm:$0xff]
    %v2186 = vld [vmem:[%s11 + $0xc8] sm:$0xff]
    %v2187 = vld [vmem:[%s11 + $0xd0] sm:$0xff]
    %v2188 = vld [vmem:[%s11 + $0xd8] sm:$0xff]
    %v2189 = vld [vmem:[%s11 + $0xe0] sm:$0xff]
    %v2190 = vld [vmem:[%s11 + $0xe8] sm:$0xff]
    %v2191 = vld [vmem:[%s11 + $0xf0] sm:$0xff]
    %v2192 = vld [vmem:[%s11 + $0xf8] sm:$0xff]
    %v2193 = vld [vmem:[%s12] sm:$0xff]
    %v2194 = vld [vmem:[%s12 + $0x8] sm:$0xff]
    %v2195 = vld [vmem:[%s12 + $0x10] sm:$0xff]
    %v2196 = vld [vmem:[%s12 + $0x18] sm:$0xff]
    %v2197 = vld [vmem:[%s13] sm:$0xff]
    %v2198 = vld [vmem:[%s13 + $0x8] sm:$0xff]
    %v2199 = vld [vmem:[%s13 + $0x10] sm:$0xff]
    %v2200 = vld [vmem:[%s13 + $0x18] sm:$0xff]
    %v2201 = vld [vmem:[%s14] sm:$0xff]
    %v2202 = vld [vmem:[%s14 + $0x8] sm:$0xff]
    %v2203 = vld [vmem:[%s14 + $0x10] sm:$0xff]
    %v2204 = vld [vmem:[%s14 + $0x18] sm:$0xff]
    %v2205 = vld [vmem:[%s15] sm:$0x1]
    %v2206 = vld [vmem:[%s16] sm:$0x1]
    %v2207 = vld [vmem:[%s17] sm:$0xff]
    %v2208 = vld [vmem:[%s17 + $0x8] sm:$0xff]
    %v2209 = vld [vmem:[%s17 + $0x10] sm:$0xff]
    %v2210 = vld [vmem:[%s17 + $0x18] sm:$0xff]
    %v2211 = vld [vmem:[%s18] sm:$0xff]
    %v2212 = vld [vmem:[%s18 + $0x8] sm:$0xff]
    %v2213 = vld [vmem:[%s18 + $0x10] sm:$0xff]
    %v2214 = vld [vmem:[%s18 + $0x18] sm:$0xff]
    %v2215 = vld [vmem:[%s19] sm:$0xff]
    %v2216 = vld [vmem:[%s19 + $0x8] sm:$0xff]
    %v2217 = vld [vmem:[%s19 + $0x10] sm:$0xff]
    %v2218 = vld [vmem:[%s19 + $0x18] sm:$0xff]
    %v2219 = vld [vmem:[%s20] sm:$0x1]
    %v2220 = vld [vmem:[%s21] sm:$0xff]
    %v2221 = vld [vmem:[%s21 + $0x8] sm:$0xff]
    %v2222 = vld [vmem:[%s21 + $0x10] sm:$0xff]
    %v2223 = vld [vmem:[%s21 + $0x18] sm:$0xff]
    %v2224 = vld [vmem:[%s21 + $0x20] sm:$0xff]
    %v2225 = vld [vmem:[%s21 + $0x28] sm:$0xff]
    %v2226 = vld [vmem:[%s21 + $0x30] sm:$0xff]
    %v2227 = vld [vmem:[%s21 + $0x38] sm:$0xff]
    %v2228 = vld [vmem:[%s21 + $0x40] sm:$0xff]
    %v2229 = vld [vmem:[%s21 + $0x48] sm:$0xff]
    %v2230 = vld [vmem:[%s21 + $0x50] sm:$0xff]
    %v2231 = vld [vmem:[%s21 + $0x58] sm:$0xff]
    %v2232 = vld [vmem:[%s21 + $0x60] sm:$0xff]
    %v2233 = vld [vmem:[%s21 + $0x68] sm:$0xff]
    %v2234 = vld [vmem:[%s21 + $0x70] sm:$0xff]
    %v2235 = vld [vmem:[%s21 + $0x78] sm:$0xff]
    %v2236 = vlaneseq
    %v2237 = vand.u32 %v2236, 127
    %vm2238 = vcmp.lt.s32.totalorder %v2237, 16
    %v2239 = vld [vmem:[%s2] sm:$0x3]
    %v2241 = vlaneseq
    %v2242 = vshrl.u32 %v2241, 7
    %v2243 = vsub.s32 0, %v2242
    %v2244 = vrot.slane %v2126, %v2243
    %v2245 = vlaneseq
    %v2246 = vshrl.u32 %v2245, 7
    %v2247 = vsub.s32 1, %v2246
    %v2248 = vrot.slane %v2126, %v2247
    %2251 = vmatprep.subr.mxu0 %v2119
    %2252 = vmatpush1.msra.mxu0 %v2118
    %2253 = vmatprep.subr.mxu0 %v2121
    %2254 = vmatpush1.msra.mxu0 %v2120
    %2255 = vmatprep.subr.mxu0 %v2123
    %2256 = vmatpush1.msra.mxu0 %v2122
    %2257 = vmatprep.subr.mxu0 %v2125
    %2258 = vmatpush1.msra.mxu0 %v2124
    %2259 = vmatprep.subr.mxu0 0.0
    %2260 = vmatpush1.msra.mxu0 0.0
    %2261 = vmatprep.subr.mxu0 0.0
    %2262 = vmatpush1.msra.mxu0 0.0
    %2263 = vmatprep.subr.mxu0 0.0
    %2264 = vmatpush1.msra.mxu0 0.0
    %2265 = vmatprep.subr.mxu0 0.0
    %2266 = vmatpush1.msra.mxu0 0.0
    %2267 = vmatprep.subr.mxu0 0.0
    %2268 = vmatpush1.msra.mxu0 0.0
    %2269 = vmatprep.subr.mxu0 0.0
    %2270 = vmatpush1.msra.mxu0 0.0
    %2271 = vmatprep.subr.mxu0 0.0
    %2272 = vmatpush1.msra.mxu0 0.0
    %2273 = vmatprep.subr.mxu0 0.0
    %2274 = vmatpush1.msra.mxu0 0.0
    %2275 = vmatprep.subr.mxu0 0.0
    %2276 = vmatpush1.msra.mxu0 0.0
    %2277 = vmatprep.subr.mxu0 0.0
    %2278 = vmatpush1.msra.mxu0 0.0
    %2279 = vmatprep.subr.mxu0 0.0
    %2280 = vmatpush1.msra.mxu0 0.0
    %2281 = vmatprep.subr.mxu0 0.0
    %2282 = vmatpush1.msra.mxu0 0.0
    %2283 = vmatprep.subr.mxu0 0.0
    %2284 = vmatpush1.msra.mxu0 0.0
    %2285 = vmatprep.subr.mxu0 0.0
    %2286 = vmatpush1.msra.mxu0 0.0
    %2287 = vmatprep.subr.mxu0 0.0
    %2288 = vmatpush1.msra.mxu0 0.0
    %2289 = vmatprep.subr.mxu0 0.0
    %2290 = vmatpush1.msra.mxu0 0.0
    %2291 = vmatprep.subr.mxu0 0.0
    %2292 = vmatpush1.msra.mxu0 0.0
    %2293 = vmatprep.subr.mxu0 0.0
    %2294 = vmatpush1.msra.mxu0 0.0
    %2295 = vmatprep.subr.mxu0 0.0
    %2296 = vmatpush1.msra.mxu0 0.0
    %2297 = vmatprep.subr.mxu0 0.0
    %2298 = vmatpush1.msra.mxu0 0.0
    %2299 = vmatprep.subr.mxu0 0.0
    %2300 = vmatpush1.msra.mxu0 0.0
    %2301 = vmatprep.subr.mxu0 0.0
    %2302 = vmatpush1.msra.mxu0 0.0
    %2303 = vmatprep.subr.mxu0 0.0
    %2304 = vmatpush1.msra.mxu0 0.0
    %2305 = vmatprep.subr.mxu0 0.0
    %2306 = vmatpush1.msra.mxu0 0.0
    %2307 = vmatprep.subr.mxu0 0.0
    %2308 = vmatpush1.msra.mxu0 0.0
    %2309 = vmatprep.subr.mxu0 0.0
    %2310 = vmatpush1.msra.mxu0 0.0
    %2311 = vmatprep.subr.mxu0 0.0
    %2312 = vmatpush1.msra.mxu0 0.0
    %2313 = vmatprep.subr.mxu0 0.0
    %2314 = vmatpush1.msra.mxu0 0.0
    %2315 = vmatprep.mubr.f32.mxu0 0.0
    %2316 = vmatmul.mubr.f32.gmra.mrb[0].mxu0 %v2016
    %v2317 = vpop.f32.mrb[0].mxu0
    %v2318 = vadd.f32 %v2244, %v2317
    %v2319 = vpop.f32.mrb[0].mxu0
    %v2320 = vadd.f32 %v2248, %v2319
    %2321 = vdwg.mxu0
    %v2322 = vadd.f32 %v2114, %v2318
    %v2323 = vadd.f32 %v2117, %v2320
    %v2324 = vtanh.pop %v2322
    %v2325 = vtanh.pop %v2323
    %2326 = vmatprep.subr.mxu0 0.0
    %2327 = vmatpush1.msra.mxu0 %v2127
    %2328 = vmatprep.subr.mxu0 0.0
    %2329 = vmatpush1.msra.mxu0 %v2128
    %2330 = vmatprep.subr.mxu0 0.0
    %2331 = vmatpush1.msra.mxu0 %v2129
    %2332 = vmatprep.subr.mxu0 0.0
    %2333 = vmatpush1.msra.mxu0 %v2130
    %2334 = vmatprep.subr.mxu0 0.0
    %2335 = vmatpush1.msra.mxu0 %v2131
    %2336 = vmatprep.subr.mxu0 0.0
    %2337 = vmatpush1.msra.mxu0 %v2132
    %2338 = vmatprep.subr.mxu0 0.0
    %2339 = vmatpush1.msra.mxu0 %v2133
    %2340 = vmatprep.subr.mxu0 0.0
    %2341 = vmatpush1.msra.mxu0 %v2134
    %2342 = vmatprep.subr.mxu0 0.0
    %2343 = vmatpush1.msra.mxu0 %v2135
    %2344 = vmatprep.subr.mxu0 0.0
    %2345 = vmatpush1.msra.mxu0 %v2136
    %2346 = vmatprep.subr.mxu0 0.0
    %2347 = vmatpush1.msra.mxu0 %v2137
    %2348 = vmatprep.subr.mxu0 0.0
    %2349 = vmatpush1.msra.mxu0 %v2138
    %2350 = vmatprep.subr.mxu0 0.0
    %2351 = vmatpush1.msra.mxu0 %v2139
    %2352 = vmatprep.subr.mxu0 0.0
    %2353 = vmatpush1.msra.mxu0 %v2140
    %2354 = vmatprep.subr.mxu0 0.0
    %2355 = vmatpush1.msra.mxu0 %v2141
    %2356 = vmatprep.subr.mxu0 0.0
    %2357 = vmatpush1.msra.mxu0 %v2142
    %2358 = vmatprep.subr.mxu0 0.0
    %2359 = vmatpush1.msra.mxu0 %v2143
    %2360 = vmatprep.subr.mxu0 0.0
    %2361 = vmatpush1.msra.mxu0 %v2144
    %2362 = vmatprep.subr.mxu0 0.0
    %2363 = vmatpush1.msra.mxu0 %v2145
    %2364 = vmatprep.subr.mxu0 0.0
    %2365 = vmatpush1.msra.mxu0 %v2146
    %2366 = vmatprep.subr.mxu0 0.0
    %2367 = vmatpush1.msra.mxu0 %v2147
    %2368 = vmatprep.subr.mxu0 0.0
    %2369 = vmatpush1.msra.mxu0 %v2148
    %2370 = vmatprep.subr.mxu0 0.0
    %2371 = vmatpush1.msra.mxu0 %v2149
    %2372 = vmatprep.subr.mxu0 0.0
    %2373 = vmatpush1.msra.mxu0 %v2150
    %2374 = vmatprep.subr.mxu0 0.0
    %2375 = vmatpush1.msra.mxu0 %v2151
    %2376 = vmatprep.subr.mxu0 0.0
    %2377 = vmatpush1.msra.mxu0 %v2152
    %2378 = vmatprep.subr.mxu0 0.0
    %2379 = vmatpush1.msra.mxu0 %v2153
    %2380 = vmatprep.subr.mxu0 0.0
    %2381 = vmatpush1.msra.mxu0 %v2154
    %2382 = vmatprep.subr.mxu0 0.0
    %2383 = vmatpush1.msra.mxu0 %v2155
    %2384 = vmatprep.subr.mxu0 0.0
    %2385 = vmatpush1.msra.mxu0 %v2156
    %2386 = vmatprep.subr.mxu0 0.0
    %2387 = vmatpush1.msra.mxu0 %v2157
    %2388 = vmatprep.subr.mxu0 0.0
    %2389 = vmatpush1.msra.mxu0 %v2158
    %2390 = vmatprep.mubr.f32.mxu0 %v2325
    %2391 = vmatmul.mubr.f32.gmra.mrb[0].mxu0 %v2324
    %v2392 = vpop.f32.mrb[0].mxu0
    %v2393 = vadd.f32 0.0, %v2392
    %v2394 = vpop.f32.mrb[0].mxu0
    %2395 = vdwg.mxu0
    %vm2396 = vcmask 58368
    %v2397 = vsel %vm2396, %v2393, -inf
    %2398 = vmax.xlane.f32.xlu0 %v2397
    %v2399 = vpop.xlane.xlu0 %2398
    %v2400 = vsub.f32 %v2393, %v2399
    %v2401 = vmul.f32 %v2400, 1.442695
    %v2402 = vpow.pop %v2401
    %v2403 = vsel %vm2396, %v2402, 0.0
    %2404 = vadd.xlane.f32.xlu0 %v2403
    %v2405 = vpop.xlane.xlu0 %2404
    %v2406 = vrcp.pop %v2405
    %v2407 = vmul.f32 1.0, %v2406
    %v2408 = vmul.f32 %v2402, %v2407
    %vm2409 = vcmask 64512
    %v2411 = vsel %vm2409, %v2408, 0
    %2413 = vmatprep.subr.mxu0 %v2160
    %2414 = vmatpush1.msra.mxu0 %v2159
    %2415 = vmatprep.subr.mxu0 0.0
    %2416 = vmatpush1.msra.mxu0 0.0
    %2417 = vmatprep.subr.mxu0 0.0
    %2418 = vmatpush1.msra.mxu0 0.0
    %2419 = vmatprep.subr.mxu0 0.0
    %2420 = vmatpush1.msra.mxu0 0.0
    %2421 = vmatprep.subr.mxu0 0.0
    %2422 = vmatpush1.msra.mxu0 0.0
    %2423 = vmatprep.subr.mxu0 0.0
    %2424 = vmatpush1.msra.mxu0 0.0
    %2425 = vmatprep.subr.mxu0 0.0
    %2426 = vmatpush1.msra.mxu0 0.0
    %2427 = vmatprep.subr.mxu0 0.0
    %2428 = vmatpush1.msra.mxu0 0.0
    %2429 = vmatprep.subr.mxu0 0.0
    %2430 = vmatpush1.msra.mxu0 0.0
    %2431 = vmatprep.subr.mxu0 0.0
    %2432 = vmatpush1.msra.mxu0 0.0
    %2433 = vmatprep.subr.mxu0 0.0
    %2434 = vmatpush1.msra.mxu0 0.0
    %2435 = vmatprep.subr.mxu0 0.0
    %2436 = vmatpush1.msra.mxu0 0.0
    %2437 = vmatprep.subr.mxu0 0.0
    %2438 = vmatpush1.msra.mxu0 0.0
    %2439 = vmatprep.subr.mxu0 0.0
    %2440 = vmatpush1.msra.mxu0 0.0
    %2441 = vmatprep.subr.mxu0 0.0
    %2442 = vmatpush1.msra.mxu0 0.0
    %2443 = vmatprep.subr.mxu0 0.0
    %2444 = vmatpush1.msra.mxu0 0.0
    %2445 = vmatprep.subr.mxu0 0.0
    %2446 = vmatpush1.msra.mxu0 0.0
    %2447 = vmatprep.subr.mxu0 0.0
    %2448 = vmatpush1.msra.mxu0 0.0
    %2449 = vmatprep.subr.mxu0 0.0
    %2450 = vmatpush1.msra.mxu0 0.0
    %2451 = vmatprep.subr.mxu0 0.0
    %2452 = vmatpush1.msra.mxu0 0.0
    %2453 = vmatprep.subr.mxu0 0.0
    %2454 = vmatpush1.msra.mxu0 0.0
    %2455 = vmatprep.subr.mxu0 0.0
    %2456 = vmatpush1.msra.mxu0 0.0
    %2457 = vmatprep.subr.mxu0 0.0
    %2458 = vmatpush1.msra.mxu0 0.0
    %2459 = vmatprep.subr.mxu0 0.0
    %2460 = vmatpush1.msra.mxu0 0.0
    %2461 = vmatprep.subr.mxu0 0.0
    %2462 = vmatpush1.msra.mxu0 0.0
    %2463 = vmatprep.subr.mxu0 0.0
    %2464 = vmatpush1.msra.mxu0 0.0
    %2465 = vmatprep.subr.mxu0 0.0
    %2466 = vmatpush1.msra.mxu0 0.0
    %2467 = vmatprep.subr.mxu0 0.0
    %2468 = vmatpush1.msra.mxu0 0.0
    %2469 = vmatprep.subr.mxu0 0.0
    %2470 = vmatpush1.msra.mxu0 0.0
    %2471 = vmatprep.subr.mxu0 0.0
    %2472 = vmatpush1.msra.mxu0 0.0
    %2473 = vmatprep.subr.mxu0 0.0
    %2474 = vmatpush1.msra.mxu0 0.0
    %2475 = vmatprep.subr.mxu0 0.0
    %2476 = vmatpush1.msra.mxu0 0.0
    %2477 = vmatprep.mubr.f32.mxu0 0.0
    %2478 = vmatmul.mubr.f32.gmra.mrb[0].mxu0 %v2411
    %v2479 = vpop.f32.mrb[0].mxu0
    %v2480 = vadd.f32 0.0, %v2479
    %v2481 = vpop.f32.mrb[0].mxu0
    %v2482 = vadd.f32 0.0, %v2481
    %2483 = vdwg.mxu0
    %v2484 = vmul.f32 %v2480, %v1520
    %v2485 = vmul.f32 %v2482, %v1523
    %2486 = vmatprep.subr.mxu0 0.0
    %2487 = vmatpush1.msra.mxu0 %v2161
    %2488 = vmatprep.subr.mxu0 0.0
    %2489 = vmatpush1.msra.mxu0 %v2162
    %2490 = vmatprep.subr.mxu0 0.0
    %2491 = vmatpush1.msra.mxu0 %v2163
    %2492 = vmatprep.subr.mxu0 0.0
    %2493 = vmatpush1.msra.mxu0 %v2164
    %2494 = vmatprep.subr.mxu0 0.0
    %2495 = vmatpush1.msra.mxu0 %v2165
    %2496 = vmatprep.subr.mxu0 0.0
    %2497 = vmatpush1.msra.mxu0 %v2166
    %2498 = vmatprep.subr.mxu0 0.0
    %2499 = vmatpush1.msra.mxu0 %v2167
    %2500 = vmatprep.subr.mxu0 0.0
    %2501 = vmatpush1.msra.mxu0 %v2168
    %2502 = vmatprep.subr.mxu0 0.0
    %2503 = vmatpush1.msra.mxu0 %v2169
    %2504 = vmatprep.subr.mxu0 0.0
    %2505 = vmatpush1.msra.mxu0 %v2170
    %2506 = vmatprep.subr.mxu0 0.0
    %2507 = vmatpush1.msra.mxu0 %v2171
    %2508 = vmatprep.subr.mxu0 0.0
    %2509 = vmatpush1.msra.mxu0 %v2172
    %2510 = vmatprep.subr.mxu0 0.0
    %2511 = vmatpush1.msra.mxu0 %v2173
    %2512 = vmatprep.subr.mxu0 0.0
    %2513 = vmatpush1.msra.mxu0 %v2174
    %2514 = vmatprep.subr.mxu0 0.0
    %2515 = vmatpush1.msra.mxu0 %v2175
    %2516 = vmatprep.subr.mxu0 0.0
    %2517 = vmatpush1.msra.mxu0 %v2176
    %2518 = vmatprep.subr.mxu0 0.0
    %2519 = vmatpush1.msra.mxu0 %v2177
    %2520 = vmatprep.subr.mxu0 0.0
    %2521 = vmatpush1.msra.mxu0 %v2178
    %2522 = vmatprep.subr.mxu0 0.0
    %2523 = vmatpush1.msra.mxu0 %v2179
    %2524 = vmatprep.subr.mxu0 0.0
    %2525 = vmatpush1.msra.mxu0 %v2180
    %2526 = vmatprep.subr.mxu0 0.0
    %2527 = vmatpush1.msra.mxu0 %v2181
    %2528 = vmatprep.subr.mxu0 0.0
    %2529 = vmatpush1.msra.mxu0 %v2182
    %2530 = vmatprep.subr.mxu0 0.0
    %2531 = vmatpush1.msra.mxu0 %v2183
    %2532 = vmatprep.subr.mxu0 0.0
    %2533 = vmatpush1.msra.mxu0 %v2184
    %2534 = vmatprep.subr.mxu0 0.0
    %2535 = vmatpush1.msra.mxu0 %v2185
    %2536 = vmatprep.subr.mxu0 0.0
    %2537 = vmatpush1.msra.mxu0 %v2186
    %2538 = vmatprep.subr.mxu0 0.0
    %2539 = vmatpush1.msra.mxu0 %v2187
    %2540 = vmatprep.subr.mxu0 0.0
    %2541 = vmatpush1.msra.mxu0 %v2188
    %2542 = vmatprep.subr.mxu0 0.0
    %2543 = vmatpush1.msra.mxu0 %v2189
    %2544 = vmatprep.subr.mxu0 0.0
    %2545 = vmatpush1.msra.mxu0 %v2190
    %2546 = vmatprep.subr.mxu0 0.0
    %2547 = vmatpush1.msra.mxu0 %v2191
    %2548 = vmatprep.subr.mxu0 0.0
    %2549 = vmatpush1.msra.mxu0 %v2192
    %2550 = vmatprep.mubr.f32.mxu0 %v2485
    %2551 = vmatmul.mubr.f32.gmra.mrb[0].mxu0 %v2484
    %v2552 = vpop.f32.mrb[0].mxu0
    %v2553 = vadd.f32 0.0, %v2552
    %v2554 = vpop.f32.mrb[0].mxu0
    %2555 = vdwg.mxu0
    %v2557 = vsel %vm98, %v2553, 0
    %2559 = vmatprep.subr.mxu0 0.0
    %2560 = vmatpush1.msra.mxu0 %v2197
    %2561 = vmatprep.subr.mxu0 0.0
    %2562 = vmatpush1.msra.mxu0 %v2198
    %2563 = vmatprep.subr.mxu0 0.0
    %2564 = vmatpush1.msra.mxu0 %v2199
    %2565 = vmatprep.subr.mxu0 0.0
    %2566 = vmatpush1.msra.mxu0 %v2200
    %2567 = vmatprep.subr.mxu0 0.0
    %2568 = vmatpush1.msra.mxu0 0.0
    %2569 = vmatprep.subr.mxu0 0.0
    %2570 = vmatpush1.msra.mxu0 0.0
    %2571 = vmatprep.subr.mxu0 0.0
    %2572 = vmatpush1.msra.mxu0 0.0
    %2573 = vmatprep.subr.mxu0 0.0
    %2574 = vmatpush1.msra.mxu0 0.0
    %2575 = vmatprep.subr.mxu0 0.0
    %2576 = vmatpush1.msra.mxu0 0.0
    %2577 = vmatprep.subr.mxu0 0.0
    %2578 = vmatpush1.msra.mxu0 0.0
    %2579 = vmatprep.subr.mxu0 0.0
    %2580 = vmatpush1.msra.mxu0 0.0
    %2581 = vmatprep.subr.mxu0 0.0
    %2582 = vmatpush1.msra.mxu0 0.0
    %2583 = vmatprep.subr.mxu0 0.0
    %2584 = vmatpush1.msra.mxu0 0.0
    %2585 = vmatprep.subr.mxu0 0.0
    %2586 = vmatpush1.msra.mxu0 0.0
    %2587 = vmatprep.subr.mxu0 0.0
    %2588 = vmatpush1.msra.mxu0 0.0
    %2589 = vmatprep.subr.mxu0 0.0
    %2590 = vmatpush1.msra.mxu0 0.0
    %2591 = vmatprep.subr.mxu0 0.0
    %2592 = vmatpush1.msra.mxu0 0.0
    %2593 = vmatprep.subr.mxu0 0.0
    %2594 = vmatpush1.msra.mxu0 0.0
    %2595 = vmatprep.subr.mxu0 0.0
    %2596 = vmatpush1.msra.mxu0 0.0
    %2597 = vmatprep.subr.mxu0 0.0
    %2598 = vmatpush1.msra.mxu0 0.0
    %2599 = vmatprep.subr.mxu0 0.0
    %2600 = vmatpush1.msra.mxu0 0.0
    %2601 = vmatprep.subr.mxu0 0.0
    %2602 = vmatpush1.msra.mxu0 0.0
    %2603 = vmatprep.subr.mxu0 0.0
    %2604 = vmatpush1.msra.mxu0 0.0
    %2605 = vmatprep.subr.mxu0 0.0
    %2606 = vmatpush1.msra.mxu0 0.0
    %2607 = vmatprep.subr.mxu0 0.0
    %2608 = vmatpush1.msra.mxu0 0.0
    %2609 = vmatprep.subr.mxu0 0.0
    %2610 = vmatpush1.msra.mxu0 0.0
    %2611 = vmatprep.subr.mxu0 0.0
    %2612 = vmatpush1.msra.mxu0 0.0
    %2613 = vmatprep.subr.mxu0 0.0
    %2614 = vmatpush1.msra.mxu0 0.0
    %2615 = vmatprep.subr.mxu0 0.0
    %2616 = vmatpush1.msra.mxu0 0.0
    %2617 = vmatprep.subr.mxu0 0.0
    %2618 = vmatpush1.msra.mxu0 0.0
    %2619 = vmatprep.subr.mxu0 0.0
    %2620 = vmatpush1.msra.mxu0 0.0
    %2621 = vmatprep.subr.mxu0 0.0
    %2622 = vmatpush1.msra.mxu0 0.0
    %2623 = vmatprep.mubr.f32.mxu0 0.0
    %2624 = vmatmul.mubr.f32.gmra.mrb[0].mxu0 %v2557
    %v2625 = vpop.f32.mrb[0].mxu0
    %v2626 = vadd.f32 0.0, %v2625
    %v2627 = vpop.f32.mrb[0].mxu0
    %2628 = vdwg.mxu0
    %v2630 = vsel %vm98, %v2239, 0
    %2632 = vmatprep.subr.mxu0 0.0
    %2633 = vmatpush1.msra.mxu0 %v2193
    %2634 = vmatprep.subr.mxu0 0.0
    %2635 = vmatpush1.msra.mxu0 %v2194
    %2636 = vmatprep.subr.mxu0 0.0
    %2637 = vmatpush1.msra.mxu0 %v2195
    %2638 = vmatprep.subr.mxu0 0.0
    %2639 = vmatpush1.msra.mxu0 %v2196
    %2640 = vmatprep.subr.mxu0 0.0
    %2641 = vmatpush1.msra.mxu0 0.0
    %2642 = vmatprep.subr.mxu0 0.0
    %2643 = vmatpush1.msra.mxu0 0.0
    %2644 = vmatprep.subr.mxu0 0.0
    %2645 = vmatpush1.msra.mxu0 0.0
    %2646 = vmatprep.subr.mxu0 0.0
    %2647 = vmatpush1.msra.mxu0 0.0
    %2648 = vmatprep.subr.mxu0 0.0
    %2649 = vmatpush1.msra.mxu0 0.0
    %2650 = vmatprep.subr.mxu0 0.0
    %2651 = vmatpush1.msra.mxu0 0.0
    %2652 = vmatprep.subr.mxu0 0.0
    %2653 = vmatpush1.msra.mxu0 0.0
    %2654 = vmatprep.subr.mxu0 0.0
    %2655 = vmatpush1.msra.mxu0 0.0
    %2656 = vmatprep.subr.mxu0 0.0
    %2657 = vmatpush1.msra.mxu0 0.0
    %2658 = vmatprep.subr.mxu0 0.0
    %2659 = vmatpush1.msra.mxu0 0.0
    %2660 = vmatprep.subr.mxu0 0.0
    %2661 = vmatpush1.msra.mxu0 0.0
    %2662 = vmatprep.subr.mxu0 0.0
    %2663 = vmatpush1.msra.mxu0 0.0
    %2664 = vmatprep.subr.mxu0 0.0
    %2665 = vmatpush1.msra.mxu0 0.0
    %2666 = vmatprep.subr.mxu0 0.0
    %2667 = vmatpush1.msra.mxu0 0.0
    %2668 = vmatprep.subr.mxu0 0.0
    %2669 = vmatpush1.msra.mxu0 0.0
    %2670 = vmatprep.subr.mxu0 0.0
    %2671 = vmatpush1.msra.mxu0 0.0
    %2672 = vmatprep.subr.mxu0 0.0
    %2673 = vmatpush1.msra.mxu0 0.0
    %2674 = vmatprep.subr.mxu0 0.0
    %2675 = vmatpush1.msra.mxu0 0.0
    %2676 = vmatprep.subr.mxu0 0.0
    %2677 = vmatpush1.msra.mxu0 0.0
    %2678 = vmatprep.subr.mxu0 0.0
    %2679 = vmatpush1.msra.mxu0 0.0
    %2680 = vmatprep.subr.mxu0 0.0
    %2681 = vmatpush1.msra.mxu0 0.0
    %2682 = vmatprep.subr.mxu0 0.0
    %2683 = vmatpush1.msra.mxu0 0.0
    %2684 = vmatprep.subr.mxu0 0.0
    %2685 = vmatpush1.msra.mxu0 0.0
    %2686 = vmatprep.subr.mxu0 0.0
    %2687 = vmatpush1.msra.mxu0 0.0
    %2688 = vmatprep.subr.mxu0 0.0
    %2689 = vmatpush1.msra.mxu0 0.0
    %2690 = vmatprep.subr.mxu0 0.0
    %2691 = vmatpush1.msra.mxu0 0.0
    %2692 = vmatprep.subr.mxu0 0.0
    %2693 = vmatpush1.msra.mxu0 0.0
    %2694 = vmatprep.subr.mxu0 0.0
    %2695 = vmatpush1.msra.mxu0 0.0
    %2696 = vmatprep.mubr.f32.mxu0 0.0
    %2697 = vmatmul.mubr.f32.gmra.mrb[0].mxu0 %v2630
    %v2698 = vpop.f32.mrb[0].mxu0
    %v2699 = vadd.f32 %v2626, %v2698
    %v2700 = vpop.f32.mrb[0].mxu0
    %2701 = vdwg.mxu0
    %v2703 = vlaneseq
    %v2704 = vshrl.u32 %v2703, 7
    %v2705 = vsub.s32 0, %v2704
    %v2706 = vrot.slane %v2205, %v2705
    %v2708 = vadd.f32 %v2699, %v2706
    %v2710 = vlaneseq
    %v2711 = vshrl.u32 %v2710, 7
    %v2712 = vsub.s32 0, %v2711
    %v2713 = vrot.slane %v2206, %v2712
    %2715 = vmatprep.subr.mxu0 0.0
    %2716 = vmatpush1.msra.mxu0 %v2201
    %2717 = vmatprep.subr.mxu0 0.0
    %2718 = vmatpush1.msra.mxu0 %v2202
    %2719 = vmatprep.subr.mxu0 0.0
    %2720 = vmatpush1.msra.mxu0 %v2203
    %2721 = vmatprep.subr.mxu0 0.0
    %2722 = vmatpush1.msra.mxu0 %v2204
    %2723 = vmatprep.subr.mxu0 0.0
    %2724 = vmatpush1.msra.mxu0 0.0
    %2725 = vmatprep.subr.mxu0 0.0
    %2726 = vmatpush1.msra.mxu0 0.0
    %2727 = vmatprep.subr.mxu0 0.0
    %2728 = vmatpush1.msra.mxu0 0.0
    %2729 = vmatprep.subr.mxu0 0.0
    %2730 = vmatpush1.msra.mxu0 0.0
    %2731 = vmatprep.subr.mxu0 0.0
    %2732 = vmatpush1.msra.mxu0 0.0
    %2733 = vmatprep.subr.mxu0 0.0
    %2734 = vmatpush1.msra.mxu0 0.0
    %2735 = vmatprep.subr.mxu0 0.0
    %2736 = vmatpush1.msra.mxu0 0.0
    %2737 = vmatprep.subr.mxu0 0.0
    %2738 = vmatpush1.msra.mxu0 0.0
    %2739 = vmatprep.subr.mxu0 0.0
    %2740 = vmatpush1.msra.mxu0 0.0
    %2741 = vmatprep.subr.mxu0 0.0
    %2742 = vmatpush1.msra.mxu0 0.0
    %2743 = vmatprep.subr.mxu0 0.0
    %2744 = vmatpush1.msra.mxu0 0.0
    %2745 = vmatprep.subr.mxu0 0.0
    %2746 = vmatpush1.msra.mxu0 0.0
    %2747 = vmatprep.subr.mxu0 0.0
    %2748 = vmatpush1.msra.mxu0 0.0
    %2749 = vmatprep.subr.mxu0 0.0
    %2750 = vmatpush1.msra.mxu0 0.0
    %2751 = vmatprep.subr.mxu0 0.0
    %2752 = vmatpush1.msra.mxu0 0.0
    %2753 = vmatprep.subr.mxu0 0.0
    %2754 = vmatpush1.msra.mxu0 0.0
    %2755 = vmatprep.subr.mxu0 0.0
    %2756 = vmatpush1.msra.mxu0 0.0
    %2757 = vmatprep.subr.mxu0 0.0
    %2758 = vmatpush1.msra.mxu0 0.0
    %2759 = vmatprep.subr.mxu0 0.0
    %2760 = vmatpush1.msra.mxu0 0.0
    %2761 = vmatprep.subr.mxu0 0.0
    %2762 = vmatpush1.msra.mxu0 0.0
    %2763 = vmatprep.subr.mxu0 0.0
    %2764 = vmatpush1.msra.mxu0 0.0
    %2765 = vmatprep.subr.mxu0 0.0
    %2766 = vmatpush1.msra.mxu0 0.0
    %2767 = vmatprep.subr.mxu0 0.0
    %2768 = vmatpush1.msra.mxu0 0.0
    %2769 = vmatprep.subr.mxu0 0.0
    %2770 = vmatpush1.msra.mxu0 0.0
    %2771 = vmatprep.subr.mxu0 0.0
    %2772 = vmatpush1.msra.mxu0 0.0
    %2773 = vmatprep.subr.mxu0 0.0
    %2774 = vmatpush1.msra.mxu0 0.0
    %2775 = vmatprep.subr.mxu0 0.0
    %2776 = vmatpush1.msra.mxu0 0.0
    %2777 = vmatprep.subr.mxu0 0.0
    %2778 = vmatpush1.msra.mxu0 0.0
    %2779 = vmatprep.mubr.f32.mxu0 0.0
    %2780 = vmatmul.mubr.f32.gmra.mrb[0].mxu0 %v2016
    %v2781 = vpop.f32.mrb[0].mxu0
    %v2782 = vadd.f32 %v2713, %v2781
    %v2783 = vpop.f32.mrb[0].mxu0
    %2784 = vdwg.mxu0
    %v2785 = vadd.f32 %v2708, %v2782
    %v2786 = vxor.u32 %v2785, 2147483648
    %v2787 = vmul.f32 %v2786, 1.442695
    %v2788 = vpow.pop %v2787
    %v2789 = vadd.f32 %v2788, 1.0
    %v2790 = vrcp.pop %v2789
    %v2791 = vmul.f32 1.0, %v2790
    %2793 = vrot.lane.b32.xlu0 %v2782, 64
    %v2794 = vpop.permute.xlu0 %2793
    %v2796 = vmul.f32 %v2791, %v2794
    %2798 = vrot.lane.b32.xlu0 %v2796, 64
    %v2799 = vpop.permute.xlu0 %2798
    %v2801 = vadd.f32 %v2708, %v2799
    %v2802 = vtanh.pop %v2801
    %v2803 = vsub.f32 1.0, %v2791
    %2805 = vrot.lane.b32.xlu0 %v2802, 96
    %v2806 = vpop.permute.xlu0 %2805
    %v2808 = vmul.f32 %v2803, %v2806
    %2809 = vrot.lane.b32.xlu0 %v1500, 96
    %v2810 = vpop.permute.xlu0 %2809
    %v2812 = vmul.f32 %v2791, %v2810
    %v2813 = vadd.f32 %v2808, %v2812
    %2814 = vmatprep.subr.mxu0 0.0
    %2815 = vmatpush1.msra.mxu0 %v2211
    %2816 = vmatprep.subr.mxu0 0.0
    %2817 = vmatpush1.msra.mxu0 %v2212
    %2818 = vmatprep.subr.mxu0 0.0
    %2819 = vmatpush1.msra.mxu0 %v2213
    %2820 = vmatprep.subr.mxu0 0.0
    %2821 = vmatpush1.msra.mxu0 %v2214
    %2822 = vmatprep.subr.mxu0 0.0
    %2823 = vmatpush1.msra.mxu0 0.0
    %2824 = vmatprep.subr.mxu0 0.0
    %2825 = vmatpush1.msra.mxu0 0.0
    %2826 = vmatprep.subr.mxu0 0.0
    %2827 = vmatpush1.msra.mxu0 0.0
    %2828 = vmatprep.subr.mxu0 0.0
    %2829 = vmatpush1.msra.mxu0 0.0
    %2830 = vmatprep.subr.mxu0 0.0
    %2831 = vmatpush1.msra.mxu0 0.0
    %2832 = vmatprep.subr.mxu0 0.0
    %2833 = vmatpush1.msra.mxu0 0.0
    %2834 = vmatprep.subr.mxu0 0.0
    %2835 = vmatpush1.msra.mxu0 0.0
    %2836 = vmatprep.subr.mxu0 0.0
    %2837 = vmatpush1.msra.mxu0 0.0
    %2838 = vmatprep.subr.mxu0 0.0
    %2839 = vmatpush1.msra.mxu0 0.0
    %2840 = vmatprep.subr.mxu0 0.0
    %2841 = vmatpush1.msra.mxu0 0.0
    %2842 = vmatprep.subr.mxu0 0.0
    %2843 = vmatpush1.msra.mxu0 0.0
    %2844 = vmatprep.subr.mxu0 0.0
    %2845 = vmatpush1.msra.mxu0 0.0
    %2846 = vmatprep.subr.mxu0 0.0
    %2847 = vmatpush1.msra.mxu0 0.0
    %2848 = vmatprep.subr.mxu0 0.0
    %2849 = vmatpush1.msra.mxu0 0.0
    %2850 = vmatprep.subr.mxu0 0.0
    %2851 = vmatpush1.msra.mxu0 0.0
    %2852 = vmatprep.subr.mxu0 0.0
    %2853 = vmatpush1.msra.mxu0 0.0
    %2854 = vmatprep.subr.mxu0 0.0
    %2855 = vmatpush1.msra.mxu0 0.0
    %2856 = vmatprep.subr.mxu0 0.0
    %2857 = vmatpush1.msra.mxu0 0.0
    %2858 = vmatprep.subr.mxu0 0.0
    %2859 = vmatpush1.msra.mxu0 0.0
    %2860 = vmatprep.subr.mxu0 0.0
    %2861 = vmatpush1.msra.mxu0 0.0
    %2862 = vmatprep.subr.mxu0 0.0
    %2863 = vmatpush1.msra.mxu0 0.0
    %2864 = vmatprep.subr.mxu0 0.0
    %2865 = vmatpush1.msra.mxu0 0.0
    %2866 = vmatprep.subr.mxu0 0.0
    %2867 = vmatpush1.msra.mxu0 0.0
    %2868 = vmatprep.subr.mxu0 0.0
    %2869 = vmatpush1.msra.mxu0 0.0
    %2870 = vmatprep.subr.mxu0 0.0
    %2871 = vmatpush1.msra.mxu0 0.0
    %2872 = vmatprep.subr.mxu0 0.0
    %2873 = vmatpush1.msra.mxu0 0.0
    %2874 = vmatprep.subr.mxu0 0.0
    %2875 = vmatpush1.msra.mxu0 0.0
    %2876 = vmatprep.subr.mxu0 0.0
    %2877 = vmatpush1.msra.mxu0 0.0
    %2878 = vmatprep.mubr.f32.mxu0 0.0
    %2879 = vmatmul.mubr.f32.gmra.mrb[0].mxu0 %v2557
    %v2880 = vpop.f32.mrb[0].mxu0
    %v2881 = vadd.f32 0.0, %v2880
    %v2882 = vpop.f32.mrb[0].mxu0
    %2883 = vdwg.mxu0
    %2885 = vrot.lane.b32.xlu0 %v2813, 96
    %v2886 = vpop.permute.xlu0 %2885
    %v2887 = vsel %vm98, %v2886, 0
    %2889 = vmatprep.subr.mxu0 0.0
    %2890 = vmatpush1.msra.mxu0 %v2207
    %2891 = vmatprep.subr.mxu0 0.0
    %2892 = vmatpush1.msra.mxu0 %v2208
    %2893 = vmatprep.subr.mxu0 0.0
    %2894 = vmatpush1.msra.mxu0 %v2209
    %2895 = vmatprep.subr.mxu0 0.0
    %2896 = vmatpush1.msra.mxu0 %v2210
    %2897 = vmatprep.subr.mxu0 0.0
    %2898 = vmatpush1.msra.mxu0 0.0
    %2899 = vmatprep.subr.mxu0 0.0
    %2900 = vmatpush1.msra.mxu0 0.0
    %2901 = vmatprep.subr.mxu0 0.0
    %2902 = vmatpush1.msra.mxu0 0.0
    %2903 = vmatprep.subr.mxu0 0.0
    %2904 = vmatpush1.msra.mxu0 0.0
    %2905 = vmatprep.subr.mxu0 0.0
    %2906 = vmatpush1.msra.mxu0 0.0
    %2907 = vmatprep.subr.mxu0 0.0
    %2908 = vmatpush1.msra.mxu0 0.0
    %2909 = vmatprep.subr.mxu0 0.0
    %2910 = vmatpush1.msra.mxu0 0.0
    %2911 = vmatprep.subr.mxu0 0.0
    %2912 = vmatpush1.msra.mxu0 0.0
    %2913 = vmatprep.subr.mxu0 0.0
    %2914 = vmatpush1.msra.mxu0 0.0
    %2915 = vmatprep.subr.mxu0 0.0
    %2916 = vmatpush1.msra.mxu0 0.0
    %2917 = vmatprep.subr.mxu0 0.0
    %2918 = vmatpush1.msra.mxu0 0.0
    %2919 = vmatprep.subr.mxu0 0.0
    %2920 = vmatpush1.msra.mxu0 0.0
    %2921 = vmatprep.subr.mxu0 0.0
    %2922 = vmatpush1.msra.mxu0 0.0
    %2923 = vmatprep.subr.mxu0 0.0
    %2924 = vmatpush1.msra.mxu0 0.0
    %2925 = vmatprep.subr.mxu0 0.0
    %2926 = vmatpush1.msra.mxu0 0.0
    %2927 = vmatprep.subr.mxu0 0.0
    %2928 = vmatpush1.msra.mxu0 0.0
    %2929 = vmatprep.subr.mxu0 0.0
    %2930 = vmatpush1.msra.mxu0 0.0
    %2931 = vmatprep.subr.mxu0 0.0
    %2932 = vmatpush1.msra.mxu0 0.0
    %2933 = vmatprep.subr.mxu0 0.0
    %2934 = vmatpush1.msra.mxu0 0.0
    %2935 = vmatprep.subr.mxu0 0.0
    %2936 = vmatpush1.msra.mxu0 0.0
    %2937 = vmatprep.subr.mxu0 0.0
    %2938 = vmatpush1.msra.mxu0 0.0
    %2939 = vmatprep.subr.mxu0 0.0
    %2940 = vmatpush1.msra.mxu0 0.0
    %2941 = vmatprep.subr.mxu0 0.0
    %2942 = vmatpush1.msra.mxu0 0.0
    %2943 = vmatprep.subr.mxu0 0.0
    %2944 = vmatpush1.msra.mxu0 0.0
    %2945 = vmatprep.subr.mxu0 0.0
    %2946 = vmatpush1.msra.mxu0 0.0
    %2947 = vmatprep.subr.mxu0 0.0
    %2948 = vmatpush1.msra.mxu0 0.0
    %2949 = vmatprep.subr.mxu0 0.0
    %2950 = vmatpush1.msra.mxu0 0.0
    %2951 = vmatprep.subr.mxu0 0.0
    %2952 = vmatpush1.msra.mxu0 0.0
    %2953 = vmatprep.mubr.f32.mxu0 0.0
    %2954 = vmatmul.mubr.f32.gmra.mrb[0].mxu0 %v2887
    %v2955 = vpop.f32.mrb[0].mxu0
    %v2956 = vadd.f32 %v2881, %v2955
    %v2957 = vpop.f32.mrb[0].mxu0
    %2958 = vdwg.mxu0
    %2959 = vmatprep.subr.mxu0 0.0
    %2960 = vmatpush1.msra.mxu0 %v2215
    %2961 = vmatprep.subr.mxu0 0.0
    %2962 = vmatpush1.msra.mxu0 %v2216
    %2963 = vmatprep.subr.mxu0 0.0
    %2964 = vmatpush1.msra.mxu0 %v2217
    %2965 = vmatprep.subr.mxu0 0.0
    %2966 = vmatpush1.msra.mxu0 %v2218
    %2967 = vmatprep.subr.mxu0 0.0
    %2968 = vmatpush1.msra.mxu0 0.0
    %2969 = vmatprep.subr.mxu0 0.0
    %2970 = vmatpush1.msra.mxu0 0.0
    %2971 = vmatprep.subr.mxu0 0.0
    %2972 = vmatpush1.msra.mxu0 0.0
    %2973 = vmatprep.subr.mxu0 0.0
    %2974 = vmatpush1.msra.mxu0 0.0
    %2975 = vmatprep.subr.mxu0 0.0
    %2976 = vmatpush1.msra.mxu0 0.0
    %2977 = vmatprep.subr.mxu0 0.0
    %2978 = vmatpush1.msra.mxu0 0.0
    %2979 = vmatprep.subr.mxu0 0.0
    %2980 = vmatpush1.msra.mxu0 0.0
    %2981 = vmatprep.subr.mxu0 0.0
    %2982 = vmatpush1.msra.mxu0 0.0
    %2983 = vmatprep.subr.mxu0 0.0
    %2984 = vmatpush1.msra.mxu0 0.0
    %2985 = vmatprep.subr.mxu0 0.0
    %2986 = vmatpush1.msra.mxu0 0.0
    %2987 = vmatprep.subr.mxu0 0.0
    %2988 = vmatpush1.msra.mxu0 0.0
    %2989 = vmatprep.subr.mxu0 0.0
    %2990 = vmatpush1.msra.mxu0 0.0
    %2991 = vmatprep.subr.mxu0 0.0
    %2992 = vmatpush1.msra.mxu0 0.0
    %2993 = vmatprep.subr.mxu0 0.0
    %2994 = vmatpush1.msra.mxu0 0.0
    %2995 = vmatprep.subr.mxu0 0.0
    %2996 = vmatpush1.msra.mxu0 0.0
    %2997 = vmatprep.subr.mxu0 0.0
    %2998 = vmatpush1.msra.mxu0 0.0
    %2999 = vmatprep.subr.mxu0 0.0
    %3000 = vmatpush1.msra.mxu0 0.0
    %3001 = vmatprep.subr.mxu0 0.0
    %3002 = vmatpush1.msra.mxu0 0.0
    %3003 = vmatprep.subr.mxu0 0.0
    %3004 = vmatpush1.msra.mxu0 0.0
    %3005 = vmatprep.subr.mxu0 0.0
    %3006 = vmatpush1.msra.mxu0 0.0
    %3007 = vmatprep.subr.mxu0 0.0
    %3008 = vmatpush1.msra.mxu0 0.0
    %3009 = vmatprep.subr.mxu0 0.0
    %3010 = vmatpush1.msra.mxu0 0.0
    %3011 = vmatprep.subr.mxu0 0.0
    %3012 = vmatpush1.msra.mxu0 0.0
    %3013 = vmatprep.subr.mxu0 0.0
    %3014 = vmatpush1.msra.mxu0 0.0
    %3015 = vmatprep.subr.mxu0 0.0
    %3016 = vmatpush1.msra.mxu0 0.0
    %3017 = vmatprep.subr.mxu0 0.0
    %3018 = vmatpush1.msra.mxu0 0.0
    %3019 = vmatprep.subr.mxu0 0.0
    %3020 = vmatpush1.msra.mxu0 0.0
    %3021 = vmatprep.subr.mxu0 0.0
    %3022 = vmatpush1.msra.mxu0 0.0
    %3023 = vmatprep.mubr.f32.mxu0 0.0
    %3024 = vmatmul.mubr.f32.gmra.mrb[0].mxu0 %v2630
    %v3025 = vpop.f32.mrb[0].mxu0
    %v3026 = vadd.f32 0.0, %v3025
    %v3027 = vpop.f32.mrb[0].mxu0
    %3028 = vdwg.mxu0
    %v3029 = vadd.f32 %v2956, %v3026
    %v3031 = vlaneseq
    %v3032 = vshrl.u32 %v3031, 7
    %v3033 = vsub.s32 0, %v3032
    %v3034 = vrot.slane %v2219, %v3033
    %v3036 = vadd.f32 %v3029, %v3034
    %3037 = vst [vmem:[%s22] sm:$0x3] %v3036
    %v3038 = vsel %vm2238, %v3036, -1e+30
    %vm3039 = vcmask 1041408
    %v3040 = vsel %vm3039, %v3038, -inf
    %3041 = vmax.xlane.f32.xlu0 %v3040
    %v3042 = vpop.xlane.xlu0 %3041
    %vm3043 = vcmp.eq.f32.partialorder %v3038, %v3042
    %v3044 = vsel %vm3043, %v2237, 128
    %v3045 = vsel %vm3039, %v3044, 2147483647
    %v3046 = vand.u32 %v3045, 65535
    %v3047 = vshra.s32 %v3045, 16
    %v3048 = vcvt.s32.f32 %v3046
    %v3049 = vcvt.s32.f32 %v3047
    %3050 = vmin.xlane.f32.xlu0 %v3049
    %v3051 = vpop.xlane.xlu0 %3050
    %vm3052 = vcmp.eq.f32.partialorder %v3049, %v3051
    %v3053 = vsel %vm3052, %v3048, inf
    %3054 = vmin.xlane.f32.xlu0 %v3053
    %v3055 = vpop.xlane.xlu0 %3054
    %v3056 = vcvt.f32.s32 %v3055
    %v3057 = vcvt.f32.s32 %v3051
    %v3058 = vshll.u32 %v3057, 16
    %v3059 = vadd.s32 %v3058, %v3056
    %vm3060 = vcmp.eq.s32.totalorder %v2237, %v3059
    %v3061 = vsel %vm3060, 1, 0
    %v3062 = vcvt.s32.f32 %v3061
    %3063 = vmatprep.subr.mxu0 0.0
    %3064 = vmatpush1.msra.mxu0 %v2220
    %3065 = vmatprep.subr.mxu0 0.0
    %3066 = vmatpush1.msra.mxu0 %v2221
    %3067 = vmatprep.subr.mxu0 0.0
    %3068 = vmatpush1.msra.mxu0 %v2222
    %3069 = vmatprep.subr.mxu0 0.0
    %3070 = vmatpush1.msra.mxu0 %v2223
    %3071 = vmatprep.subr.mxu0 0.0
    %3072 = vmatpush1.msra.mxu0 %v2224
    %3073 = vmatprep.subr.mxu0 0.0
    %3074 = vmatpush1.msra.mxu0 %v2225
    %3075 = vmatprep.subr.mxu0 0.0
    %3076 = vmatpush1.msra.mxu0 %v2226
    %3077 = vmatprep.subr.mxu0 0.0
    %3078 = vmatpush1.msra.mxu0 %v2227
    %3079 = vmatprep.subr.mxu0 0.0
    %3080 = vmatpush1.msra.mxu0 %v2228
    %3081 = vmatprep.subr.mxu0 0.0
    %3082 = vmatpush1.msra.mxu0 %v2229
    %3083 = vmatprep.subr.mxu0 0.0
    %3084 = vmatpush1.msra.mxu0 %v2230
    %3085 = vmatprep.subr.mxu0 0.0
    %3086 = vmatpush1.msra.mxu0 %v2231
    %3087 = vmatprep.subr.mxu0 0.0
    %3088 = vmatpush1.msra.mxu0 %v2232
    %3089 = vmatprep.subr.mxu0 0.0
    %3090 = vmatpush1.msra.mxu0 %v2233
    %3091 = vmatprep.subr.mxu0 0.0
    %3092 = vmatpush1.msra.mxu0 %v2234
    %3093 = vmatprep.subr.mxu0 0.0
    %3094 = vmatpush1.msra.mxu0 %v2235
    %3095 = vmatprep.subr.mxu0 0.0
    %3096 = vmatpush1.msra.mxu0 0.0
    %3097 = vmatprep.subr.mxu0 0.0
    %3098 = vmatpush1.msra.mxu0 0.0
    %3099 = vmatprep.subr.mxu0 0.0
    %3100 = vmatpush1.msra.mxu0 0.0
    %3101 = vmatprep.subr.mxu0 0.0
    %3102 = vmatpush1.msra.mxu0 0.0
    %3103 = vmatprep.subr.mxu0 0.0
    %3104 = vmatpush1.msra.mxu0 0.0
    %3105 = vmatprep.subr.mxu0 0.0
    %3106 = vmatpush1.msra.mxu0 0.0
    %3107 = vmatprep.subr.mxu0 0.0
    %3108 = vmatpush1.msra.mxu0 0.0
    %3109 = vmatprep.subr.mxu0 0.0
    %3110 = vmatpush1.msra.mxu0 0.0
    %3111 = vmatprep.subr.mxu0 0.0
    %3112 = vmatpush1.msra.mxu0 0.0
    %3113 = vmatprep.subr.mxu0 0.0
    %3114 = vmatpush1.msra.mxu0 0.0
    %3115 = vmatprep.subr.mxu0 0.0
    %3116 = vmatpush1.msra.mxu0 0.0
    %3117 = vmatprep.subr.mxu0 0.0
    %3118 = vmatpush1.msra.mxu0 0.0
    %3119 = vmatprep.subr.mxu0 0.0
    %3120 = vmatpush1.msra.mxu0 0.0
    %3121 = vmatprep.subr.mxu0 0.0
    %3122 = vmatpush1.msra.mxu0 0.0
    %3123 = vmatprep.subr.mxu0 0.0
    %3124 = vmatpush1.msra.mxu0 0.0
    %3125 = vmatprep.subr.mxu0 0.0
    %3126 = vmatpush1.msra.mxu0 0.0
    %3127 = vmatprep.mubr.f32.mxu0 0.0
    %3128 = vmatmul.mubr.f32.gmra.mrb[0].mxu0 %v3062
    %v3129 = vpop.f32.mrb[0].mxu0
    %v3130 = vadd.f32 0.0, %v3129
    %v3131 = vpop.f32.mrb[0].mxu0
    %3132 = vdwg.mxu0
    %s3133 = scalar_lea.vmem %s2, 2
    %v3134 = vld [vmem:[%s3133] sm:$0x3]
    %s3135 = sld [smem:[#allocation2 + $0x1]]
    %p3136 = scmp.gt.s32.totalorder %s3135, 0
    %s3137 = scalar_select %p3136, 1, 0
    %s3138 = scvt.s32.f32 %s3137
    %v3139 = vstv %s3138
    %v3140 = vmul.f32 %v3139, %v3134
    %s3141 = ssub.f32 1.0, %s3138
    %v3142 = vstv %s3141
    %v3143 = vmul.f32 %v3142, %v3130
    %v3144 = vadd.f32 %v3140, %v3143
    %3145 = vmatprep.subr.mxu0 %v2119
    %3146 = vmatpush1.msra.mxu0 %v2118
    %3147 = vmatprep.subr.mxu0 %v2121
    %3148 = vmatpush1.msra.mxu0 %v2120
    %3149 = vmatprep.subr.mxu0 %v2123
    %3150 = vmatpush1.msra.mxu0 %v2122
    %3151 = vmatprep.subr.mxu0 %v2125
    %3152 = vmatpush1.msra.mxu0 %v2124
    %3153 = vmatprep.subr.mxu0 0.0
    %3154 = vmatpush1.msra.mxu0 0.0
    %3155 = vmatprep.subr.mxu0 0.0
    %3156 = vmatpush1.msra.mxu0 0.0
    %3157 = vmatprep.subr.mxu0 0.0
    %3158 = vmatpush1.msra.mxu0 0.0
    %3159 = vmatprep.subr.mxu0 0.0
    %3160 = vmatpush1.msra.mxu0 0.0
    %3161 = vmatprep.subr.mxu0 0.0
    %3162 = vmatpush1.msra.mxu0 0.0
    %3163 = vmatprep.subr.mxu0 0.0
    %3164 = vmatpush1.msra.mxu0 0.0
    %3165 = vmatprep.subr.mxu0 0.0
    %3166 = vmatpush1.msra.mxu0 0.0
    %3167 = vmatprep.subr.mxu0 0.0
    %3168 = vmatpush1.msra.mxu0 0.0
    %3169 = vmatprep.subr.mxu0 0.0
    %3170 = vmatpush1.msra.mxu0 0.0
    %3171 = vmatprep.subr.mxu0 0.0
    %3172 = vmatpush1.msra.mxu0 0.0
    %3173 = vmatprep.subr.mxu0 0.0
    %3174 = vmatpush1.msra.mxu0 0.0
    %3175 = vmatprep.subr.mxu0 0.0
    %3176 = vmatpush1.msra.mxu0 0.0
    %3177 = vmatprep.subr.mxu0 0.0
    %3178 = vmatpush1.msra.mxu0 0.0
    %3179 = vmatprep.subr.mxu0 0.0
    %3180 = vmatpush1.msra.mxu0 0.0
    %3181 = vmatprep.subr.mxu0 0.0
    %3182 = vmatpush1.msra.mxu0 0.0
    %3183 = vmatprep.subr.mxu0 0.0
    %3184 = vmatpush1.msra.mxu0 0.0
    %3185 = vmatprep.subr.mxu0 0.0
    %3186 = vmatpush1.msra.mxu0 0.0
    %3187 = vmatprep.subr.mxu0 0.0
    %3188 = vmatpush1.msra.mxu0 0.0
    %3189 = vmatprep.subr.mxu0 0.0
    %3190 = vmatpush1.msra.mxu0 0.0
    %3191 = vmatprep.subr.mxu0 0.0
    %3192 = vmatpush1.msra.mxu0 0.0
    %3193 = vmatprep.subr.mxu0 0.0
    %3194 = vmatpush1.msra.mxu0 0.0
    %3195 = vmatprep.subr.mxu0 0.0
    %3196 = vmatpush1.msra.mxu0 0.0
    %3197 = vmatprep.subr.mxu0 0.0
    %3198 = vmatpush1.msra.mxu0 0.0
    %3199 = vmatprep.subr.mxu0 0.0
    %3200 = vmatpush1.msra.mxu0 0.0
    %3201 = vmatprep.subr.mxu0 0.0
    %3202 = vmatpush1.msra.mxu0 0.0
    %3203 = vmatprep.subr.mxu0 0.0
    %3204 = vmatpush1.msra.mxu0 0.0
    %3205 = vmatprep.subr.mxu0 0.0
    %3206 = vmatpush1.msra.mxu0 0.0
    %3207 = vmatprep.subr.mxu0 0.0
    %3208 = vmatpush1.msra.mxu0 0.0
    %3209 = vmatprep.mubr.f32.mxu0 0.0
    %3210 = vmatmul.mubr.f32.gmra.mrb[0].mxu0 %v2887
    %v3211 = vpop.f32.mrb[0].mxu0
    %v3212 = vadd.f32 %v2244, %v3211
    %v3213 = vpop.f32.mrb[0].mxu0
    %v3214 = vadd.f32 %v2248, %v3213
    %3215 = vdwg.mxu0
    %v3216 = vadd.f32 %v2114, %v3212
    %v3217 = vadd.f32 %v2117, %v3214
    %v3218 = vtanh.pop %v3216
    %v3219 = vtanh.pop %v3217
    %3220 = vmatprep.subr.mxu0 0.0
    %3221 = vmatpush1.msra.mxu0 %v2127
    %3222 = vmatprep.subr.mxu0 0.0
    %3223 = vmatpush1.msra.mxu0 %v2128
    %3224 = vmatprep.subr.mxu0 0.0
    %3225 = vmatpush1.msra.mxu0 %v2129
    %3226 = vmatprep.subr.mxu0 0.0
    %3227 = vmatpush1.msra.mxu0 %v2130
    %3228 = vmatprep.subr.mxu0 0.0
    %3229 = vmatpush1.msra.mxu0 %v2131
    %3230 = vmatprep.subr.mxu0 0.0
    %3231 = vmatpush1.msra.mxu0 %v2132
    %3232 = vmatprep.subr.mxu0 0.0
    %3233 = vmatpush1.msra.mxu0 %v2133
    %3234 = vmatprep.subr.mxu0 0.0
    %3235 = vmatpush1.msra.mxu0 %v2134
    %3236 = vmatprep.subr.mxu0 0.0
    %3237 = vmatpush1.msra.mxu0 %v2135
    %3238 = vmatprep.subr.mxu0 0.0
    %3239 = vmatpush1.msra.mxu0 %v2136
    %3240 = vmatprep.subr.mxu0 0.0
    %3241 = vmatpush1.msra.mxu0 %v2137
    %3242 = vmatprep.subr.mxu0 0.0
    %3243 = vmatpush1.msra.mxu0 %v2138
    %3244 = vmatprep.subr.mxu0 0.0
    %3245 = vmatpush1.msra.mxu0 %v2139
    %3246 = vmatprep.subr.mxu0 0.0
    %3247 = vmatpush1.msra.mxu0 %v2140
    %3248 = vmatprep.subr.mxu0 0.0
    %3249 = vmatpush1.msra.mxu0 %v2141
    %3250 = vmatprep.subr.mxu0 0.0
    %3251 = vmatpush1.msra.mxu0 %v2142
    %3252 = vmatprep.subr.mxu0 0.0
    %3253 = vmatpush1.msra.mxu0 %v2143
    %3254 = vmatprep.subr.mxu0 0.0
    %3255 = vmatpush1.msra.mxu0 %v2144
    %3256 = vmatprep.subr.mxu0 0.0
    %3257 = vmatpush1.msra.mxu0 %v2145
    %3258 = vmatprep.subr.mxu0 0.0
    %3259 = vmatpush1.msra.mxu0 %v2146
    %3260 = vmatprep.subr.mxu0 0.0
    %3261 = vmatpush1.msra.mxu0 %v2147
    %3262 = vmatprep.subr.mxu0 0.0
    %3263 = vmatpush1.msra.mxu0 %v2148
    %3264 = vmatprep.subr.mxu0 0.0
    %3265 = vmatpush1.msra.mxu0 %v2149
    %3266 = vmatprep.subr.mxu0 0.0
    %3267 = vmatpush1.msra.mxu0 %v2150
    %3268 = vmatprep.subr.mxu0 0.0
    %3269 = vmatpush1.msra.mxu0 %v2151
    %3270 = vmatprep.subr.mxu0 0.0
    %3271 = vmatpush1.msra.mxu0 %v2152
    %3272 = vmatprep.subr.mxu0 0.0
    %3273 = vmatpush1.msra.mxu0 %v2153
    %3274 = vmatprep.subr.mxu0 0.0
    %3275 = vmatpush1.msra.mxu0 %v2154
    %3276 = vmatprep.subr.mxu0 0.0
    %3277 = vmatpush1.msra.mxu0 %v2155
    %3278 = vmatprep.subr.mxu0 0.0
    %3279 = vmatpush1.msra.mxu0 %v2156
    %3280 = vmatprep.subr.mxu0 0.0
    %3281 = vmatpush1.msra.mxu0 %v2157
    %3282 = vmatprep.subr.mxu0 0.0
    %3283 = vmatpush1.msra.mxu0 %v2158
    %3284 = vmatprep.mubr.f32.mxu0 %v3219
    %3285 = vmatmul.mubr.f32.gmra.mrb[0].mxu0 %v3218
    %v3286 = vpop.f32.mrb[0].mxu0
    %v3287 = vadd.f32 0.0, %v3286
    %v3288 = vpop.f32.mrb[0].mxu0
    %3289 = vdwg.mxu0
    %v3290 = vsel %vm2396, %v3287, -inf
    %3291 = vmax.xlane.f32.xlu0 %v3290
    %v3292 = vpop.xlane.xlu0 %3291
    %v3293 = vsub.f32 %v3287, %v3292
    %v3294 = vmul.f32 %v3293, 1.442695
    %v3295 = vpow.pop %v3294
    %v3296 = vsel %vm2396, %v3295, 0.0
    %3297 = vadd.xlane.f32.xlu0 %v3296
    %v3298 = vpop.xlane.xlu0 %3297
    %v3299 = vrcp.pop %v3298
    %v3300 = vmul.f32 1.0, %v3299
    %v3301 = vmul.f32 %v3295, %v3300
    %v3303 = vsel %vm2409, %v3301, 0
    %3305 = vmatprep.subr.mxu0 %v2160
    %3306 = vmatpush1.msra.mxu0 %v2159
    %3307 = vmatprep.subr.mxu0 0.0
    %3308 = vmatpush1.msra.mxu0 0.0
    %3309 = vmatprep.subr.mxu0 0.0
    %3310 = vmatpush1.msra.mxu0 0.0
    %3311 = vmatprep.subr.mxu0 0.0
    %3312 = vmatpush1.msra.mxu0 0.0
    %3313 = vmatprep.subr.mxu0 0.0
    %3314 = vmatpush1.msra.mxu0 0.0
    %3315 = vmatprep.subr.mxu0 0.0
    %3316 = vmatpush1.msra.mxu0 0.0
    %3317 = vmatprep.subr.mxu0 0.0
    %3318 = vmatpush1.msra.mxu0 0.0
    %3319 = vmatprep.subr.mxu0 0.0
    %3320 = vmatpush1.msra.mxu0 0.0
    %3321 = vmatprep.subr.mxu0 0.0
    %3322 = vmatpush1.msra.mxu0 0.0
    %3323 = vmatprep.subr.mxu0 0.0
    %3324 = vmatpush1.msra.mxu0 0.0
    %3325 = vmatprep.subr.mxu0 0.0
    %3326 = vmatpush1.msra.mxu0 0.0
    %3327 = vmatprep.subr.mxu0 0.0
    %3328 = vmatpush1.msra.mxu0 0.0
    %3329 = vmatprep.subr.mxu0 0.0
    %3330 = vmatpush1.msra.mxu0 0.0
    %3331 = vmatprep.subr.mxu0 0.0
    %3332 = vmatpush1.msra.mxu0 0.0
    %3333 = vmatprep.subr.mxu0 0.0
    %3334 = vmatpush1.msra.mxu0 0.0
    %3335 = vmatprep.subr.mxu0 0.0
    %3336 = vmatpush1.msra.mxu0 0.0
    %3337 = vmatprep.subr.mxu0 0.0
    %3338 = vmatpush1.msra.mxu0 0.0
    %3339 = vmatprep.subr.mxu0 0.0
    %3340 = vmatpush1.msra.mxu0 0.0
    %3341 = vmatprep.subr.mxu0 0.0
    %3342 = vmatpush1.msra.mxu0 0.0
    %3343 = vmatprep.subr.mxu0 0.0
    %3344 = vmatpush1.msra.mxu0 0.0
    %3345 = vmatprep.subr.mxu0 0.0
    %3346 = vmatpush1.msra.mxu0 0.0
    %3347 = vmatprep.subr.mxu0 0.0
    %3348 = vmatpush1.msra.mxu0 0.0
    %3349 = vmatprep.subr.mxu0 0.0
    %3350 = vmatpush1.msra.mxu0 0.0
    %3351 = vmatprep.subr.mxu0 0.0
    %3352 = vmatpush1.msra.mxu0 0.0
    %3353 = vmatprep.subr.mxu0 0.0
    %3354 = vmatpush1.msra.mxu0 0.0
    %3355 = vmatprep.subr.mxu0 0.0
    %3356 = vmatpush1.msra.mxu0 0.0
    %3357 = vmatprep.subr.mxu0 0.0
    %3358 = vmatpush1.msra.mxu0 0.0
    %3359 = vmatprep.subr.mxu0 0.0
    %3360 = vmatpush1.msra.mxu0 0.0
    %3361 = vmatprep.subr.mxu0 0.0
    %3362 = vmatpush1.msra.mxu0 0.0
    %3363 = vmatprep.subr.mxu0 0.0
    %3364 = vmatpush1.msra.mxu0 0.0
    %3365 = vmatprep.subr.mxu0 0.0
    %3366 = vmatpush1.msra.mxu0 0.0
    %3367 = vmatprep.subr.mxu0 0.0
    %3368 = vmatpush1.msra.mxu0 0.0
    %3369 = vmatprep.mubr.f32.mxu0 0.0
    %3370 = vmatmul.mubr.f32.gmra.mrb[0].mxu0 %v3303
    %v3371 = vpop.f32.mrb[0].mxu0
    %v3372 = vadd.f32 0.0, %v3371
    %v3373 = vpop.f32.mrb[0].mxu0
    %v3374 = vadd.f32 0.0, %v3373
    %3375 = vdwg.mxu0
    %v3376 = vmul.f32 %v3372, %v1520
    %v3377 = vmul.f32 %v3374, %v1523
    %3378 = vmatprep.subr.mxu0 0.0
    %3379 = vmatpush1.msra.mxu0 %v2161
    %3380 = vmatprep.subr.mxu0 0.0
    %3381 = vmatpush1.msra.mxu0 %v2162
    %3382 = vmatprep.subr.mxu0 0.0
    %3383 = vmatpush1.msra.mxu0 %v2163
    %3384 = vmatprep.subr.mxu0 0.0
    %3385 = vmatpush1.msra.mxu0 %v2164
    %3386 = vmatprep.subr.mxu0 0.0
    %3387 = vmatpush1.msra.mxu0 %v2165
    %3388 = vmatprep.subr.mxu0 0.0
    %3389 = vmatpush1.msra.mxu0 %v2166
    %3390 = vmatprep.subr.mxu0 0.0
    %3391 = vmatpush1.msra.mxu0 %v2167
    %3392 = vmatprep.subr.mxu0 0.0
    %3393 = vmatpush1.msra.mxu0 %v2168
    %3394 = vmatprep.subr.mxu0 0.0
    %3395 = vmatpush1.msra.mxu0 %v2169
    %3396 = vmatprep.subr.mxu0 0.0
    %3397 = vmatpush1.msra.mxu0 %v2170
    %3398 = vmatprep.subr.mxu0 0.0
    %3399 = vmatpush1.msra.mxu0 %v2171
    %3400 = vmatprep.subr.mxu0 0.0
    %3401 = vmatpush1.msra.mxu0 %v2172
    %3402 = vmatprep.subr.mxu0 0.0
    %3403 = vmatpush1.msra.mxu0 %v2173
    %3404 = vmatprep.subr.mxu0 0.0
    %3405 = vmatpush1.msra.mxu0 %v2174
    %3406 = vmatprep.subr.mxu0 0.0
    %3407 = vmatpush1.msra.mxu0 %v2175
    %3408 = vmatprep.subr.mxu0 0.0
    %3409 = vmatpush1.msra.mxu0 %v2176
    %3410 = vmatprep.subr.mxu0 0.0
    %3411 = vmatpush1.msra.mxu0 %v2177
    %3412 = vmatprep.subr.mxu0 0.0
    %3413 = vmatpush1.msra.mxu0 %v2178
    %3414 = vmatprep.subr.mxu0 0.0
    %3415 = vmatpush1.msra.mxu0 %v2179
    %3416 = vmatprep.subr.mxu0 0.0
    %3417 = vmatpush1.msra.mxu0 %v2180
    %3418 = vmatprep.subr.mxu0 0.0
    %3419 = vmatpush1.msra.mxu0 %v2181
    %3420 = vmatprep.subr.mxu0 0.0
    %3421 = vmatpush1.msra.mxu0 %v2182
    %3422 = vmatprep.subr.mxu0 0.0
    %3423 = vmatpush1.msra.mxu0 %v2183
    %3424 = vmatprep.subr.mxu0 0.0
    %3425 = vmatpush1.msra.mxu0 %v2184
    %3426 = vmatprep.subr.mxu0 0.0
    %3427 = vmatpush1.msra.mxu0 %v2185
    %3428 = vmatprep.subr.mxu0 0.0
    %3429 = vmatpush1.msra.mxu0 %v2186
    %3430 = vmatprep.subr.mxu0 0.0
    %3431 = vmatpush1.msra.mxu0 %v2187
    %3432 = vmatprep.subr.mxu0 0.0
    %3433 = vmatpush1.msra.mxu0 %v2188
    %3434 = vmatprep.subr.mxu0 0.0
    %3435 = vmatpush1.msra.mxu0 %v2189
    %3436 = vmatprep.subr.mxu0 0.0
    %3437 = vmatpush1.msra.mxu0 %v2190
    %3438 = vmatprep.subr.mxu0 0.0
    %3439 = vmatpush1.msra.mxu0 %v2191
    %3440 = vmatprep.subr.mxu0 0.0
    %3441 = vmatpush1.msra.mxu0 %v2192
    %3442 = vmatprep.mubr.f32.mxu0 %v3377
    %3443 = vmatmul.mubr.f32.gmra.mrb[0].mxu0 %v3376
    %v3444 = vpop.f32.mrb[0].mxu0
    %v3445 = vadd.f32 0.0, %v3444
    %v3446 = vpop.f32.mrb[0].mxu0
    %3447 = vdwg.mxu0
    %v3449 = vsel %vm98, %v3445, 0
    %3451 = vmatprep.subr.mxu0 0.0
    %3452 = vmatpush1.msra.mxu0 %v2197
    %3453 = vmatprep.subr.mxu0 0.0
    %3454 = vmatpush1.msra.mxu0 %v2198
    %3455 = vmatprep.subr.mxu0 0.0
    %3456 = vmatpush1.msra.mxu0 %v2199
    %3457 = vmatprep.subr.mxu0 0.0
    %3458 = vmatpush1.msra.mxu0 %v2200
    %3459 = vmatprep.subr.mxu0 0.0
    %3460 = vmatpush1.msra.mxu0 0.0
    %3461 = vmatprep.subr.mxu0 0.0
    %3462 = vmatpush1.msra.mxu0 0.0
    %3463 = vmatprep.subr.mxu0 0.0
    %3464 = vmatpush1.msra.mxu0 0.0
    %3465 = vmatprep.subr.mxu0 0.0
    %3466 = vmatpush1.msra.mxu0 0.0
    %3467 = vmatprep.subr.mxu0 0.0
    %3468 = vmatpush1.msra.mxu0 0.0
    %3469 = vmatprep.subr.mxu0 0.0
    %3470 = vmatpush1.msra.mxu0 0.0
    %3471 = vmatprep.subr.mxu0 0.0
    %3472 = vmatpush1.msra.mxu0 0.0
    %3473 = vmatprep.subr.mxu0 0.0
    %3474 = vmatpush1.msra.mxu0 0.0
    %3475 = vmatprep.subr.mxu0 0.0
    %3476 = vmatpush1.msra.mxu0 0.0
    %3477 = vmatprep.subr.mxu0 0.0
    %3478 = vmatpush1.msra.mxu0 0.0
    %3479 = vmatprep.subr.mxu0 0.0
    %3480 = vmatpush1.msra.mxu0 0.0
    %3481 = vmatprep.subr.mxu0 0.0
    %3482 = vmatpush1.msra.mxu0 0.0
    %3483 = vmatprep.subr.mxu0 0.0
    %3484 = vmatpush1.msra.mxu0 0.0
    %3485 = vmatprep.subr.mxu0 0.0
    %3486 = vmatpush1.msra.mxu0 0.0
    %3487 = vmatprep.subr.mxu0 0.0
    %3488 = vmatpush1.msra.mxu0 0.0
    %3489 = vmatprep.subr.mxu0 0.0
    %3490 = vmatpush1.msra.mxu0 0.0
    %3491 = vmatprep.subr.mxu0 0.0
    %3492 = vmatpush1.msra.mxu0 0.0
    %3493 = vmatprep.subr.mxu0 0.0
    %3494 = vmatpush1.msra.mxu0 0.0
    %3495 = vmatprep.subr.mxu0 0.0
    %3496 = vmatpush1.msra.mxu0 0.0
    %3497 = vmatprep.subr.mxu0 0.0
    %3498 = vmatpush1.msra.mxu0 0.0
    %3499 = vmatprep.subr.mxu0 0.0
    %3500 = vmatpush1.msra.mxu0 0.0
    %3501 = vmatprep.subr.mxu0 0.0
    %3502 = vmatpush1.msra.mxu0 0.0
    %3503 = vmatprep.subr.mxu0 0.0
    %3504 = vmatpush1.msra.mxu0 0.0
    %3505 = vmatprep.subr.mxu0 0.0
    %3506 = vmatpush1.msra.mxu0 0.0
    %3507 = vmatprep.subr.mxu0 0.0
    %3508 = vmatpush1.msra.mxu0 0.0
    %3509 = vmatprep.subr.mxu0 0.0
    %3510 = vmatpush1.msra.mxu0 0.0
    %3511 = vmatprep.subr.mxu0 0.0
    %3512 = vmatpush1.msra.mxu0 0.0
    %3513 = vmatprep.subr.mxu0 0.0
    %3514 = vmatpush1.msra.mxu0 0.0
    %3515 = vmatprep.mubr.f32.mxu0 0.0
    %3516 = vmatmul.mubr.f32.gmra.mrb[0].mxu0 %v3449
    %v3517 = vpop.f32.mrb[0].mxu0
    %v3518 = vadd.f32 0.0, %v3517
    %v3519 = vpop.f32.mrb[0].mxu0
    %3520 = vdwg.mxu0
    %v3522 = vsel %vm98, %v3144, 0
    %3524 = vmatprep.subr.mxu0 0.0
    %3525 = vmatpush1.msra.mxu0 %v2193
    %3526 = vmatprep.subr.mxu0 0.0
    %3527 = vmatpush1.msra.mxu0 %v2194
    %3528 = vmatprep.subr.mxu0 0.0
    %3529 = vmatpush1.msra.mxu0 %v2195
    %3530 = vmatprep.subr.mxu0 0.0
    %3531 = vmatpush1.msra.mxu0 %v2196
    %3532 = vmatprep.subr.mxu0 0.0
    %3533 = vmatpush1.msra.mxu0 0.0
    %3534 = vmatprep.subr.mxu0 0.0
    %3535 = vmatpush1.msra.mxu0 0.0
    %3536 = vmatprep.subr.mxu0 0.0
    %3537 = vmatpush1.msra.mxu0 0.0
    %3538 = vmatprep.subr.mxu0 0.0
    %3539 = vmatpush1.msra.mxu0 0.0
    %3540 = vmatprep.subr.mxu0 0.0
    %3541 = vmatpush1.msra.mxu0 0.0
    %3542 = vmatprep.subr.mxu0 0.0
    %3543 = vmatpush1.msra.mxu0 0.0
    %3544 = vmatprep.subr.mxu0 0.0
    %3545 = vmatpush1.msra.mxu0 0.0
    %3546 = vmatprep.subr.mxu0 0.0
    %3547 = vmatpush1.msra.mxu0 0.0
    %3548 = vmatprep.subr.mxu0 0.0
    %3549 = vmatpush1.msra.mxu0 0.0
    %3550 = vmatprep.subr.mxu0 0.0
    %3551 = vmatpush1.msra.mxu0 0.0
    %3552 = vmatprep.subr.mxu0 0.0
    %3553 = vmatpush1.msra.mxu0 0.0
    %3554 = vmatprep.subr.mxu0 0.0
    %3555 = vmatpush1.msra.mxu0 0.0
    %3556 = vmatprep.subr.mxu0 0.0
    %3557 = vmatpush1.msra.mxu0 0.0
    %3558 = vmatprep.subr.mxu0 0.0
    %3559 = vmatpush1.msra.mxu0 0.0
    %3560 = vmatprep.subr.mxu0 0.0
    %3561 = vmatpush1.msra.mxu0 0.0
    %3562 = vmatprep.subr.mxu0 0.0
    %3563 = vmatpush1.msra.mxu0 0.0
    %3564 = vmatprep.subr.mxu0 0.0
    %3565 = vmatpush1.msra.mxu0 0.0
    %3566 = vmatprep.subr.mxu0 0.0
    %3567 = vmatpush1.msra.mxu0 0.0
    %3568 = vmatprep.subr.mxu0 0.0
    %3569 = vmatpush1.msra.mxu0 0.0
    %3570 = vmatprep.subr.mxu0 0.0
    %3571 = vmatpush1.msra.mxu0 0.0
    %3572 = vmatprep.subr.mxu0 0.0
    %3573 = vmatpush1.msra.mxu0 0.0
    %3574 = vmatprep.subr.mxu0 0.0
    %3575 = vmatpush1.msra.mxu0 0.0
    %3576 = vmatprep.subr.mxu0 0.0
    %3577 = vmatpush1.msra.mxu0 0.0
    %3578 = vmatprep.subr.mxu0 0.0
    %3579 = vmatpush1.msra.mxu0 0.0
    %3580 = vmatprep.subr.mxu0 0.0
    %3581 = vmatpush1.msra.mxu0 0.0
    %3582 = vmatprep.subr.mxu0 0.0
    %3583 = vmatpush1.msra.mxu0 0.0
    %3584 = vmatprep.subr.mxu0 0.0
    %3585 = vmatpush1.msra.mxu0 0.0
    %3586 = vmatprep.subr.mxu0 0.0
    %3587 = vmatpush1.msra.mxu0 0.0
    %3588 = vmatprep.mubr.f32.mxu0 0.0
    %3589 = vmatmul.mubr.f32.gmra.mrb[0].mxu0 %v3522
    %v3590 = vpop.f32.mrb[0].mxu0
    %v3591 = vadd.f32 %v3518, %v3590
    %v3592 = vpop.f32.mrb[0].mxu0
    %3593 = vdwg.mxu0
    %v3594 = vadd.f32 %v3591, %v2706
    %3595 = vmatprep.subr.mxu0 0.0
    %3596 = vmatpush1.msra.mxu0 %v2201
    %3597 = vmatprep.subr.mxu0 0.0
    %3598 = vmatpush1.msra.mxu0 %v2202
    %3599 = vmatprep.subr.mxu0 0.0
    %3600 = vmatpush1.msra.mxu0 %v2203
    %3601 = vmatprep.subr.mxu0 0.0
    %3602 = vmatpush1.msra.mxu0 %v2204
    %3603 = vmatprep.subr.mxu0 0.0
    %3604 = vmatpush1.msra.mxu0 0.0
    %3605 = vmatprep.subr.mxu0 0.0
    %3606 = vmatpush1.msra.mxu0 0.0
    %3607 = vmatprep.subr.mxu0 0.0
    %3608 = vmatpush1.msra.mxu0 0.0
    %3609 = vmatprep.subr.mxu0 0.0
    %3610 = vmatpush1.msra.mxu0 0.0
    %3611 = vmatprep.subr.mxu0 0.0
    %3612 = vmatpush1.msra.mxu0 0.0
    %3613 = vmatprep.subr.mxu0 0.0
    %3614 = vmatpush1.msra.mxu0 0.0
    %3615 = vmatprep.subr.mxu0 0.0
    %3616 = vmatpush1.msra.mxu0 0.0
    %3617 = vmatprep.subr.mxu0 0.0
    %3618 = vmatpush1.msra.mxu0 0.0
    %3619 = vmatprep.subr.mxu0 0.0
    %3620 = vmatpush1.msra.mxu0 0.0
    %3621 = vmatprep.subr.mxu0 0.0
    %3622 = vmatpush1.msra.mxu0 0.0
    %3623 = vmatprep.subr.mxu0 0.0
    %3624 = vmatpush1.msra.mxu0 0.0
    %3625 = vmatprep.subr.mxu0 0.0
    %3626 = vmatpush1.msra.mxu0 0.0
    %3627 = vmatprep.subr.mxu0 0.0
    %3628 = vmatpush1.msra.mxu0 0.0
    %3629 = vmatprep.subr.mxu0 0.0
    %3630 = vmatpush1.msra.mxu0 0.0
    %3631 = vmatprep.subr.mxu0 0.0
    %3632 = vmatpush1.msra.mxu0 0.0
    %3633 = vmatprep.subr.mxu0 0.0
    %3634 = vmatpush1.msra.mxu0 0.0
    %3635 = vmatprep.subr.mxu0 0.0
    %3636 = vmatpush1.msra.mxu0 0.0
    %3637 = vmatprep.subr.mxu0 0.0
    %3638 = vmatpush1.msra.mxu0 0.0
    %3639 = vmatprep.subr.mxu0 0.0
    %3640 = vmatpush1.msra.mxu0 0.0
    %3641 = vmatprep.subr.mxu0 0.0
    %3642 = vmatpush1.msra.mxu0 0.0
    %3643 = vmatprep.subr.mxu0 0.0
    %3644 = vmatpush1.msra.mxu0 0.0
    %3645 = vmatprep.subr.mxu0 0.0
    %3646 = vmatpush1.msra.mxu0 0.0
    %3647 = vmatprep.subr.mxu0 0.0
    %3648 = vmatpush1.msra.mxu0 0.0
    %3649 = vmatprep.subr.mxu0 0.0
    %3650 = vmatpush1.msra.mxu0 0.0
    %3651 = vmatprep.subr.mxu0 0.0
    %3652 = vmatpush1.msra.mxu0 0.0
    %3653 = vmatprep.subr.mxu0 0.0
    %3654 = vmatpush1.msra.mxu0 0.0
    %3655 = vmatprep.subr.mxu0 0.0
    %3656 = vmatpush1.msra.mxu0 0.0
    %3657 = vmatprep.subr.mxu0 0.0
    %3658 = vmatpush1.msra.mxu0 0.0
    %3659 = vmatprep.mubr.f32.mxu0 0.0
    %3660 = vmatmul.mubr.f32.gmra.mrb[0].mxu0 %v2887
    %v3661 = vpop.f32.mrb[0].mxu0
    %v3662 = vadd.f32 %v2713, %v3661
    %v3663 = vpop.f32.mrb[0].mxu0
    %3664 = vdwg.mxu0
    %v3665 = vadd.f32 %v3594, %v3662
    %v3666 = vxor.u32 %v3665, 2147483648
    %v3667 = vmul.f32 %v3666, 1.442695
    %v3668 = vpow.pop %v3667
    %v3669 = vadd.f32 %v3668, 1.0
    %v3670 = vrcp.pop %v3669
    %v3671 = vmul.f32 1.0, %v3670
    %3673 = vrot.lane.b32.xlu0 %v3662, 64
    %v3674 = vpop.permute.xlu0 %3673
    %v3676 = vmul.f32 %v3671, %v3674
    %3678 = vrot.lane.b32.xlu0 %v3676, 64
    %v3679 = vpop.permute.xlu0 %3678
    %v3681 = vadd.f32 %v3594, %v3679
    %v3682 = vtanh.pop %v3681
    %v3683 = vsub.f32 1.0, %v3671
    %3685 = vrot.lane.b32.xlu0 %v3682, 96
    %v3686 = vpop.permute.xlu0 %3685
    %v3688 = vmul.f32 %v3683, %v3686
    %v3689 = vmul.f32 %v3671, %v2813
    %v3690 = vadd.f32 %v3688, %v3689
    %3691 = vmatprep.subr.mxu0 0.0
    %3692 = vmatpush1.msra.mxu0 %v2211
    %3693 = vmatprep.subr.mxu0 0.0
    %3694 = vmatpush1.msra.mxu0 %v2212
    %3695 = vmatprep.subr.mxu0 0.0
    %3696 = vmatpush1.msra.mxu0 %v2213
    %3697 = vmatprep.subr.mxu0 0.0
    %3698 = vmatpush1.msra.mxu0 %v2214
    %3699 = vmatprep.subr.mxu0 0.0
    %3700 = vmatpush1.msra.mxu0 0.0
    %3701 = vmatprep.subr.mxu0 0.0
    %3702 = vmatpush1.msra.mxu0 0.0
    %3703 = vmatprep.subr.mxu0 0.0
    %3704 = vmatpush1.msra.mxu0 0.0
    %3705 = vmatprep.subr.mxu0 0.0
    %3706 = vmatpush1.msra.mxu0 0.0
    %3707 = vmatprep.subr.mxu0 0.0
    %3708 = vmatpush1.msra.mxu0 0.0
    %3709 = vmatprep.subr.mxu0 0.0
    %3710 = vmatpush1.msra.mxu0 0.0
    %3711 = vmatprep.subr.mxu0 0.0
    %3712 = vmatpush1.msra.mxu0 0.0
    %3713 = vmatprep.subr.mxu0 0.0
    %3714 = vmatpush1.msra.mxu0 0.0
    %3715 = vmatprep.subr.mxu0 0.0
    %3716 = vmatpush1.msra.mxu0 0.0
    %3717 = vmatprep.subr.mxu0 0.0
    %3718 = vmatpush1.msra.mxu0 0.0
    %3719 = vmatprep.subr.mxu0 0.0
    %3720 = vmatpush1.msra.mxu0 0.0
    %3721 = vmatprep.subr.mxu0 0.0
    %3722 = vmatpush1.msra.mxu0 0.0
    %3723 = vmatprep.subr.mxu0 0.0
    %3724 = vmatpush1.msra.mxu0 0.0
    %3725 = vmatprep.subr.mxu0 0.0
    %3726 = vmatpush1.msra.mxu0 0.0
    %3727 = vmatprep.subr.mxu0 0.0
    %3728 = vmatpush1.msra.mxu0 0.0
    %3729 = vmatprep.subr.mxu0 0.0
    %3730 = vmatpush1.msra.mxu0 0.0
    %3731 = vmatprep.subr.mxu0 0.0
    %3732 = vmatpush1.msra.mxu0 0.0
    %3733 = vmatprep.subr.mxu0 0.0
    %3734 = vmatpush1.msra.mxu0 0.0
    %3735 = vmatprep.subr.mxu0 0.0
    %3736 = vmatpush1.msra.mxu0 0.0
    %3737 = vmatprep.subr.mxu0 0.0
    %3738 = vmatpush1.msra.mxu0 0.0
    %3739 = vmatprep.subr.mxu0 0.0
    %3740 = vmatpush1.msra.mxu0 0.0
    %3741 = vmatprep.subr.mxu0 0.0
    %3742 = vmatpush1.msra.mxu0 0.0
    %3743 = vmatprep.subr.mxu0 0.0
    %3744 = vmatpush1.msra.mxu0 0.0
    %3745 = vmatprep.subr.mxu0 0.0
    %3746 = vmatpush1.msra.mxu0 0.0
    %3747 = vmatprep.subr.mxu0 0.0
    %3748 = vmatpush1.msra.mxu0 0.0
    %3749 = vmatprep.subr.mxu0 0.0
    %3750 = vmatpush1.msra.mxu0 0.0
    %3751 = vmatprep.subr.mxu0 0.0
    %3752 = vmatpush1.msra.mxu0 0.0
    %3753 = vmatprep.subr.mxu0 0.0
    %3754 = vmatpush1.msra.mxu0 0.0
    %3755 = vmatprep.mubr.f32.mxu0 0.0
    %3756 = vmatmul.mubr.f32.gmra.mrb[0].mxu0 %v3449
    %v3757 = vpop.f32.mrb[0].mxu0
    %v3758 = vadd.f32 0.0, %v3757
    %v3759 = vpop.f32.mrb[0].mxu0
    %3760 = vdwg.mxu0
    %3762 = vrot.lane.b32.xlu0 %v3690, 96
    %v3763 = vpop.permute.xlu0 %3762
    %v3764 = vsel %vm98, %v3763, 0
    %3766 = vmatprep.subr.mxu0 0.0
    %3767 = vmatpush1.msra.mxu0 %v2207
    %3768 = vmatprep.subr.mxu0 0.0
    %3769 = vmatpush1.msra.mxu0 %v2208
    %3770 = vmatprep.subr.mxu0 0.0
    %3771 = vmatpush1.msra.mxu0 %v2209
    %3772 = vmatprep.subr.mxu0 0.0
    %3773 = vmatpush1.msra.mxu0 %v2210
    %3774 = vmatprep.subr.mxu0 0.0
    %3775 = vmatpush1.msra.mxu0 0.0
    %3776 = vmatprep.subr.mxu0 0.0
    %3777 = vmatpush1.msra.mxu0 0.0
    %3778 = vmatprep.subr.mxu0 0.0
    %3779 = vmatpush1.msra.mxu0 0.0
    %3780 = vmatprep.subr.mxu0 0.0
    %3781 = vmatpush1.msra.mxu0 0.0
    %3782 = vmatprep.subr.mxu0 0.0
    %3783 = vmatpush1.msra.mxu0 0.0
    %3784 = vmatprep.subr.mxu0 0.0
    %3785 = vmatpush1.msra.mxu0 0.0
    %3786 = vmatprep.subr.mxu0 0.0
    %3787 = vmatpush1.msra.mxu0 0.0
    %3788 = vmatprep.subr.mxu0 0.0
    %3789 = vmatpush1.msra.mxu0 0.0
    %3790 = vmatprep.subr.mxu0 0.0
    %3791 = vmatpush1.msra.mxu0 0.0
    %3792 = vmatprep.subr.mxu0 0.0
    %3793 = vmatpush1.msra.mxu0 0.0
    %3794 = vmatprep.subr.mxu0 0.0
    %3795 = vmatpush1.msra.mxu0 0.0
    %3796 = vmatprep.subr.mxu0 0.0
    %3797 = vmatpush1.msra.mxu0 0.0
    %3798 = vmatprep.subr.mxu0 0.0
    %3799 = vmatpush1.msra.mxu0 0.0
    %3800 = vmatprep.subr.mxu0 0.0
    %3801 = vmatpush1.msra.mxu0 0.0
    %3802 = vmatprep.subr.mxu0 0.0
    %3803 = vmatpush1.msra.mxu0 0.0
    %3804 = vmatprep.subr.mxu0 0.0
    %3805 = vmatpush1.msra.mxu0 0.0
    %3806 = vmatprep.subr.mxu0 0.0
    %3807 = vmatpush1.msra.mxu0 0.0
    %3808 = vmatprep.subr.mxu0 0.0
    %3809 = vmatpush1.msra.mxu0 0.0
    %3810 = vmatprep.subr.mxu0 0.0
    %3811 = vmatpush1.msra.mxu0 0.0
    %3812 = vmatprep.subr.mxu0 0.0
    %3813 = vmatpush1.msra.mxu0 0.0
    %3814 = vmatprep.subr.mxu0 0.0
    %3815 = vmatpush1.msra.mxu0 0.0
    %3816 = vmatprep.subr.mxu0 0.0
    %3817 = vmatpush1.msra.mxu0 0.0
    %3818 = vmatprep.subr.mxu0 0.0
    %3819 = vmatpush1.msra.mxu0 0.0
    %3820 = vmatprep.subr.mxu0 0.0
    %3821 = vmatpush1.msra.mxu0 0.0
    %3822 = vmatprep.subr.mxu0 0.0
    %3823 = vmatpush1.msra.mxu0 0.0
    %3824 = vmatprep.subr.mxu0 0.0
    %3825 = vmatpush1.msra.mxu0 0.0
    %3826 = vmatprep.subr.mxu0 0.0
    %3827 = vmatpush1.msra.mxu0 0.0
    %3828 = vmatprep.subr.mxu0 0.0
    %3829 = vmatpush1.msra.mxu0 0.0
    %3830 = vmatprep.mubr.f32.mxu0 0.0
    %3831 = vmatmul.mubr.f32.gmra.mrb[0].mxu0 %v3764
    %v3832 = vpop.f32.mrb[0].mxu0
    %v3833 = vadd.f32 %v3758, %v3832
    %v3834 = vpop.f32.mrb[0].mxu0
    %3835 = vdwg.mxu0
    %3836 = vmatprep.subr.mxu0 0.0
    %3837 = vmatpush1.msra.mxu0 %v2215
    %3838 = vmatprep.subr.mxu0 0.0
    %3839 = vmatpush1.msra.mxu0 %v2216
    %3840 = vmatprep.subr.mxu0 0.0
    %3841 = vmatpush1.msra.mxu0 %v2217
    %3842 = vmatprep.subr.mxu0 0.0
    %3843 = vmatpush1.msra.mxu0 %v2218
    %3844 = vmatprep.subr.mxu0 0.0
    %3845 = vmatpush1.msra.mxu0 0.0
    %3846 = vmatprep.subr.mxu0 0.0
    %3847 = vmatpush1.msra.mxu0 0.0
    %3848 = vmatprep.subr.mxu0 0.0
    %3849 = vmatpush1.msra.mxu0 0.0
    %3850 = vmatprep.subr.mxu0 0.0
    %3851 = vmatpush1.msra.mxu0 0.0
    %3852 = vmatprep.subr.mxu0 0.0
    %3853 = vmatpush1.msra.mxu0 0.0
    %3854 = vmatprep.subr.mxu0 0.0
    %3855 = vmatpush1.msra.mxu0 0.0
    %3856 = vmatprep.subr.mxu0 0.0
    %3857 = vmatpush1.msra.mxu0 0.0
    %3858 = vmatprep.subr.mxu0 0.0
    %3859 = vmatpush1.msra.mxu0 0.0
    %3860 = vmatprep.subr.mxu0 0.0
    %3861 = vmatpush1.msra.mxu0 0.0
    %3862 = vmatprep.subr.mxu0 0.0
    %3863 = vmatpush1.msra.mxu0 0.0
    %3864 = vmatprep.subr.mxu0 0.0
    %3865 = vmatpush1.msra.mxu0 0.0
    %3866 = vmatprep.subr.mxu0 0.0
    %3867 = vmatpush1.msra.mxu0 0.0
    %3868 = vmatprep.subr.mxu0 0.0
    %3869 = vmatpush1.msra.mxu0 0.0
    %3870 = vmatprep.subr.mxu0 0.0
    %3871 = vmatpush1.msra.mxu0 0.0
    %3872 = vmatprep.subr.mxu0 0.0
    %3873 = vmatpush1.msra.mxu0 0.0
    %3874 = vmatprep.subr.mxu0 0.0
    %3875 = vmatpush1.msra.mxu0 0.0
    %3876 = vmatprep.subr.mxu0 0.0
    %3877 = vmatpush1.msra.mxu0 0.0
    %3878 = vmatprep.subr.mxu0 0.0
    %3879 = vmatpush1.msra.mxu0 0.0
    %3880 = vmatprep.subr.mxu0 0.0
    %3881 = vmatpush1.msra.mxu0 0.0
    %3882 = vmatprep.subr.mxu0 0.0
    %3883 = vmatpush1.msra.mxu0 0.0
    %3884 = vmatprep.subr.mxu0 0.0
    %3885 = vmatpush1.msra.mxu0 0.0
    %3886 = vmatprep.subr.mxu0 0.0
    %3887 = vmatpush1.msra.mxu0 0.0
    %3888 = vmatprep.subr.mxu0 0.0
    %3889 = vmatpush1.msra.mxu0 0.0
    %3890 = vmatprep.subr.mxu0 0.0
    %3891 = vmatpush1.msra.mxu0 0.0
    %3892 = vmatprep.subr.mxu0 0.0
    %3893 = vmatpush1.msra.mxu0 0.0
    %3894 = vmatprep.subr.mxu0 0.0
    %3895 = vmatpush1.msra.mxu0 0.0
    %3896 = vmatprep.subr.mxu0 0.0
    %3897 = vmatpush1.msra.mxu0 0.0
    %3898 = vmatprep.subr.mxu0 0.0
    %3899 = vmatpush1.msra.mxu0 0.0
    %3900 = vmatprep.mubr.f32.mxu0 0.0
    %3901 = vmatmul.mubr.f32.gmra.mrb[0].mxu0 %v3522
    %v3902 = vpop.f32.mrb[0].mxu0
    %v3903 = vadd.f32 0.0, %v3902
    %v3904 = vpop.f32.mrb[0].mxu0
    %3905 = vdwg.mxu0
    %v3906 = vadd.f32 %v3833, %v3903
    %v3907 = vadd.f32 %v3906, %v3034
    %s3908 = scalar_lea.vmem %s22, 2
    %3909 = vst [vmem:[%s3908] sm:$0x3] %v3907
    %v3910 = vsel %vm2238, %v3907, -1e+30
    %v3911 = vsel %vm3039, %v3910, -inf
    %3912 = vmax.xlane.f32.xlu0 %v3911
    %v3913 = vpop.xlane.xlu0 %3912
    %vm3914 = vcmp.eq.f32.partialorder %v3910, %v3913
    %v3915 = vsel %vm3914, %v2237, 128
    %v3916 = vsel %vm3039, %v3915, 2147483647
    %v3917 = vand.u32 %v3916, 65535
    %v3918 = vshra.s32 %v3916, 16
    %v3919 = vcvt.s32.f32 %v3917
    %v3920 = vcvt.s32.f32 %v3918
    %3921 = vmin.xlane.f32.xlu0 %v3920
    %v3922 = vpop.xlane.xlu0 %3921
    %vm3923 = vcmp.eq.f32.partialorder %v3920, %v3922
    %v3924 = vsel %vm3923, %v3919, inf
    %3925 = vmin.xlane.f32.xlu0 %v3924
    %v3926 = vpop.xlane.xlu0 %3925
    %v3927 = vcvt.f32.s32 %v3926
    %v3928 = vcvt.f32.s32 %v3922
    %v3929 = vshll.u32 %v3928, 16
    %v3930 = vadd.s32 %v3929, %v3927
    %vm3931 = vcmp.eq.s32.totalorder %v2237, %v3930
    %v3932 = vsel %vm3931, 1, 0
    %v3933 = vcvt.s32.f32 %v3932
    %3934 = vmatprep.subr.mxu0 0.0
    %3935 = vmatpush1.msra.mxu0 %v2220
    %3936 = vmatprep.subr.mxu0 0.0
    %3937 = vmatpush1.msra.mxu0 %v2221
    %3938 = vmatprep.subr.mxu0 0.0
    %3939 = vmatpush1.msra.mxu0 %v2222
    %3940 = vmatprep.subr.mxu0 0.0
    %3941 = vmatpush1.msra.mxu0 %v2223
    %3942 = vmatprep.subr.mxu0 0.0
    %3943 = vmatpush1.msra.mxu0 %v2224
    %3944 = vmatprep.subr.mxu0 0.0
    %3945 = vmatpush1.msra.mxu0 %v2225
    %3946 = vmatprep.subr.mxu0 0.0
    %3947 = vmatpush1.msra.mxu0 %v2226
    %3948 = vmatprep.subr.mxu0 0.0
    %3949 = vmatpush1.msra.mxu0 %v2227
    %3950 = vmatprep.subr.mxu0 0.0
    %3951 = vmatpush1.msra.mxu0 %v2228
    %3952 = vmatprep.subr.mxu0 0.0
    %3953 = vmatpush1.msra.mxu0 %v2229
    %3954 = vmatprep.subr.mxu0 0.0
    %3955 = vmatpush1.msra.mxu0 %v2230
    %3956 = vmatprep.subr.mxu0 0.0
    %3957 = vmatpush1.msra.mxu0 %v2231
    %3958 = vmatprep.subr.mxu0 0.0
    %3959 = vmatpush1.msra.mxu0 %v2232
    %3960 = vmatprep.subr.mxu0 0.0
    %3961 = vmatpush1.msra.mxu0 %v2233
    %3962 = vmatprep.subr.mxu0 0.0
    %3963 = vmatpush1.msra.mxu0 %v2234
    %3964 = vmatprep.subr.mxu0 0.0
    %3965 = vmatpush1.msra.mxu0 %v2235
    %3966 = vmatprep.subr.mxu0 0.0
    %3967 = vmatpush1.msra.mxu0 0.0
    %3968 = vmatprep.subr.mxu0 0.0
    %3969 = vmatpush1.msra.mxu0 0.0
    %3970 = vmatprep.subr.mxu0 0.0
    %3971 = vmatpush1.msra.mxu0 0.0
    %3972 = vmatprep.subr.mxu0 0.0
    %3973 = vmatpush1.msra.mxu0 0.0
    %3974 = vmatprep.subr.mxu0 0.0
    %3975 = vmatpush1.msra.mxu0 0.0
    %3976 = vmatprep.subr.mxu0 0.0
    %3977 = vmatpush1.msra.mxu0 0.0
    %3978 = vmatprep.subr.mxu0 0.0
    %3979 = vmatpush1.msra.mxu0 0.0
    %3980 = vmatprep.subr.mxu0 0.0
    %3981 = vmatpush1.msra.mxu0 0.0
    %3982 = vmatprep.subr.mxu0 0.0
    %3983 = vmatpush1.msra.mxu0 0.0
    %3984 = vmatprep.subr.mxu0 0.0
    %3985 = vmatpush1.msra.mxu0 0.0
    %3986 = vmatprep.subr.mxu0 0.0
    %3987 = vmatpush1.msra.mxu0 0.0
    %3988 = vmatprep.subr.mxu0 0.0
    %3989 = vmatpush1.msra.mxu0 0.0
    %3990 = vmatprep.subr.mxu0 0.0
    %3991 = vmatpush1.msra.mxu0 0.0
    %3992 = vmatprep.subr.mxu0 0.0
    %3993 = vmatpush1.msra.mxu0 0.0
    %3994 = vmatprep.subr.mxu0 0.0
    %3995 = vmatpush1.msra.mxu0 0.0
    %3996 = vmatprep.subr.mxu0 0.0
    %3997 = vmatpush1.msra.mxu0 0.0
    %3998 = vmatprep.mubr.f32.mxu0 0.0
    %3999 = vmatmul.mubr.f32.gmra.mrb[0].mxu0 %v3933
    %v4000 = vpop.f32.mrb[0].mxu0
    %v4001 = vadd.f32 0.0, %v4000
    %v4002 = vpop.f32.mrb[0].mxu0
    %4003 = vdwg.mxu0
    %s4004 = scalar_lea.vmem %s2, 4
    %v4005 = vld [vmem:[%s4004] sm:$0x3]
    %s4006 = sld [smem:[#allocation2 + $0x2]]
    %p4007 = scmp.gt.s32.totalorder %s4006, 0
    %s4008 = scalar_select %p4007, 1, 0
    %s4009 = scvt.s32.f32 %s4008
    %v4010 = vstv %s4009
    %v4011 = vmul.f32 %v4010, %v4005
    %s4012 = ssub.f32 1.0, %s4009
    %v4013 = vstv %s4012
    %v4014 = vmul.f32 %v4013, %v4001
    %v4015 = vadd.f32 %v4011, %v4014
    %4016 = vmatprep.subr.mxu0 %v2119
    %4017 = vmatpush1.msra.mxu0 %v2118
    %4018 = vmatprep.subr.mxu0 %v2121
    %4019 = vmatpush1.msra.mxu0 %v2120
    %4020 = vmatprep.subr.mxu0 %v2123
    %4021 = vmatpush1.msra.mxu0 %v2122
    %4022 = vmatprep.subr.mxu0 %v2125
    %4023 = vmatpush1.msra.mxu0 %v2124
    %4024 = vmatprep.subr.mxu0 0.0
    %4025 = vmatpush1.msra.mxu0 0.0
    %4026 = vmatprep.subr.mxu0 0.0
    %4027 = vmatpush1.msra.mxu0 0.0
    %4028 = vmatprep.subr.mxu0 0.0
    %4029 = vmatpush1.msra.mxu0 0.0
    %4030 = vmatprep.subr.mxu0 0.0
    %4031 = vmatpush1.msra.mxu0 0.0
    %4032 = vmatprep.subr.mxu0 0.0
    %4033 = vmatpush1.msra.mxu0 0.0
    %4034 = vmatprep.subr.mxu0 0.0
    %4035 = vmatpush1.msra.mxu0 0.0
    %4036 = vmatprep.subr.mxu0 0.0
    %4037 = vmatpush1.msra.mxu0 0.0
    %4038 = vmatprep.subr.mxu0 0.0
    %4039 = vmatpush1.msra.mxu0 0.0
    %4040 = vmatprep.subr.mxu0 0.0
    %4041 = vmatpush1.msra.mxu0 0.0
    %4042 = vmatprep.subr.mxu0 0.0
    %4043 = vmatpush1.msra.mxu0 0.0
    %4044 = vmatprep.subr.mxu0 0.0
    %4045 = vmatpush1.msra.mxu0 0.0
    %4046 = vmatprep.subr.mxu0 0.0
    %4047 = vmatpush1.msra.mxu0 0.0
    %4048 = vmatprep.subr.mxu0 0.0
    %4049 = vmatpush1.msra.mxu0 0.0
    %4050 = vmatprep.subr.mxu0 0.0
    %4051 = vmatpush1.msra.mxu0 0.0
    %4052 = vmatprep.subr.mxu0 0.0
    %4053 = vmatpush1.msra.mxu0 0.0
    %4054 = vmatprep.subr.mxu0 0.0
    %4055 = vmatpush1.msra.mxu0 0.0
    %4056 = vmatprep.subr.mxu0 0.0
    %4057 = vmatpush1.msra.mxu0 0.0
    %4058 = vmatprep.subr.mxu0 0.0
    %4059 = vmatpush1.msra.mxu0 0.0
    %4060 = vmatprep.subr.mxu0 0.0
    %4061 = vmatpush1.msra.mxu0 0.0
    %4062 = vmatprep.subr.mxu0 0.0
    %4063 = vmatpush1.msra.mxu0 0.0
    %4064 = vmatprep.subr.mxu0 0.0
    %4065 = vmatpush1.msra.mxu0 0.0
    %4066 = vmatprep.subr.mxu0 0.0
    %4067 = vmatpush1.msra.mxu0 0.0
    %4068 = vmatprep.subr.mxu0 0.0
    %4069 = vmatpush1.msra.mxu0 0.0
    %4070 = vmatprep.subr.mxu0 0.0
    %4071 = vmatpush1.msra.mxu0 0.0
    %4072 = vmatprep.subr.mxu0 0.0
    %4073 = vmatpush1.msra.mxu0 0.0
    %4074 = vmatprep.subr.mxu0 0.0
    %4075 = vmatpush1.msra.mxu0 0.0
    %4076 = vmatprep.subr.mxu0 0.0
    %4077 = vmatpush1.msra.mxu0 0.0
    %4078 = vmatprep.subr.mxu0 0.0
    %4079 = vmatpush1.msra.mxu0 0.0
    %4080 = vmatprep.mubr.f32.mxu0 0.0
    %4081 = vmatmul.mubr.f32.gmra.mrb[0].mxu0 %v3764
    %v4082 = vpop.f32.mrb[0].mxu0
    %v4083 = vadd.f32 %v2244, %v4082
    %v4084 = vpop.f32.mrb[0].mxu0
    %v4085 = vadd.f32 %v2248, %v4084
    %4086 = vdwg.mxu0
    %v4087 = vadd.f32 %v2114, %v4083
    %v4088 = vadd.f32 %v2117, %v4085
    %v4089 = vtanh.pop %v4087
    %v4090 = vtanh.pop %v4088
    %4091 = vmatprep.subr.mxu0 0.0
    %4092 = vmatpush1.msra.mxu0 %v2127
    %4093 = vmatprep.subr.mxu0 0.0
    %4094 = vmatpush1.msra.mxu0 %v2128
    %4095 = vmatprep.subr.mxu0 0.0
    %4096 = vmatpush1.msra.mxu0 %v2129
    %4097 = vmatprep.subr.mxu0 0.0
    %4098 = vmatpush1.msra.mxu0 %v2130
    %4099 = vmatprep.subr.mxu0 0.0
    %4100 = vmatpush1.msra.mxu0 %v2131
    %4101 = vmatprep.subr.mxu0 0.0
    %4102 = vmatpush1.msra.mxu0 %v2132
    %4103 = vmatprep.subr.mxu0 0.0
    %4104 = vmatpush1.msra.mxu0 %v2133
    %4105 = vmatprep.subr.mxu0 0.0
    %4106 = vmatpush1.msra.mxu0 %v2134
    %4107 = vmatprep.subr.mxu0 0.0
    %4108 = vmatpush1.msra.mxu0 %v2135
    %4109 = vmatprep.subr.mxu0 0.0
    %4110 = vmatpush1.msra.mxu0 %v2136
    %4111 = vmatprep.subr.mxu0 0.0
    %4112 = vmatpush1.msra.mxu0 %v2137
    %4113 = vmatprep.subr.mxu0 0.0
    %4114 = vmatpush1.msra.mxu0 %v2138
    %4115 = vmatprep.subr.mxu0 0.0
    %4116 = vmatpush1.msra.mxu0 %v2139
    %4117 = vmatprep.subr.mxu0 0.0
    %4118 = vmatpush1.msra.mxu0 %v2140
    %4119 = vmatprep.subr.mxu0 0.0
    %4120 = vmatpush1.msra.mxu0 %v2141
    %4121 = vmatprep.subr.mxu0 0.0
    %4122 = vmatpush1.msra.mxu0 %v2142
    %4123 = vmatprep.subr.mxu0 0.0
    %4124 = vmatpush1.msra.mxu0 %v2143
    %4125 = vmatprep.subr.mxu0 0.0
    %4126 = vmatpush1.msra.mxu0 %v2144
    %4127 = vmatprep.subr.mxu0 0.0
    %4128 = vmatpush1.msra.mxu0 %v2145
    %4129 = vmatprep.subr.mxu0 0.0
    %4130 = vmatpush1.msra.mxu0 %v2146
    %4131 = vmatprep.subr.mxu0 0.0
    %4132 = vmatpush1.msra.mxu0 %v2147
    %4133 = vmatprep.subr.mxu0 0.0
    %4134 = vmatpush1.msra.mxu0 %v2148
    %4135 = vmatprep.subr.mxu0 0.0
    %4136 = vmatpush1.msra.mxu0 %v2149
    %4137 = vmatprep.subr.mxu0 0.0
    %4138 = vmatpush1.msra.mxu0 %v2150
    %4139 = vmatprep.subr.mxu0 0.0
    %4140 = vmatpush1.msra.mxu0 %v2151
    %4141 = vmatprep.subr.mxu0 0.0
    %4142 = vmatpush1.msra.mxu0 %v2152
    %4143 = vmatprep.subr.mxu0 0.0
    %4144 = vmatpush1.msra.mxu0 %v2153
    %4145 = vmatprep.subr.mxu0 0.0
    %4146 = vmatpush1.msra.mxu0 %v2154
    %4147 = vmatprep.subr.mxu0 0.0
    %4148 = vmatpush1.msra.mxu0 %v2155
    %4149 = vmatprep.subr.mxu0 0.0
    %4150 = vmatpush1.msra.mxu0 %v2156
    %4151 = vmatprep.subr.mxu0 0.0
    %4152 = vmatpush1.msra.mxu0 %v2157
    %4153 = vmatprep.subr.mxu0 0.0
    %4154 = vmatpush1.msra.mxu0 %v2158
    %4155 = vmatprep.mubr.f32.mxu0 %v4090
    %4156 = vmatmul.mubr.f32.gmra.mrb[0].mxu0 %v4089
    %v4157 = vpop.f32.mrb[0].mxu0
    %v4158 = vadd.f32 0.0, %v4157
    %v4159 = vpop.f32.mrb[0].mxu0
    %4160 = vdwg.mxu0
    %v4161 = vsel %vm2396, %v4158, -inf
    %4162 = vmax.xlane.f32.xlu0 %v4161
    %v4163 = vpop.xlane.xlu0 %4162
    %v4164 = vsub.f32 %v4158, %v4163
    %v4165 = vmul.f32 %v4164, 1.442695
    %v4166 = vpow.pop %v4165
    %v4167 = vsel %vm2396, %v4166, 0.0
    %4168 = vadd.xlane.f32.xlu0 %v4167
    %v4169 = vpop.xlane.xlu0 %4168
    %v4170 = vrcp.pop %v4169
    %v4171 = vmul.f32 1.0, %v4170
    %v4172 = vmul.f32 %v4166, %v4171
    %v4174 = vsel %vm2409, %v4172, 0
    %4176 = vmatprep.subr.mxu0 %v2160
    %4177 = vmatpush1.msra.mxu0 %v2159
    %4178 = vmatprep.subr.mxu0 0.0
    %4179 = vmatpush1.msra.mxu0 0.0
    %4180 = vmatprep.subr.mxu0 0.0
    %4181 = vmatpush1.msra.mxu0 0.0
    %4182 = vmatprep.subr.mxu0 0.0
    %4183 = vmatpush1.msra.mxu0 0.0
    %4184 = vmatprep.subr.mxu0 0.0
    %4185 = vmatpush1.msra.mxu0 0.0
    %4186 = vmatprep.subr.mxu0 0.0
    %4187 = vmatpush1.msra.mxu0 0.0
    %4188 = vmatprep.subr.mxu0 0.0
    %4189 = vmatpush1.msra.mxu0 0.0
    %4190 = vmatprep.subr.mxu0 0.0
    %4191 = vmatpush1.msra.mxu0 0.0
    %4192 = vmatprep.subr.mxu0 0.0
    %4193 = vmatpush1.msra.mxu0 0.0
    %4194 = vmatprep.subr.mxu0 0.0
    %4195 = vmatpush1.msra.mxu0 0.0
    %4196 = vmatprep.subr.mxu0 0.0
    %4197 = vmatpush1.msra.mxu0 0.0
    %4198 = vmatprep.subr.mxu0 0.0
    %4199 = vmatpush1.msra.mxu0 0.0
    %4200 = vmatprep.subr.mxu0 0.0
    %4201 = vmatpush1.msra.mxu0 0.0
    %4202 = vmatprep.subr.mxu0 0.0
    %4203 = vmatpush1.msra.mxu0 0.0
    %4204 = vmatprep.subr.mxu0 0.0
    %4205 = vmatpush1.msra.mxu0 0.0
    %4206 = vmatprep.subr.mxu0 0.0
    %4207 = vmatpush1.msra.mxu0 0.0
    %4208 = vmatprep.subr.mxu0 0.0
    %4209 = vmatpush1.msra.mxu0 0.0
    %4210 = vmatprep.subr.mxu0 0.0
    %4211 = vmatpush1.msra.mxu0 0.0
    %4212 = vmatprep.subr.mxu0 0.0
    %4213 = vmatpush1.msra.mxu0 0.0
    %4214 = vmatprep.subr.mxu0 0.0
    %4215 = vmatpush1.msra.mxu0 0.0
    %4216 = vmatprep.subr.mxu0 0.0
    %4217 = vmatpush1.msra.mxu0 0.0
    %4218 = vmatprep.subr.mxu0 0.0
    %4219 = vmatpush1.msra.mxu0 0.0
    %4220 = vmatprep.subr.mxu0 0.0
    %4221 = vmatpush1.msra.mxu0 0.0
    %4222 = vmatprep.subr.mxu0 0.0
    %4223 = vmatpush1.msra.mxu0 0.0
    %4224 = vmatprep.subr.mxu0 0.0
    %4225 = vmatpush1.msra.mxu0 0.0
    %4226 = vmatprep.subr.mxu0 0.0
    %4227 = vmatpush1.msra.mxu0 0.0
    %4228 = vmatprep.subr.mxu0 0.0
    %4229 = vmatpush1.msra.mxu0 0.0
    %4230 = vmatprep.subr.mxu0 0.0
    %4231 = vmatpush1.msra.mxu0 0.0
    %4232 = vmatprep.subr.mxu0 0.0
    %4233 = vmatpush1.msra.mxu0 0.0
    %4234 = vmatprep.subr.mxu0 0.0
    %4235 = vmatpush1.msra.mxu0 0.0
    %4236 = vmatprep.subr.mxu0 0.0
    %4237 = vmatpush1.msra.mxu0 0.0
    %4238 = vmatprep.subr.mxu0 0.0
    %4239 = vmatpush1.msra.mxu0 0.0
    %4240 = vmatprep.mubr.f32.mxu0 0.0
    %4241 = vmatmul.mubr.f32.gmra.mrb[0].mxu0 %v4174
    %v4242 = vpop.f32.mrb[0].mxu0
    %v4243 = vadd.f32 0.0, %v4242
    %v4244 = vpop.f32.mrb[0].mxu0
    %v4245 = vadd.f32 0.0, %v4244
    %4246 = vdwg.mxu0
    %v4247 = vmul.f32 %v4243, %v1520
    %v4248 = vmul.f32 %v4245, %v1523
    %4249 = vmatprep.subr.mxu0 0.0
    %4250 = vmatpush1.msra.mxu0 %v2161
    %4251 = vmatprep.subr.mxu0 0.0
    %4252 = vmatpush1.msra.mxu0 %v2162
    %4253 = vmatprep.subr.mxu0 0.0
    %4254 = vmatpush1.msra.mxu0 %v2163
    %4255 = vmatprep.subr.mxu0 0.0
    %4256 = vmatpush1.msra.mxu0 %v2164
    %4257 = vmatprep.subr.mxu0 0.0
    %4258 = vmatpush1.msra.mxu0 %v2165
    %4259 = vmatprep.subr.mxu0 0.0
    %4260 = vmatpush1.msra.mxu0 %v2166
    %4261 = vmatprep.subr.mxu0 0.0
    %4262 = vmatpush1.msra.mxu0 %v2167
    %4263 = vmatprep.subr.mxu0 0.0
    %4264 = vmatpush1.msra.mxu0 %v2168
    %4265 = vmatprep.subr.mxu0 0.0
    %4266 = vmatpush1.msra.mxu0 %v2169
    %4267 = vmatprep.subr.mxu0 0.0
    %4268 = vmatpush1.msra.mxu0 %v2170
    %4269 = vmatprep.subr.mxu0 0.0
    %4270 = vmatpush1.msra.mxu0 %v2171
    %4271 = vmatprep.subr.mxu0 0.0
    %4272 = vmatpush1.msra.mxu0 %v2172
    %4273 = vmatprep.subr.mxu0 0.0
    %4274 = vmatpush1.msra.mxu0 %v2173
    %4275 = vmatprep.subr.mxu0 0.0
    %4276 = vmatpush1.msra.mxu0 %v2174
    %4277 = vmatprep.subr.mxu0 0.0
    %4278 = vmatpush1.msra.mxu0 %v2175
    %4279 = vmatprep.subr.mxu0 0.0
    %4280 = vmatpush1.msra.mxu0 %v2176
    %4281 = vmatprep.subr.mxu0 0.0
    %4282 = vmatpush1.msra.mxu0 %v2177
    %4283 = vmatprep.subr.mxu0 0.0
    %4284 = vmatpush1.msra.mxu0 %v2178
    %4285 = vmatprep.subr.mxu0 0.0
    %4286 = vmatpush1.msra.mxu0 %v2179
    %4287 = vmatprep.subr.mxu0 0.0
    %4288 = vmatpush1.msra.mxu0 %v2180
    %4289 = vmatprep.subr.mxu0 0.0
    %4290 = vmatpush1.msra.mxu0 %v2181
    %4291 = vmatprep.subr.mxu0 0.0
    %4292 = vmatpush1.msra.mxu0 %v2182
    %4293 = vmatprep.subr.mxu0 0.0
    %4294 = vmatpush1.msra.mxu0 %v2183
    %4295 = vmatprep.subr.mxu0 0.0
    %4296 = vmatpush1.msra.mxu0 %v2184
    %4297 = vmatprep.subr.mxu0 0.0
    %4298 = vmatpush1.msra.mxu0 %v2185
    %4299 = vmatprep.subr.mxu0 0.0
    %4300 = vmatpush1.msra.mxu0 %v2186
    %4301 = vmatprep.subr.mxu0 0.0
    %4302 = vmatpush1.msra.mxu0 %v2187
    %4303 = vmatprep.subr.mxu0 0.0
    %4304 = vmatpush1.msra.mxu0 %v2188
    %4305 = vmatprep.subr.mxu0 0.0
    %4306 = vmatpush1.msra.mxu0 %v2189
    %4307 = vmatprep.subr.mxu0 0.0
    %4308 = vmatpush1.msra.mxu0 %v2190
    %4309 = vmatprep.subr.mxu0 0.0
    %4310 = vmatpush1.msra.mxu0 %v2191
    %4311 = vmatprep.subr.mxu0 0.0
    %4312 = vmatpush1.msra.mxu0 %v2192
    %4313 = vmatprep.mubr.f32.mxu0 %v4248
    %4314 = vmatmul.mubr.f32.gmra.mrb[0].mxu0 %v4247
    %v4315 = vpop.f32.mrb[0].mxu0
    %v4316 = vadd.f32 0.0, %v4315
    %v4317 = vpop.f32.mrb[0].mxu0
    %4318 = vdwg.mxu0
    %v4320 = vsel %vm98, %v4316, 0
    %4322 = vmatprep.subr.mxu0 0.0
    %4323 = vmatpush1.msra.mxu0 %v2197
    %4324 = vmatprep.subr.mxu0 0.0
    %4325 = vmatpush1.msra.mxu0 %v2198
    %4326 = vmatprep.subr.mxu0 0.0
    %4327 = vmatpush1.msra.mxu0 %v2199
    %4328 = vmatprep.subr.mxu0 0.0
    %4329 = vmatpush1.msra.mxu0 %v2200
    %4330 = vmatprep.subr.mxu0 0.0
    %4331 = vmatpush1.msra.mxu0 0.0
    %4332 = vmatprep.subr.mxu0 0.0
    %4333 = vmatpush1.msra.mxu0 0.0
    %4334 = vmatprep.subr.mxu0 0.0
    %4335 = vmatpush1.msra.mxu0 0.0
    %4336 = vmatprep.subr.mxu0 0.0
    %4337 = vmatpush1.msra.mxu0 0.0
    %4338 = vmatprep.subr.mxu0 0.0
    %4339 = vmatpush1.msra.mxu0 0.0
    %4340 = vmatprep.subr.mxu0 0.0
    %4341 = vmatpush1.msra.mxu0 0.0
    %4342 = vmatprep.subr.mxu0 0.0
    %4343 = vmatpush1.msra.mxu0 0.0
    %4344 = vmatprep.subr.mxu0 0.0
    %4345 = vmatpush1.msra.mxu0 0.0
    %4346 = vmatprep.subr.mxu0 0.0
    %4347 = vmatpush1.msra.mxu0 0.0
    %4348 = vmatprep.subr.mxu0 0.0
    %4349 = vmatpush1.msra.mxu0 0.0
    %4350 = vmatprep.subr.mxu0 0.0
    %4351 = vmatpush1.msra.mxu0 0.0
    %4352 = vmatprep.subr.mxu0 0.0
    %4353 = vmatpush1.msra.mxu0 0.0
    %4354 = vmatprep.subr.mxu0 0.0
    %4355 = vmatpush1.msra.mxu0 0.0
    %4356 = vmatprep.subr.mxu0 0.0
    %4357 = vmatpush1.msra.mxu0 0.0
    %4358 = vmatprep.subr.mxu0 0.0
    %4359 = vmatpush1.msra.mxu0 0.0
    %4360 = vmatprep.subr.mxu0 0.0
    %4361 = vmatpush1.msra.mxu0 0.0
    %4362 = vmatprep.subr.mxu0 0.0
    %4363 = vmatpush1.msra.mxu0 0.0
    %4364 = vmatprep.subr.mxu0 0.0
    %4365 = vmatpush1.msra.mxu0 0.0
    %4366 = vmatprep.subr.mxu0 0.0
    %4367 = vmatpush1.msra.mxu0 0.0
    %4368 = vmatprep.subr.mxu0 0.0
    %4369 = vmatpush1.msra.mxu0 0.0
    %4370 = vmatprep.subr.mxu0 0.0
    %4371 = vmatpush1.msra.mxu0 0.0
    %4372 = vmatprep.subr.mxu0 0.0
    %4373 = vmatpush1.msra.mxu0 0.0
    %4374 = vmatprep.subr.mxu0 0.0
    %4375 = vmatpush1.msra.mxu0 0.0
    %4376 = vmatprep.subr.mxu0 0.0
    %4377 = vmatpush1.msra.mxu0 0.0
    %4378 = vmatprep.subr.mxu0 0.0
    %4379 = vmatpush1.msra.mxu0 0.0
    %4380 = vmatprep.subr.mxu0 0.0
    %4381 = vmatpush1.msra.mxu0 0.0
    %4382 = vmatprep.subr.mxu0 0.0
    %4383 = vmatpush1.msra.mxu0 0.0
    %4384 = vmatprep.subr.mxu0 0.0
    %4385 = vmatpush1.msra.mxu0 0.0
    %4386 = vmatprep.mubr.f32.mxu0 0.0
    %4387 = vmatmul.mubr.f32.gmra.mrb[0].mxu0 %v4320
    %v4388 = vpop.f32.mrb[0].mxu0
    %v4389 = vadd.f32 0.0, %v4388
    %v4390 = vpop.f32.mrb[0].mxu0
    %4391 = vdwg.mxu0
    %v4393 = vsel %vm98, %v4015, 0
    %4395 = vmatprep.subr.mxu0 0.0
    %4396 = vmatpush1.msra.mxu0 %v2193
    %4397 = vmatprep.subr.mxu0 0.0
    %4398 = vmatpush1.msra.mxu0 %v2194
    %4399 = vmatprep.subr.mxu0 0.0
    %4400 = vmatpush1.msra.mxu0 %v2195
    %4401 = vmatprep.subr.mxu0 0.0
    %4402 = vmatpush1.msra.mxu0 %v2196
    %4403 = vmatprep.subr.mxu0 0.0
    %4404 = vmatpush1.msra.mxu0 0.0
    %4405 = vmatprep.subr.mxu0 0.0
    %4406 = vmatpush1.msra.mxu0 0.0
    %4407 = vmatprep.subr.mxu0 0.0
    %4408 = vmatpush1.msra.mxu0 0.0
    %4409 = vmatprep.subr.mxu0 0.0
    %4410 = vmatpush1.msra.mxu0 0.0
    %4411 = vmatprep.subr.mxu0 0.0
    %4412 = vmatpush1.msra.mxu0 0.0
    %4413 = vmatprep.subr.mxu0 0.0
    %4414 = vmatpush1.msra.mxu0 0.0
    %4415 = vmatprep.subr.mxu0 0.0
    %4416 = vmatpush1.msra.mxu0 0.0
    %4417 = vmatprep.subr.mxu0 0.0
    %4418 = vmatpush1.msra.mxu0 0.0
    %4419 = vmatprep.subr.mxu0 0.0
    %4420 = vmatpush1.msra.mxu0 0.0
    %4421 = vmatprep.subr.mxu0 0.0
    %4422 = vmatpush1.msra.mxu0 0.0
    %4423 = vmatprep.subr.mxu0 0.0
    %4424 = vmatpush1.msra.mxu0 0.0
    %4425 = vmatprep.subr.mxu0 0.0
    %4426 = vmatpush1.msra.mxu0 0.0
    %4427 = vmatprep.subr.mxu0 0.0
    %4428 = vmatpush1.msra.mxu0 0.0
    %4429 = vmatprep.subr.mxu0 0.0
    %4430 = vmatpush1.msra.mxu0 0.0
    %4431 = vmatprep.subr.mxu0 0.0
    %4432 = vmatpush1.msra.mxu0 0.0
    %4433 = vmatprep.subr.mxu0 0.0
    %4434 = vmatpush1.msra.mxu0 0.0
    %4435 = vmatprep.subr.mxu0 0.0
    %4436 = vmatpush1.msra.mxu0 0.0
    %4437 = vmatprep.subr.mxu0 0.0
    %4438 = vmatpush1.msra.mxu0 0.0
    %4439 = vmatprep.subr.mxu0 0.0
    %4440 = vmatpush1.msra.mxu0 0.0
    %4441 = vmatprep.subr.mxu0 0.0
    %4442 = vmatpush1.msra.mxu0 0.0
    %4443 = vmatprep.subr.mxu0 0.0
    %4444 = vmatpush1.msra.mxu0 0.0
    %4445 = vmatprep.subr.mxu0 0.0
    %4446 = vmatpush1.msra.mxu0 0.0
    %4447 = vmatprep.subr.mxu0 0.0
    %4448 = vmatpush1.msra.mxu0 0.0
    %4449 = vmatprep.subr.mxu0 0.0
    %4450 = vmatpush1.msra.mxu0 0.0
    %4451 = vmatprep.subr.mxu0 0.0
    %4452 = vmatpush1.msra.mxu0 0.0
    %4453 = vmatprep.subr.mxu0 0.0
    %4454 = vmatpush1.msra.mxu0 0.0
    %4455 = vmatprep.subr.mxu0 0.0
    %4456 = vmatpush1.msra.mxu0 0.0
    %4457 = vmatprep.subr.mxu0 0.0
    %4458 = vmatpush1.msra.mxu0 0.0
    %4459 = vmatprep.mubr.f32.mxu0 0.0
    %4460 = vmatmul.mubr.f32.gmra.mrb[0].mxu0 %v4393
    %v4461 = vpop.f32.mrb[0].mxu0
    %v4462 = vadd.f32 %v4389, %v4461
    %v4463 = vpop.f32.mrb[0].mxu0
    %4464 = vdwg.mxu0
    %v4465 = vadd.f32 %v4462, %v2706
    %4466 = vmatprep.subr.mxu0 0.0
    %4467 = vmatpush1.msra.mxu0 %v2201
    %4468 = vmatprep.subr.mxu0 0.0
    %4469 = vmatpush1.msra.mxu0 %v2202
    %4470 = vmatprep.subr.mxu0 0.0
    %4471 = vmatpush1.msra.mxu0 %v2203
    %4472 = vmatprep.subr.mxu0 0.0
    %4473 = vmatpush1.msra.mxu0 %v2204
    %4474 = vmatprep.subr.mxu0 0.0
    %4475 = vmatpush1.msra.mxu0 0.0
    %4476 = vmatprep.subr.mxu0 0.0
    %4477 = vmatpush1.msra.mxu0 0.0
    %4478 = vmatprep.subr.mxu0 0.0
    %4479 = vmatpush1.msra.mxu0 0.0
    %4480 = vmatprep.subr.mxu0 0.0
    %4481 = vmatpush1.msra.mxu0 0.0
    %4482 = vmatprep.subr.mxu0 0.0
    %4483 = vmatpush1.msra.mxu0 0.0
    %4484 = vmatprep.subr.mxu0 0.0
    %4485 = vmatpush1.msra.mxu0 0.0
    %4486 = vmatprep.subr.mxu0 0.0
    %4487 = vmatpush1.msra.mxu0 0.0
    %4488 = vmatprep.subr.mxu0 0.0
    %4489 = vmatpush1.msra.mxu0 0.0
    %4490 = vmatprep.subr.mxu0 0.0
    %4491 = vmatpush1.msra.mxu0 0.0
    %4492 = vmatprep.subr.mxu0 0.0
    %4493 = vmatpush1.msra.mxu0 0.0
    %4494 = vmatprep.subr.mxu0 0.0
    %4495 = vmatpush1.msra.mxu0 0.0
    %4496 = vmatprep.subr.mxu0 0.0
    %4497 = vmatpush1.msra.mxu0 0.0
    %4498 = vmatprep.subr.mxu0 0.0
    %4499 = vmatpush1.msra.mxu0 0.0
    %4500 = vmatprep.subr.mxu0 0.0
    %4501 = vmatpush1.msra.mxu0 0.0
    %4502 = vmatprep.subr.mxu0 0.0
    %4503 = vmatpush1.msra.mxu0 0.0
    %4504 = vmatprep.subr.mxu0 0.0
    %4505 = vmatpush1.msra.mxu0 0.0
    %4506 = vmatprep.subr.mxu0 0.0
    %4507 = vmatpush1.msra.mxu0 0.0
    %4508 = vmatprep.subr.mxu0 0.0
    %4509 = vmatpush1.msra.mxu0 0.0
    %4510 = vmatprep.subr.mxu0 0.0
    %4511 = vmatpush1.msra.mxu0 0.0
    %4512 = vmatprep.subr.mxu0 0.0
    %4513 = vmatpush1.msra.mxu0 0.0
    %4514 = vmatprep.subr.mxu0 0.0
    %4515 = vmatpush1.msra.mxu0 0.0
    %4516 = vmatprep.subr.mxu0 0.0
    %4517 = vmatpush1.msra.mxu0 0.0
    %4518 = vmatprep.subr.mxu0 0.0
    %4519 = vmatpush1.msra.mxu0 0.0
    %4520 = vmatprep.subr.mxu0 0.0
    %4521 = vmatpush1.msra.mxu0 0.0
    %4522 = vmatprep.subr.mxu0 0.0
    %4523 = vmatpush1.msra.mxu0 0.0
    %4524 = vmatprep.subr.mxu0 0.0
    %4525 = vmatpush1.msra.mxu0 0.0
    %4526 = vmatprep.subr.mxu0 0.0
    %4527 = vmatpush1.msra.mxu0 0.0
    %4528 = vmatprep.subr.mxu0 0.0
    %4529 = vmatpush1.msra.mxu0 0.0
    %4530 = vmatprep.mubr.f32.mxu0 0.0
    %4531 = vmatmul.mubr.f32.gmra.mrb[0].mxu0 %v3764
    %v4532 = vpop.f32.mrb[0].mxu0
    %v4533 = vadd.f32 %v2713, %v4532
    %v4534 = vpop.f32.mrb[0].mxu0
    %4535 = vdwg.mxu0
    %v4536 = vadd.f32 %v4465, %v4533
    %v4537 = vxor.u32 %v4536, 2147483648
    %v4538 = vmul.f32 %v4537, 1.442695
    %v4539 = vpow.pop %v4538
    %v4540 = vadd.f32 %v4539, 1.0
    %v4541 = vrcp.pop %v4540
    %v4542 = vmul.f32 1.0, %v4541
    %4544 = vrot.lane.b32.xlu0 %v4533, 64
    %v4545 = vpop.permute.xlu0 %4544
    %v4547 = vmul.f32 %v4542, %v4545
    %4549 = vrot.lane.b32.xlu0 %v4547, 64
    %v4550 = vpop.permute.xlu0 %4549
    %v4552 = vadd.f32 %v4465, %v4550
    %v4553 = vtanh.pop %v4552
    %v4554 = vsub.f32 1.0, %v4542
    %4556 = vrot.lane.b32.xlu0 %v4553, 96
    %v4557 = vpop.permute.xlu0 %4556
    %v4559 = vmul.f32 %v4554, %v4557
    %v4560 = vmul.f32 %v4542, %v3690
    %v4561 = vadd.f32 %v4559, %v4560
    %4562 = vmatprep.subr.mxu0 0.0
    %4563 = vmatpush1.msra.mxu0 %v2211
    %4564 = vmatprep.subr.mxu0 0.0
    %4565 = vmatpush1.msra.mxu0 %v2212
    %4566 = vmatprep.subr.mxu0 0.0
    %4567 = vmatpush1.msra.mxu0 %v2213
    %4568 = vmatprep.subr.mxu0 0.0
    %4569 = vmatpush1.msra.mxu0 %v2214
    %4570 = vmatprep.subr.mxu0 0.0
    %4571 = vmatpush1.msra.mxu0 0.0
    %4572 = vmatprep.subr.mxu0 0.0
    %4573 = vmatpush1.msra.mxu0 0.0
    %4574 = vmatprep.subr.mxu0 0.0
    %4575 = vmatpush1.msra.mxu0 0.0
    %4576 = vmatprep.subr.mxu0 0.0
    %4577 = vmatpush1.msra.mxu0 0.0
    %4578 = vmatprep.subr.mxu0 0.0
    %4579 = vmatpush1.msra.mxu0 0.0
    %4580 = vmatprep.subr.mxu0 0.0
    %4581 = vmatpush1.msra.mxu0 0.0
    %4582 = vmatprep.subr.mxu0 0.0
    %4583 = vmatpush1.msra.mxu0 0.0
    %4584 = vmatprep.subr.mxu0 0.0
    %4585 = vmatpush1.msra.mxu0 0.0
    %4586 = vmatprep.subr.mxu0 0.0
    %4587 = vmatpush1.msra.mxu0 0.0
    %4588 = vmatprep.subr.mxu0 0.0
    %4589 = vmatpush1.msra.mxu0 0.0
    %4590 = vmatprep.subr.mxu0 0.0
    %4591 = vmatpush1.msra.mxu0 0.0
    %4592 = vmatprep.subr.mxu0 0.0
    %4593 = vmatpush1.msra.mxu0 0.0
    %4594 = vmatprep.subr.mxu0 0.0
    %4595 = vmatpush1.msra.mxu0 0.0
    %4596 = vmatprep.subr.mxu0 0.0
    %4597 = vmatpush1.msra.mxu0 0.0
    %4598 = vmatprep.subr.mxu0 0.0
    %4599 = vmatpush1.msra.mxu0 0.0
    %4600 = vmatprep.subr.mxu0 0.0
    %4601 = vmatpush1.msra.mxu0 0.0
    %4602 = vmatprep.subr.mxu0 0.0
    %4603 = vmatpush1.msra.mxu0 0.0
    %4604 = vmatprep.subr.mxu0 0.0
    %4605 = vmatpush1.msra.mxu0 0.0
    %4606 = vmatprep.subr.mxu0 0.0
    %4607 = vmatpush1.msra.mxu0 0.0
    %4608 = vmatprep.subr.mxu0 0.0
    %4609 = vmatpush1.msra.mxu0 0.0
    %4610 = vmatprep.subr.mxu0 0.0
    %4611 = vmatpush1.msra.mxu0 0.0
    %4612 = vmatprep.subr.mxu0 0.0
    %4613 = vmatpush1.msra.mxu0 0.0
    %4614 = vmatprep.subr.mxu0 0.0
    %4615 = vmatpush1.msra.mxu0 0.0
    %4616 = vmatprep.subr.mxu0 0.0
    %4617 = vmatpush1.msra.mxu0 0.0
    %4618 = vmatprep.subr.mxu0 0.0
    %4619 = vmatpush1.msra.mxu0 0.0
    %4620 = vmatprep.subr.mxu0 0.0
    %4621 = vmatpush1.msra.mxu0 0.0
    %4622 = vmatprep.subr.mxu0 0.0
    %4623 = vmatpush1.msra.mxu0 0.0
    %4624 = vmatprep.subr.mxu0 0.0
    %4625 = vmatpush1.msra.mxu0 0.0
    %4626 = vmatprep.mubr.f32.mxu0 0.0
    %4627 = vmatmul.mubr.f32.gmra.mrb[0].mxu0 %v4320
    %v4628 = vpop.f32.mrb[0].mxu0
    %v4629 = vadd.f32 0.0, %v4628
    %v4630 = vpop.f32.mrb[0].mxu0
    %4631 = vdwg.mxu0
    %4633 = vrot.lane.b32.xlu0 %v4561, 96
    %v4634 = vpop.permute.xlu0 %4633
    %v4635 = vsel %vm98, %v4634, 0
    %4637 = vmatprep.subr.mxu0 0.0
    %4638 = vmatpush1.msra.mxu0 %v2207
    %4639 = vmatprep.subr.mxu0 0.0
    %4640 = vmatpush1.msra.mxu0 %v2208
    %4641 = vmatprep.subr.mxu0 0.0
    %4642 = vmatpush1.msra.mxu0 %v2209
    %4643 = vmatprep.subr.mxu0 0.0
    %4644 = vmatpush1.msra.mxu0 %v2210
    %4645 = vmatprep.subr.mxu0 0.0
    %4646 = vmatpush1.msra.mxu0 0.0
    %4647 = vmatprep.subr.mxu0 0.0
    %4648 = vmatpush1.msra.mxu0 0.0
    %4649 = vmatprep.subr.mxu0 0.0
    %4650 = vmatpush1.msra.mxu0 0.0
    %4651 = vmatprep.subr.mxu0 0.0
    %4652 = vmatpush1.msra.mxu0 0.0
    %4653 = vmatprep.subr.mxu0 0.0
    %4654 = vmatpush1.msra.mxu0 0.0
    %4655 = vmatprep.subr.mxu0 0.0
    %4656 = vmatpush1.msra.mxu0 0.0
    %4657 = vmatprep.subr.mxu0 0.0
    %4658 = vmatpush1.msra.mxu0 0.0
    %4659 = vmatprep.subr.mxu0 0.0
    %4660 = vmatpush1.msra.mxu0 0.0
    %4661 = vmatprep.subr.mxu0 0.0
    %4662 = vmatpush1.msra.mxu0 0.0
    %4663 = vmatprep.subr.mxu0 0.0
    %4664 = vmatpush1.msra.mxu0 0.0
    %4665 = vmatprep.subr.mxu0 0.0
    %4666 = vmatpush1.msra.mxu0 0.0
    %4667 = vmatprep.subr.mxu0 0.0
    %4668 = vmatpush1.msra.mxu0 0.0
    %4669 = vmatprep.subr.mxu0 0.0
    %4670 = vmatpush1.msra.mxu0 0.0
    %4671 = vmatprep.subr.mxu0 0.0
    %4672 = vmatpush1.msra.mxu0 0.0
    %4673 = vmatprep.subr.mxu0 0.0
    %4674 = vmatpush1.msra.mxu0 0.0
    %4675 = vmatprep.subr.mxu0 0.0
    %4676 = vmatpush1.msra.mxu0 0.0
    %4677 = vmatprep.subr.mxu0 0.0
    %4678 = vmatpush1.msra.mxu0 0.0
    %4679 = vmatprep.subr.mxu0 0.0
    %4680 = vmatpush1.msra.mxu0 0.0
    %4681 = vmatprep.subr.mxu0 0.0
    %4682 = vmatpush1.msra.mxu0 0.0
    %4683 = vmatprep.subr.mxu0 0.0
    %4684 = vmatpush1.msra.mxu0 0.0
    %4685 = vmatprep.subr.mxu0 0.0
    %4686 = vmatpush1.msra.mxu0 0.0
    %4687 = vmatprep.subr.mxu0 0.0
    %4688 = vmatpush1.msra.mxu0 0.0
    %4689 = vmatprep.subr.mxu0 0.0
    %4690 = vmatpush1.msra.mxu0 0.0
    %4691 = vmatprep.subr.mxu0 0.0
    %4692 = vmatpush1.msra.mxu0 0.0
    %4693 = vmatprep.subr.mxu0 0.0
    %4694 = vmatpush1.msra.mxu0 0.0
    %4695 = vmatprep.subr.mxu0 0.0
    %4696 = vmatpush1.msra.mxu0 0.0
    %4697 = vmatprep.subr.mxu0 0.0
    %4698 = vmatpush1.msra.mxu0 0.0
    %4699 = vmatprep.subr.mxu0 0.0
    %4700 = vmatpush1.msra.mxu0 0.0
    %4701 = vmatprep.mubr.f32.mxu0 0.0
    %4702 = vmatmul.mubr.f32.gmra.mrb[0].mxu0 %v4635
    %v4703 = vpop.f32.mrb[0].mxu0
    %v4704 = vadd.f32 %v4629, %v4703
    %v4705 = vpop.f32.mrb[0].mxu0
    %4706 = vdwg.mxu0
    %4707 = vmatprep.subr.mxu0 0.0
    %4708 = vmatpush1.msra.mxu0 %v2215
    %4709 = vmatprep.subr.mxu0 0.0
    %4710 = vmatpush1.msra.mxu0 %v2216
    %4711 = vmatprep.subr.mxu0 0.0
    %4712 = vmatpush1.msra.mxu0 %v2217
    %4713 = vmatprep.subr.mxu0 0.0
    %4714 = vmatpush1.msra.mxu0 %v2218
    %4715 = vmatprep.subr.mxu0 0.0
    %4716 = vmatpush1.msra.mxu0 0.0
    %4717 = vmatprep.subr.mxu0 0.0
    %4718 = vmatpush1.msra.mxu0 0.0
    %4719 = vmatprep.subr.mxu0 0.0
    %4720 = vmatpush1.msra.mxu0 0.0
    %4721 = vmatprep.subr.mxu0 0.0
    %4722 = vmatpush1.msra.mxu0 0.0
    %4723 = vmatprep.subr.mxu0 0.0
    %4724 = vmatpush1.msra.mxu0 0.0
    %4725 = vmatprep.subr.mxu0 0.0
    %4726 = vmatpush1.msra.mxu0 0.0
    %4727 = vmatprep.subr.mxu0 0.0
    %4728 = vmatpush1.msra.mxu0 0.0
    %4729 = vmatprep.subr.mxu0 0.0
    %4730 = vmatpush1.msra.mxu0 0.0
    %4731 = vmatprep.subr.mxu0 0.0
    %4732 = vmatpush1.msra.mxu0 0.0
    %4733 = vmatprep.subr.mxu0 0.0
    %4734 = vmatpush1.msra.mxu0 0.0
    %4735 = vmatprep.subr.mxu0 0.0
    %4736 = vmatpush1.msra.mxu0 0.0
    %4737 = vmatprep.subr.mxu0 0.0
    %4738 = vmatpush1.msra.mxu0 0.0
    %4739 = vmatprep.subr.mxu0 0.0
    %4740 = vmatpush1.msra.mxu0 0.0
    %4741 = vmatprep.subr.mxu0 0.0
    %4742 = vmatpush1.msra.mxu0 0.0
    %4743 = vmatprep.subr.mxu0 0.0
    %4744 = vmatpush1.msra.mxu0 0.0
    %4745 = vmatprep.subr.mxu0 0.0
    %4746 = vmatpush1.msra.mxu0 0.0
    %4747 = vmatprep.subr.mxu0 0.0
    %4748 = vmatpush1.msra.mxu0 0.0
    %4749 = vmatprep.subr.mxu0 0.0
    %4750 = vmatpush1.msra.mxu0 0.0
    %4751 = vmatprep.subr.mxu0 0.0
    %4752 = vmatpush1.msra.mxu0 0.0
    %4753 = vmatprep.subr.mxu0 0.0
    %4754 = vmatpush1.msra.mxu0 0.0
    %4755 = vmatprep.subr.mxu0 0.0
    %4756 = vmatpush1.msra.mxu0 0.0
    %4757 = vmatprep.subr.mxu0 0.0
    %4758 = vmatpush1.msra.mxu0 0.0
    %4759 = vmatprep.subr.mxu0 0.0
    %4760 = vmatpush1.msra.mxu0 0.0
    %4761 = vmatprep.subr.mxu0 0.0
    %4762 = vmatpush1.msra.mxu0 0.0
    %4763 = vmatprep.subr.mxu0 0.0
    %4764 = vmatpush1.msra.mxu0 0.0
    %4765 = vmatprep.subr.mxu0 0.0
    %4766 = vmatpush1.msra.mxu0 0.0
    %4767 = vmatprep.subr.mxu0 0.0
    %4768 = vmatpush1.msra.mxu0 0.0
    %4769 = vmatprep.subr.mxu0 0.0
    %4770 = vmatpush1.msra.mxu0 0.0
    %4771 = vmatprep.mubr.f32.mxu0 0.0
    %4772 = vmatmul.mubr.f32.gmra.mrb[0].mxu0 %v4393
    %v4773 = vpop.f32.mrb[0].mxu0
    %v4774 = vadd.f32 0.0, %v4773
    %v4775 = vpop.f32.mrb[0].mxu0
    %4776 = vdwg.mxu0
    %v4777 = vadd.f32 %v4704, %v4774
    %v4778 = vadd.f32 %v4777, %v3034
    %s4779 = scalar_lea.vmem %s22, 4
    %4780 = vst [vmem:[%s4779] sm:$0x3] %v4778
    %v4781 = vsel %vm2238, %v4778, -1e+30
    %v4782 = vsel %vm3039, %v4781, -inf
    %4783 = vmax.xlane.f32.xlu0 %v4782
    %v4784 = vpop.xlane.xlu0 %4783
    %vm4785 = vcmp.eq.f32.partialorder %v4781, %v4784
    %v4786 = vsel %vm4785, %v2237, 128
    %v4787 = vsel %vm3039, %v4786, 2147483647
    %v4788 = vand.u32 %v4787, 65535
    %v4789 = vshra.s32 %v4787, 16
    %v4790 = vcvt.s32.f32 %v4788
    %v4791 = vcvt.s32.f32 %v4789
    %4792 = vmin.xlane.f32.xlu0 %v4791
    %v4793 = vpop.xlane.xlu0 %4792
    %vm4794 = vcmp.eq.f32.partialorder %v4791, %v4793
    %v4795 = vsel %vm4794, %v4790, inf
    %4796 = vmin.xlane.f32.xlu0 %v4795
    %v4797 = vpop.xlane.xlu0 %4796
    %v4798 = vcvt.f32.s32 %v4797
    %v4799 = vcvt.f32.s32 %v4793
    %v4800 = vshll.u32 %v4799, 16
    %v4801 = vadd.s32 %v4800, %v4798
    %vm4802 = vcmp.eq.s32.totalorder %v2237, %v4801
    %v4803 = vsel %vm4802, 1, 0
    %v4804 = vcvt.s32.f32 %v4803
    %4805 = vmatprep.subr.mxu0 0.0
    %4806 = vmatpush1.msra.mxu0 %v2220
    %4807 = vmatprep.subr.mxu0 0.0
    %4808 = vmatpush1.msra.mxu0 %v2221
    %4809 = vmatprep.subr.mxu0 0.0
    %4810 = vmatpush1.msra.mxu0 %v2222
    %4811 = vmatprep.subr.mxu0 0.0
    %4812 = vmatpush1.msra.mxu0 %v2223
    %4813 = vmatprep.subr.mxu0 0.0
    %4814 = vmatpush1.msra.mxu0 %v2224
    %4815 = vmatprep.subr.mxu0 0.0
    %4816 = vmatpush1.msra.mxu0 %v2225
    %4817 = vmatprep.subr.mxu0 0.0
    %4818 = vmatpush1.msra.mxu0 %v2226
    %4819 = vmatprep.subr.mxu0 0.0
    %4820 = vmatpush1.msra.mxu0 %v2227
    %4821 = vmatprep.subr.mxu0 0.0
    %4822 = vmatpush1.msra.mxu0 %v2228
    %4823 = vmatprep.subr.mxu0 0.0
    %4824 = vmatpush1.msra.mxu0 %v2229
    %4825 = vmatprep.subr.mxu0 0.0
    %4826 = vmatpush1.msra.mxu0 %v2230
    %4827 = vmatprep.subr.mxu0 0.0
    %4828 = vmatpush1.msra.mxu0 %v2231
    %4829 = vmatprep.subr.mxu0 0.0
    %4830 = vmatpush1.msra.mxu0 %v2232
    %4831 = vmatprep.subr.mxu0 0.0
    %4832 = vmatpush1.msra.mxu0 %v2233
    %4833 = vmatprep.subr.mxu0 0.0
    %4834 = vmatpush1.msra.mxu0 %v2234
    %4835 = vmatprep.subr.mxu0 0.0
    %4836 = vmatpush1.msra.mxu0 %v2235
    %4837 = vmatprep.subr.mxu0 0.0
    %4838 = vmatpush1.msra.mxu0 0.0
    %4839 = vmatprep.subr.mxu0 0.0
    %4840 = vmatpush1.msra.mxu0 0.0
    %4841 = vmatprep.subr.mxu0 0.0
    %4842 = vmatpush1.msra.mxu0 0.0
    %4843 = vmatprep.subr.mxu0 0.0
    %4844 = vmatpush1.msra.mxu0 0.0
    %4845 = vmatprep.subr.mxu0 0.0
    %4846 = vmatpush1.msra.mxu0 0.0
    %4847 = vmatprep.subr.mxu0 0.0
    %4848 = vmatpush1.msra.mxu0 0.0
    %4849 = vmatprep.subr.mxu0 0.0
    %4850 = vmatpush1.msra.mxu0 0.0
    %4851 = vmatprep.subr.mxu0 0.0
    %4852 = vmatpush1.msra.mxu0 0.0
    %4853 = vmatprep.subr.mxu0 0.0
    %4854 = vmatpush1.msra.mxu0 0.0
    %4855 = vmatprep.subr.mxu0 0.0
    %4856 = vmatpush1.msra.mxu0 0.0
    %4857 = vmatprep.subr.mxu0 0.0
    %4858 = vmatpush1.msra.mxu0 0.0
    %4859 = vmatprep.subr.mxu0 0.0
    %4860 = vmatpush1.msra.mxu0 0.0
    %4861 = vmatprep.subr.mxu0 0.0
    %4862 = vmatpush1.msra.mxu0 0.0
    %4863 = vmatprep.subr.mxu0 0.0
    %4864 = vmatpush1.msra.mxu0 0.0
    %4865 = vmatprep.subr.mxu0 0.0
    %4866 = vmatpush1.msra.mxu0 0.0
    %4867 = vmatprep.subr.mxu0 0.0
    %4868 = vmatpush1.msra.mxu0 0.0
    %4869 = vmatprep.mubr.f32.mxu0 0.0
    %4870 = vmatmul.mubr.f32.gmra.mrb[0].mxu0 %v4804
    %v4871 = vpop.f32.mrb[0].mxu0
    %v4872 = vadd.f32 0.0, %v4871
    %v4873 = vpop.f32.mrb[0].mxu0
    %4874 = vdwg.mxu0
    %s4875 = scalar_lea.vmem %s2, 6
    %v4876 = vld [vmem:[%s4875] sm:$0x3]
    %s4877 = sld [smem:[#allocation2 + $0x3]]
    %p4878 = scmp.gt.s32.totalorder %s4877, 0
    %s4879 = scalar_select %p4878, 1, 0
    %s4880 = scvt.s32.f32 %s4879
    %v4881 = vstv %s4880
    %v4882 = vmul.f32 %v4881, %v4876
    %s4883 = ssub.f32 1.0, %s4880
    %v4884 = vstv %s4883
    %v4885 = vmul.f32 %v4884, %v4872
    %v4886 = vadd.f32 %v4882, %v4885
    %4887 = vmatprep.subr.mxu0 %v2119
    %4888 = vmatpush1.msra.mxu0 %v2118
    %4889 = vmatprep.subr.mxu0 %v2121
    %4890 = vmatpush1.msra.mxu0 %v2120
    %4891 = vmatprep.subr.mxu0 %v2123
    %4892 = vmatpush1.msra.mxu0 %v2122
    %4893 = vmatprep.subr.mxu0 %v2125
    %4894 = vmatpush1.msra.mxu0 %v2124
    %4895 = vmatprep.subr.mxu0 0.0
    %4896 = vmatpush1.msra.mxu0 0.0
    %4897 = vmatprep.subr.mxu0 0.0
    %4898 = vmatpush1.msra.mxu0 0.0
    %4899 = vmatprep.subr.mxu0 0.0
    %4900 = vmatpush1.msra.mxu0 0.0
    %4901 = vmatprep.subr.mxu0 0.0
    %4902 = vmatpush1.msra.mxu0 0.0
    %4903 = vmatprep.subr.mxu0 0.0
    %4904 = vmatpush1.msra.mxu0 0.0
    %4905 = vmatprep.subr.mxu0 0.0
    %4906 = vmatpush1.msra.mxu0 0.0
    %4907 = vmatprep.subr.mxu0 0.0
    %4908 = vmatpush1.msra.mxu0 0.0
    %4909 = vmatprep.subr.mxu0 0.0
    %4910 = vmatpush1.msra.mxu0 0.0
    %4911 = vmatprep.subr.mxu0 0.0
    %4912 = vmatpush1.msra.mxu0 0.0
    %4913 = vmatprep.subr.mxu0 0.0
    %4914 = vmatpush1.msra.mxu0 0.0
    %4915 = vmatprep.subr.mxu0 0.0
    %4916 = vmatpush1.msra.mxu0 0.0
    %4917 = vmatprep.subr.mxu0 0.0
    %4918 = vmatpush1.msra.mxu0 0.0
    %4919 = vmatprep.subr.mxu0 0.0
    %4920 = vmatpush1.msra.mxu0 0.0
    %4921 = vmatprep.subr.mxu0 0.0
    %4922 = vmatpush1.msra.mxu0 0.0
    %4923 = vmatprep.subr.mxu0 0.0
    %4924 = vmatpush1.msra.mxu0 0.0
    %4925 = vmatprep.subr.mxu0 0.0
    %4926 = vmatpush1.msra.mxu0 0.0
    %4927 = vmatprep.subr.mxu0 0.0
    %4928 = vmatpush1.msra.mxu0 0.0
    %4929 = vmatprep.subr.mxu0 0.0
    %4930 = vmatpush1.msra.mxu0 0.0
    %4931 = vmatprep.subr.mxu0 0.0
    %4932 = vmatpush1.msra.mxu0 0.0
    %4933 = vmatprep.subr.mxu0 0.0
    %4934 = vmatpush1.msra.mxu0 0.0
    %4935 = vmatprep.subr.mxu0 0.0
    %4936 = vmatpush1.msra.mxu0 0.0
    %4937 = vmatprep.subr.mxu0 0.0
    %4938 = vmatpush1.msra.mxu0 0.0
    %4939 = vmatprep.subr.mxu0 0.0
    %4940 = vmatpush1.msra.mxu0 0.0
    %4941 = vmatprep.subr.mxu0 0.0
    %4942 = vmatpush1.msra.mxu0 0.0
    %4943 = vmatprep.subr.mxu0 0.0
    %4944 = vmatpush1.msra.mxu0 0.0
    %4945 = vmatprep.subr.mxu0 0.0
    %4946 = vmatpush1.msra.mxu0 0.0
    %4947 = vmatprep.subr.mxu0 0.0
    %4948 = vmatpush1.msra.mxu0 0.0
    %4949 = vmatprep.subr.mxu0 0.0
    %4950 = vmatpush1.msra.mxu0 0.0
    %4951 = vmatprep.mubr.f32.mxu0 0.0
    %4952 = vmatmul.mubr.f32.gmra.mrb[0].mxu0 %v4635
    %v4953 = vpop.f32.mrb[0].mxu0
    %v4954 = vadd.f32 %v2244, %v4953
    %v4955 = vpop.f32.mrb[0].mxu0
    %v4956 = vadd.f32 %v2248, %v4955
    %4957 = vdwg.mxu0
    %v4958 = vadd.f32 %v2114, %v4954
    %v4959 = vadd.f32 %v2117, %v4956
    %v4960 = vtanh.pop %v4958
    %v4961 = vtanh.pop %v4959
    %4962 = vmatprep.subr.mxu0 0.0
    %4963 = vmatpush1.msra.mxu0 %v2127
    %4964 = vmatprep.subr.mxu0 0.0
    %4965 = vmatpush1.msra.mxu0 %v2128
    %4966 = vmatprep.subr.mxu0 0.0
    %4967 = vmatpush1.msra.mxu0 %v2129
    %4968 = vmatprep.subr.mxu0 0.0
    %4969 = vmatpush1.msra.mxu0 %v2130
    %4970 = vmatprep.subr.mxu0 0.0
    %4971 = vmatpush1.msra.mxu0 %v2131
    %4972 = vmatprep.subr.mxu0 0.0
    %4973 = vmatpush1.msra.mxu0 %v2132
    %4974 = vmatprep.subr.mxu0 0.0
    %4975 = vmatpush1.msra.mxu0 %v2133
    %4976 = vmatprep.subr.mxu0 0.0
    %4977 = vmatpush1.msra.mxu0 %v2134
    %4978 = vmatprep.subr.mxu0 0.0
    %4979 = vmatpush1.msra.mxu0 %v2135
    %4980 = vmatprep.subr.mxu0 0.0
    %4981 = vmatpush1.msra.mxu0 %v2136
    %4982 = vmatprep.subr.mxu0 0.0
    %4983 = vmatpush1.msra.mxu0 %v2137
    %4984 = vmatprep.subr.mxu0 0.0
    %4985 = vmatpush1.msra.mxu0 %v2138
    %4986 = vmatprep.subr.mxu0 0.0
    %4987 = vmatpush1.msra.mxu0 %v2139
    %4988 = vmatprep.subr.mxu0 0.0
    %4989 = vmatpush1.msra.mxu0 %v2140
    %4990 = vmatprep.subr.mxu0 0.0
    %4991 = vmatpush1.msra.mxu0 %v2141
    %4992 = vmatprep.subr.mxu0 0.0
    %4993 = vmatpush1.msra.mxu0 %v2142
    %4994 = vmatprep.subr.mxu0 0.0
    %4995 = vmatpush1.msra.mxu0 %v2143
    %4996 = vmatprep.subr.mxu0 0.0
    %4997 = vmatpush1.msra.mxu0 %v2144
    %4998 = vmatprep.subr.mxu0 0.0
    %4999 = vmatpush1.msra.mxu0 %v2145
    %5000 = vmatprep.subr.mxu0 0.0
    %5001 = vmatpush1.msra.mxu0 %v2146
    %5002 = vmatprep.subr.mxu0 0.0
    %5003 = vmatpush1.msra.mxu0 %v2147
    %5004 = vmatprep.subr.mxu0 0.0
    %5005 = vmatpush1.msra.mxu0 %v2148
    %5006 = vmatprep.subr.mxu0 0.0
    %5007 = vmatpush1.msra.mxu0 %v2149
    %5008 = vmatprep.subr.mxu0 0.0
    %5009 = vmatpush1.msra.mxu0 %v2150
    %5010 = vmatprep.subr.mxu0 0.0
    %5011 = vmatpush1.msra.mxu0 %v2151
    %5012 = vmatprep.subr.mxu0 0.0
    %5013 = vmatpush1.msra.mxu0 %v2152
    %5014 = vmatprep.subr.mxu0 0.0
    %5015 = vmatpush1.msra.mxu0 %v2153
    %5016 = vmatprep.subr.mxu0 0.0
    %5017 = vmatpush1.msra.mxu0 %v2154
    %5018 = vmatprep.subr.mxu0 0.0
    %5019 = vmatpush1.msra.mxu0 %v2155
    %5020 = vmatprep.subr.mxu0 0.0
    %5021 = vmatpush1.msra.mxu0 %v2156
    %5022 = vmatprep.subr.mxu0 0.0
    %5023 = vmatpush1.msra.mxu0 %v2157
    %5024 = vmatprep.subr.mxu0 0.0
    %5025 = vmatpush1.msra.mxu0 %v2158
    %5026 = vmatprep.mubr.f32.mxu0 %v4961
    %5027 = vmatmul.mubr.f32.gmra.mrb[0].mxu0 %v4960
    %v5028 = vpop.f32.mrb[0].mxu0
    %v5029 = vadd.f32 0.0, %v5028
    %v5030 = vpop.f32.mrb[0].mxu0
    %5031 = vdwg.mxu0
    %v5032 = vsel %vm2396, %v5029, -inf
    %5033 = vmax.xlane.f32.xlu0 %v5032
    %v5034 = vpop.xlane.xlu0 %5033
    %v5035 = vsub.f32 %v5029, %v5034
    %v5036 = vmul.f32 %v5035, 1.442695
    %v5037 = vpow.pop %v5036
    %v5038 = vsel %vm2396, %v5037, 0.0
    %5039 = vadd.xlane.f32.xlu0 %v5038
    %v5040 = vpop.xlane.xlu0 %5039
    %v5041 = vrcp.pop %v5040
    %v5042 = vmul.f32 1.0, %v5041
    %v5043 = vmul.f32 %v5037, %v5042
    %v5045 = vsel %vm2409, %v5043, 0
    %5047 = vmatprep.subr.mxu0 %v2160
    %5048 = vmatpush1.msra.mxu0 %v2159
    %5049 = vmatprep.subr.mxu0 0.0
    %5050 = vmatpush1.msra.mxu0 0.0
    %5051 = vmatprep.subr.mxu0 0.0
    %5052 = vmatpush1.msra.mxu0 0.0
    %5053 = vmatprep.subr.mxu0 0.0
    %5054 = vmatpush1.msra.mxu0 0.0
    %5055 = vmatprep.subr.mxu0 0.0
    %5056 = vmatpush1.msra.mxu0 0.0
    %5057 = vmatprep.subr.mxu0 0.0
    %5058 = vmatpush1.msra.mxu0 0.0
    %5059 = vmatprep.subr.mxu0 0.0
    %5060 = vmatpush1.msra.mxu0 0.0
    %5061 = vmatprep.subr.mxu0 0.0
    %5062 = vmatpush1.msra.mxu0 0.0
    %5063 = vmatprep.subr.mxu0 0.0
    %5064 = vmatpush1.msra.mxu0 0.0
    %5065 = vmatprep.subr.mxu0 0.0
    %5066 = vmatpush1.msra.mxu0 0.0
    %5067 = vmatprep.subr.mxu0 0.0
    %5068 = vmatpush1.msra.mxu0 0.0
    %5069 = vmatprep.subr.mxu0 0.0
    %5070 = vmatpush1.msra.mxu0 0.0
    %5071 = vmatprep.subr.mxu0 0.0
    %5072 = vmatpush1.msra.mxu0 0.0
    %5073 = vmatprep.subr.mxu0 0.0
    %5074 = vmatpush1.msra.mxu0 0.0
    %5075 = vmatprep.subr.mxu0 0.0
    %5076 = vmatpush1.msra.mxu0 0.0
    %5077 = vmatprep.subr.mxu0 0.0
    %5078 = vmatpush1.msra.mxu0 0.0
    %5079 = vmatprep.subr.mxu0 0.0
    %5080 = vmatpush1.msra.mxu0 0.0
    %5081 = vmatprep.subr.mxu0 0.0
    %5082 = vmatpush1.msra.mxu0 0.0
    %5083 = vmatprep.subr.mxu0 0.0
    %5084 = vmatpush1.msra.mxu0 0.0
    %5085 = vmatprep.subr.mxu0 0.0
    %5086 = vmatpush1.msra.mxu0 0.0
    %5087 = vmatprep.subr.mxu0 0.0
    %5088 = vmatpush1.msra.mxu0 0.0
    %5089 = vmatprep.subr.mxu0 0.0
    %5090 = vmatpush1.msra.mxu0 0.0
    %5091 = vmatprep.subr.mxu0 0.0
    %5092 = vmatpush1.msra.mxu0 0.0
    %5093 = vmatprep.subr.mxu0 0.0
    %5094 = vmatpush1.msra.mxu0 0.0
    %5095 = vmatprep.subr.mxu0 0.0
    %5096 = vmatpush1.msra.mxu0 0.0
    %5097 = vmatprep.subr.mxu0 0.0
    %5098 = vmatpush1.msra.mxu0 0.0
    %5099 = vmatprep.subr.mxu0 0.0
    %5100 = vmatpush1.msra.mxu0 0.0
    %5101 = vmatprep.subr.mxu0 0.0
    %5102 = vmatpush1.msra.mxu0 0.0
    %5103 = vmatprep.subr.mxu0 0.0
    %5104 = vmatpush1.msra.mxu0 0.0
    %5105 = vmatprep.subr.mxu0 0.0
    %5106 = vmatpush1.msra.mxu0 0.0
    %5107 = vmatprep.subr.mxu0 0.0
    %5108 = vmatpush1.msra.mxu0 0.0
    %5109 = vmatprep.subr.mxu0 0.0
    %5110 = vmatpush1.msra.mxu0 0.0
    %5111 = vmatprep.mubr.f32.mxu0 0.0
    %5112 = vmatmul.mubr.f32.gmra.mrb[0].mxu0 %v5045
    %v5113 = vpop.f32.mrb[0].mxu0
    %v5114 = vadd.f32 0.0, %v5113
    %v5115 = vpop.f32.mrb[0].mxu0
    %v5116 = vadd.f32 0.0, %v5115
    %5117 = vdwg.mxu0
    %v5118 = vmul.f32 %v5114, %v1520
    %v5119 = vmul.f32 %v5116, %v1523
    %5120 = vmatprep.subr.mxu0 0.0
    %5121 = vmatpush1.msra.mxu0 %v2161
    %5122 = vmatprep.subr.mxu0 0.0
    %5123 = vmatpush1.msra.mxu0 %v2162
    %5124 = vmatprep.subr.mxu0 0.0
    %5125 = vmatpush1.msra.mxu0 %v2163
    %5126 = vmatprep.subr.mxu0 0.0
    %5127 = vmatpush1.msra.mxu0 %v2164
    %5128 = vmatprep.subr.mxu0 0.0
    %5129 = vmatpush1.msra.mxu0 %v2165
    %5130 = vmatprep.subr.mxu0 0.0
    %5131 = vmatpush1.msra.mxu0 %v2166
    %5132 = vmatprep.subr.mxu0 0.0
    %5133 = vmatpush1.msra.mxu0 %v2167
    %5134 = vmatprep.subr.mxu0 0.0
    %5135 = vmatpush1.msra.mxu0 %v2168
    %5136 = vmatprep.subr.mxu0 0.0
    %5137 = vmatpush1.msra.mxu0 %v2169
    %5138 = vmatprep.subr.mxu0 0.0
    %5139 = vmatpush1.msra.mxu0 %v2170
    %5140 = vmatprep.subr.mxu0 0.0
    %5141 = vmatpush1.msra.mxu0 %v2171
    %5142 = vmatprep.subr.mxu0 0.0
    %5143 = vmatpush1.msra.mxu0 %v2172
    %5144 = vmatprep.subr.mxu0 0.0
    %5145 = vmatpush1.msra.mxu0 %v2173
    %5146 = vmatprep.subr.mxu0 0.0
    %5147 = vmatpush1.msra.mxu0 %v2174
    %5148 = vmatprep.subr.mxu0 0.0
    %5149 = vmatpush1.msra.mxu0 %v2175
    %5150 = vmatprep.subr.mxu0 0.0
    %5151 = vmatpush1.msra.mxu0 %v2176
    %5152 = vmatprep.subr.mxu0 0.0
    %5153 = vmatpush1.msra.mxu0 %v2177
    %5154 = vmatprep.subr.mxu0 0.0
    %5155 = vmatpush1.msra.mxu0 %v2178
    %5156 = vmatprep.subr.mxu0 0.0
    %5157 = vmatpush1.msra.mxu0 %v2179
    %5158 = vmatprep.subr.mxu0 0.0
    %5159 = vmatpush1.msra.mxu0 %v2180
    %5160 = vmatprep.subr.mxu0 0.0
    %5161 = vmatpush1.msra.mxu0 %v2181
    %5162 = vmatprep.subr.mxu0 0.0
    %5163 = vmatpush1.msra.mxu0 %v2182
    %5164 = vmatprep.subr.mxu0 0.0
    %5165 = vmatpush1.msra.mxu0 %v2183
    %5166 = vmatprep.subr.mxu0 0.0
    %5167 = vmatpush1.msra.mxu0 %v2184
    %5168 = vmatprep.subr.mxu0 0.0
    %5169 = vmatpush1.msra.mxu0 %v2185
    %5170 = vmatprep.subr.mxu0 0.0
    %5171 = vmatpush1.msra.mxu0 %v2186
    %5172 = vmatprep.subr.mxu0 0.0
    %5173 = vmatpush1.msra.mxu0 %v2187
    %5174 = vmatprep.subr.mxu0 0.0
    %5175 = vmatpush1.msra.mxu0 %v2188
    %5176 = vmatprep.subr.mxu0 0.0
    %5177 = vmatpush1.msra.mxu0 %v2189
    %5178 = vmatprep.subr.mxu0 0.0
    %5179 = vmatpush1.msra.mxu0 %v2190
    %5180 = vmatprep.subr.mxu0 0.0
    %5181 = vmatpush1.msra.mxu0 %v2191
    %5182 = vmatprep.subr.mxu0 0.0
    %5183 = vmatpush1.msra.mxu0 %v2192
    %5184 = vmatprep.mubr.f32.mxu0 %v5119
    %5185 = vmatmul.mubr.f32.gmra.mrb[0].mxu0 %v5118
    %v5186 = vpop.f32.mrb[0].mxu0
    %v5187 = vadd.f32 0.0, %v5186
    %v5188 = vpop.f32.mrb[0].mxu0
    %5189 = vdwg.mxu0
    %v5191 = vsel %vm98, %v5187, 0
    %5193 = vmatprep.subr.mxu0 0.0
    %5194 = vmatpush1.msra.mxu0 %v2197
    %5195 = vmatprep.subr.mxu0 0.0
    %5196 = vmatpush1.msra.mxu0 %v2198
    %5197 = vmatprep.subr.mxu0 0.0
    %5198 = vmatpush1.msra.mxu0 %v2199
    %5199 = vmatprep.subr.mxu0 0.0
    %5200 = vmatpush1.msra.mxu0 %v2200
    %5201 = vmatprep.subr.mxu0 0.0
    %5202 = vmatpush1.msra.mxu0 0.0
    %5203 = vmatprep.subr.mxu0 0.0
    %5204 = vmatpush1.msra.mxu0 0.0
    %5205 = vmatprep.subr.mxu0 0.0
    %5206 = vmatpush1.msra.mxu0 0.0
    %5207 = vmatprep.subr.mxu0 0.0
    %5208 = vmatpush1.msra.mxu0 0.0
    %5209 = vmatprep.subr.mxu0 0.0
    %5210 = vmatpush1.msra.mxu0 0.0
    %5211 = vmatprep.subr.mxu0 0.0
    %5212 = vmatpush1.msra.mxu0 0.0
    %5213 = vmatprep.subr.mxu0 0.0
    %5214 = vmatpush1.msra.mxu0 0.0
    %5215 = vmatprep.subr.mxu0 0.0
    %5216 = vmatpush1.msra.mxu0 0.0
    %5217 = vmatprep.subr.mxu0 0.0
    %5218 = vmatpush1.msra.mxu0 0.0
    %5219 = vmatprep.subr.mxu0 0.0
    %5220 = vmatpush1.msra.mxu0 0.0
    %5221 = vmatprep.subr.mxu0 0.0
    %5222 = vmatpush1.msra.mxu0 0.0
    %5223 = vmatprep.subr.mxu0 0.0
    %5224 = vmatpush1.msra.mxu0 0.0
    %5225 = vmatprep.subr.mxu0 0.0
    %5226 = vmatpush1.msra.mxu0 0.0
    %5227 = vmatprep.subr.mxu0 0.0
    %5228 = vmatpush1.msra.mxu0 0.0
    %5229 = vmatprep.subr.mxu0 0.0
    %5230 = vmatpush1.msra.mxu0 0.0
    %5231 = vmatprep.subr.mxu0 0.0
    %5232 = vmatpush1.msra.mxu0 0.0
    %5233 = vmatprep.subr.mxu0 0.0
    %5234 = vmatpush1.msra.mxu0 0.0
    %5235 = vmatprep.subr.mxu0 0.0
    %5236 = vmatpush1.msra.mxu0 0.0
    %5237 = vmatprep.subr.mxu0 0.0
    %5238 = vmatpush1.msra.mxu0 0.0
    %5239 = vmatprep.subr.mxu0 0.0
    %5240 = vmatpush1.msra.mxu0 0.0
    %5241 = vmatprep.subr.mxu0 0.0
    %5242 = vmatpush1.msra.mxu0 0.0
    %5243 = vmatprep.subr.mxu0 0.0
    %5244 = vmatpush1.msra.mxu0 0.0
    %5245 = vmatprep.subr.mxu0 0.0
    %5246 = vmatpush1.msra.mxu0 0.0
    %5247 = vmatprep.subr.mxu0 0.0
    %5248 = vmatpush1.msra.mxu0 0.0
    %5249 = vmatprep.subr.mxu0 0.0
    %5250 = vmatpush1.msra.mxu0 0.0
    %5251 = vmatprep.subr.mxu0 0.0
    %5252 = vmatpush1.msra.mxu0 0.0
    %5253 = vmatprep.subr.mxu0 0.0
    %5254 = vmatpush1.msra.mxu0 0.0
    %5255 = vmatprep.subr.mxu0 0.0
    %5256 = vmatpush1.msra.mxu0 0.0
    %5257 = vmatprep.mubr.f32.mxu0 0.0
    %5258 = vmatmul.mubr.f32.gmra.mrb[0].mxu0 %v5191
    %v5259 = vpop.f32.mrb[0].mxu0
    %v5260 = vadd.f32 0.0, %v5259
    %v5261 = vpop.f32.mrb[0].mxu0
    %5262 = vdwg.mxu0
    %v5264 = vsel %vm98, %v4886, 0
    %5266 = vmatprep.subr.mxu0 0.0
    %5267 = vmatpush1.msra.mxu0 %v2193
    %5268 = vmatprep.subr.mxu0 0.0
    %5269 = vmatpush1.msra.mxu0 %v2194
    %5270 = vmatprep.subr.mxu0 0.0
    %5271 = vmatpush1.msra.mxu0 %v2195
    %5272 = vmatprep.subr.mxu0 0.0
    %5273 = vmatpush1.msra.mxu0 %v2196
    %5274 = vmatprep.subr.mxu0 0.0
    %5275 = vmatpush1.msra.mxu0 0.0
    %5276 = vmatprep.subr.mxu0 0.0
    %5277 = vmatpush1.msra.mxu0 0.0
    %5278 = vmatprep.subr.mxu0 0.0
    %5279 = vmatpush1.msra.mxu0 0.0
    %5280 = vmatprep.subr.mxu0 0.0
    %5281 = vmatpush1.msra.mxu0 0.0
    %5282 = vmatprep.subr.mxu0 0.0
    %5283 = vmatpush1.msra.mxu0 0.0
    %5284 = vmatprep.subr.mxu0 0.0
    %5285 = vmatpush1.msra.mxu0 0.0
    %5286 = vmatprep.subr.mxu0 0.0
    %5287 = vmatpush1.msra.mxu0 0.0
    %5288 = vmatprep.subr.mxu0 0.0
    %5289 = vmatpush1.msra.mxu0 0.0
    %5290 = vmatprep.subr.mxu0 0.0
    %5291 = vmatpush1.msra.mxu0 0.0
    %5292 = vmatprep.subr.mxu0 0.0
    %5293 = vmatpush1.msra.mxu0 0.0
    %5294 = vmatprep.subr.mxu0 0.0
    %5295 = vmatpush1.msra.mxu0 0.0
    %5296 = vmatprep.subr.mxu0 0.0
    %5297 = vmatpush1.msra.mxu0 0.0
    %5298 = vmatprep.subr.mxu0 0.0
    %5299 = vmatpush1.msra.mxu0 0.0
    %5300 = vmatprep.subr.mxu0 0.0
    %5301 = vmatpush1.msra.mxu0 0.0
    %5302 = vmatprep.subr.mxu0 0.0
    %5303 = vmatpush1.msra.mxu0 0.0
    %5304 = vmatprep.subr.mxu0 0.0
    %5305 = vmatpush1.msra.mxu0 0.0
    %5306 = vmatprep.subr.mxu0 0.0
    %5307 = vmatpush1.msra.mxu0 0.0
    %5308 = vmatprep.subr.mxu0 0.0
    %5309 = vmatpush1.msra.mxu0 0.0
    %5310 = vmatprep.subr.mxu0 0.0
    %5311 = vmatpush1.msra.mxu0 0.0
    %5312 = vmatprep.subr.mxu0 0.0
    %5313 = vmatpush1.msra.mxu0 0.0
    %5314 = vmatprep.subr.mxu0 0.0
    %5315 = vmatpush1.msra.mxu0 0.0
    %5316 = vmatprep.subr.mxu0 0.0
    %5317 = vmatpush1.msra.mxu0 0.0
    %5318 = vmatprep.subr.mxu0 0.0
    %5319 = vmatpush1.msra.mxu0 0.0
    %5320 = vmatprep.subr.mxu0 0.0
    %5321 = vmatpush1.msra.mxu0 0.0
    %5322 = vmatprep.subr.mxu0 0.0
    %5323 = vmatpush1.msra.mxu0 0.0
    %5324 = vmatprep.subr.mxu0 0.0
    %5325 = vmatpush1.msra.mxu0 0.0
    %5326 = vmatprep.subr.mxu0 0.0
    %5327 = vmatpush1.msra.mxu0 0.0
    %5328 = vmatprep.subr.mxu0 0.0
    %5329 = vmatpush1.msra.mxu0 0.0
    %5330 = vmatprep.mubr.f32.mxu0 0.0
    %5331 = vmatmul.mubr.f32.gmra.mrb[0].mxu0 %v5264
    %v5332 = vpop.f32.mrb[0].mxu0
    %v5333 = vadd.f32 %v5260, %v5332
    %v5334 = vpop.f32.mrb[0].mxu0
    %5335 = vdwg.mxu0
    %v5336 = vadd.f32 %v5333, %v2706
    %5337 = vmatprep.subr.mxu0 0.0
    %5338 = vmatpush1.msra.mxu0 %v2201
    %5339 = vmatprep.subr.mxu0 0.0
    %5340 = vmatpush1.msra.mxu0 %v2202
    %5341 = vmatprep.subr.mxu0 0.0
    %5342 = vmatpush1.msra.mxu0 %v2203
    %5343 = vmatprep.subr.mxu0 0.0
    %5344 = vmatpush1.msra.mxu0 %v2204
    %5345 = vmatprep.subr.mxu0 0.0
    %5346 = vmatpush1.msra.mxu0 0.0
    %5347 = vmatprep.subr.mxu0 0.0
    %5348 = vmatpush1.msra.mxu0 0.0
    %5349 = vmatprep.subr.mxu0 0.0
    %5350 = vmatpush1.msra.mxu0 0.0
    %5351 = vmatprep.subr.mxu0 0.0
    %5352 = vmatpush1.msra.mxu0 0.0
    %5353 = vmatprep.subr.mxu0 0.0
    %5354 = vmatpush1.msra.mxu0 0.0
    %5355 = vmatprep.subr.mxu0 0.0
    %5356 = vmatpush1.msra.mxu0 0.0
    %5357 = vmatprep.subr.mxu0 0.0
    %5358 = vmatpush1.msra.mxu0 0.0
    %5359 = vmatprep.subr.mxu0 0.0
    %5360 = vmatpush1.msra.mxu0 0.0
    %5361 = vmatprep.subr.mxu0 0.0
    %5362 = vmatpush1.msra.mxu0 0.0
    %5363 = vmatprep.subr.mxu0 0.0
    %5364 = vmatpush1.msra.mxu0 0.0
    %5365 = vmatprep.subr.mxu0 0.0
    %5366 = vmatpush1.msra.mxu0 0.0
    %5367 = vmatprep.subr.mxu0 0.0
    %5368 = vmatpush1.msra.mxu0 0.0
    %5369 = vmatprep.subr.mxu0 0.0
    %5370 = vmatpush1.msra.mxu0 0.0
    %5371 = vmatprep.subr.mxu0 0.0
    %5372 = vmatpush1.msra.mxu0 0.0
    %5373 = vmatprep.subr.mxu0 0.0
    %5374 = vmatpush1.msra.mxu0 0.0
    %5375 = vmatprep.subr.mxu0 0.0
    %5376 = vmatpush1.msra.mxu0 0.0
    %5377 = vmatprep.subr.mxu0 0.0
    %5378 = vmatpush1.msra.mxu0 0.0
    %5379 = vmatprep.subr.mxu0 0.0
    %5380 = vmatpush1.msra.mxu0 0.0
    %5381 = vmatprep.subr.mxu0 0.0
    %5382 = vmatpush1.msra.mxu0 0.0
    %5383 = vmatprep.subr.mxu0 0.0
    %5384 = vmatpush1.msra.mxu0 0.0
    %5385 = vmatprep.subr.mxu0 0.0
    %5386 = vmatpush1.msra.mxu0 0.0
    %5387 = vmatprep.subr.mxu0 0.0
    %5388 = vmatpush1.msra.mxu0 0.0
    %5389 = vmatprep.subr.mxu0 0.0
    %5390 = vmatpush1.msra.mxu0 0.0
    %5391 = vmatprep.subr.mxu0 0.0
    %5392 = vmatpush1.msra.mxu0 0.0
    %5393 = vmatprep.subr.mxu0 0.0
    %5394 = vmatpush1.msra.mxu0 0.0
    %5395 = vmatprep.subr.mxu0 0.0
    %5396 = vmatpush1.msra.mxu0 0.0
    %5397 = vmatprep.subr.mxu0 0.0
    %5398 = vmatpush1.msra.mxu0 0.0
    %5399 = vmatprep.subr.mxu0 0.0
    %5400 = vmatpush1.msra.mxu0 0.0
    %5401 = vmatprep.mubr.f32.mxu0 0.0
    %5402 = vmatmul.mubr.f32.gmra.mrb[0].mxu0 %v4635
    %v5403 = vpop.f32.mrb[0].mxu0
    %v5404 = vadd.f32 %v2713, %v5403
    %v5405 = vpop.f32.mrb[0].mxu0
    %5406 = vdwg.mxu0
    %v5407 = vadd.f32 %v5336, %v5404
    %v5408 = vxor.u32 %v5407, 2147483648
    %v5409 = vmul.f32 %v5408, 1.442695
    %v5410 = vpow.pop %v5409
    %v5411 = vadd.f32 %v5410, 1.0
    %v5412 = vrcp.pop %v5411
    %v5413 = vmul.f32 1.0, %v5412
    %5415 = vrot.lane.b32.xlu0 %v5404, 64
    %v5416 = vpop.permute.xlu0 %5415
    %v5418 = vmul.f32 %v5413, %v5416
    %5420 = vrot.lane.b32.xlu0 %v5418, 64
    %v5421 = vpop.permute.xlu0 %5420
    %v5423 = vadd.f32 %v5336, %v5421
    %v5424 = vtanh.pop %v5423
    %v5425 = vsub.f32 1.0, %v5413
    %5427 = vrot.lane.b32.xlu0 %v5424, 96
    %v5428 = vpop.permute.xlu0 %5427
    %v5430 = vmul.f32 %v5425, %v5428
    %v5431 = vmul.f32 %v5413, %v4561
    %v5432 = vadd.f32 %v5430, %v5431
    %5433 = vmatprep.subr.mxu0 0.0
    %5434 = vmatpush1.msra.mxu0 %v2211
    %5435 = vmatprep.subr.mxu0 0.0
    %5436 = vmatpush1.msra.mxu0 %v2212
    %5437 = vmatprep.subr.mxu0 0.0
    %5438 = vmatpush1.msra.mxu0 %v2213
    %5439 = vmatprep.subr.mxu0 0.0
    %5440 = vmatpush1.msra.mxu0 %v2214
    %5441 = vmatprep.subr.mxu0 0.0
    %5442 = vmatpush1.msra.mxu0 0.0
    %5443 = vmatprep.subr.mxu0 0.0
    %5444 = vmatpush1.msra.mxu0 0.0
    %5445 = vmatprep.subr.mxu0 0.0
    %5446 = vmatpush1.msra.mxu0 0.0
    %5447 = vmatprep.subr.mxu0 0.0
    %5448 = vmatpush1.msra.mxu0 0.0
    %5449 = vmatprep.subr.mxu0 0.0
    %5450 = vmatpush1.msra.mxu0 0.0
    %5451 = vmatprep.subr.mxu0 0.0
    %5452 = vmatpush1.msra.mxu0 0.0
    %5453 = vmatprep.subr.mxu0 0.0
    %5454 = vmatpush1.msra.mxu0 0.0
    %5455 = vmatprep.subr.mxu0 0.0
    %5456 = vmatpush1.msra.mxu0 0.0
    %5457 = vmatprep.subr.mxu0 0.0
    %5458 = vmatpush1.msra.mxu0 0.0
    %5459 = vmatprep.subr.mxu0 0.0
    %5460 = vmatpush1.msra.mxu0 0.0
    %5461 = vmatprep.subr.mxu0 0.0
    %5462 = vmatpush1.msra.mxu0 0.0
    %5463 = vmatprep.subr.mxu0 0.0
    %5464 = vmatpush1.msra.mxu0 0.0
    %5465 = vmatprep.subr.mxu0 0.0
    %5466 = vmatpush1.msra.mxu0 0.0
    %5467 = vmatprep.subr.mxu0 0.0
    %5468 = vmatpush1.msra.mxu0 0.0
    %5469 = vmatprep.subr.mxu0 0.0
    %5470 = vmatpush1.msra.mxu0 0.0
    %5471 = vmatprep.subr.mxu0 0.0
    %5472 = vmatpush1.msra.mxu0 0.0
    %5473 = vmatprep.subr.mxu0 0.0
    %5474 = vmatpush1.msra.mxu0 0.0
    %5475 = vmatprep.subr.mxu0 0.0
    %5476 = vmatpush1.msra.mxu0 0.0
    %5477 = vmatprep.subr.mxu0 0.0
    %5478 = vmatpush1.msra.mxu0 0.0
    %5479 = vmatprep.subr.mxu0 0.0
    %5480 = vmatpush1.msra.mxu0 0.0
    %5481 = vmatprep.subr.mxu0 0.0
    %5482 = vmatpush1.msra.mxu0 0.0
    %5483 = vmatprep.subr.mxu0 0.0
    %5484 = vmatpush1.msra.mxu0 0.0
    %5485 = vmatprep.subr.mxu0 0.0
    %5486 = vmatpush1.msra.mxu0 0.0
    %5487 = vmatprep.subr.mxu0 0.0
    %5488 = vmatpush1.msra.mxu0 0.0
    %5489 = vmatprep.subr.mxu0 0.0
    %5490 = vmatpush1.msra.mxu0 0.0
    %5491 = vmatprep.subr.mxu0 0.0
    %5492 = vmatpush1.msra.mxu0 0.0
    %5493 = vmatprep.subr.mxu0 0.0
    %5494 = vmatpush1.msra.mxu0 0.0
    %5495 = vmatprep.subr.mxu0 0.0
    %5496 = vmatpush1.msra.mxu0 0.0
    %5497 = vmatprep.mubr.f32.mxu0 0.0
    %5498 = vmatmul.mubr.f32.gmra.mrb[0].mxu0 %v5191
    %v5499 = vpop.f32.mrb[0].mxu0
    %v5500 = vadd.f32 0.0, %v5499
    %v5501 = vpop.f32.mrb[0].mxu0
    %5502 = vdwg.mxu0
    %5504 = vrot.lane.b32.xlu0 %v5432, 96
    %v5505 = vpop.permute.xlu0 %5504
    %v5506 = vsel %vm98, %v5505, 0
    %5508 = vmatprep.subr.mxu0 0.0
    %5509 = vmatpush1.msra.mxu0 %v2207
    %5510 = vmatprep.subr.mxu0 0.0
    %5511 = vmatpush1.msra.mxu0 %v2208
    %5512 = vmatprep.subr.mxu0 0.0
    %5513 = vmatpush1.msra.mxu0 %v2209
    %5514 = vmatprep.subr.mxu0 0.0
    %5515 = vmatpush1.msra.mxu0 %v2210
    %5516 = vmatprep.subr.mxu0 0.0
    %5517 = vmatpush1.msra.mxu0 0.0
    %5518 = vmatprep.subr.mxu0 0.0
    %5519 = vmatpush1.msra.mxu0 0.0
    %5520 = vmatprep.subr.mxu0 0.0
    %5521 = vmatpush1.msra.mxu0 0.0
    %5522 = vmatprep.subr.mxu0 0.0
    %5523 = vmatpush1.msra.mxu0 0.0
    %5524 = vmatprep.subr.mxu0 0.0
    %5525 = vmatpush1.msra.mxu0 0.0
    %5526 = vmatprep.subr.mxu0 0.0
    %5527 = vmatpush1.msra.mxu0 0.0
    %5528 = vmatprep.subr.mxu0 0.0
    %5529 = vmatpush1.msra.mxu0 0.0
    %5530 = vmatprep.subr.mxu0 0.0
    %5531 = vmatpush1.msra.mxu0 0.0
    %5532 = vmatprep.subr.mxu0 0.0
    %5533 = vmatpush1.msra.mxu0 0.0
    %5534 = vmatprep.subr.mxu0 0.0
    %5535 = vmatpush1.msra.mxu0 0.0
    %5536 = vmatprep.subr.mxu0 0.0
    %5537 = vmatpush1.msra.mxu0 0.0
    %5538 = vmatprep.subr.mxu0 0.0
    %5539 = vmatpush1.msra.mxu0 0.0
    %5540 = vmatprep.subr.mxu0 0.0
    %5541 = vmatpush1.msra.mxu0 0.0
    %5542 = vmatprep.subr.mxu0 0.0
    %5543 = vmatpush1.msra.mxu0 0.0
    %5544 = vmatprep.subr.mxu0 0.0
    %5545 = vmatpush1.msra.mxu0 0.0
    %5546 = vmatprep.subr.mxu0 0.0
    %5547 = vmatpush1.msra.mxu0 0.0
    %5548 = vmatprep.subr.mxu0 0.0
    %5549 = vmatpush1.msra.mxu0 0.0
    %5550 = vmatprep.subr.mxu0 0.0
    %5551 = vmatpush1.msra.mxu0 0.0
    %5552 = vmatprep.subr.mxu0 0.0
    %5553 = vmatpush1.msra.mxu0 0.0
    %5554 = vmatprep.subr.mxu0 0.0
    %5555 = vmatpush1.msra.mxu0 0.0
    %5556 = vmatprep.subr.mxu0 0.0
    %5557 = vmatpush1.msra.mxu0 0.0
    %5558 = vmatprep.subr.mxu0 0.0
    %5559 = vmatpush1.msra.mxu0 0.0
    %5560 = vmatprep.subr.mxu0 0.0
    %5561 = vmatpush1.msra.mxu0 0.0
    %5562 = vmatprep.subr.mxu0 0.0
    %5563 = vmatpush1.msra.mxu0 0.0
    %5564 = vmatprep.subr.mxu0 0.0
    %5565 = vmatpush1.msra.mxu0 0.0
    %5566 = vmatprep.subr.mxu0 0.0
    %5567 = vmatpush1.msra.mxu0 0.0
    %5568 = vmatprep.subr.mxu0 0.0
    %5569 = vmatpush1.msra.mxu0 0.0
    %5570 = vmatprep.subr.mxu0 0.0
    %5571 = vmatpush1.msra.mxu0 0.0
    %5572 = vmatprep.mubr.f32.mxu0 0.0
    %5573 = vmatmul.mubr.f32.gmra.mrb[0].mxu0 %v5506
    %v5574 = vpop.f32.mrb[0].mxu0
    %v5575 = vadd.f32 %v5500, %v5574
    %v5576 = vpop.f32.mrb[0].mxu0
    %5577 = vdwg.mxu0
    %5578 = vmatprep.subr.mxu0 0.0
    %5579 = vmatpush1.msra.mxu0 %v2215
    %5580 = vmatprep.subr.mxu0 0.0
    %5581 = vmatpush1.msra.mxu0 %v2216
    %5582 = vmatprep.subr.mxu0 0.0
    %5583 = vmatpush1.msra.mxu0 %v2217
    %5584 = vmatprep.subr.mxu0 0.0
    %5585 = vmatpush1.msra.mxu0 %v2218
    %5586 = vmatprep.subr.mxu0 0.0
    %5587 = vmatpush1.msra.mxu0 0.0
    %5588 = vmatprep.subr.mxu0 0.0
    %5589 = vmatpush1.msra.mxu0 0.0
    %5590 = vmatprep.subr.mxu0 0.0
    %5591 = vmatpush1.msra.mxu0 0.0
    %5592 = vmatprep.subr.mxu0 0.0
    %5593 = vmatpush1.msra.mxu0 0.0
    %5594 = vmatprep.subr.mxu0 0.0
    %5595 = vmatpush1.msra.mxu0 0.0
    %5596 = vmatprep.subr.mxu0 0.0
    %5597 = vmatpush1.msra.mxu0 0.0
    %5598 = vmatprep.subr.mxu0 0.0
    %5599 = vmatpush1.msra.mxu0 0.0
    %5600 = vmatprep.subr.mxu0 0.0
    %5601 = vmatpush1.msra.mxu0 0.0
    %5602 = vmatprep.subr.mxu0 0.0
    %5603 = vmatpush1.msra.mxu0 0.0
    %5604 = vmatprep.subr.mxu0 0.0
    %5605 = vmatpush1.msra.mxu0 0.0
    %5606 = vmatprep.subr.mxu0 0.0
    %5607 = vmatpush1.msra.mxu0 0.0
    %5608 = vmatprep.subr.mxu0 0.0
    %5609 = vmatpush1.msra.mxu0 0.0
    %5610 = vmatprep.subr.mxu0 0.0
    %5611 = vmatpush1.msra.mxu0 0.0
    %5612 = vmatprep.subr.mxu0 0.0
    %5613 = vmatpush1.msra.mxu0 0.0
    %5614 = vmatprep.subr.mxu0 0.0
    %5615 = vmatpush1.msra.mxu0 0.0
    %5616 = vmatprep.subr.mxu0 0.0
    %5617 = vmatpush1.msra.mxu0 0.0
    %5618 = vmatprep.subr.mxu0 0.0
    %5619 = vmatpush1.msra.mxu0 0.0
    %5620 = vmatprep.subr.mxu0 0.0
    %5621 = vmatpush1.msra.mxu0 0.0
    %5622 = vmatprep.subr.mxu0 0.0
    %5623 = vmatpush1.msra.mxu0 0.0
    %5624 = vmatprep.subr.mxu0 0.0
    %5625 = vmatpush1.msra.mxu0 0.0
    %5626 = vmatprep.subr.mxu0 0.0
    %5627 = vmatpush1.msra.mxu0 0.0
    %5628 = vmatprep.subr.mxu0 0.0
    %5629 = vmatpush1.msra.mxu0 0.0
    %5630 = vmatprep.subr.mxu0 0.0
    %5631 = vmatpush1.msra.mxu0 0.0
    %5632 = vmatprep.subr.mxu0 0.0
    %5633 = vmatpush1.msra.mxu0 0.0
    %5634 = vmatprep.subr.mxu0 0.0
    %5635 = vmatpush1.msra.mxu0 0.0
    %5636 = vmatprep.subr.mxu0 0.0
    %5637 = vmatpush1.msra.mxu0 0.0
    %5638 = vmatprep.subr.mxu0 0.0
    %5639 = vmatpush1.msra.mxu0 0.0
    %5640 = vmatprep.subr.mxu0 0.0
    %5641 = vmatpush1.msra.mxu0 0.0
    %5642 = vmatprep.mubr.f32.mxu0 0.0
    %5643 = vmatmul.mubr.f32.gmra.mrb[0].mxu0 %v5264
    %v5644 = vpop.f32.mrb[0].mxu0
    %v5645 = vadd.f32 0.0, %v5644
    %v5646 = vpop.f32.mrb[0].mxu0
    %5647 = vdwg.mxu0
    %v5648 = vadd.f32 %v5575, %v5645
    %v5649 = vadd.f32 %v5648, %v3034
    %s5650 = scalar_lea.vmem %s22, 6
    %5651 = vst [vmem:[%s5650] sm:$0x3] %v5649
    %v5652 = vsel %vm2238, %v5649, -1e+30
    %v5653 = vsel %vm3039, %v5652, -inf
    %5654 = vmax.xlane.f32.xlu0 %v5653
    %v5655 = vpop.xlane.xlu0 %5654
    %vm5656 = vcmp.eq.f32.partialorder %v5652, %v5655
    %v5657 = vsel %vm5656, %v2237, 128
    %v5658 = vsel %vm3039, %v5657, 2147483647
    %v5659 = vand.u32 %v5658, 65535
    %v5660 = vshra.s32 %v5658, 16
    %v5661 = vcvt.s32.f32 %v5659
    %v5662 = vcvt.s32.f32 %v5660
    %5663 = vmin.xlane.f32.xlu0 %v5662
    %v5664 = vpop.xlane.xlu0 %5663
    %vm5665 = vcmp.eq.f32.partialorder %v5662, %v5664
    %v5666 = vsel %vm5665, %v5661, inf
    %5667 = vmin.xlane.f32.xlu0 %v5666
    %v5668 = vpop.xlane.xlu0 %5667
    %v5669 = vcvt.f32.s32 %v5668
    %v5670 = vcvt.f32.s32 %v5664
    %v5671 = vshll.u32 %v5670, 16
    %v5672 = vadd.s32 %v5671, %v5669
    %vm5673 = vcmp.eq.s32.totalorder %v2237, %v5672
    %v5674 = vsel %vm5673, 1, 0
    %v5675 = vcvt.s32.f32 %v5674
    %5676 = vmatprep.subr.mxu0 0.0
    %5677 = vmatpush1.msra.mxu0 %v2220
    %5678 = vmatprep.subr.mxu0 0.0
    %5679 = vmatpush1.msra.mxu0 %v2221
    %5680 = vmatprep.subr.mxu0 0.0
    %5681 = vmatpush1.msra.mxu0 %v2222
    %5682 = vmatprep.subr.mxu0 0.0
    %5683 = vmatpush1.msra.mxu0 %v2223
    %5684 = vmatprep.subr.mxu0 0.0
    %5685 = vmatpush1.msra.mxu0 %v2224
    %5686 = vmatprep.subr.mxu0 0.0
    %5687 = vmatpush1.msra.mxu0 %v2225
    %5688 = vmatprep.subr.mxu0 0.0
    %5689 = vmatpush1.msra.mxu0 %v2226
    %5690 = vmatprep.subr.mxu0 0.0
    %5691 = vmatpush1.msra.mxu0 %v2227
    %5692 = vmatprep.subr.mxu0 0.0
    %5693 = vmatpush1.msra.mxu0 %v2228
    %5694 = vmatprep.subr.mxu0 0.0
    %5695 = vmatpush1.msra.mxu0 %v2229
    %5696 = vmatprep.subr.mxu0 0.0
    %5697 = vmatpush1.msra.mxu0 %v2230
    %5698 = vmatprep.subr.mxu0 0.0
    %5699 = vmatpush1.msra.mxu0 %v2231
    %5700 = vmatprep.subr.mxu0 0.0
    %5701 = vmatpush1.msra.mxu0 %v2232
    %5702 = vmatprep.subr.mxu0 0.0
    %5703 = vmatpush1.msra.mxu0 %v2233
    %5704 = vmatprep.subr.mxu0 0.0
    %5705 = vmatpush1.msra.mxu0 %v2234
    %5706 = vmatprep.subr.mxu0 0.0
    %5707 = vmatpush1.msra.mxu0 %v2235
    %5708 = vmatprep.subr.mxu0 0.0
    %5709 = vmatpush1.msra.mxu0 0.0
    %5710 = vmatprep.subr.mxu0 0.0
    %5711 = vmatpush1.msra.mxu0 0.0
    %5712 = vmatprep.subr.mxu0 0.0
    %5713 = vmatpush1.msra.mxu0 0.0
    %5714 = vmatprep.subr.mxu0 0.0
    %5715 = vmatpush1.msra.mxu0 0.0
    %5716 = vmatprep.subr.mxu0 0.0
    %5717 = vmatpush1.msra.mxu0 0.0
    %5718 = vmatprep.subr.mxu0 0.0
    %5719 = vmatpush1.msra.mxu0 0.0
    %5720 = vmatprep.subr.mxu0 0.0
    %5721 = vmatpush1.msra.mxu0 0.0
    %5722 = vmatprep.subr.mxu0 0.0
    %5723 = vmatpush1.msra.mxu0 0.0
    %5724 = vmatprep.subr.mxu0 0.0
    %5725 = vmatpush1.msra.mxu0 0.0
    %5726 = vmatprep.subr.mxu0 0.0
    %5727 = vmatpush1.msra.mxu0 0.0
    %5728 = vmatprep.subr.mxu0 0.0
    %5729 = vmatpush1.msra.mxu0 0.0
    %5730 = vmatprep.subr.mxu0 0.0
    %5731 = vmatpush1.msra.mxu0 0.0
    %5732 = vmatprep.subr.mxu0 0.0
    %5733 = vmatpush1.msra.mxu0 0.0
    %5734 = vmatprep.subr.mxu0 0.0
    %5735 = vmatpush1.msra.mxu0 0.0
    %5736 = vmatprep.subr.mxu0 0.0
    %5737 = vmatpush1.msra.mxu0 0.0
    %5738 = vmatprep.subr.mxu0 0.0
    %5739 = vmatpush1.msra.mxu0 0.0
    %5740 = vmatprep.mubr.f32.mxu0 0.0
    %5741 = vmatmul.mubr.f32.gmra.mrb[0].mxu0 %v5675
    %v5742 = vpop.f32.mrb[0].mxu0
    %v5743 = vadd.f32 0.0, %v5742
    %v5744 = vpop.f32.mrb[0].mxu0
    %5745 = vdwg.mxu0
    %s5746 = scalar_lea.vmem %s2, 8
    %v5747 = vld [vmem:[%s5746] sm:$0x3]
    %s5748 = sld [smem:[#allocation2 + $0x4]]
    %p5749 = scmp.gt.s32.totalorder %s5748, 0
    %s5750 = scalar_select %p5749, 1, 0
    %s5751 = scvt.s32.f32 %s5750
    %v5752 = vstv %s5751
    %v5753 = vmul.f32 %v5752, %v5747
    %s5754 = ssub.f32 1.0, %s5751
    %v5755 = vstv %s5754
    %v5756 = vmul.f32 %v5755, %v5743
    %v5757 = vadd.f32 %v5753, %v5756
    %5758 = vmatprep.subr.mxu0 %v2119
    %5759 = vmatpush1.msra.mxu0 %v2118
    %5760 = vmatprep.subr.mxu0 %v2121
    %5761 = vmatpush1.msra.mxu0 %v2120
    %5762 = vmatprep.subr.mxu0 %v2123
    %5763 = vmatpush1.msra.mxu0 %v2122
    %5764 = vmatprep.subr.mxu0 %v2125
    %5765 = vmatpush1.msra.mxu0 %v2124
    %5766 = vmatprep.subr.mxu0 0.0
    %5767 = vmatpush1.msra.mxu0 0.0
    %5768 = vmatprep.subr.mxu0 0.0
    %5769 = vmatpush1.msra.mxu0 0.0
    %5770 = vmatprep.subr.mxu0 0.0
    %5771 = vmatpush1.msra.mxu0 0.0
    %5772 = vmatprep.subr.mxu0 0.0
    %5773 = vmatpush1.msra.mxu0 0.0
    %5774 = vmatprep.subr.mxu0 0.0
    %5775 = vmatpush1.msra.mxu0 0.0
    %5776 = vmatprep.subr.mxu0 0.0
    %5777 = vmatpush1.msra.mxu0 0.0
    %5778 = vmatprep.subr.mxu0 0.0
    %5779 = vmatpush1.msra.mxu0 0.0
    %5780 = vmatprep.subr.mxu0 0.0
    %5781 = vmatpush1.msra.mxu0 0.0
    %5782 = vmatprep.subr.mxu0 0.0
    %5783 = vmatpush1.msra.mxu0 0.0
    %5784 = vmatprep.subr.mxu0 0.0
    %5785 = vmatpush1.msra.mxu0 0.0
    %5786 = vmatprep.subr.mxu0 0.0
    %5787 = vmatpush1.msra.mxu0 0.0
    %5788 = vmatprep.subr.mxu0 0.0
    %5789 = vmatpush1.msra.mxu0 0.0
    %5790 = vmatprep.subr.mxu0 0.0
    %5791 = vmatpush1.msra.mxu0 0.0
    %5792 = vmatprep.subr.mxu0 0.0
    %5793 = vmatpush1.msra.mxu0 0.0
    %5794 = vmatprep.subr.mxu0 0.0
    %5795 = vmatpush1.msra.mxu0 0.0
    %5796 = vmatprep.subr.mxu0 0.0
    %5797 = vmatpush1.msra.mxu0 0.0
    %5798 = vmatprep.subr.mxu0 0.0
    %5799 = vmatpush1.msra.mxu0 0.0
    %5800 = vmatprep.subr.mxu0 0.0
    %5801 = vmatpush1.msra.mxu0 0.0
    %5802 = vmatprep.subr.mxu0 0.0
    %5803 = vmatpush1.msra.mxu0 0.0
    %5804 = vmatprep.subr.mxu0 0.0
    %5805 = vmatpush1.msra.mxu0 0.0
    %5806 = vmatprep.subr.mxu0 0.0
    %5807 = vmatpush1.msra.mxu0 0.0
    %5808 = vmatprep.subr.mxu0 0.0
    %5809 = vmatpush1.msra.mxu0 0.0
    %5810 = vmatprep.subr.mxu0 0.0
    %5811 = vmatpush1.msra.mxu0 0.0
    %5812 = vmatprep.subr.mxu0 0.0
    %5813 = vmatpush1.msra.mxu0 0.0
    %5814 = vmatprep.subr.mxu0 0.0
    %5815 = vmatpush1.msra.mxu0 0.0
    %5816 = vmatprep.subr.mxu0 0.0
    %5817 = vmatpush1.msra.mxu0 0.0
    %5818 = vmatprep.subr.mxu0 0.0
    %5819 = vmatpush1.msra.mxu0 0.0
    %5820 = vmatprep.subr.mxu0 0.0
    %5821 = vmatpush1.msra.mxu0 0.0
    %5822 = vmatprep.mubr.f32.mxu0 0.0
    %5823 = vmatmul.mubr.f32.gmra.mrb[0].mxu0 %v5506
    %v5824 = vpop.f32.mrb[0].mxu0
    %v5825 = vadd.f32 %v2244, %v5824
    %v5826 = vpop.f32.mrb[0].mxu0
    %v5827 = vadd.f32 %v2248, %v5826
    %5828 = vdwg.mxu0
    %v5829 = vadd.f32 %v2114, %v5825
    %v5830 = vadd.f32 %v2117, %v5827
    %v5831 = vtanh.pop %v5829
    %v5832 = vtanh.pop %v5830
    %5833 = vmatprep.subr.mxu0 0.0
    %5834 = vmatpush1.msra.mxu0 %v2127
    %5835 = vmatprep.subr.mxu0 0.0
    %5836 = vmatpush1.msra.mxu0 %v2128
    %5837 = vmatprep.subr.mxu0 0.0
    %5838 = vmatpush1.msra.mxu0 %v2129
    %5839 = vmatprep.subr.mxu0 0.0
    %5840 = vmatpush1.msra.mxu0 %v2130
    %5841 = vmatprep.subr.mxu0 0.0
    %5842 = vmatpush1.msra.mxu0 %v2131
    %5843 = vmatprep.subr.mxu0 0.0
    %5844 = vmatpush1.msra.mxu0 %v2132
    %5845 = vmatprep.subr.mxu0 0.0
    %5846 = vmatpush1.msra.mxu0 %v2133
    %5847 = vmatprep.subr.mxu0 0.0
    %5848 = vmatpush1.msra.mxu0 %v2134
    %5849 = vmatprep.subr.mxu0 0.0
    %5850 = vmatpush1.msra.mxu0 %v2135
    %5851 = vmatprep.subr.mxu0 0.0
    %5852 = vmatpush1.msra.mxu0 %v2136
    %5853 = vmatprep.subr.mxu0 0.0
    %5854 = vmatpush1.msra.mxu0 %v2137
    %5855 = vmatprep.subr.mxu0 0.0
    %5856 = vmatpush1.msra.mxu0 %v2138
    %5857 = vmatprep.subr.mxu0 0.0
    %5858 = vmatpush1.msra.mxu0 %v2139
    %5859 = vmatprep.subr.mxu0 0.0
    %5860 = vmatpush1.msra.mxu0 %v2140
    %5861 = vmatprep.subr.mxu0 0.0
    %5862 = vmatpush1.msra.mxu0 %v2141
    %5863 = vmatprep.subr.mxu0 0.0
    %5864 = vmatpush1.msra.mxu0 %v2142
    %5865 = vmatprep.subr.mxu0 0.0
    %5866 = vmatpush1.msra.mxu0 %v2143
    %5867 = vmatprep.subr.mxu0 0.0
    %5868 = vmatpush1.msra.mxu0 %v2144
    %5869 = vmatprep.subr.mxu0 0.0
    %5870 = vmatpush1.msra.mxu0 %v2145
    %5871 = vmatprep.subr.mxu0 0.0
    %5872 = vmatpush1.msra.mxu0 %v2146
    %5873 = vmatprep.subr.mxu0 0.0
    %5874 = vmatpush1.msra.mxu0 %v2147
    %5875 = vmatprep.subr.mxu0 0.0
    %5876 = vmatpush1.msra.mxu0 %v2148
    %5877 = vmatprep.subr.mxu0 0.0
    %5878 = vmatpush1.msra.mxu0 %v2149
    %5879 = vmatprep.subr.mxu0 0.0
    %5880 = vmatpush1.msra.mxu0 %v2150
    %5881 = vmatprep.subr.mxu0 0.0
    %5882 = vmatpush1.msra.mxu0 %v2151
    %5883 = vmatprep.subr.mxu0 0.0
    %5884 = vmatpush1.msra.mxu0 %v2152
    %5885 = vmatprep.subr.mxu0 0.0
    %5886 = vmatpush1.msra.mxu0 %v2153
    %5887 = vmatprep.subr.mxu0 0.0
    %5888 = vmatpush1.msra.mxu0 %v2154
    %5889 = vmatprep.subr.mxu0 0.0
    %5890 = vmatpush1.msra.mxu0 %v2155
    %5891 = vmatprep.subr.mxu0 0.0
    %5892 = vmatpush1.msra.mxu0 %v2156
    %5893 = vmatprep.subr.mxu0 0.0
    %5894 = vmatpush1.msra.mxu0 %v2157
    %5895 = vmatprep.subr.mxu0 0.0
    %5896 = vmatpush1.msra.mxu0 %v2158
    %5897 = vmatprep.mubr.f32.mxu0 %v5832
    %5898 = vmatmul.mubr.f32.gmra.mrb[0].mxu0 %v5831
    %v5899 = vpop.f32.mrb[0].mxu0
    %v5900 = vadd.f32 0.0, %v5899
    %v5901 = vpop.f32.mrb[0].mxu0
    %5902 = vdwg.mxu0
    %v5903 = vsel %vm2396, %v5900, -inf
    %5904 = vmax.xlane.f32.xlu0 %v5903
    %v5905 = vpop.xlane.xlu0 %5904
    %v5906 = vsub.f32 %v5900, %v5905
    %v5907 = vmul.f32 %v5906, 1.442695
    %v5908 = vpow.pop %v5907
    %v5909 = vsel %vm2396, %v5908, 0.0
    %5910 = vadd.xlane.f32.xlu0 %v5909
    %v5911 = vpop.xlane.xlu0 %5910
    %v5912 = vrcp.pop %v5911
    %v5913 = vmul.f32 1.0, %v5912
    %v5914 = vmul.f32 %v5908, %v5913
    %v5916 = vsel %vm2409, %v5914, 0
    %5918 = vmatprep.subr.mxu0 %v2160
    %5919 = vmatpush1.msra.mxu0 %v2159
    %5920 = vmatprep.subr.mxu0 0.0
    %5921 = vmatpush1.msra.mxu0 0.0
    %5922 = vmatprep.subr.mxu0 0.0
    %5923 = vmatpush1.msra.mxu0 0.0
    %5924 = vmatprep.subr.mxu0 0.0
    %5925 = vmatpush1.msra.mxu0 0.0
    %5926 = vmatprep.subr.mxu0 0.0
    %5927 = vmatpush1.msra.mxu0 0.0
    %5928 = vmatprep.subr.mxu0 0.0
    %5929 = vmatpush1.msra.mxu0 0.0
    %5930 = vmatprep.subr.mxu0 0.0
    %5931 = vmatpush1.msra.mxu0 0.0
    %5932 = vmatprep.subr.mxu0 0.0
    %5933 = vmatpush1.msra.mxu0 0.0
    %5934 = vmatprep.subr.mxu0 0.0
    %5935 = vmatpush1.msra.mxu0 0.0
    %5936 = vmatprep.subr.mxu0 0.0
    %5937 = vmatpush1.msra.mxu0 0.0
    %5938 = vmatprep.subr.mxu0 0.0
    %5939 = vmatpush1.msra.mxu0 0.0
    %5940 = vmatprep.subr.mxu0 0.0
    %5941 = vmatpush1.msra.mxu0 0.0
    %5942 = vmatprep.subr.mxu0 0.0
    %5943 = vmatpush1.msra.mxu0 0.0
    %5944 = vmatprep.subr.mxu0 0.0
    %5945 = vmatpush1.msra.mxu0 0.0
    %5946 = vmatprep.subr.mxu0 0.0
    %5947 = vmatpush1.msra.mxu0 0.0
    %5948 = vmatprep.subr.mxu0 0.0
    %5949 = vmatpush1.msra.mxu0 0.0
    %5950 = vmatprep.subr.mxu0 0.0
    %5951 = vmatpush1.msra.mxu0 0.0
    %5952 = vmatprep.subr.mxu0 0.0
    %5953 = vmatpush1.msra.mxu0 0.0
    %5954 = vmatprep.subr.mxu0 0.0
    %5955 = vmatpush1.msra.mxu0 0.0
    %5956 = vmatprep.subr.mxu0 0.0
    %5957 = vmatpush1.msra.mxu0 0.0
    %5958 = vmatprep.subr.mxu0 0.0
    %5959 = vmatpush1.msra.mxu0 0.0
    %5960 = vmatprep.subr.mxu0 0.0
    %5961 = vmatpush1.msra.mxu0 0.0
    %5962 = vmatprep.subr.mxu0 0.0
    %5963 = vmatpush1.msra.mxu0 0.0
    %5964 = vmatprep.subr.mxu0 0.0
    %5965 = vmatpush1.msra.mxu0 0.0
    %5966 = vmatprep.subr.mxu0 0.0
    %5967 = vmatpush1.msra.mxu0 0.0
    %5968 = vmatprep.subr.mxu0 0.0
    %5969 = vmatpush1.msra.mxu0 0.0
    %5970 = vmatprep.subr.mxu0 0.0
    %5971 = vmatpush1.msra.mxu0 0.0
    %5972 = vmatprep.subr.mxu0 0.0
    %5973 = vmatpush1.msra.mxu0 0.0
    %5974 = vmatprep.subr.mxu0 0.0
    %5975 = vmatpush1.msra.mxu0 0.0
    %5976 = vmatprep.subr.mxu0 0.0
    %5977 = vmatpush1.msra.mxu0 0.0
    %5978 = vmatprep.subr.mxu0 0.0
    %5979 = vmatpush1.msra.mxu0 0.0
    %5980 = vmatprep.subr.mxu0 0.0
    %5981 = vmatpush1.msra.mxu0 0.0
    %5982 = vmatprep.mubr.f32.mxu0 0.0
    %5983 = vmatmul.mubr.f32.gmra.mrb[0].mxu0 %v5916
    %v5984 = vpop.f32.mrb[0].mxu0
    %v5985 = vadd.f32 0.0, %v5984
    %v5986 = vpop.f32.mrb[0].mxu0
    %v5987 = vadd.f32 0.0, %v5986
    %5988 = vdwg.mxu0
    %v5989 = vmul.f32 %v5985, %v1520
    %v5990 = vmul.f32 %v5987, %v1523
    %5991 = vmatprep.subr.mxu0 0.0
    %5992 = vmatpush1.msra.mxu0 %v2161
    %5993 = vmatprep.subr.mxu0 0.0
    %5994 = vmatpush1.msra.mxu0 %v2162
    %5995 = vmatprep.subr.mxu0 0.0
    %5996 = vmatpush1.msra.mxu0 %v2163
    %5997 = vmatprep.subr.mxu0 0.0
    %5998 = vmatpush1.msra.mxu0 %v2164
    %5999 = vmatprep.subr.mxu0 0.0
    %6000 = vmatpush1.msra.mxu0 %v2165
    %6001 = vmatprep.subr.mxu0 0.0
    %6002 = vmatpush1.msra.mxu0 %v2166
    %6003 = vmatprep.subr.mxu0 0.0
    %6004 = vmatpush1.msra.mxu0 %v2167
    %6005 = vmatprep.subr.mxu0 0.0
    %6006 = vmatpush1.msra.mxu0 %v2168
    %6007 = vmatprep.subr.mxu0 0.0
    %6008 = vmatpush1.msra.mxu0 %v2169
    %6009 = vmatprep.subr.mxu0 0.0
    %6010 = vmatpush1.msra.mxu0 %v2170
    %6011 = vmatprep.subr.mxu0 0.0
    %6012 = vmatpush1.msra.mxu0 %v2171
    %6013 = vmatprep.subr.mxu0 0.0
    %6014 = vmatpush1.msra.mxu0 %v2172
    %6015 = vmatprep.subr.mxu0 0.0
    %6016 = vmatpush1.msra.mxu0 %v2173
    %6017 = vmatprep.subr.mxu0 0.0
    %6018 = vmatpush1.msra.mxu0 %v2174
    %6019 = vmatprep.subr.mxu0 0.0
    %6020 = vmatpush1.msra.mxu0 %v2175
    %6021 = vmatprep.subr.mxu0 0.0
    %6022 = vmatpush1.msra.mxu0 %v2176
    %6023 = vmatprep.subr.mxu0 0.0
    %6024 = vmatpush1.msra.mxu0 %v2177
    %6025 = vmatprep.subr.mxu0 0.0
    %6026 = vmatpush1.msra.mxu0 %v2178
    %6027 = vmatprep.subr.mxu0 0.0
    %6028 = vmatpush1.msra.mxu0 %v2179
    %6029 = vmatprep.subr.mxu0 0.0
    %6030 = vmatpush1.msra.mxu0 %v2180
    %6031 = vmatprep.subr.mxu0 0.0
    %6032 = vmatpush1.msra.mxu0 %v2181
    %6033 = vmatprep.subr.mxu0 0.0
    %6034 = vmatpush1.msra.mxu0 %v2182
    %6035 = vmatprep.subr.mxu0 0.0
    %6036 = vmatpush1.msra.mxu0 %v2183
    %6037 = vmatprep.subr.mxu0 0.0
    %6038 = vmatpush1.msra.mxu0 %v2184
    %6039 = vmatprep.subr.mxu0 0.0
    %6040 = vmatpush1.msra.mxu0 %v2185
    %6041 = vmatprep.subr.mxu0 0.0
    %6042 = vmatpush1.msra.mxu0 %v2186
    %6043 = vmatprep.subr.mxu0 0.0
    %6044 = vmatpush1.msra.mxu0 %v2187
    %6045 = vmatprep.subr.mxu0 0.0
    %6046 = vmatpush1.msra.mxu0 %v2188
    %6047 = vmatprep.subr.mxu0 0.0
    %6048 = vmatpush1.msra.mxu0 %v2189
    %6049 = vmatprep.subr.mxu0 0.0
    %6050 = vmatpush1.msra.mxu0 %v2190
    %6051 = vmatprep.subr.mxu0 0.0
    %6052 = vmatpush1.msra.mxu0 %v2191
    %6053 = vmatprep.subr.mxu0 0.0
    %6054 = vmatpush1.msra.mxu0 %v2192
    %6055 = vmatprep.mubr.f32.mxu0 %v5990
    %6056 = vmatmul.mubr.f32.gmra.mrb[0].mxu0 %v5989
    %v6057 = vpop.f32.mrb[0].mxu0
    %v6058 = vadd.f32 0.0, %v6057
    %v6059 = vpop.f32.mrb[0].mxu0
    %6060 = vdwg.mxu0
    %v6062 = vsel %vm98, %v6058, 0
    %6064 = vmatprep.subr.mxu0 0.0
    %6065 = vmatpush1.msra.mxu0 %v2197
    %6066 = vmatprep.subr.mxu0 0.0
    %6067 = vmatpush1.msra.mxu0 %v2198
    %6068 = vmatprep.subr.mxu0 0.0
    %6069 = vmatpush1.msra.mxu0 %v2199
    %6070 = vmatprep.subr.mxu0 0.0
    %6071 = vmatpush1.msra.mxu0 %v2200
    %6072 = vmatprep.subr.mxu0 0.0
    %6073 = vmatpush1.msra.mxu0 0.0
    %6074 = vmatprep.subr.mxu0 0.0
    %6075 = vmatpush1.msra.mxu0 0.0
    %6076 = vmatprep.subr.mxu0 0.0
    %6077 = vmatpush1.msra.mxu0 0.0
    %6078 = vmatprep.subr.mxu0 0.0
    %6079 = vmatpush1.msra.mxu0 0.0
    %6080 = vmatprep.subr.mxu0 0.0
    %6081 = vmatpush1.msra.mxu0 0.0
    %6082 = vmatprep.subr.mxu0 0.0
    %6083 = vmatpush1.msra.mxu0 0.0
    %6084 = vmatprep.subr.mxu0 0.0
    %6085 = vmatpush1.msra.mxu0 0.0
    %6086 = vmatprep.subr.mxu0 0.0
    %6087 = vmatpush1.msra.mxu0 0.0
    %6088 = vmatprep.subr.mxu0 0.0
    %6089 = vmatpush1.msra.mxu0 0.0
    %6090 = vmatprep.subr.mxu0 0.0
    %6091 = vmatpush1.msra.mxu0 0.0
    %6092 = vmatprep.subr.mxu0 0.0
    %6093 = vmatpush1.msra.mxu0 0.0
    %6094 = vmatprep.subr.mxu0 0.0
    %6095 = vmatpush1.msra.mxu0 0.0
    %6096 = vmatprep.subr.mxu0 0.0
    %6097 = vmatpush1.msra.mxu0 0.0
    %6098 = vmatprep.subr.mxu0 0.0
    %6099 = vmatpush1.msra.mxu0 0.0
    %6100 = vmatprep.subr.mxu0 0.0
    %6101 = vmatpush1.msra.mxu0 0.0
    %6102 = vmatprep.subr.mxu0 0.0
    %6103 = vmatpush1.msra.mxu0 0.0
    %6104 = vmatprep.subr.mxu0 0.0
    %6105 = vmatpush1.msra.mxu0 0.0
    %6106 = vmatprep.subr.mxu0 0.0
    %6107 = vmatpush1.msra.mxu0 0.0
    %6108 = vmatprep.subr.mxu0 0.0
    %6109 = vmatpush1.msra.mxu0 0.0
    %6110 = vmatprep.subr.mxu0 0.0
    %6111 = vmatpush1.msra.mxu0 0.0
    %6112 = vmatprep.subr.mxu0 0.0
    %6113 = vmatpush1.msra.mxu0 0.0
    %6114 = vmatprep.subr.mxu0 0.0
    %6115 = vmatpush1.msra.mxu0 0.0
    %6116 = vmatprep.subr.mxu0 0.0
    %6117 = vmatpush1.msra.mxu0 0.0
    %6118 = vmatprep.subr.mxu0 0.0
    %6119 = vmatpush1.msra.mxu0 0.0
    %6120 = vmatprep.subr.mxu0 0.0
    %6121 = vmatpush1.msra.mxu0 0.0
    %6122 = vmatprep.subr.mxu0 0.0
    %6123 = vmatpush1.msra.mxu0 0.0
    %6124 = vmatprep.subr.mxu0 0.0
    %6125 = vmatpush1.msra.mxu0 0.0
    %6126 = vmatprep.subr.mxu0 0.0
    %6127 = vmatpush1.msra.mxu0 0.0
    %6128 = vmatprep.mubr.f32.mxu0 0.0
    %6129 = vmatmul.mubr.f32.gmra.mrb[0].mxu0 %v6062
    %v6130 = vpop.f32.mrb[0].mxu0
    %v6131 = vadd.f32 0.0, %v6130
    %v6132 = vpop.f32.mrb[0].mxu0
    %6133 = vdwg.mxu0
    %v6135 = vsel %vm98, %v5757, 0
    %6137 = vmatprep.subr.mxu0 0.0
    %6138 = vmatpush1.msra.mxu0 %v2193
    %6139 = vmatprep.subr.mxu0 0.0
    %6140 = vmatpush1.msra.mxu0 %v2194
    %6141 = vmatprep.subr.mxu0 0.0
    %6142 = vmatpush1.msra.mxu0 %v2195
    %6143 = vmatprep.subr.mxu0 0.0
    %6144 = vmatpush1.msra.mxu0 %v2196
    %6145 = vmatprep.subr.mxu0 0.0
    %6146 = vmatpush1.msra.mxu0 0.0
    %6147 = vmatprep.subr.mxu0 0.0
    %6148 = vmatpush1.msra.mxu0 0.0
    %6149 = vmatprep.subr.mxu0 0.0
    %6150 = vmatpush1.msra.mxu0 0.0
    %6151 = vmatprep.subr.mxu0 0.0
    %6152 = vmatpush1.msra.mxu0 0.0
    %6153 = vmatprep.subr.mxu0 0.0
    %6154 = vmatpush1.msra.mxu0 0.0
    %6155 = vmatprep.subr.mxu0 0.0
    %6156 = vmatpush1.msra.mxu0 0.0
    %6157 = vmatprep.subr.mxu0 0.0
    %6158 = vmatpush1.msra.mxu0 0.0
    %6159 = vmatprep.subr.mxu0 0.0
    %6160 = vmatpush1.msra.mxu0 0.0
    %6161 = vmatprep.subr.mxu0 0.0
    %6162 = vmatpush1.msra.mxu0 0.0
    %6163 = vmatprep.subr.mxu0 0.0
    %6164 = vmatpush1.msra.mxu0 0.0
    %6165 = vmatprep.subr.mxu0 0.0
    %6166 = vmatpush1.msra.mxu0 0.0
    %6167 = vmatprep.subr.mxu0 0.0
    %6168 = vmatpush1.msra.mxu0 0.0
    %6169 = vmatprep.subr.mxu0 0.0
    %6170 = vmatpush1.msra.mxu0 0.0
    %6171 = vmatprep.subr.mxu0 0.0
    %6172 = vmatpush1.msra.mxu0 0.0
    %6173 = vmatprep.subr.mxu0 0.0
    %6174 = vmatpush1.msra.mxu0 0.0
    %6175 = vmatprep.subr.mxu0 0.0
    %6176 = vmatpush1.msra.mxu0 0.0
    %6177 = vmatprep.subr.mxu0 0.0
    %6178 = vmatpush1.msra.mxu0 0.0
    %6179 = vmatprep.subr.mxu0 0.0
    %6180 = vmatpush1.msra.mxu0 0.0
    %6181 = vmatprep.subr.mxu0 0.0
    %6182 = vmatpush1.msra.mxu0 0.0
    %6183 = vmatprep.subr.mxu0 0.0
    %6184 = vmatpush1.msra.mxu0 0.0
    %6185 = vmatprep.subr.mxu0 0.0
    %6186 = vmatpush1.msra.mxu0 0.0
    %6187 = vmatprep.subr.mxu0 0.0
    %6188 = vmatpush1.msra.mxu0 0.0
    %6189 = vmatprep.subr.mxu0 0.0
    %6190 = vmatpush1.msra.mxu0 0.0
    %6191 = vmatprep.subr.mxu0 0.0
    %6192 = vmatpush1.msra.mxu0 0.0
    %6193 = vmatprep.subr.mxu0 0.0
    %6194 = vmatpush1.msra.mxu0 0.0
    %6195 = vmatprep.subr.mxu0 0.0
    %6196 = vmatpush1.msra.mxu0 0.0
    %6197 = vmatprep.subr.mxu0 0.0
    %6198 = vmatpush1.msra.mxu0 0.0
    %6199 = vmatprep.subr.mxu0 0.0
    %6200 = vmatpush1.msra.mxu0 0.0
    %6201 = vmatprep.mubr.f32.mxu0 0.0
    %6202 = vmatmul.mubr.f32.gmra.mrb[0].mxu0 %v6135
    %v6203 = vpop.f32.mrb[0].mxu0
    %v6204 = vadd.f32 %v6131, %v6203
    %v6205 = vpop.f32.mrb[0].mxu0
    %6206 = vdwg.mxu0
    %v6207 = vadd.f32 %v6204, %v2706
    %6208 = vmatprep.subr.mxu0 0.0
    %6209 = vmatpush1.msra.mxu0 %v2201
    %6210 = vmatprep.subr.mxu0 0.0
    %6211 = vmatpush1.msra.mxu0 %v2202
    %6212 = vmatprep.subr.mxu0 0.0
    %6213 = vmatpush1.msra.mxu0 %v2203
    %6214 = vmatprep.subr.mxu0 0.0
    %6215 = vmatpush1.msra.mxu0 %v2204
    %6216 = vmatprep.subr.mxu0 0.0
    %6217 = vmatpush1.msra.mxu0 0.0
    %6218 = vmatprep.subr.mxu0 0.0
    %6219 = vmatpush1.msra.mxu0 0.0
    %6220 = vmatprep.subr.mxu0 0.0
    %6221 = vmatpush1.msra.mxu0 0.0
    %6222 = vmatprep.subr.mxu0 0.0
    %6223 = vmatpush1.msra.mxu0 0.0
    %6224 = vmatprep.subr.mxu0 0.0
    %6225 = vmatpush1.msra.mxu0 0.0
    %6226 = vmatprep.subr.mxu0 0.0
    %6227 = vmatpush1.msra.mxu0 0.0
    %6228 = vmatprep.subr.mxu0 0.0
    %6229 = vmatpush1.msra.mxu0 0.0
    %6230 = vmatprep.subr.mxu0 0.0
    %6231 = vmatpush1.msra.mxu0 0.0
    %6232 = vmatprep.subr.mxu0 0.0
    %6233 = vmatpush1.msra.mxu0 0.0
    %6234 = vmatprep.subr.mxu0 0.0
    %6235 = vmatpush1.msra.mxu0 0.0
    %6236 = vmatprep.subr.mxu0 0.0
    %6237 = vmatpush1.msra.mxu0 0.0
    %6238 = vmatprep.subr.mxu0 0.0
    %6239 = vmatpush1.msra.mxu0 0.0
    %6240 = vmatprep.subr.mxu0 0.0
    %6241 = vmatpush1.msra.mxu0 0.0
    %6242 = vmatprep.subr.mxu0 0.0
    %6243 = vmatpush1.msra.mxu0 0.0
    %6244 = vmatprep.subr.mxu0 0.0
    %6245 = vmatpush1.msra.mxu0 0.0
    %6246 = vmatprep.subr.mxu0 0.0
    %6247 = vmatpush1.msra.mxu0 0.0
    %6248 = vmatprep.subr.mxu0 0.0
    %6249 = vmatpush1.msra.mxu0 0.0
    %6250 = vmatprep.subr.mxu0 0.0
    %6251 = vmatpush1.msra.mxu0 0.0
    %6252 = vmatprep.subr.mxu0 0.0
    %6253 = vmatpush1.msra.mxu0 0.0
    %6254 = vmatprep.subr.mxu0 0.0
    %6255 = vmatpush1.msra.mxu0 0.0
    %6256 = vmatprep.subr.mxu0 0.0
    %6257 = vmatpush1.msra.mxu0 0.0
    %6258 = vmatprep.subr.mxu0 0.0
    %6259 = vmatpush1.msra.mxu0 0.0
    %6260 = vmatprep.subr.mxu0 0.0
    %6261 = vmatpush1.msra.mxu0 0.0
    %6262 = vmatprep.subr.mxu0 0.0
    %6263 = vmatpush1.msra.mxu0 0.0
    %6264 = vmatprep.subr.mxu0 0.0
    %6265 = vmatpush1.msra.mxu0 0.0
    %6266 = vmatprep.subr.mxu0 0.0
    %6267 = vmatpush1.msra.mxu0 0.0
    %6268 = vmatprep.subr.mxu0 0.0
    %6269 = vmatpush1.msra.mxu0 0.0
    %6270 = vmatprep.subr.mxu0 0.0
    %6271 = vmatpush1.msra.mxu0 0.0
    %6272 = vmatprep.mubr.f32.mxu0 0.0
    %6273 = vmatmul.mubr.f32.gmra.mrb[0].mxu0 %v5506
    %v6274 = vpop.f32.mrb[0].mxu0
    %v6275 = vadd.f32 %v2713, %v6274
    %v6276 = vpop.f32.mrb[0].mxu0
    %6277 = vdwg.mxu0
    %v6278 = vadd.f32 %v6207, %v6275
    %v6279 = vxor.u32 %v6278, 2147483648
    %v6280 = vmul.f32 %v6279, 1.442695
    %v6281 = vpow.pop %v6280
    %v6282 = vadd.f32 %v6281, 1.0
    %v6283 = vrcp.pop %v6282
    %v6284 = vmul.f32 1.0, %v6283
    %6286 = vrot.lane.b32.xlu0 %v6275, 64
    %v6287 = vpop.permute.xlu0 %6286
    %v6289 = vmul.f32 %v6284, %v6287
    %6291 = vrot.lane.b32.xlu0 %v6289, 64
    %v6292 = vpop.permute.xlu0 %6291
    %v6294 = vadd.f32 %v6207, %v6292
    %v6295 = vtanh.pop %v6294
    %v6296 = vsub.f32 1.0, %v6284
    %6298 = vrot.lane.b32.xlu0 %v6295, 96
    %v6299 = vpop.permute.xlu0 %6298
    %v6301 = vmul.f32 %v6296, %v6299
    %v6302 = vmul.f32 %v6284, %v5432
    %v6303 = vadd.f32 %v6301, %v6302
    %6304 = vmatprep.subr.mxu0 0.0
    %6305 = vmatpush1.msra.mxu0 %v2211
    %6306 = vmatprep.subr.mxu0 0.0
    %6307 = vmatpush1.msra.mxu0 %v2212
    %6308 = vmatprep.subr.mxu0 0.0
    %6309 = vmatpush1.msra.mxu0 %v2213
    %6310 = vmatprep.subr.mxu0 0.0
    %6311 = vmatpush1.msra.mxu0 %v2214
    %6312 = vmatprep.subr.mxu0 0.0
    %6313 = vmatpush1.msra.mxu0 0.0
    %6314 = vmatprep.subr.mxu0 0.0
    %6315 = vmatpush1.msra.mxu0 0.0
    %6316 = vmatprep.subr.mxu0 0.0
    %6317 = vmatpush1.msra.mxu0 0.0
    %6318 = vmatprep.subr.mxu0 0.0
    %6319 = vmatpush1.msra.mxu0 0.0
    %6320 = vmatprep.subr.mxu0 0.0
    %6321 = vmatpush1.msra.mxu0 0.0
    %6322 = vmatprep.subr.mxu0 0.0
    %6323 = vmatpush1.msra.mxu0 0.0
    %6324 = vmatprep.subr.mxu0 0.0
    %6325 = vmatpush1.msra.mxu0 0.0
    %6326 = vmatprep.subr.mxu0 0.0
    %6327 = vmatpush1.msra.mxu0 0.0
    %6328 = vmatprep.subr.mxu0 0.0
    %6329 = vmatpush1.msra.mxu0 0.0
    %6330 = vmatprep.subr.mxu0 0.0
    %6331 = vmatpush1.msra.mxu0 0.0
    %6332 = vmatprep.subr.mxu0 0.0
    %6333 = vmatpush1.msra.mxu0 0.0
    %6334 = vmatprep.subr.mxu0 0.0
    %6335 = vmatpush1.msra.mxu0 0.0
    %6336 = vmatprep.subr.mxu0 0.0
    %6337 = vmatpush1.msra.mxu0 0.0
    %6338 = vmatprep.subr.mxu0 0.0
    %6339 = vmatpush1.msra.mxu0 0.0
    %6340 = vmatprep.subr.mxu0 0.0
    %6341 = vmatpush1.msra.mxu0 0.0
    %6342 = vmatprep.subr.mxu0 0.0
    %6343 = vmatpush1.msra.mxu0 0.0
    %6344 = vmatprep.subr.mxu0 0.0
    %6345 = vmatpush1.msra.mxu0 0.0
    %6346 = vmatprep.subr.mxu0 0.0
    %6347 = vmatpush1.msra.mxu0 0.0
    %6348 = vmatprep.subr.mxu0 0.0
    %6349 = vmatpush1.msra.mxu0 0.0
    %6350 = vmatprep.subr.mxu0 0.0
    %6351 = vmatpush1.msra.mxu0 0.0
    %6352 = vmatprep.subr.mxu0 0.0
    %6353 = vmatpush1.msra.mxu0 0.0
    %6354 = vmatprep.subr.mxu0 0.0
    %6355 = vmatpush1.msra.mxu0 0.0
    %6356 = vmatprep.subr.mxu0 0.0
    %6357 = vmatpush1.msra.mxu0 0.0
    %6358 = vmatprep.subr.mxu0 0.0
    %6359 = vmatpush1.msra.mxu0 0.0
    %6360 = vmatprep.subr.mxu0 0.0
    %6361 = vmatpush1.msra.mxu0 0.0
    %6362 = vmatprep.subr.mxu0 0.0
    %6363 = vmatpush1.msra.mxu0 0.0
    %6364 = vmatprep.subr.mxu0 0.0
    %6365 = vmatpush1.msra.mxu0 0.0
    %6366 = vmatprep.subr.mxu0 0.0
    %6367 = vmatpush1.msra.mxu0 0.0
    %6368 = vmatprep.mubr.f32.mxu0 0.0
    %6369 = vmatmul.mubr.f32.gmra.mrb[0].mxu0 %v6062
    %v6370 = vpop.f32.mrb[0].mxu0
    %v6371 = vadd.f32 0.0, %v6370
    %v6372 = vpop.f32.mrb[0].mxu0
    %6373 = vdwg.mxu0
    %6375 = vrot.lane.b32.xlu0 %v6303, 96
    %v6376 = vpop.permute.xlu0 %6375
    %v6377 = vsel %vm98, %v6376, 0
    %6379 = vmatprep.subr.mxu0 0.0
    %6380 = vmatpush1.msra.mxu0 %v2207
    %6381 = vmatprep.subr.mxu0 0.0
    %6382 = vmatpush1.msra.mxu0 %v2208
    %6383 = vmatprep.subr.mxu0 0.0
    %6384 = vmatpush1.msra.mxu0 %v2209
    %6385 = vmatprep.subr.mxu0 0.0
    %6386 = vmatpush1.msra.mxu0 %v2210
    %6387 = vmatprep.subr.mxu0 0.0
    %6388 = vmatpush1.msra.mxu0 0.0
    %6389 = vmatprep.subr.mxu0 0.0
    %6390 = vmatpush1.msra.mxu0 0.0
    %6391 = vmatprep.subr.mxu0 0.0
    %6392 = vmatpush1.msra.mxu0 0.0
    %6393 = vmatprep.subr.mxu0 0.0
    %6394 = vmatpush1.msra.mxu0 0.0
    %6395 = vmatprep.subr.mxu0 0.0
    %6396 = vmatpush1.msra.mxu0 0.0
    %6397 = vmatprep.subr.mxu0 0.0
    %6398 = vmatpush1.msra.mxu0 0.0
    %6399 = vmatprep.subr.mxu0 0.0
    %6400 = vmatpush1.msra.mxu0 0.0
    %6401 = vmatprep.subr.mxu0 0.0
    %6402 = vmatpush1.msra.mxu0 0.0
    %6403 = vmatprep.subr.mxu0 0.0
    %6404 = vmatpush1.msra.mxu0 0.0
    %6405 = vmatprep.subr.mxu0 0.0
    %6406 = vmatpush1.msra.mxu0 0.0
    %6407 = vmatprep.subr.mxu0 0.0
    %6408 = vmatpush1.msra.mxu0 0.0
    %6409 = vmatprep.subr.mxu0 0.0
    %6410 = vmatpush1.msra.mxu0 0.0
    %6411 = vmatprep.subr.mxu0 0.0
    %6412 = vmatpush1.msra.mxu0 0.0
    %6413 = vmatprep.subr.mxu0 0.0
    %6414 = vmatpush1.msra.mxu0 0.0
    %6415 = vmatprep.subr.mxu0 0.0
    %6416 = vmatpush1.msra.mxu0 0.0
    %6417 = vmatprep.subr.mxu0 0.0
    %6418 = vmatpush1.msra.mxu0 0.0
    %6419 = vmatprep.subr.mxu0 0.0
    %6420 = vmatpush1.msra.mxu0 0.0
    %6421 = vmatprep.subr.mxu0 0.0
    %6422 = vmatpush1.msra.mxu0 0.0
    %6423 = vmatprep.subr.mxu0 0.0
    %6424 = vmatpush1.msra.mxu0 0.0
    %6425 = vmatprep.subr.mxu0 0.0
    %6426 = vmatpush1.msra.mxu0 0.0
    %6427 = vmatprep.subr.mxu0 0.0
    %6428 = vmatpush1.msra.mxu0 0.0
    %6429 = vmatprep.subr.mxu0 0.0
    %6430 = vmatpush1.msra.mxu0 0.0
    %6431 = vmatprep.subr.mxu0 0.0
    %6432 = vmatpush1.msra.mxu0 0.0
    %6433 = vmatprep.subr.mxu0 0.0
    %6434 = vmatpush1.msra.mxu0 0.0
    %6435 = vmatprep.subr.mxu0 0.0
    %6436 = vmatpush1.msra.mxu0 0.0
    %6437 = vmatprep.subr.mxu0 0.0
    %6438 = vmatpush1.msra.mxu0 0.0
    %6439 = vmatprep.subr.mxu0 0.0
    %6440 = vmatpush1.msra.mxu0 0.0
    %6441 = vmatprep.subr.mxu0 0.0
    %6442 = vmatpush1.msra.mxu0 0.0
    %6443 = vmatprep.mubr.f32.mxu0 0.0
    %6444 = vmatmul.mubr.f32.gmra.mrb[0].mxu0 %v6377
    %v6445 = vpop.f32.mrb[0].mxu0
    %v6446 = vadd.f32 %v6371, %v6445
    %v6447 = vpop.f32.mrb[0].mxu0
    %6448 = vdwg.mxu0
    %6449 = vmatprep.subr.mxu0 0.0
    %6450 = vmatpush1.msra.mxu0 %v2215
    %6451 = vmatprep.subr.mxu0 0.0
    %6452 = vmatpush1.msra.mxu0 %v2216
    %6453 = vmatprep.subr.mxu0 0.0
    %6454 = vmatpush1.msra.mxu0 %v2217
    %6455 = vmatprep.subr.mxu0 0.0
    %6456 = vmatpush1.msra.mxu0 %v2218
    %6457 = vmatprep.subr.mxu0 0.0
    %6458 = vmatpush1.msra.mxu0 0.0
    %6459 = vmatprep.subr.mxu0 0.0
    %6460 = vmatpush1.msra.mxu0 0.0
    %6461 = vmatprep.subr.mxu0 0.0
    %6462 = vmatpush1.msra.mxu0 0.0
    %6463 = vmatprep.subr.mxu0 0.0
    %6464 = vmatpush1.msra.mxu0 0.0
    %6465 = vmatprep.subr.mxu0 0.0
    %6466 = vmatpush1.msra.mxu0 0.0
    %6467 = vmatprep.subr.mxu0 0.0
    %6468 = vmatpush1.msra.mxu0 0.0
    %6469 = vmatprep.subr.mxu0 0.0
    %6470 = vmatpush1.msra.mxu0 0.0
    %6471 = vmatprep.subr.mxu0 0.0
    %6472 = vmatpush1.msra.mxu0 0.0
    %6473 = vmatprep.subr.mxu0 0.0
    %6474 = vmatpush1.msra.mxu0 0.0
    %6475 = vmatprep.subr.mxu0 0.0
    %6476 = vmatpush1.msra.mxu0 0.0
    %6477 = vmatprep.subr.mxu0 0.0
    %6478 = vmatpush1.msra.mxu0 0.0
    %6479 = vmatprep.subr.mxu0 0.0
    %6480 = vmatpush1.msra.mxu0 0.0
    %6481 = vmatprep.subr.mxu0 0.0
    %6482 = vmatpush1.msra.mxu0 0.0
    %6483 = vmatprep.subr.mxu0 0.0
    %6484 = vmatpush1.msra.mxu0 0.0
    %6485 = vmatprep.subr.mxu0 0.0
    %6486 = vmatpush1.msra.mxu0 0.0
    %6487 = vmatprep.subr.mxu0 0.0
    %6488 = vmatpush1.msra.mxu0 0.0
    %6489 = vmatprep.subr.mxu0 0.0
    %6490 = vmatpush1.msra.mxu0 0.0
    %6491 = vmatprep.subr.mxu0 0.0
    %6492 = vmatpush1.msra.mxu0 0.0
    %6493 = vmatprep.subr.mxu0 0.0
    %6494 = vmatpush1.msra.mxu0 0.0
    %6495 = vmatprep.subr.mxu0 0.0
    %6496 = vmatpush1.msra.mxu0 0.0
    %6497 = vmatprep.subr.mxu0 0.0
    %6498 = vmatpush1.msra.mxu0 0.0
    %6499 = vmatprep.subr.mxu0 0.0
    %6500 = vmatpush1.msra.mxu0 0.0
    %6501 = vmatprep.subr.mxu0 0.0
    %6502 = vmatpush1.msra.mxu0 0.0
    %6503 = vmatprep.subr.mxu0 0.0
    %6504 = vmatpush1.msra.mxu0 0.0
    %6505 = vmatprep.subr.mxu0 0.0
    %6506 = vmatpush1.msra.mxu0 0.0
    %6507 = vmatprep.subr.mxu0 0.0
    %6508 = vmatpush1.msra.mxu0 0.0
    %6509 = vmatprep.subr.mxu0 0.0
    %6510 = vmatpush1.msra.mxu0 0.0
    %6511 = vmatprep.subr.mxu0 0.0
    %6512 = vmatpush1.msra.mxu0 0.0
    %6513 = vmatprep.mubr.f32.mxu0 0.0
    %6514 = vmatmul.mubr.f32.gmra.mrb[0].mxu0 %v6135
    %v6515 = vpop.f32.mrb[0].mxu0
    %v6516 = vadd.f32 0.0, %v6515
    %v6517 = vpop.f32.mrb[0].mxu0
    %6518 = vdwg.mxu0
    %v6519 = vadd.f32 %v6446, %v6516
    %v6520 = vadd.f32 %v6519, %v3034
    %s6521 = scalar_lea.vmem %s22, 8
    %6522 = vst [vmem:[%s6521] sm:$0x3] %v6520
    %v6523 = vsel %vm2238, %v6520, -1e+30
    %v6524 = vsel %vm3039, %v6523, -inf
    %6525 = vmax.xlane.f32.xlu0 %v6524
    %v6526 = vpop.xlane.xlu0 %6525
    %vm6527 = vcmp.eq.f32.partialorder %v6523, %v6526
    %v6528 = vsel %vm6527, %v2237, 128
    %v6529 = vsel %vm3039, %v6528, 2147483647
    %v6530 = vand.u32 %v6529, 65535
    %v6531 = vshra.s32 %v6529, 16
    %v6532 = vcvt.s32.f32 %v6530
    %v6533 = vcvt.s32.f32 %v6531
    %6534 = vmin.xlane.f32.xlu0 %v6533
    %v6535 = vpop.xlane.xlu0 %6534
    %vm6536 = vcmp.eq.f32.partialorder %v6533, %v6535
    %v6537 = vsel %vm6536, %v6532, inf
    %6538 = vmin.xlane.f32.xlu0 %v6537
    %v6539 = vpop.xlane.xlu0 %6538
    %v6540 = vcvt.f32.s32 %v6539
    %v6541 = vcvt.f32.s32 %v6535
    %v6542 = vshll.u32 %v6541, 16
    %v6543 = vadd.s32 %v6542, %v6540
    %vm6544 = vcmp.eq.s32.totalorder %v2237, %v6543
    %v6545 = vsel %vm6544, 1, 0
    %v6546 = vcvt.s32.f32 %v6545
    %6547 = vmatprep.subr.mxu0 0.0
    %6548 = vmatpush1.msra.mxu0 %v2220
    %6549 = vmatprep.subr.mxu0 0.0
    %6550 = vmatpush1.msra.mxu0 %v2221
    %6551 = vmatprep.subr.mxu0 0.0
    %6552 = vmatpush1.msra.mxu0 %v2222
    %6553 = vmatprep.subr.mxu0 0.0
    %6554 = vmatpush1.msra.mxu0 %v2223
    %6555 = vmatprep.subr.mxu0 0.0
    %6556 = vmatpush1.msra.mxu0 %v2224
    %6557 = vmatprep.subr.mxu0 0.0
    %6558 = vmatpush1.msra.mxu0 %v2225
    %6559 = vmatprep.subr.mxu0 0.0
    %6560 = vmatpush1.msra.mxu0 %v2226
    %6561 = vmatprep.subr.mxu0 0.0
    %6562 = vmatpush1.msra.mxu0 %v2227
    %6563 = vmatprep.subr.mxu0 0.0
    %6564 = vmatpush1.msra.mxu0 %v2228
    %6565 = vmatprep.subr.mxu0 0.0
    %6566 = vmatpush1.msra.mxu0 %v2229
    %6567 = vmatprep.subr.mxu0 0.0
    %6568 = vmatpush1.msra.mxu0 %v2230
    %6569 = vmatprep.subr.mxu0 0.0
    %6570 = vmatpush1.msra.mxu0 %v2231
    %6571 = vmatprep.subr.mxu0 0.0
    %6572 = vmatpush1.msra.mxu0 %v2232
    %6573 = vmatprep.subr.mxu0 0.0
    %6574 = vmatpush1.msra.mxu0 %v2233
    %6575 = vmatprep.subr.mxu0 0.0
    %6576 = vmatpush1.msra.mxu0 %v2234
    %6577 = vmatprep.subr.mxu0 0.0
    %6578 = vmatpush1.msra.mxu0 %v2235
    %6579 = vmatprep.subr.mxu0 0.0
    %6580 = vmatpush1.msra.mxu0 0.0
    %6581 = vmatprep.subr.mxu0 0.0
    %6582 = vmatpush1.msra.mxu0 0.0
    %6583 = vmatprep.subr.mxu0 0.0
    %6584 = vmatpush1.msra.mxu0 0.0
    %6585 = vmatprep.subr.mxu0 0.0
    %6586 = vmatpush1.msra.mxu0 0.0
    %6587 = vmatprep.subr.mxu0 0.0
    %6588 = vmatpush1.msra.mxu0 0.0
    %6589 = vmatprep.subr.mxu0 0.0
    %6590 = vmatpush1.msra.mxu0 0.0
    %6591 = vmatprep.subr.mxu0 0.0
    %6592 = vmatpush1.msra.mxu0 0.0
    %6593 = vmatprep.subr.mxu0 0.0
    %6594 = vmatpush1.msra.mxu0 0.0
    %6595 = vmatprep.subr.mxu0 0.0
    %6596 = vmatpush1.msra.mxu0 0.0
    %6597 = vmatprep.subr.mxu0 0.0
    %6598 = vmatpush1.msra.mxu0 0.0
    %6599 = vmatprep.subr.mxu0 0.0
    %6600 = vmatpush1.msra.mxu0 0.0
    %6601 = vmatprep.subr.mxu0 0.0
    %6602 = vmatpush1.msra.mxu0 0.0
    %6603 = vmatprep.subr.mxu0 0.0
    %6604 = vmatpush1.msra.mxu0 0.0
    %6605 = vmatprep.subr.mxu0 0.0
    %6606 = vmatpush1.msra.mxu0 0.0
    %6607 = vmatprep.subr.mxu0 0.0
    %6608 = vmatpush1.msra.mxu0 0.0
    %6609 = vmatprep.subr.mxu0 0.0
    %6610 = vmatpush1.msra.mxu0 0.0
    %6611 = vmatprep.mubr.f32.mxu0 0.0
    %6612 = vmatmul.mubr.f32.gmra.mrb[0].mxu0 %v6546
    %v6613 = vpop.f32.mrb[0].mxu0
    %v6614 = vadd.f32 0.0, %v6613
    %v6615 = vpop.f32.mrb[0].mxu0
    %6616 = vdwg.mxu0
    %s6617 = scalar_lea.vmem %s2, 10
    %v6618 = vld [vmem:[%s6617] sm:$0x3]
    %s6619 = sld [smem:[#allocation2 + $0x5]]
    %p6620 = scmp.gt.s32.totalorder %s6619, 0
    %s6621 = scalar_select %p6620, 1, 0
    %s6622 = scvt.s32.f32 %s6621
    %v6623 = vstv %s6622
    %v6624 = vmul.f32 %v6623, %v6618
    %s6625 = ssub.f32 1.0, %s6622
    %v6626 = vstv %s6625
    %v6627 = vmul.f32 %v6626, %v6614
    %v6628 = vadd.f32 %v6624, %v6627
    %6629 = vmatprep.subr.mxu0 %v2119
    %6630 = vmatpush1.msra.mxu0 %v2118
    %6631 = vmatprep.subr.mxu0 %v2121
    %6632 = vmatpush1.msra.mxu0 %v2120
    %6633 = vmatprep.subr.mxu0 %v2123
    %6634 = vmatpush1.msra.mxu0 %v2122
    %6635 = vmatprep.subr.mxu0 %v2125
    %6636 = vmatpush1.msra.mxu0 %v2124
    %6637 = vmatprep.subr.mxu0 0.0
    %6638 = vmatpush1.msra.mxu0 0.0
    %6639 = vmatprep.subr.mxu0 0.0
    %6640 = vmatpush1.msra.mxu0 0.0
    %6641 = vmatprep.subr.mxu0 0.0
    %6642 = vmatpush1.msra.mxu0 0.0
    %6643 = vmatprep.subr.mxu0 0.0
    %6644 = vmatpush1.msra.mxu0 0.0
    %6645 = vmatprep.subr.mxu0 0.0
    %6646 = vmatpush1.msra.mxu0 0.0
    %6647 = vmatprep.subr.mxu0 0.0
    %6648 = vmatpush1.msra.mxu0 0.0
    %6649 = vmatprep.subr.mxu0 0.0
    %6650 = vmatpush1.msra.mxu0 0.0
    %6651 = vmatprep.subr.mxu0 0.0
    %6652 = vmatpush1.msra.mxu0 0.0
    %6653 = vmatprep.subr.mxu0 0.0
    %6654 = vmatpush1.msra.mxu0 0.0
    %6655 = vmatprep.subr.mxu0 0.0
    %6656 = vmatpush1.msra.mxu0 0.0
    %6657 = vmatprep.subr.mxu0 0.0
    %6658 = vmatpush1.msra.mxu0 0.0
    %6659 = vmatprep.subr.mxu0 0.0
    %6660 = vmatpush1.msra.mxu0 0.0
    %6661 = vmatprep.subr.mxu0 0.0
    %6662 = vmatpush1.msra.mxu0 0.0
    %6663 = vmatprep.subr.mxu0 0.0
    %6664 = vmatpush1.msra.mxu0 0.0
    %6665 = vmatprep.subr.mxu0 0.0
    %6666 = vmatpush1.msra.mxu0 0.0
    %6667 = vmatprep.subr.mxu0 0.0
    %6668 = vmatpush1.msra.mxu0 0.0
    %6669 = vmatprep.subr.mxu0 0.0
    %6670 = vmatpush1.msra.mxu0 0.0
    %6671 = vmatprep.subr.mxu0 0.0
    %6672 = vmatpush1.msra.mxu0 0.0
    %6673 = vmatprep.subr.mxu0 0.0
    %6674 = vmatpush1.msra.mxu0 0.0
    %6675 = vmatprep.subr.mxu0 0.0
    %6676 = vmatpush1.msra.mxu0 0.0
    %6677 = vmatprep.subr.mxu0 0.0
    %6678 = vmatpush1.msra.mxu0 0.0
    %6679 = vmatprep.subr.mxu0 0.0
    %6680 = vmatpush1.msra.mxu0 0.0
    %6681 = vmatprep.subr.mxu0 0.0
    %6682 = vmatpush1.msra.mxu0 0.0
    %6683 = vmatprep.subr.mxu0 0.0
    %6684 = vmatpush1.msra.mxu0 0.0
    %6685 = vmatprep.subr.mxu0 0.0
    %6686 = vmatpush1.msra.mxu0 0.0
    %6687 = vmatprep.subr.mxu0 0.0
    %6688 = vmatpush1.msra.mxu0 0.0
    %6689 = vmatprep.subr.mxu0 0.0
    %6690 = vmatpush1.msra.mxu0 0.0
    %6691 = vmatprep.subr.mxu0 0.0
    %6692 = vmatpush1.msra.mxu0 0.0
    %6693 = vmatprep.mubr.f32.mxu0 0.0
    %6694 = vmatmul.mubr.f32.gmra.mrb[0].mxu0 %v6377
    %v6695 = vpop.f32.mrb[0].mxu0
    %v6696 = vadd.f32 %v2244, %v6695
    %v6697 = vpop.f32.mrb[0].mxu0
    %v6698 = vadd.f32 %v2248, %v6697
    %6699 = vdwg.mxu0
    %v6700 = vadd.f32 %v2114, %v6696
    %v6701 = vadd.f32 %v2117, %v6698
    %v6702 = vtanh.pop %v6700
    %v6703 = vtanh.pop %v6701
    %6704 = vmatprep.subr.mxu0 0.0
    %6705 = vmatpush1.msra.mxu0 %v2127
    %6706 = vmatprep.subr.mxu0 0.0
    %6707 = vmatpush1.msra.mxu0 %v2128
    %6708 = vmatprep.subr.mxu0 0.0
    %6709 = vmatpush1.msra.mxu0 %v2129
    %6710 = vmatprep.subr.mxu0 0.0
    %6711 = vmatpush1.msra.mxu0 %v2130
    %6712 = vmatprep.subr.mxu0 0.0
    %6713 = vmatpush1.msra.mxu0 %v2131
    %6714 = vmatprep.subr.mxu0 0.0
    %6715 = vmatpush1.msra.mxu0 %v2132
    %6716 = vmatprep.subr.mxu0 0.0
    %6717 = vmatpush1.msra.mxu0 %v2133
    %6718 = vmatprep.subr.mxu0 0.0
    %6719 = vmatpush1.msra.mxu0 %v2134
    %6720 = vmatprep.subr.mxu0 0.0
    %6721 = vmatpush1.msra.mxu0 %v2135
    %6722 = vmatprep.subr.mxu0 0.0
    %6723 = vmatpush1.msra.mxu0 %v2136
    %6724 = vmatprep.subr.mxu0 0.0
    %6725 = vmatpush1.msra.mxu0 %v2137
    %6726 = vmatprep.subr.mxu0 0.0
    %6727 = vmatpush1.msra.mxu0 %v2138
    %6728 = vmatprep.subr.mxu0 0.0
    %6729 = vmatpush1.msra.mxu0 %v2139
    %6730 = vmatprep.subr.mxu0 0.0
    %6731 = vmatpush1.msra.mxu0 %v2140
    %6732 = vmatprep.subr.mxu0 0.0
    %6733 = vmatpush1.msra.mxu0 %v2141
    %6734 = vmatprep.subr.mxu0 0.0
    %6735 = vmatpush1.msra.mxu0 %v2142
    %6736 = vmatprep.subr.mxu0 0.0
    %6737 = vmatpush1.msra.mxu0 %v2143
    %6738 = vmatprep.subr.mxu0 0.0
    %6739 = vmatpush1.msra.mxu0 %v2144
    %6740 = vmatprep.subr.mxu0 0.0
    %6741 = vmatpush1.msra.mxu0 %v2145
    %6742 = vmatprep.subr.mxu0 0.0
    %6743 = vmatpush1.msra.mxu0 %v2146
    %6744 = vmatprep.subr.mxu0 0.0
    %6745 = vmatpush1.msra.mxu0 %v2147
    %6746 = vmatprep.subr.mxu0 0.0
    %6747 = vmatpush1.msra.mxu0 %v2148
    %6748 = vmatprep.subr.mxu0 0.0
    %6749 = vmatpush1.msra.mxu0 %v2149
    %6750 = vmatprep.subr.mxu0 0.0
    %6751 = vmatpush1.msra.mxu0 %v2150
    %6752 = vmatprep.subr.mxu0 0.0
    %6753 = vmatpush1.msra.mxu0 %v2151
    %6754 = vmatprep.subr.mxu0 0.0
    %6755 = vmatpush1.msra.mxu0 %v2152
    %6756 = vmatprep.subr.mxu0 0.0
    %6757 = vmatpush1.msra.mxu0 %v2153
    %6758 = vmatprep.subr.mxu0 0.0
    %6759 = vmatpush1.msra.mxu0 %v2154
    %6760 = vmatprep.subr.mxu0 0.0
    %6761 = vmatpush1.msra.mxu0 %v2155
    %6762 = vmatprep.subr.mxu0 0.0
    %6763 = vmatpush1.msra.mxu0 %v2156
    %6764 = vmatprep.subr.mxu0 0.0
    %6765 = vmatpush1.msra.mxu0 %v2157
    %6766 = vmatprep.subr.mxu0 0.0
    %6767 = vmatpush1.msra.mxu0 %v2158
    %6768 = vmatprep.mubr.f32.mxu0 %v6703
    %6769 = vmatmul.mubr.f32.gmra.mrb[0].mxu0 %v6702
    %v6770 = vpop.f32.mrb[0].mxu0
    %v6771 = vadd.f32 0.0, %v6770
    %v6772 = vpop.f32.mrb[0].mxu0
    %6773 = vdwg.mxu0
    %v6774 = vsel %vm2396, %v6771, -inf
    %6775 = vmax.xlane.f32.xlu0 %v6774
    %v6776 = vpop.xlane.xlu0 %6775
    %v6777 = vsub.f32 %v6771, %v6776
    %v6778 = vmul.f32 %v6777, 1.442695
    %v6779 = vpow.pop %v6778
    %v6780 = vsel %vm2396, %v6779, 0.0
    %6781 = vadd.xlane.f32.xlu0 %v6780
    %v6782 = vpop.xlane.xlu0 %6781
    %v6783 = vrcp.pop %v6782
    %v6784 = vmul.f32 1.0, %v6783
    %v6785 = vmul.f32 %v6779, %v6784
    %v6787 = vsel %vm2409, %v6785, 0
    %6789 = vmatprep.subr.mxu0 %v2160
    %6790 = vmatpush1.msra.mxu0 %v2159
    %6791 = vmatprep.subr.mxu0 0.0
    %6792 = vmatpush1.msra.mxu0 0.0
    %6793 = vmatprep.subr.mxu0 0.0
    %6794 = vmatpush1.msra.mxu0 0.0
    %6795 = vmatprep.subr.mxu0 0.0
    %6796 = vmatpush1.msra.mxu0 0.0
    %6797 = vmatprep.subr.mxu0 0.0
    %6798 = vmatpush1.msra.mxu0 0.0
    %6799 = vmatprep.subr.mxu0 0.0
    %6800 = vmatpush1.msra.mxu0 0.0
    %6801 = vmatprep.subr.mxu0 0.0
    %6802 = vmatpush1.msra.mxu0 0.0
    %6803 = vmatprep.subr.mxu0 0.0
    %6804 = vmatpush1.msra.mxu0 0.0
    %6805 = vmatprep.subr.mxu0 0.0
    %6806 = vmatpush1.msra.mxu0 0.0
    %6807 = vmatprep.subr.mxu0 0.0
    %6808 = vmatpush1.msra.mxu0 0.0
    %6809 = vmatprep.subr.mxu0 0.0
    %6810 = vmatpush1.msra.mxu0 0.0
    %6811 = vmatprep.subr.mxu0 0.0
    %6812 = vmatpush1.msra.mxu0 0.0
    %6813 = vmatprep.subr.mxu0 0.0
    %6814 = vmatpush1.msra.mxu0 0.0
    %6815 = vmatprep.subr.mxu0 0.0
    %6816 = vmatpush1.msra.mxu0 0.0
    %6817 = vmatprep.subr.mxu0 0.0
    %6818 = vmatpush1.msra.mxu0 0.0
    %6819 = vmatprep.subr.mxu0 0.0
    %6820 = vmatpush1.msra.mxu0 0.0
    %6821 = vmatprep.subr.mxu0 0.0
    %6822 = vmatpush1.msra.mxu0 0.0
    %6823 = vmatprep.subr.mxu0 0.0
    %6824 = vmatpush1.msra.mxu0 0.0
    %6825 = vmatprep.subr.mxu0 0.0
    %6826 = vmatpush1.msra.mxu0 0.0
    %6827 = vmatprep.subr.mxu0 0.0
    %6828 = vmatpush1.msra.mxu0 0.0
    %6829 = vmatprep.subr.mxu0 0.0
    %6830 = vmatpush1.msra.mxu0 0.0
    %6831 = vmatprep.subr.mxu0 0.0
    %6832 = vmatpush1.msra.mxu0 0.0
    %6833 = vmatprep.subr.mxu0 0.0
    %6834 = vmatpush1.msra.mxu0 0.0
    %6835 = vmatprep.subr.mxu0 0.0
    %6836 = vmatpush1.msra.mxu0 0.0
    %6837 = vmatprep.subr.mxu0 0.0
    %6838 = vmatpush1.msra.mxu0 0.0
    %6839 = vmatprep.subr.mxu0 0.0
    %6840 = vmatpush1.msra.mxu0 0.0
    %6841 = vmatprep.subr.mxu0 0.0
    %6842 = vmatpush1.msra.mxu0 0.0
    %6843 = vmatprep.subr.mxu0 0.0
    %6844 = vmatpush1.msra.mxu0 0.0
    %6845 = vmatprep.subr.mxu0 0.0
    %6846 = vmatpush1.msra.mxu0 0.0
    %6847 = vmatprep.subr.mxu0 0.0
    %6848 = vmatpush1.msra.mxu0 0.0
    %6849 = vmatprep.subr.mxu0 0.0
    %6850 = vmatpush1.msra.mxu0 0.0
    %6851 = vmatprep.subr.mxu0 0.0
    %6852 = vmatpush1.msra.mxu0 0.0
    %6853 = vmatprep.mubr.f32.mxu0 0.0
    %6854 = vmatmul.mubr.f32.gmra.mrb[0].mxu0 %v6787
    %v6855 = vpop.f32.mrb[0].mxu0
    %v6856 = vadd.f32 0.0, %v6855
    %v6857 = vpop.f32.mrb[0].mxu0
    %v6858 = vadd.f32 0.0, %v6857
    %6859 = vdwg.mxu0
    %v6860 = vmul.f32 %v6856, %v1520
    %v6861 = vmul.f32 %v6858, %v1523
    %6862 = vmatprep.subr.mxu0 0.0
    %6863 = vmatpush1.msra.mxu0 %v2161
    %6864 = vmatprep.subr.mxu0 0.0
    %6865 = vmatpush1.msra.mxu0 %v2162
    %6866 = vmatprep.subr.mxu0 0.0
    %6867 = vmatpush1.msra.mxu0 %v2163
    %6868 = vmatprep.subr.mxu0 0.0
    %6869 = vmatpush1.msra.mxu0 %v2164
    %6870 = vmatprep.subr.mxu0 0.0
    %6871 = vmatpush1.msra.mxu0 %v2165
    %6872 = vmatprep.subr.mxu0 0.0
    %6873 = vmatpush1.msra.mxu0 %v2166
    %6874 = vmatprep.subr.mxu0 0.0
    %6875 = vmatpush1.msra.mxu0 %v2167
    %6876 = vmatprep.subr.mxu0 0.0
    %6877 = vmatpush1.msra.mxu0 %v2168
    %6878 = vmatprep.subr.mxu0 0.0
    %6879 = vmatpush1.msra.mxu0 %v2169
    %6880 = vmatprep.subr.mxu0 0.0
    %6881 = vmatpush1.msra.mxu0 %v2170
    %6882 = vmatprep.subr.mxu0 0.0
    %6883 = vmatpush1.msra.mxu0 %v2171
    %6884 = vmatprep.subr.mxu0 0.0
    %6885 = vmatpush1.msra.mxu0 %v2172
    %6886 = vmatprep.subr.mxu0 0.0
    %6887 = vmatpush1.msra.mxu0 %v2173
    %6888 = vmatprep.subr.mxu0 0.0
    %6889 = vmatpush1.msra.mxu0 %v2174
    %6890 = vmatprep.subr.mxu0 0.0
    %6891 = vmatpush1.msra.mxu0 %v2175
    %6892 = vmatprep.subr.mxu0 0.0
    %6893 = vmatpush1.msra.mxu0 %v2176
    %6894 = vmatprep.subr.mxu0 0.0
    %6895 = vmatpush1.msra.mxu0 %v2177
    %6896 = vmatprep.subr.mxu0 0.0
    %6897 = vmatpush1.msra.mxu0 %v2178
    %6898 = vmatprep.subr.mxu0 0.0
    %6899 = vmatpush1.msra.mxu0 %v2179
    %6900 = vmatprep.subr.mxu0 0.0
    %6901 = vmatpush1.msra.mxu0 %v2180
    %6902 = vmatprep.subr.mxu0 0.0
    %6903 = vmatpush1.msra.mxu0 %v2181
    %6904 = vmatprep.subr.mxu0 0.0
    %6905 = vmatpush1.msra.mxu0 %v2182
    %6906 = vmatprep.subr.mxu0 0.0
    %6907 = vmatpush1.msra.mxu0 %v2183
    %6908 = vmatprep.subr.mxu0 0.0
    %6909 = vmatpush1.msra.mxu0 %v2184
    %6910 = vmatprep.subr.mxu0 0.0
    %6911 = vmatpush1.msra.mxu0 %v2185
    %6912 = vmatprep.subr.mxu0 0.0
    %6913 = vmatpush1.msra.mxu0 %v2186
    %6914 = vmatprep.subr.mxu0 0.0
    %6915 = vmatpush1.msra.mxu0 %v2187
    %6916 = vmatprep.subr.mxu0 0.0
    %6917 = vmatpush1.msra.mxu0 %v2188
    %6918 = vmatprep.subr.mxu0 0.0
    %6919 = vmatpush1.msra.mxu0 %v2189
    %6920 = vmatprep.subr.mxu0 0.0
    %6921 = vmatpush1.msra.mxu0 %v2190
    %6922 = vmatprep.subr.mxu0 0.0
    %6923 = vmatpush1.msra.mxu0 %v2191
    %6924 = vmatprep.subr.mxu0 0.0
    %6925 = vmatpush1.msra.mxu0 %v2192
    %6926 = vmatprep.mubr.f32.mxu0 %v6861
    %6927 = vmatmul.mubr.f32.gmra.mrb[0].mxu0 %v6860
    %v6928 = vpop.f32.mrb[0].mxu0
    %v6929 = vadd.f32 0.0, %v6928
    %v6930 = vpop.f32.mrb[0].mxu0
    %6931 = vdwg.mxu0
    %v6933 = vsel %vm98, %v6929, 0
    %6935 = vmatprep.subr.mxu0 0.0
    %6936 = vmatpush1.msra.mxu0 %v2197
    %6937 = vmatprep.subr.mxu0 0.0
    %6938 = vmatpush1.msra.mxu0 %v2198
    %6939 = vmatprep.subr.mxu0 0.0
    %6940 = vmatpush1.msra.mxu0 %v2199
    %6941 = vmatprep.subr.mxu0 0.0
    %6942 = vmatpush1.msra.mxu0 %v2200
    %6943 = vmatprep.subr.mxu0 0.0
    %6944 = vmatpush1.msra.mxu0 0.0
    %6945 = vmatprep.subr.mxu0 0.0
    %6946 = vmatpush1.msra.mxu0 0.0
    %6947 = vmatprep.subr.mxu0 0.0
    %6948 = vmatpush1.msra.mxu0 0.0
    %6949 = vmatprep.subr.mxu0 0.0
    %6950 = vmatpush1.msra.mxu0 0.0
    %6951 = vmatprep.subr.mxu0 0.0
    %6952 = vmatpush1.msra.mxu0 0.0
    %6953 = vmatprep.subr.mxu0 0.0
    %6954 = vmatpush1.msra.mxu0 0.0
    %6955 = vmatprep.subr.mxu0 0.0
    %6956 = vmatpush1.msra.mxu0 0.0
    %6957 = vmatprep.subr.mxu0 0.0
    %6958 = vmatpush1.msra.mxu0 0.0
    %6959 = vmatprep.subr.mxu0 0.0
    %6960 = vmatpush1.msra.mxu0 0.0
    %6961 = vmatprep.subr.mxu0 0.0
    %6962 = vmatpush1.msra.mxu0 0.0
    %6963 = vmatprep.subr.mxu0 0.0
    %6964 = vmatpush1.msra.mxu0 0.0
    %6965 = vmatprep.subr.mxu0 0.0
    %6966 = vmatpush1.msra.mxu0 0.0
    %6967 = vmatprep.subr.mxu0 0.0
    %6968 = vmatpush1.msra.mxu0 0.0
    %6969 = vmatprep.subr.mxu0 0.0
    %6970 = vmatpush1.msra.mxu0 0.0
    %6971 = vmatprep.subr.mxu0 0.0
    %6972 = vmatpush1.msra.mxu0 0.0
    %6973 = vmatprep.subr.mxu0 0.0
    %6974 = vmatpush1.msra.mxu0 0.0
    %6975 = vmatprep.subr.mxu0 0.0
    %6976 = vmatpush1.msra.mxu0 0.0
    %6977 = vmatprep.subr.mxu0 0.0
    %6978 = vmatpush1.msra.mxu0 0.0
    %6979 = vmatprep.subr.mxu0 0.0
    %6980 = vmatpush1.msra.mxu0 0.0
    %6981 = vmatprep.subr.mxu0 0.0
    %6982 = vmatpush1.msra.mxu0 0.0
    %6983 = vmatprep.subr.mxu0 0.0
    %6984 = vmatpush1.msra.mxu0 0.0
    %6985 = vmatprep.subr.mxu0 0.0
    %6986 = vmatpush1.msra.mxu0 0.0
    %6987 = vmatprep.subr.mxu0 0.0
    %6988 = vmatpush1.msra.mxu0 0.0
    %6989 = vmatprep.subr.mxu0 0.0
    %6990 = vmatpush1.msra.mxu0 0.0
    %6991 = vmatprep.subr.mxu0 0.0
    %6992 = vmatpush1.msra.mxu0 0.0
    %6993 = vmatprep.subr.mxu0 0.0
    %6994 = vmatpush1.msra.mxu0 0.0
    %6995 = vmatprep.subr.mxu0 0.0
    %6996 = vmatpush1.msra.mxu0 0.0
    %6997 = vmatprep.subr.mxu0 0.0
    %6998 = vmatpush1.msra.mxu0 0.0
    %6999 = vmatprep.mubr.f32.mxu0 0.0
    %7000 = vmatmul.mubr.f32.gmra.mrb[0].mxu0 %v6933
    %v7001 = vpop.f32.mrb[0].mxu0
    %v7002 = vadd.f32 0.0, %v7001
    %v7003 = vpop.f32.mrb[0].mxu0
    %7004 = vdwg.mxu0
    %v7006 = vsel %vm98, %v6628, 0
    %7008 = vmatprep.subr.mxu0 0.0
    %7009 = vmatpush1.msra.mxu0 %v2193
    %7010 = vmatprep.subr.mxu0 0.0
    %7011 = vmatpush1.msra.mxu0 %v2194
    %7012 = vmatprep.subr.mxu0 0.0
    %7013 = vmatpush1.msra.mxu0 %v2195
    %7014 = vmatprep.subr.mxu0 0.0
    %7015 = vmatpush1.msra.mxu0 %v2196
    %7016 = vmatprep.subr.mxu0 0.0
    %7017 = vmatpush1.msra.mxu0 0.0
    %7018 = vmatprep.subr.mxu0 0.0
    %7019 = vmatpush1.msra.mxu0 0.0
    %7020 = vmatprep.subr.mxu0 0.0
    %7021 = vmatpush1.msra.mxu0 0.0
    %7022 = vmatprep.subr.mxu0 0.0
    %7023 = vmatpush1.msra.mxu0 0.0
    %7024 = vmatprep.subr.mxu0 0.0
    %7025 = vmatpush1.msra.mxu0 0.0
    %7026 = vmatprep.subr.mxu0 0.0
    %7027 = vmatpush1.msra.mxu0 0.0
    %7028 = vmatprep.subr.mxu0 0.0
    %7029 = vmatpush1.msra.mxu0 0.0
    %7030 = vmatprep.subr.mxu0 0.0
    %7031 = vmatpush1.msra.mxu0 0.0
    %7032 = vmatprep.subr.mxu0 0.0
    %7033 = vmatpush1.msra.mxu0 0.0
    %7034 = vmatprep.subr.mxu0 0.0
    %7035 = vmatpush1.msra.mxu0 0.0
    %7036 = vmatprep.subr.mxu0 0.0
    %7037 = vmatpush1.msra.mxu0 0.0
    %7038 = vmatprep.subr.mxu0 0.0
    %7039 = vmatpush1.msra.mxu0 0.0
    %7040 = vmatprep.subr.mxu0 0.0
    %7041 = vmatpush1.msra.mxu0 0.0
    %7042 = vmatprep.subr.mxu0 0.0
    %7043 = vmatpush1.msra.mxu0 0.0
    %7044 = vmatprep.subr.mxu0 0.0
    %7045 = vmatpush1.msra.mxu0 0.0
    %7046 = vmatprep.subr.mxu0 0.0
    %7047 = vmatpush1.msra.mxu0 0.0
    %7048 = vmatprep.subr.mxu0 0.0
    %7049 = vmatpush1.msra.mxu0 0.0
    %7050 = vmatprep.subr.mxu0 0.0
    %7051 = vmatpush1.msra.mxu0 0.0
    %7052 = vmatprep.subr.mxu0 0.0
    %7053 = vmatpush1.msra.mxu0 0.0
    %7054 = vmatprep.subr.mxu0 0.0
    %7055 = vmatpush1.msra.mxu0 0.0
    %7056 = vmatprep.subr.mxu0 0.0
    %7057 = vmatpush1.msra.mxu0 0.0
    %7058 = vmatprep.subr.mxu0 0.0
    %7059 = vmatpush1.msra.mxu0 0.0
    %7060 = vmatprep.subr.mxu0 0.0
    %7061 = vmatpush1.msra.mxu0 0.0
    %7062 = vmatprep.subr.mxu0 0.0
    %7063 = vmatpush1.msra.mxu0 0.0
    %7064 = vmatprep.subr.mxu0 0.0
    %7065 = vmatpush1.msra.mxu0 0.0
    %7066 = vmatprep.subr.mxu0 0.0
    %7067 = vmatpush1.msra.mxu0 0.0
    %7068 = vmatprep.subr.mxu0 0.0
    %7069 = vmatpush1.msra.mxu0 0.0
    %7070 = vmatprep.subr.mxu0 0.0
    %7071 = vmatpush1.msra.mxu0 0.0
    %7072 = vmatprep.mubr.f32.mxu0 0.0
    %7073 = vmatmul.mubr.f32.gmra.mrb[0].mxu0 %v7006
    %v7074 = vpop.f32.mrb[0].mxu0
    %v7075 = vadd.f32 %v7002, %v7074
    %v7076 = vpop.f32.mrb[0].mxu0
    %7077 = vdwg.mxu0
    %v7078 = vadd.f32 %v7075, %v2706
    %7079 = vmatprep.subr.mxu0 0.0
    %7080 = vmatpush1.msra.mxu0 %v2201
    %7081 = vmatprep.subr.mxu0 0.0
    %7082 = vmatpush1.msra.mxu0 %v2202
    %7083 = vmatprep.subr.mxu0 0.0
    %7084 = vmatpush1.msra.mxu0 %v2203
    %7085 = vmatprep.subr.mxu0 0.0
    %7086 = vmatpush1.msra.mxu0 %v2204
    %7087 = vmatprep.subr.mxu0 0.0
    %7088 = vmatpush1.msra.mxu0 0.0
    %7089 = vmatprep.subr.mxu0 0.0
    %7090 = vmatpush1.msra.mxu0 0.0
    %7091 = vmatprep.subr.mxu0 0.0
    %7092 = vmatpush1.msra.mxu0 0.0
    %7093 = vmatprep.subr.mxu0 0.0
    %7094 = vmatpush1.msra.mxu0 0.0
    %7095 = vmatprep.subr.mxu0 0.0
    %7096 = vmatpush1.msra.mxu0 0.0
    %7097 = vmatprep.subr.mxu0 0.0
    %7098 = vmatpush1.msra.mxu0 0.0
    %7099 = vmatprep.subr.mxu0 0.0
    %7100 = vmatpush1.msra.mxu0 0.0
    %7101 = vmatprep.subr.mxu0 0.0
    %7102 = vmatpush1.msra.mxu0 0.0
    %7103 = vmatprep.subr.mxu0 0.0
    %7104 = vmatpush1.msra.mxu0 0.0
    %7105 = vmatprep.subr.mxu0 0.0
    %7106 = vmatpush1.msra.mxu0 0.0
    %7107 = vmatprep.subr.mxu0 0.0
    %7108 = vmatpush1.msra.mxu0 0.0
    %7109 = vmatprep.subr.mxu0 0.0
    %7110 = vmatpush1.msra.mxu0 0.0
    %7111 = vmatprep.subr.mxu0 0.0
    %7112 = vmatpush1.msra.mxu0 0.0
    %7113 = vmatprep.subr.mxu0 0.0
    %7114 = vmatpush1.msra.mxu0 0.0
    %7115 = vmatprep.subr.mxu0 0.0
    %7116 = vmatpush1.msra.mxu0 0.0
    %7117 = vmatprep.subr.mxu0 0.0
    %7118 = vmatpush1.msra.mxu0 0.0
    %7119 = vmatprep.subr.mxu0 0.0
    %7120 = vmatpush1.msra.mxu0 0.0
    %7121 = vmatprep.subr.mxu0 0.0
    %7122 = vmatpush1.msra.mxu0 0.0
    %7123 = vmatprep.subr.mxu0 0.0
    %7124 = vmatpush1.msra.mxu0 0.0
    %7125 = vmatprep.subr.mxu0 0.0
    %7126 = vmatpush1.msra.mxu0 0.0
    %7127 = vmatprep.subr.mxu0 0.0
    %7128 = vmatpush1.msra.mxu0 0.0
    %7129 = vmatprep.subr.mxu0 0.0
    %7130 = vmatpush1.msra.mxu0 0.0
    %7131 = vmatprep.subr.mxu0 0.0
    %7132 = vmatpush1.msra.mxu0 0.0
    %7133 = vmatprep.subr.mxu0 0.0
    %7134 = vmatpush1.msra.mxu0 0.0
    %7135 = vmatprep.subr.mxu0 0.0
    %7136 = vmatpush1.msra.mxu0 0.0
    %7137 = vmatprep.subr.mxu0 0.0
    %7138 = vmatpush1.msra.mxu0 0.0
    %7139 = vmatprep.subr.mxu0 0.0
    %7140 = vmatpush1.msra.mxu0 0.0
    %7141 = vmatprep.subr.mxu0 0.0
    %7142 = vmatpush1.msra.mxu0 0.0
    %7143 = vmatprep.mubr.f32.mxu0 0.0
    %7144 = vmatmul.mubr.f32.gmra.mrb[0].mxu0 %v6377
    %v7145 = vpop.f32.mrb[0].mxu0
    %v7146 = vadd.f32 %v2713, %v7145
    %v7147 = vpop.f32.mrb[0].mxu0
    %7148 = vdwg.mxu0
    %v7149 = vadd.f32 %v7078, %v7146
    %v7150 = vxor.u32 %v7149, 2147483648
    %v7151 = vmul.f32 %v7150, 1.442695
    %v7152 = vpow.pop %v7151
    %v7153 = vadd.f32 %v7152, 1.0
    %v7154 = vrcp.pop %v7153
    %v7155 = vmul.f32 1.0, %v7154
    %7157 = vrot.lane.b32.xlu0 %v7146, 64
    %v7158 = vpop.permute.xlu0 %7157
    %v7160 = vmul.f32 %v7155, %v7158
    %7162 = vrot.lane.b32.xlu0 %v7160, 64
    %v7163 = vpop.permute.xlu0 %7162
    %v7165 = vadd.f32 %v7078, %v7163
    %v7166 = vtanh.pop %v7165
    %v7167 = vsub.f32 1.0, %v7155
    %7169 = vrot.lane.b32.xlu0 %v7166, 96
    %v7170 = vpop.permute.xlu0 %7169
    %v7172 = vmul.f32 %v7167, %v7170
    %v7173 = vmul.f32 %v7155, %v6303
    %v7174 = vadd.f32 %v7172, %v7173
    %7175 = vmatprep.subr.mxu0 0.0
    %7176 = vmatpush1.msra.mxu0 %v2211
    %7177 = vmatprep.subr.mxu0 0.0
    %7178 = vmatpush1.msra.mxu0 %v2212
    %7179 = vmatprep.subr.mxu0 0.0
    %7180 = vmatpush1.msra.mxu0 %v2213
    %7181 = vmatprep.subr.mxu0 0.0
    %7182 = vmatpush1.msra.mxu0 %v2214
    %7183 = vmatprep.subr.mxu0 0.0
    %7184 = vmatpush1.msra.mxu0 0.0
    %7185 = vmatprep.subr.mxu0 0.0
    %7186 = vmatpush1.msra.mxu0 0.0
    %7187 = vmatprep.subr.mxu0 0.0
    %7188 = vmatpush1.msra.mxu0 0.0
    %7189 = vmatprep.subr.mxu0 0.0
    %7190 = vmatpush1.msra.mxu0 0.0
    %7191 = vmatprep.subr.mxu0 0.0
    %7192 = vmatpush1.msra.mxu0 0.0
    %7193 = vmatprep.subr.mxu0 0.0
    %7194 = vmatpush1.msra.mxu0 0.0
    %7195 = vmatprep.subr.mxu0 0.0
    %7196 = vmatpush1.msra.mxu0 0.0
    %7197 = vmatprep.subr.mxu0 0.0
    %7198 = vmatpush1.msra.mxu0 0.0
    %7199 = vmatprep.subr.mxu0 0.0
    %7200 = vmatpush1.msra.mxu0 0.0
    %7201 = vmatprep.subr.mxu0 0.0
    %7202 = vmatpush1.msra.mxu0 0.0
    %7203 = vmatprep.subr.mxu0 0.0
    %7204 = vmatpush1.msra.mxu0 0.0
    %7205 = vmatprep.subr.mxu0 0.0
    %7206 = vmatpush1.msra.mxu0 0.0
    %7207 = vmatprep.subr.mxu0 0.0
    %7208 = vmatpush1.msra.mxu0 0.0
    %7209 = vmatprep.subr.mxu0 0.0
    %7210 = vmatpush1.msra.mxu0 0.0
    %7211 = vmatprep.subr.mxu0 0.0
    %7212 = vmatpush1.msra.mxu0 0.0
    %7213 = vmatprep.subr.mxu0 0.0
    %7214 = vmatpush1.msra.mxu0 0.0
    %7215 = vmatprep.subr.mxu0 0.0
    %7216 = vmatpush1.msra.mxu0 0.0
    %7217 = vmatprep.subr.mxu0 0.0
    %7218 = vmatpush1.msra.mxu0 0.0
    %7219 = vmatprep.subr.mxu0 0.0
    %7220 = vmatpush1.msra.mxu0 0.0
    %7221 = vmatprep.subr.mxu0 0.0
    %7222 = vmatpush1.msra.mxu0 0.0
    %7223 = vmatprep.subr.mxu0 0.0
    %7224 = vmatpush1.msra.mxu0 0.0
    %7225 = vmatprep.subr.mxu0 0.0
    %7226 = vmatpush1.msra.mxu0 0.0
    %7227 = vmatprep.subr.mxu0 0.0
    %7228 = vmatpush1.msra.mxu0 0.0
    %7229 = vmatprep.subr.mxu0 0.0
    %7230 = vmatpush1.msra.mxu0 0.0
    %7231 = vmatprep.subr.mxu0 0.0
    %7232 = vmatpush1.msra.mxu0 0.0
    %7233 = vmatprep.subr.mxu0 0.0
    %7234 = vmatpush1.msra.mxu0 0.0
    %7235 = vmatprep.subr.mxu0 0.0
    %7236 = vmatpush1.msra.mxu0 0.0
    %7237 = vmatprep.subr.mxu0 0.0
    %7238 = vmatpush1.msra.mxu0 0.0
    %7239 = vmatprep.mubr.f32.mxu0 0.0
    %7240 = vmatmul.mubr.f32.gmra.mrb[0].mxu0 %v6933
    %v7241 = vpop.f32.mrb[0].mxu0
    %v7242 = vadd.f32 0.0, %v7241
    %v7243 = vpop.f32.mrb[0].mxu0
    %7244 = vdwg.mxu0
    %7246 = vrot.lane.b32.xlu0 %v7174, 96
    %v7247 = vpop.permute.xlu0 %7246
    %v7248 = vsel %vm98, %v7247, 0
    %7250 = vmatprep.subr.mxu0 0.0
    %7251 = vmatpush1.msra.mxu0 %v2207
    %7252 = vmatprep.subr.mxu0 0.0
    %7253 = vmatpush1.msra.mxu0 %v2208
    %7254 = vmatprep.subr.mxu0 0.0
    %7255 = vmatpush1.msra.mxu0 %v2209
    %7256 = vmatprep.subr.mxu0 0.0
    %7257 = vmatpush1.msra.mxu0 %v2210
    %7258 = vmatprep.subr.mxu0 0.0
    %7259 = vmatpush1.msra.mxu0 0.0
    %7260 = vmatprep.subr.mxu0 0.0
    %7261 = vmatpush1.msra.mxu0 0.0
    %7262 = vmatprep.subr.mxu0 0.0
    %7263 = vmatpush1.msra.mxu0 0.0
    %7264 = vmatprep.subr.mxu0 0.0
    %7265 = vmatpush1.msra.mxu0 0.0
    %7266 = vmatprep.subr.mxu0 0.0
    %7267 = vmatpush1.msra.mxu0 0.0
    %7268 = vmatprep.subr.mxu0 0.0
    %7269 = vmatpush1.msra.mxu0 0.0
    %7270 = vmatprep.subr.mxu0 0.0
    %7271 = vmatpush1.msra.mxu0 0.0
    %7272 = vmatprep.subr.mxu0 0.0
    %7273 = vmatpush1.msra.mxu0 0.0
    %7274 = vmatprep.subr.mxu0 0.0
    %7275 = vmatpush1.msra.mxu0 0.0
    %7276 = vmatprep.subr.mxu0 0.0
    %7277 = vmatpush1.msra.mxu0 0.0
    %7278 = vmatprep.subr.mxu0 0.0
    %7279 = vmatpush1.msra.mxu0 0.0
    %7280 = vmatprep.subr.mxu0 0.0
    %7281 = vmatpush1.msra.mxu0 0.0
    %7282 = vmatprep.subr.mxu0 0.0
    %7283 = vmatpush1.msra.mxu0 0.0
    %7284 = vmatprep.subr.mxu0 0.0
    %7285 = vmatpush1.msra.mxu0 0.0
    %7286 = vmatprep.subr.mxu0 0.0
    %7287 = vmatpush1.msra.mxu0 0.0
    %7288 = vmatprep.subr.mxu0 0.0
    %7289 = vmatpush1.msra.mxu0 0.0
    %7290 = vmatprep.subr.mxu0 0.0
    %7291 = vmatpush1.msra.mxu0 0.0
    %7292 = vmatprep.subr.mxu0 0.0
    %7293 = vmatpush1.msra.mxu0 0.0
    %7294 = vmatprep.subr.mxu0 0.0
    %7295 = vmatpush1.msra.mxu0 0.0
    %7296 = vmatprep.subr.mxu0 0.0
    %7297 = vmatpush1.msra.mxu0 0.0
    %7298 = vmatprep.subr.mxu0 0.0
    %7299 = vmatpush1.msra.mxu0 0.0
    %7300 = vmatprep.subr.mxu0 0.0
    %7301 = vmatpush1.msra.mxu0 0.0
    %7302 = vmatprep.subr.mxu0 0.0
    %7303 = vmatpush1.msra.mxu0 0.0
    %7304 = vmatprep.subr.mxu0 0.0
    %7305 = vmatpush1.msra.mxu0 0.0
    %7306 = vmatprep.subr.mxu0 0.0
    %7307 = vmatpush1.msra.mxu0 0.0
    %7308 = vmatprep.subr.mxu0 0.0
    %7309 = vmatpush1.msra.mxu0 0.0
    %7310 = vmatprep.subr.mxu0 0.0
    %7311 = vmatpush1.msra.mxu0 0.0
    %7312 = vmatprep.subr.mxu0 0.0
    %7313 = vmatpush1.msra.mxu0 0.0
    %7314 = vmatprep.mubr.f32.mxu0 0.0
    %7315 = vmatmul.mubr.f32.gmra.mrb[0].mxu0 %v7248
    %v7316 = vpop.f32.mrb[0].mxu0
    %v7317 = vadd.f32 %v7242, %v7316
    %v7318 = vpop.f32.mrb[0].mxu0
    %7319 = vdwg.mxu0
    %7320 = vmatprep.subr.mxu0 0.0
    %7321 = vmatpush1.msra.mxu0 %v2215
    %7322 = vmatprep.subr.mxu0 0.0
    %7323 = vmatpush1.msra.mxu0 %v2216
    %7324 = vmatprep.subr.mxu0 0.0
    %7325 = vmatpush1.msra.mxu0 %v2217
    %7326 = vmatprep.subr.mxu0 0.0
    %7327 = vmatpush1.msra.mxu0 %v2218
    %7328 = vmatprep.subr.mxu0 0.0
    %7329 = vmatpush1.msra.mxu0 0.0
    %7330 = vmatprep.subr.mxu0 0.0
    %7331 = vmatpush1.msra.mxu0 0.0
    %7332 = vmatprep.subr.mxu0 0.0
    %7333 = vmatpush1.msra.mxu0 0.0
    %7334 = vmatprep.subr.mxu0 0.0
    %7335 = vmatpush1.msra.mxu0 0.0
    %7336 = vmatprep.subr.mxu0 0.0
    %7337 = vmatpush1.msra.mxu0 0.0
    %7338 = vmatprep.subr.mxu0 0.0
    %7339 = vmatpush1.msra.mxu0 0.0
    %7340 = vmatprep.subr.mxu0 0.0
    %7341 = vmatpush1.msra.mxu0 0.0
    %7342 = vmatprep.subr.mxu0 0.0
    %7343 = vmatpush1.msra.mxu0 0.0
    %7344 = vmatprep.subr.mxu0 0.0
    %7345 = vmatpush1.msra.mxu0 0.0
    %7346 = vmatprep.subr.mxu0 0.0
    %7347 = vmatpush1.msra.mxu0 0.0
    %7348 = vmatprep.subr.mxu0 0.0
    %7349 = vmatpush1.msra.mxu0 0.0
    %7350 = vmatprep.subr.mxu0 0.0
    %7351 = vmatpush1.msra.mxu0 0.0
    %7352 = vmatprep.subr.mxu0 0.0
    %7353 = vmatpush1.msra.mxu0 0.0
    %7354 = vmatprep.subr.mxu0 0.0
    %7355 = vmatpush1.msra.mxu0 0.0
    %7356 = vmatprep.subr.mxu0 0.0
    %7357 = vmatpush1.msra.mxu0 0.0
    %7358 = vmatprep.subr.mxu0 0.0
    %7359 = vmatpush1.msra.mxu0 0.0
    %7360 = vmatprep.subr.mxu0 0.0
    %7361 = vmatpush1.msra.mxu0 0.0
    %7362 = vmatprep.subr.mxu0 0.0
    %7363 = vmatpush1.msra.mxu0 0.0
    %7364 = vmatprep.subr.mxu0 0.0
    %7365 = vmatpush1.msra.mxu0 0.0
    %7366 = vmatprep.subr.mxu0 0.0
    %7367 = vmatpush1.msra.mxu0 0.0
    %7368 = vmatprep.subr.mxu0 0.0
    %7369 = vmatpush1.msra.mxu0 0.0
    %7370 = vmatprep.subr.mxu0 0.0
    %7371 = vmatpush1.msra.mxu0 0.0
    %7372 = vmatprep.subr.mxu0 0.0
    %7373 = vmatpush1.msra.mxu0 0.0
    %7374 = vmatprep.subr.mxu0 0.0
    %7375 = vmatpush1.msra.mxu0 0.0
    %7376 = vmatprep.subr.mxu0 0.0
    %7377 = vmatpush1.msra.mxu0 0.0
    %7378 = vmatprep.subr.mxu0 0.0
    %7379 = vmatpush1.msra.mxu0 0.0
    %7380 = vmatprep.subr.mxu0 0.0
    %7381 = vmatpush1.msra.mxu0 0.0
    %7382 = vmatprep.subr.mxu0 0.0
    %7383 = vmatpush1.msra.mxu0 0.0
    %7384 = vmatprep.mubr.f32.mxu0 0.0
    %7385 = vmatmul.mubr.f32.gmra.mrb[0].mxu0 %v7006
    %v7386 = vpop.f32.mrb[0].mxu0
    %v7387 = vadd.f32 0.0, %v7386
    %v7388 = vpop.f32.mrb[0].mxu0
    %7389 = vdwg.mxu0
    %v7390 = vadd.f32 %v7317, %v7387
    %v7391 = vadd.f32 %v7390, %v3034
    %s7392 = scalar_lea.vmem %s22, 10
    %7393 = vst [vmem:[%s7392] sm:$0x3] %v7391
    %v7394 = vsel %vm2238, %v7391, -1e+30
    %v7395 = vsel %vm3039, %v7394, -inf
    %7396 = vmax.xlane.f32.xlu0 %v7395
    %v7397 = vpop.xlane.xlu0 %7396
    %vm7398 = vcmp.eq.f32.partialorder %v7394, %v7397
    %v7399 = vsel %vm7398, %v2237, 128
    %v7400 = vsel %vm3039, %v7399, 2147483647
    %v7401 = vand.u32 %v7400, 65535
    %v7402 = vshra.s32 %v7400, 16
    %v7403 = vcvt.s32.f32 %v7401
    %v7404 = vcvt.s32.f32 %v7402
    %7405 = vmin.xlane.f32.xlu0 %v7404
    %v7406 = vpop.xlane.xlu0 %7405
    %vm7407 = vcmp.eq.f32.partialorder %v7404, %v7406
    %v7408 = vsel %vm7407, %v7403, inf
    %7409 = vmin.xlane.f32.xlu0 %v7408
    %v7410 = vpop.xlane.xlu0 %7409
    %v7411 = vcvt.f32.s32 %v7410
    %v7412 = vcvt.f32.s32 %v7406
    %v7413 = vshll.u32 %v7412, 16
    %v7414 = vadd.s32 %v7413, %v7411
    %vm7415 = vcmp.eq.s32.totalorder %v2237, %v7414
    %v7416 = vsel %vm7415, 1, 0
    %v7417 = vcvt.s32.f32 %v7416
    %7418 = vmatprep.subr.mxu0 0.0
    %7419 = vmatpush1.msra.mxu0 %v2220
    %7420 = vmatprep.subr.mxu0 0.0
    %7421 = vmatpush1.msra.mxu0 %v2221
    %7422 = vmatprep.subr.mxu0 0.0
    %7423 = vmatpush1.msra.mxu0 %v2222
    %7424 = vmatprep.subr.mxu0 0.0
    %7425 = vmatpush1.msra.mxu0 %v2223
    %7426 = vmatprep.subr.mxu0 0.0
    %7427 = vmatpush1.msra.mxu0 %v2224
    %7428 = vmatprep.subr.mxu0 0.0
    %7429 = vmatpush1.msra.mxu0 %v2225
    %7430 = vmatprep.subr.mxu0 0.0
    %7431 = vmatpush1.msra.mxu0 %v2226
    %7432 = vmatprep.subr.mxu0 0.0
    %7433 = vmatpush1.msra.mxu0 %v2227
    %7434 = vmatprep.subr.mxu0 0.0
    %7435 = vmatpush1.msra.mxu0 %v2228
    %7436 = vmatprep.subr.mxu0 0.0
    %7437 = vmatpush1.msra.mxu0 %v2229
    %7438 = vmatprep.subr.mxu0 0.0
    %7439 = vmatpush1.msra.mxu0 %v2230
    %7440 = vmatprep.subr.mxu0 0.0
    %7441 = vmatpush1.msra.mxu0 %v2231
    %7442 = vmatprep.subr.mxu0 0.0
    %7443 = vmatpush1.msra.mxu0 %v2232
    %7444 = vmatprep.subr.mxu0 0.0
    %7445 = vmatpush1.msra.mxu0 %v2233
    %7446 = vmatprep.subr.mxu0 0.0
    %7447 = vmatpush1.msra.mxu0 %v2234
    %7448 = vmatprep.subr.mxu0 0.0
    %7449 = vmatpush1.msra.mxu0 %v2235
    %7450 = vmatprep.subr.mxu0 0.0
    %7451 = vmatpush1.msra.mxu0 0.0
    %7452 = vmatprep.subr.mxu0 0.0
    %7453 = vmatpush1.msra.mxu0 0.0
    %7454 = vmatprep.subr.mxu0 0.0
    %7455 = vmatpush1.msra.mxu0 0.0
    %7456 = vmatprep.subr.mxu0 0.0
    %7457 = vmatpush1.msra.mxu0 0.0
    %7458 = vmatprep.subr.mxu0 0.0
    %7459 = vmatpush1.msra.mxu0 0.0
    %7460 = vmatprep.subr.mxu0 0.0
    %7461 = vmatpush1.msra.mxu0 0.0
    %7462 = vmatprep.subr.mxu0 0.0
    %7463 = vmatpush1.msra.mxu0 0.0
    %7464 = vmatprep.subr.mxu0 0.0
    %7465 = vmatpush1.msra.mxu0 0.0
    %7466 = vmatprep.subr.mxu0 0.0
    %7467 = vmatpush1.msra.mxu0 0.0
    %7468 = vmatprep.subr.mxu0 0.0
    %7469 = vmatpush1.msra.mxu0 0.0
    %7470 = vmatprep.subr.mxu0 0.0
    %7471 = vmatpush1.msra.mxu0 0.0
    %7472 = vmatprep.subr.mxu0 0.0
    %7473 = vmatpush1.msra.mxu0 0.0
    %7474 = vmatprep.subr.mxu0 0.0
    %7475 = vmatpush1.msra.mxu0 0.0
    %7476 = vmatprep.subr.mxu0 0.0
    %7477 = vmatpush1.msra.mxu0 0.0
    %7478 = vmatprep.subr.mxu0 0.0
    %7479 = vmatpush1.msra.mxu0 0.0
    %7480 = vmatprep.subr.mxu0 0.0
    %7481 = vmatpush1.msra.mxu0 0.0
    %7482 = vmatprep.mubr.f32.mxu0 0.0
    %7483 = vmatmul.mubr.f32.gmra.mrb[0].mxu0 %v7417
    %v7484 = vpop.f32.mrb[0].mxu0
    %v7485 = vadd.f32 0.0, %v7484
    %v7486 = vpop.f32.mrb[0].mxu0
    %7487 = vdwg.mxu0
    %s7488 = scalar_lea.vmem %s2, 12
    %v7489 = vld [vmem:[%s7488] sm:$0x3]
    %s7490 = sld [smem:[#allocation2 + $0x6]]
    %p7491 = scmp.gt.s32.totalorder %s7490, 0
    %s7492 = scalar_select %p7491, 1, 0
    %s7493 = scvt.s32.f32 %s7492
    %v7494 = vstv %s7493
    %v7495 = vmul.f32 %v7494, %v7489
    %s7496 = ssub.f32 1.0, %s7493
    %v7497 = vstv %s7496
    %v7498 = vmul.f32 %v7497, %v7485
    %v7499 = vadd.f32 %v7495, %v7498
    %7500 = vmatprep.subr.mxu0 %v2119
    %7501 = vmatpush1.msra.mxu0 %v2118
    %7502 = vmatprep.subr.mxu0 %v2121
    %7503 = vmatpush1.msra.mxu0 %v2120
    %7504 = vmatprep.subr.mxu0 %v2123
    %7505 = vmatpush1.msra.mxu0 %v2122
    %7506 = vmatprep.subr.mxu0 %v2125
    %7507 = vmatpush1.msra.mxu0 %v2124
    %7508 = vmatprep.subr.mxu0 0.0
    %7509 = vmatpush1.msra.mxu0 0.0
    %7510 = vmatprep.subr.mxu0 0.0
    %7511 = vmatpush1.msra.mxu0 0.0
    %7512 = vmatprep.subr.mxu0 0.0
    %7513 = vmatpush1.msra.mxu0 0.0
    %7514 = vmatprep.subr.mxu0 0.0
    %7515 = vmatpush1.msra.mxu0 0.0
    %7516 = vmatprep.subr.mxu0 0.0
    %7517 = vmatpush1.msra.mxu0 0.0
    %7518 = vmatprep.subr.mxu0 0.0
    %7519 = vmatpush1.msra.mxu0 0.0
    %7520 = vmatprep.subr.mxu0 0.0
    %7521 = vmatpush1.msra.mxu0 0.0
    %7522 = vmatprep.subr.mxu0 0.0
    %7523 = vmatpush1.msra.mxu0 0.0
    %7524 = vmatprep.subr.mxu0 0.0
    %7525 = vmatpush1.msra.mxu0 0.0
    %7526 = vmatprep.subr.mxu0 0.0
    %7527 = vmatpush1.msra.mxu0 0.0
    %7528 = vmatprep.subr.mxu0 0.0
    %7529 = vmatpush1.msra.mxu0 0.0
    %7530 = vmatprep.subr.mxu0 0.0
    %7531 = vmatpush1.msra.mxu0 0.0
    %7532 = vmatprep.subr.mxu0 0.0
    %7533 = vmatpush1.msra.mxu0 0.0
    %7534 = vmatprep.subr.mxu0 0.0
    %7535 = vmatpush1.msra.mxu0 0.0
    %7536 = vmatprep.subr.mxu0 0.0
    %7537 = vmatpush1.msra.mxu0 0.0
    %7538 = vmatprep.subr.mxu0 0.0
    %7539 = vmatpush1.msra.mxu0 0.0
    %7540 = vmatprep.subr.mxu0 0.0
    %7541 = vmatpush1.msra.mxu0 0.0
    %7542 = vmatprep.subr.mxu0 0.0
    %7543 = vmatpush1.msra.mxu0 0.0
    %7544 = vmatprep.subr.mxu0 0.0
    %7545 = vmatpush1.msra.mxu0 0.0
    %7546 = vmatprep.subr.mxu0 0.0
    %7547 = vmatpush1.msra.mxu0 0.0
    %7548 = vmatprep.subr.mxu0 0.0
    %7549 = vmatpush1.msra.mxu0 0.0
    %7550 = vmatprep.subr.mxu0 0.0
    %7551 = vmatpush1.msra.mxu0 0.0
    %7552 = vmatprep.subr.mxu0 0.0
    %7553 = vmatpush1.msra.mxu0 0.0
    %7554 = vmatprep.subr.mxu0 0.0
    %7555 = vmatpush1.msra.mxu0 0.0
    %7556 = vmatprep.subr.mxu0 0.0
    %7557 = vmatpush1.msra.mxu0 0.0
    %7558 = vmatprep.subr.mxu0 0.0
    %7559 = vmatpush1.msra.mxu0 0.0
    %7560 = vmatprep.subr.mxu0 0.0
    %7561 = vmatpush1.msra.mxu0 0.0
    %7562 = vmatprep.subr.mxu0 0.0
    %7563 = vmatpush1.msra.mxu0 0.0
    %7564 = vmatprep.mubr.f32.mxu0 0.0
    %7565 = vmatmul.mubr.f32.gmra.mrb[0].mxu0 %v7248
    %v7566 = vpop.f32.mrb[0].mxu0
    %v7567 = vadd.f32 %v2244, %v7566
    %v7568 = vpop.f32.mrb[0].mxu0
    %v7569 = vadd.f32 %v2248, %v7568
    %7570 = vdwg.mxu0
    %v7571 = vadd.f32 %v2114, %v7567
    %v7572 = vadd.f32 %v2117, %v7569
    %v7573 = vtanh.pop %v7571
    %v7574 = vtanh.pop %v7572
    %7575 = vmatprep.subr.mxu0 0.0
    %7576 = vmatpush1.msra.mxu0 %v2127
    %7577 = vmatprep.subr.mxu0 0.0
    %7578 = vmatpush1.msra.mxu0 %v2128
    %7579 = vmatprep.subr.mxu0 0.0
    %7580 = vmatpush1.msra.mxu0 %v2129
    %7581 = vmatprep.subr.mxu0 0.0
    %7582 = vmatpush1.msra.mxu0 %v2130
    %7583 = vmatprep.subr.mxu0 0.0
    %7584 = vmatpush1.msra.mxu0 %v2131
    %7585 = vmatprep.subr.mxu0 0.0
    %7586 = vmatpush1.msra.mxu0 %v2132
    %7587 = vmatprep.subr.mxu0 0.0
    %7588 = vmatpush1.msra.mxu0 %v2133
    %7589 = vmatprep.subr.mxu0 0.0
    %7590 = vmatpush1.msra.mxu0 %v2134
    %7591 = vmatprep.subr.mxu0 0.0
    %7592 = vmatpush1.msra.mxu0 %v2135
    %7593 = vmatprep.subr.mxu0 0.0
    %7594 = vmatpush1.msra.mxu0 %v2136
    %7595 = vmatprep.subr.mxu0 0.0
    %7596 = vmatpush1.msra.mxu0 %v2137
    %7597 = vmatprep.subr.mxu0 0.0
    %7598 = vmatpush1.msra.mxu0 %v2138
    %7599 = vmatprep.subr.mxu0 0.0
    %7600 = vmatpush1.msra.mxu0 %v2139
    %7601 = vmatprep.subr.mxu0 0.0
    %7602 = vmatpush1.msra.mxu0 %v2140
    %7603 = vmatprep.subr.mxu0 0.0
    %7604 = vmatpush1.msra.mxu0 %v2141
    %7605 = vmatprep.subr.mxu0 0.0
    %7606 = vmatpush1.msra.mxu0 %v2142
    %7607 = vmatprep.subr.mxu0 0.0
    %7608 = vmatpush1.msra.mxu0 %v2143
    %7609 = vmatprep.subr.mxu0 0.0
    %7610 = vmatpush1.msra.mxu0 %v2144
    %7611 = vmatprep.subr.mxu0 0.0
    %7612 = vmatpush1.msra.mxu0 %v2145
    %7613 = vmatprep.subr.mxu0 0.0
    %7614 = vmatpush1.msra.mxu0 %v2146
    %7615 = vmatprep.subr.mxu0 0.0
    %7616 = vmatpush1.msra.mxu0 %v2147
    %7617 = vmatprep.subr.mxu0 0.0
    %7618 = vmatpush1.msra.mxu0 %v2148
    %7619 = vmatprep.subr.mxu0 0.0
    %7620 = vmatpush1.msra.mxu0 %v2149
    %7621 = vmatprep.subr.mxu0 0.0
    %7622 = vmatpush1.msra.mxu0 %v2150
    %7623 = vmatprep.subr.mxu0 0.0
    %7624 = vmatpush1.msra.mxu0 %v2151
    %7625 = vmatprep.subr.mxu0 0.0
    %7626 = vmatpush1.msra.mxu0 %v2152
    %7627 = vmatprep.subr.mxu0 0.0
    %7628 = vmatpush1.msra.mxu0 %v2153
    %7629 = vmatprep.subr.mxu0 0.0
    %7630 = vmatpush1.msra.mxu0 %v2154
    %7631 = vmatprep.subr.mxu0 0.0
    %7632 = vmatpush1.msra.mxu0 %v2155
    %7633 = vmatprep.subr.mxu0 0.0
    %7634 = vmatpush1.msra.mxu0 %v2156
    %7635 = vmatprep.subr.mxu0 0.0
    %7636 = vmatpush1.msra.mxu0 %v2157
    %7637 = vmatprep.subr.mxu0 0.0
    %7638 = vmatpush1.msra.mxu0 %v2158
    %7639 = vmatprep.mubr.f32.mxu0 %v7574
    %7640 = vmatmul.mubr.f32.gmra.mrb[0].mxu0 %v7573
    %v7641 = vpop.f32.mrb[0].mxu0
    %v7642 = vadd.f32 0.0, %v7641
    %v7643 = vpop.f32.mrb[0].mxu0
    %7644 = vdwg.mxu0
    %v7645 = vsel %vm2396, %v7642, -inf
    %7646 = vmax.xlane.f32.xlu0 %v7645
    %v7647 = vpop.xlane.xlu0 %7646
    %v7648 = vsub.f32 %v7642, %v7647
    %v7649 = vmul.f32 %v7648, 1.442695
    %v7650 = vpow.pop %v7649
    %v7651 = vsel %vm2396, %v7650, 0.0
    %7652 = vadd.xlane.f32.xlu0 %v7651
    %v7653 = vpop.xlane.xlu0 %7652
    %v7654 = vrcp.pop %v7653
    %v7655 = vmul.f32 1.0, %v7654
    %v7656 = vmul.f32 %v7650, %v7655
    %v7658 = vsel %vm2409, %v7656, 0
    %7660 = vmatprep.subr.mxu0 %v2160
    %7661 = vmatpush1.msra.mxu0 %v2159
    %7662 = vmatprep.subr.mxu0 0.0
    %7663 = vmatpush1.msra.mxu0 0.0
    %7664 = vmatprep.subr.mxu0 0.0
    %7665 = vmatpush1.msra.mxu0 0.0
    %7666 = vmatprep.subr.mxu0 0.0
    %7667 = vmatpush1.msra.mxu0 0.0
    %7668 = vmatprep.subr.mxu0 0.0
    %7669 = vmatpush1.msra.mxu0 0.0
    %7670 = vmatprep.subr.mxu0 0.0
    %7671 = vmatpush1.msra.mxu0 0.0
    %7672 = vmatprep.subr.mxu0 0.0
    %7673 = vmatpush1.msra.mxu0 0.0
    %7674 = vmatprep.subr.mxu0 0.0
    %7675 = vmatpush1.msra.mxu0 0.0
    %7676 = vmatprep.subr.mxu0 0.0
    %7677 = vmatpush1.msra.mxu0 0.0
    %7678 = vmatprep.subr.mxu0 0.0
    %7679 = vmatpush1.msra.mxu0 0.0
    %7680 = vmatprep.subr.mxu0 0.0
    %7681 = vmatpush1.msra.mxu0 0.0
    %7682 = vmatprep.subr.mxu0 0.0
    %7683 = vmatpush1.msra.mxu0 0.0
    %7684 = vmatprep.subr.mxu0 0.0
    %7685 = vmatpush1.msra.mxu0 0.0
    %7686 = vmatprep.subr.mxu0 0.0
    %7687 = vmatpush1.msra.mxu0 0.0
    %7688 = vmatprep.subr.mxu0 0.0
    %7689 = vmatpush1.msra.mxu0 0.0
    %7690 = vmatprep.subr.mxu0 0.0
    %7691 = vmatpush1.msra.mxu0 0.0
    %7692 = vmatprep.subr.mxu0 0.0
    %7693 = vmatpush1.msra.mxu0 0.0
    %7694 = vmatprep.subr.mxu0 0.0
    %7695 = vmatpush1.msra.mxu0 0.0
    %7696 = vmatprep.subr.mxu0 0.0
    %7697 = vmatpush1.msra.mxu0 0.0
    %7698 = vmatprep.subr.mxu0 0.0
    %7699 = vmatpush1.msra.mxu0 0.0
    %7700 = vmatprep.subr.mxu0 0.0
    %7701 = vmatpush1.msra.mxu0 0.0
    %7702 = vmatprep.subr.mxu0 0.0
    %7703 = vmatpush1.msra.mxu0 0.0
    %7704 = vmatprep.subr.mxu0 0.0
    %7705 = vmatpush1.msra.mxu0 0.0
    %7706 = vmatprep.subr.mxu0 0.0
    %7707 = vmatpush1.msra.mxu0 0.0
    %7708 = vmatprep.subr.mxu0 0.0
    %7709 = vmatpush1.msra.mxu0 0.0
    %7710 = vmatprep.subr.mxu0 0.0
    %7711 = vmatpush1.msra.mxu0 0.0
    %7712 = vmatprep.subr.mxu0 0.0
    %7713 = vmatpush1.msra.mxu0 0.0
    %7714 = vmatprep.subr.mxu0 0.0
    %7715 = vmatpush1.msra.mxu0 0.0
    %7716 = vmatprep.subr.mxu0 0.0
    %7717 = vmatpush1.msra.mxu0 0.0
    %7718 = vmatprep.subr.mxu0 0.0
    %7719 = vmatpush1.msra.mxu0 0.0
    %7720 = vmatprep.subr.mxu0 0.0
    %7721 = vmatpush1.msra.mxu0 0.0
    %7722 = vmatprep.subr.mxu0 0.0
    %7723 = vmatpush1.msra.mxu0 0.0
    %7724 = vmatprep.mubr.f32.mxu0 0.0
    %7725 = vmatmul.mubr.f32.gmra.mrb[0].mxu0 %v7658
    %v7726 = vpop.f32.mrb[0].mxu0
    %v7727 = vadd.f32 0.0, %v7726
    %v7728 = vpop.f32.mrb[0].mxu0
    %v7729 = vadd.f32 0.0, %v7728
    %7730 = vdwg.mxu0
    %v7731 = vmul.f32 %v7727, %v1520
    %v7732 = vmul.f32 %v7729, %v1523
    %7733 = vmatprep.subr.mxu0 0.0
    %7734 = vmatpush1.msra.mxu0 %v2161
    %7735 = vmatprep.subr.mxu0 0.0
    %7736 = vmatpush1.msra.mxu0 %v2162
    %7737 = vmatprep.subr.mxu0 0.0
    %7738 = vmatpush1.msra.mxu0 %v2163
    %7739 = vmatprep.subr.mxu0 0.0
    %7740 = vmatpush1.msra.mxu0 %v2164
    %7741 = vmatprep.subr.mxu0 0.0
    %7742 = vmatpush1.msra.mxu0 %v2165
    %7743 = vmatprep.subr.mxu0 0.0
    %7744 = vmatpush1.msra.mxu0 %v2166
    %7745 = vmatprep.subr.mxu0 0.0
    %7746 = vmatpush1.msra.mxu0 %v2167
    %7747 = vmatprep.subr.mxu0 0.0
    %7748 = vmatpush1.msra.mxu0 %v2168
    %7749 = vmatprep.subr.mxu0 0.0
    %7750 = vmatpush1.msra.mxu0 %v2169
    %7751 = vmatprep.subr.mxu0 0.0
    %7752 = vmatpush1.msra.mxu0 %v2170
    %7753 = vmatprep.subr.mxu0 0.0
    %7754 = vmatpush1.msra.mxu0 %v2171
    %7755 = vmatprep.subr.mxu0 0.0
    %7756 = vmatpush1.msra.mxu0 %v2172
    %7757 = vmatprep.subr.mxu0 0.0
    %7758 = vmatpush1.msra.mxu0 %v2173
    %7759 = vmatprep.subr.mxu0 0.0
    %7760 = vmatpush1.msra.mxu0 %v2174
    %7761 = vmatprep.subr.mxu0 0.0
    %7762 = vmatpush1.msra.mxu0 %v2175
    %7763 = vmatprep.subr.mxu0 0.0
    %7764 = vmatpush1.msra.mxu0 %v2176
    %7765 = vmatprep.subr.mxu0 0.0
    %7766 = vmatpush1.msra.mxu0 %v2177
    %7767 = vmatprep.subr.mxu0 0.0
    %7768 = vmatpush1.msra.mxu0 %v2178
    %7769 = vmatprep.subr.mxu0 0.0
    %7770 = vmatpush1.msra.mxu0 %v2179
    %7771 = vmatprep.subr.mxu0 0.0
    %7772 = vmatpush1.msra.mxu0 %v2180
    %7773 = vmatprep.subr.mxu0 0.0
    %7774 = vmatpush1.msra.mxu0 %v2181
    %7775 = vmatprep.subr.mxu0 0.0
    %7776 = vmatpush1.msra.mxu0 %v2182
    %7777 = vmatprep.subr.mxu0 0.0
    %7778 = vmatpush1.msra.mxu0 %v2183
    %7779 = vmatprep.subr.mxu0 0.0
    %7780 = vmatpush1.msra.mxu0 %v2184
    %7781 = vmatprep.subr.mxu0 0.0
    %7782 = vmatpush1.msra.mxu0 %v2185
    %7783 = vmatprep.subr.mxu0 0.0
    %7784 = vmatpush1.msra.mxu0 %v2186
    %7785 = vmatprep.subr.mxu0 0.0
    %7786 = vmatpush1.msra.mxu0 %v2187
    %7787 = vmatprep.subr.mxu0 0.0
    %7788 = vmatpush1.msra.mxu0 %v2188
    %7789 = vmatprep.subr.mxu0 0.0
    %7790 = vmatpush1.msra.mxu0 %v2189
    %7791 = vmatprep.subr.mxu0 0.0
    %7792 = vmatpush1.msra.mxu0 %v2190
    %7793 = vmatprep.subr.mxu0 0.0
    %7794 = vmatpush1.msra.mxu0 %v2191
    %7795 = vmatprep.subr.mxu0 0.0
    %7796 = vmatpush1.msra.mxu0 %v2192
    %7797 = vmatprep.mubr.f32.mxu0 %v7732
    %7798 = vmatmul.mubr.f32.gmra.mrb[0].mxu0 %v7731
    %v7799 = vpop.f32.mrb[0].mxu0
    %v7800 = vadd.f32 0.0, %v7799
    %v7801 = vpop.f32.mrb[0].mxu0
    %7802 = vdwg.mxu0
    %v7804 = vsel %vm98, %v7800, 0
    %7806 = vmatprep.subr.mxu0 0.0
    %7807 = vmatpush1.msra.mxu0 %v2197
    %7808 = vmatprep.subr.mxu0 0.0
    %7809 = vmatpush1.msra.mxu0 %v2198
    %7810 = vmatprep.subr.mxu0 0.0
    %7811 = vmatpush1.msra.mxu0 %v2199
    %7812 = vmatprep.subr.mxu0 0.0
    %7813 = vmatpush1.msra.mxu0 %v2200
    %7814 = vmatprep.subr.mxu0 0.0
    %7815 = vmatpush1.msra.mxu0 0.0
    %7816 = vmatprep.subr.mxu0 0.0
    %7817 = vmatpush1.msra.mxu0 0.0
    %7818 = vmatprep.subr.mxu0 0.0
    %7819 = vmatpush1.msra.mxu0 0.0
    %7820 = vmatprep.subr.mxu0 0.0
    %7821 = vmatpush1.msra.mxu0 0.0
    %7822 = vmatprep.subr.mxu0 0.0
    %7823 = vmatpush1.msra.mxu0 0.0
    %7824 = vmatprep.subr.mxu0 0.0
    %7825 = vmatpush1.msra.mxu0 0.0
    %7826 = vmatprep.subr.mxu0 0.0
    %7827 = vmatpush1.msra.mxu0 0.0
    %7828 = vmatprep.subr.mxu0 0.0
    %7829 = vmatpush1.msra.mxu0 0.0
    %7830 = vmatprep.subr.mxu0 0.0
    %7831 = vmatpush1.msra.mxu0 0.0
    %7832 = vmatprep.subr.mxu0 0.0
    %7833 = vmatpush1.msra.mxu0 0.0
    %7834 = vmatprep.subr.mxu0 0.0
    %7835 = vmatpush1.msra.mxu0 0.0
    %7836 = vmatprep.subr.mxu0 0.0
    %7837 = vmatpush1.msra.mxu0 0.0
    %7838 = vmatprep.subr.mxu0 0.0
    %7839 = vmatpush1.msra.mxu0 0.0
    %7840 = vmatprep.subr.mxu0 0.0
    %7841 = vmatpush1.msra.mxu0 0.0
    %7842 = vmatprep.subr.mxu0 0.0
    %7843 = vmatpush1.msra.mxu0 0.0
    %7844 = vmatprep.subr.mxu0 0.0
    %7845 = vmatpush1.msra.mxu0 0.0
    %7846 = vmatprep.subr.mxu0 0.0
    %7847 = vmatpush1.msra.mxu0 0.0
    %7848 = vmatprep.subr.mxu0 0.0
    %7849 = vmatpush1.msra.mxu0 0.0
    %7850 = vmatprep.subr.mxu0 0.0
    %7851 = vmatpush1.msra.mxu0 0.0
    %7852 = vmatprep.subr.mxu0 0.0
    %7853 = vmatpush1.msra.mxu0 0.0
    %7854 = vmatprep.subr.mxu0 0.0
    %7855 = vmatpush1.msra.mxu0 0.0
    %7856 = vmatprep.subr.mxu0 0.0
    %7857 = vmatpush1.msra.mxu0 0.0
    %7858 = vmatprep.subr.mxu0 0.0
    %7859 = vmatpush1.msra.mxu0 0.0
    %7860 = vmatprep.subr.mxu0 0.0
    %7861 = vmatpush1.msra.mxu0 0.0
    %7862 = vmatprep.subr.mxu0 0.0
    %7863 = vmatpush1.msra.mxu0 0.0
    %7864 = vmatprep.subr.mxu0 0.0
    %7865 = vmatpush1.msra.mxu0 0.0
    %7866 = vmatprep.subr.mxu0 0.0
    %7867 = vmatpush1.msra.mxu0 0.0
    %7868 = vmatprep.subr.mxu0 0.0
    %7869 = vmatpush1.msra.mxu0 0.0
    %7870 = vmatprep.mubr.f32.mxu0 0.0
    %7871 = vmatmul.mubr.f32.gmra.mrb[0].mxu0 %v7804
    %v7872 = vpop.f32.mrb[0].mxu0
    %v7873 = vadd.f32 0.0, %v7872
    %v7874 = vpop.f32.mrb[0].mxu0
    %7875 = vdwg.mxu0
    %v7877 = vsel %vm98, %v7499, 0
    %7879 = vmatprep.subr.mxu0 0.0
    %7880 = vmatpush1.msra.mxu0 %v2193
    %7881 = vmatprep.subr.mxu0 0.0
    %7882 = vmatpush1.msra.mxu0 %v2194
    %7883 = vmatprep.subr.mxu0 0.0
    %7884 = vmatpush1.msra.mxu0 %v2195
    %7885 = vmatprep.subr.mxu0 0.0
    %7886 = vmatpush1.msra.mxu0 %v2196
    %7887 = vmatprep.subr.mxu0 0.0
    %7888 = vmatpush1.msra.mxu0 0.0
    %7889 = vmatprep.subr.mxu0 0.0
    %7890 = vmatpush1.msra.mxu0 0.0
    %7891 = vmatprep.subr.mxu0 0.0
    %7892 = vmatpush1.msra.mxu0 0.0
    %7893 = vmatprep.subr.mxu0 0.0
    %7894 = vmatpush1.msra.mxu0 0.0
    %7895 = vmatprep.subr.mxu0 0.0
    %7896 = vmatpush1.msra.mxu0 0.0
    %7897 = vmatprep.subr.mxu0 0.0
    %7898 = vmatpush1.msra.mxu0 0.0
    %7899 = vmatprep.subr.mxu0 0.0
    %7900 = vmatpush1.msra.mxu0 0.0
    %7901 = vmatprep.subr.mxu0 0.0
    %7902 = vmatpush1.msra.mxu0 0.0
    %7903 = vmatprep.subr.mxu0 0.0
    %7904 = vmatpush1.msra.mxu0 0.0
    %7905 = vmatprep.subr.mxu0 0.0
    %7906 = vmatpush1.msra.mxu0 0.0
    %7907 = vmatprep.subr.mxu0 0.0
    %7908 = vmatpush1.msra.mxu0 0.0
    %7909 = vmatprep.subr.mxu0 0.0
    %7910 = vmatpush1.msra.mxu0 0.0
    %7911 = vmatprep.subr.mxu0 0.0
    %7912 = vmatpush1.msra.mxu0 0.0
    %7913 = vmatprep.subr.mxu0 0.0
    %7914 = vmatpush1.msra.mxu0 0.0
    %7915 = vmatprep.subr.mxu0 0.0
    %7916 = vmatpush1.msra.mxu0 0.0
    %7917 = vmatprep.subr.mxu0 0.0
    %7918 = vmatpush1.msra.mxu0 0.0
    %7919 = vmatprep.subr.mxu0 0.0
    %7920 = vmatpush1.msra.mxu0 0.0
    %7921 = vmatprep.subr.mxu0 0.0
    %7922 = vmatpush1.msra.mxu0 0.0
    %7923 = vmatprep.subr.mxu0 0.0
    %7924 = vmatpush1.msra.mxu0 0.0
    %7925 = vmatprep.subr.mxu0 0.0
    %7926 = vmatpush1.msra.mxu0 0.0
    %7927 = vmatprep.subr.mxu0 0.0
    %7928 = vmatpush1.msra.mxu0 0.0
    %7929 = vmatprep.subr.mxu0 0.0
    %7930 = vmatpush1.msra.mxu0 0.0
    %7931 = vmatprep.subr.mxu0 0.0
    %7932 = vmatpush1.msra.mxu0 0.0
    %7933 = vmatprep.subr.mxu0 0.0
    %7934 = vmatpush1.msra.mxu0 0.0
    %7935 = vmatprep.subr.mxu0 0.0
    %7936 = vmatpush1.msra.mxu0 0.0
    %7937 = vmatprep.subr.mxu0 0.0
    %7938 = vmatpush1.msra.mxu0 0.0
    %7939 = vmatprep.subr.mxu0 0.0
    %7940 = vmatpush1.msra.mxu0 0.0
    %7941 = vmatprep.subr.mxu0 0.0
    %7942 = vmatpush1.msra.mxu0 0.0
    %7943 = vmatprep.mubr.f32.mxu0 0.0
    %7944 = vmatmul.mubr.f32.gmra.mrb[0].mxu0 %v7877
    %v7945 = vpop.f32.mrb[0].mxu0
    %v7946 = vadd.f32 %v7873, %v7945
    %v7947 = vpop.f32.mrb[0].mxu0
    %7948 = vdwg.mxu0
    %v7949 = vadd.f32 %v7946, %v2706
    %7950 = vmatprep.subr.mxu0 0.0
    %7951 = vmatpush1.msra.mxu0 %v2201
    %7952 = vmatprep.subr.mxu0 0.0
    %7953 = vmatpush1.msra.mxu0 %v2202
    %7954 = vmatprep.subr.mxu0 0.0
    %7955 = vmatpush1.msra.mxu0 %v2203
    %7956 = vmatprep.subr.mxu0 0.0
    %7957 = vmatpush1.msra.mxu0 %v2204
    %7958 = vmatprep.subr.mxu0 0.0
    %7959 = vmatpush1.msra.mxu0 0.0
    %7960 = vmatprep.subr.mxu0 0.0
    %7961 = vmatpush1.msra.mxu0 0.0
    %7962 = vmatprep.subr.mxu0 0.0
    %7963 = vmatpush1.msra.mxu0 0.0
    %7964 = vmatprep.subr.mxu0 0.0
    %7965 = vmatpush1.msra.mxu0 0.0
    %7966 = vmatprep.subr.mxu0 0.0
    %7967 = vmatpush1.msra.mxu0 0.0
    %7968 = vmatprep.subr.mxu0 0.0
    %7969 = vmatpush1.msra.mxu0 0.0
    %7970 = vmatprep.subr.mxu0 0.0
    %7971 = vmatpush1.msra.mxu0 0.0
    %7972 = vmatprep.subr.mxu0 0.0
    %7973 = vmatpush1.msra.mxu0 0.0
    %7974 = vmatprep.subr.mxu0 0.0
    %7975 = vmatpush1.msra.mxu0 0.0
    %7976 = vmatprep.subr.mxu0 0.0
    %7977 = vmatpush1.msra.mxu0 0.0
    %7978 = vmatprep.subr.mxu0 0.0
    %7979 = vmatpush1.msra.mxu0 0.0
    %7980 = vmatprep.subr.mxu0 0.0
    %7981 = vmatpush1.msra.mxu0 0.0
    %7982 = vmatprep.subr.mxu0 0.0
    %7983 = vmatpush1.msra.mxu0 0.0
    %7984 = vmatprep.subr.mxu0 0.0
    %7985 = vmatpush1.msra.mxu0 0.0
    %7986 = vmatprep.subr.mxu0 0.0
    %7987 = vmatpush1.msra.mxu0 0.0
    %7988 = vmatprep.subr.mxu0 0.0
    %7989 = vmatpush1.msra.mxu0 0.0
    %7990 = vmatprep.subr.mxu0 0.0
    %7991 = vmatpush1.msra.mxu0 0.0
    %7992 = vmatprep.subr.mxu0 0.0
    %7993 = vmatpush1.msra.mxu0 0.0
    %7994 = vmatprep.subr.mxu0 0.0
    %7995 = vmatpush1.msra.mxu0 0.0
    %7996 = vmatprep.subr.mxu0 0.0
    %7997 = vmatpush1.msra.mxu0 0.0
    %7998 = vmatprep.subr.mxu0 0.0
    %7999 = vmatpush1.msra.mxu0 0.0
    %8000 = vmatprep.subr.mxu0 0.0
    %8001 = vmatpush1.msra.mxu0 0.0
    %8002 = vmatprep.subr.mxu0 0.0
    %8003 = vmatpush1.msra.mxu0 0.0
    %8004 = vmatprep.subr.mxu0 0.0
    %8005 = vmatpush1.msra.mxu0 0.0
    %8006 = vmatprep.subr.mxu0 0.0
    %8007 = vmatpush1.msra.mxu0 0.0
    %8008 = vmatprep.subr.mxu0 0.0
    %8009 = vmatpush1.msra.mxu0 0.0
    %8010 = vmatprep.subr.mxu0 0.0
    %8011 = vmatpush1.msra.mxu0 0.0
    %8012 = vmatprep.subr.mxu0 0.0
    %8013 = vmatpush1.msra.mxu0 0.0
    %8014 = vmatprep.mubr.f32.mxu0 0.0
    %8015 = vmatmul.mubr.f32.gmra.mrb[0].mxu0 %v7248
    %v8016 = vpop.f32.mrb[0].mxu0
    %v8017 = vadd.f32 %v2713, %v8016
    %v8018 = vpop.f32.mrb[0].mxu0
    %8019 = vdwg.mxu0
    %v8020 = vadd.f32 %v7949, %v8017
    %v8021 = vxor.u32 %v8020, 2147483648
    %v8022 = vmul.f32 %v8021, 1.442695
    %v8023 = vpow.pop %v8022
    %v8024 = vadd.f32 %v8023, 1.0
    %v8025 = vrcp.pop %v8024
    %v8026 = vmul.f32 1.0, %v8025
    %8028 = vrot.lane.b32.xlu0 %v8017, 64
    %v8029 = vpop.permute.xlu0 %8028
    %v8031 = vmul.f32 %v8026, %v8029
    %8033 = vrot.lane.b32.xlu0 %v8031, 64
    %v8034 = vpop.permute.xlu0 %8033
    %v8036 = vadd.f32 %v7949, %v8034
    %v8037 = vtanh.pop %v8036
    %v8038 = vsub.f32 1.0, %v8026
    %8040 = vrot.lane.b32.xlu0 %v8037, 96
    %v8041 = vpop.permute.xlu0 %8040
    %v8043 = vmul.f32 %v8038, %v8041
    %v8044 = vmul.f32 %v8026, %v7174
    %v8045 = vadd.f32 %v8043, %v8044
    %8046 = vmatprep.subr.mxu0 0.0
    %8047 = vmatpush1.msra.mxu0 %v2211
    %8048 = vmatprep.subr.mxu0 0.0
    %8049 = vmatpush1.msra.mxu0 %v2212
    %8050 = vmatprep.subr.mxu0 0.0
    %8051 = vmatpush1.msra.mxu0 %v2213
    %8052 = vmatprep.subr.mxu0 0.0
    %8053 = vmatpush1.msra.mxu0 %v2214
    %8054 = vmatprep.subr.mxu0 0.0
    %8055 = vmatpush1.msra.mxu0 0.0
    %8056 = vmatprep.subr.mxu0 0.0
    %8057 = vmatpush1.msra.mxu0 0.0
    %8058 = vmatprep.subr.mxu0 0.0
    %8059 = vmatpush1.msra.mxu0 0.0
    %8060 = vmatprep.subr.mxu0 0.0
    %8061 = vmatpush1.msra.mxu0 0.0
    %8062 = vmatprep.subr.mxu0 0.0
    %8063 = vmatpush1.msra.mxu0 0.0
    %8064 = vmatprep.subr.mxu0 0.0
    %8065 = vmatpush1.msra.mxu0 0.0
    %8066 = vmatprep.subr.mxu0 0.0
    %8067 = vmatpush1.msra.mxu0 0.0
    %8068 = vmatprep.subr.mxu0 0.0
    %8069 = vmatpush1.msra.mxu0 0.0
    %8070 = vmatprep.subr.mxu0 0.0
    %8071 = vmatpush1.msra.mxu0 0.0
    %8072 = vmatprep.subr.mxu0 0.0
    %8073 = vmatpush1.msra.mxu0 0.0
    %8074 = vmatprep.subr.mxu0 0.0
    %8075 = vmatpush1.msra.mxu0 0.0
    %8076 = vmatprep.subr.mxu0 0.0
    %8077 = vmatpush1.msra.mxu0 0.0
    %8078 = vmatprep.subr.mxu0 0.0
    %8079 = vmatpush1.msra.mxu0 0.0
    %8080 = vmatprep.subr.mxu0 0.0
    %8081 = vmatpush1.msra.mxu0 0.0
    %8082 = vmatprep.subr.mxu0 0.0
    %8083 = vmatpush1.msra.mxu0 0.0
    %8084 = vmatprep.subr.mxu0 0.0
    %8085 = vmatpush1.msra.mxu0 0.0
    %8086 = vmatprep.subr.mxu0 0.0
    %8087 = vmatpush1.msra.mxu0 0.0
    %8088 = vmatprep.subr.mxu0 0.0
    %8089 = vmatpush1.msra.mxu0 0.0
    %8090 = vmatprep.subr.mxu0 0.0
    %8091 = vmatpush1.msra.mxu0 0.0
    %8092 = vmatprep.subr.mxu0 0.0
    %8093 = vmatpush1.msra.mxu0 0.0
    %8094 = vmatprep.subr.mxu0 0.0
    %8095 = vmatpush1.msra.mxu0 0.0
    %8096 = vmatprep.subr.mxu0 0.0
    %8097 = vmatpush1.msra.mxu0 0.0
    %8098 = vmatprep.subr.mxu0 0.0
    %8099 = vmatpush1.msra.mxu0 0.0
    %8100 = vmatprep.subr.mxu0 0.0
    %8101 = vmatpush1.msra.mxu0 0.0
    %8102 = vmatprep.subr.mxu0 0.0
    %8103 = vmatpush1.msra.mxu0 0.0
    %8104 = vmatprep.subr.mxu0 0.0
    %8105 = vmatpush1.msra.mxu0 0.0
    %8106 = vmatprep.subr.mxu0 0.0
    %8107 = vmatpush1.msra.mxu0 0.0
    %8108 = vmatprep.subr.mxu0 0.0
    %8109 = vmatpush1.msra.mxu0 0.0
    %8110 = vmatprep.mubr.f32.mxu0 0.0
    %8111 = vmatmul.mubr.f32.gmra.mrb[0].mxu0 %v7804
    %v8112 = vpop.f32.mrb[0].mxu0
    %v8113 = vadd.f32 0.0, %v8112
    %v8114 = vpop.f32.mrb[0].mxu0
    %8115 = vdwg.mxu0
    %8117 = vrot.lane.b32.xlu0 %v8045, 96
    %v8118 = vpop.permute.xlu0 %8117
    %v8119 = vsel %vm98, %v8118, 0
    %8121 = vmatprep.subr.mxu0 0.0
    %8122 = vmatpush1.msra.mxu0 %v2207
    %8123 = vmatprep.subr.mxu0 0.0
    %8124 = vmatpush1.msra.mxu0 %v2208
    %8125 = vmatprep.subr.mxu0 0.0
    %8126 = vmatpush1.msra.mxu0 %v2209
    %8127 = vmatprep.subr.mxu0 0.0
    %8128 = vmatpush1.msra.mxu0 %v2210
    %8129 = vmatprep.subr.mxu0 0.0
    %8130 = vmatpush1.msra.mxu0 0.0
    %8131 = vmatprep.subr.mxu0 0.0
    %8132 = vmatpush1.msra.mxu0 0.0
    %8133 = vmatprep.subr.mxu0 0.0
    %8134 = vmatpush1.msra.mxu0 0.0
    %8135 = vmatprep.subr.mxu0 0.0
    %8136 = vmatpush1.msra.mxu0 0.0
    %8137 = vmatprep.subr.mxu0 0.0
    %8138 = vmatpush1.msra.mxu0 0.0
    %8139 = vmatprep.subr.mxu0 0.0
    %8140 = vmatpush1.msra.mxu0 0.0
    %8141 = vmatprep.subr.mxu0 0.0
    %8142 = vmatpush1.msra.mxu0 0.0
    %8143 = vmatprep.subr.mxu0 0.0
    %8144 = vmatpush1.msra.mxu0 0.0
    %8145 = vmatprep.subr.mxu0 0.0
    %8146 = vmatpush1.msra.mxu0 0.0
    %8147 = vmatprep.subr.mxu0 0.0
    %8148 = vmatpush1.msra.mxu0 0.0
    %8149 = vmatprep.subr.mxu0 0.0
    %8150 = vmatpush1.msra.mxu0 0.0
    %8151 = vmatprep.subr.mxu0 0.0
    %8152 = vmatpush1.msra.mxu0 0.0
    %8153 = vmatprep.subr.mxu0 0.0
    %8154 = vmatpush1.msra.mxu0 0.0
    %8155 = vmatprep.subr.mxu0 0.0
    %8156 = vmatpush1.msra.mxu0 0.0
    %8157 = vmatprep.subr.mxu0 0.0
    %8158 = vmatpush1.msra.mxu0 0.0
    %8159 = vmatprep.subr.mxu0 0.0
    %8160 = vmatpush1.msra.mxu0 0.0
    %8161 = vmatprep.subr.mxu0 0.0
    %8162 = vmatpush1.msra.mxu0 0.0
    %8163 = vmatprep.subr.mxu0 0.0
    %8164 = vmatpush1.msra.mxu0 0.0
    %8165 = vmatprep.subr.mxu0 0.0
    %8166 = vmatpush1.msra.mxu0 0.0
    %8167 = vmatprep.subr.mxu0 0.0
    %8168 = vmatpush1.msra.mxu0 0.0
    %8169 = vmatprep.subr.mxu0 0.0
    %8170 = vmatpush1.msra.mxu0 0.0
    %8171 = vmatprep.subr.mxu0 0.0
    %8172 = vmatpush1.msra.mxu0 0.0
    %8173 = vmatprep.subr.mxu0 0.0
    %8174 = vmatpush1.msra.mxu0 0.0
    %8175 = vmatprep.subr.mxu0 0.0
    %8176 = vmatpush1.msra.mxu0 0.0
    %8177 = vmatprep.subr.mxu0 0.0
    %8178 = vmatpush1.msra.mxu0 0.0
    %8179 = vmatprep.subr.mxu0 0.0
    %8180 = vmatpush1.msra.mxu0 0.0
    %8181 = vmatprep.subr.mxu0 0.0
    %8182 = vmatpush1.msra.mxu0 0.0
    %8183 = vmatprep.subr.mxu0 0.0
    %8184 = vmatpush1.msra.mxu0 0.0
    %8185 = vmatprep.mubr.f32.mxu0 0.0
    %8186 = vmatmul.mubr.f32.gmra.mrb[0].mxu0 %v8119
    %v8187 = vpop.f32.mrb[0].mxu0
    %v8188 = vadd.f32 %v8113, %v8187
    %v8189 = vpop.f32.mrb[0].mxu0
    %8190 = vdwg.mxu0
    %8191 = vmatprep.subr.mxu0 0.0
    %8192 = vmatpush1.msra.mxu0 %v2215
    %8193 = vmatprep.subr.mxu0 0.0
    %8194 = vmatpush1.msra.mxu0 %v2216
    %8195 = vmatprep.subr.mxu0 0.0
    %8196 = vmatpush1.msra.mxu0 %v2217
    %8197 = vmatprep.subr.mxu0 0.0
    %8198 = vmatpush1.msra.mxu0 %v2218
    %8199 = vmatprep.subr.mxu0 0.0
    %8200 = vmatpush1.msra.mxu0 0.0
    %8201 = vmatprep.subr.mxu0 0.0
    %8202 = vmatpush1.msra.mxu0 0.0
    %8203 = vmatprep.subr.mxu0 0.0
    %8204 = vmatpush1.msra.mxu0 0.0
    %8205 = vmatprep.subr.mxu0 0.0
    %8206 = vmatpush1.msra.mxu0 0.0
    %8207 = vmatprep.subr.mxu0 0.0
    %8208 = vmatpush1.msra.mxu0 0.0
    %8209 = vmatprep.subr.mxu0 0.0
    %8210 = vmatpush1.msra.mxu0 0.0
    %8211 = vmatprep.subr.mxu0 0.0
    %8212 = vmatpush1.msra.mxu0 0.0
    %8213 = vmatprep.subr.mxu0 0.0
    %8214 = vmatpush1.msra.mxu0 0.0
    %8215 = vmatprep.subr.mxu0 0.0
    %8216 = vmatpush1.msra.mxu0 0.0
    %8217 = vmatprep.subr.mxu0 0.0
    %8218 = vmatpush1.msra.mxu0 0.0
    %8219 = vmatprep.subr.mxu0 0.0
    %8220 = vmatpush1.msra.mxu0 0.0
    %8221 = vmatprep.subr.mxu0 0.0
    %8222 = vmatpush1.msra.mxu0 0.0
    %8223 = vmatprep.subr.mxu0 0.0
    %8224 = vmatpush1.msra.mxu0 0.0
    %8225 = vmatprep.subr.mxu0 0.0
    %8226 = vmatpush1.msra.mxu0 0.0
    %8227 = vmatprep.subr.mxu0 0.0
    %8228 = vmatpush1.msra.mxu0 0.0
    %8229 = vmatprep.subr.mxu0 0.0
    %8230 = vmatpush1.msra.mxu0 0.0
    %8231 = vmatprep.subr.mxu0 0.0
    %8232 = vmatpush1.msra.mxu0 0.0
    %8233 = vmatprep.subr.mxu0 0.0
    %8234 = vmatpush1.msra.mxu0 0.0
    %8235 = vmatprep.subr.mxu0 0.0
    %8236 = vmatpush1.msra.mxu0 0.0
    %8237 = vmatprep.subr.mxu0 0.0
    %8238 = vmatpush1.msra.mxu0 0.0
    %8239 = vmatprep.subr.mxu0 0.0
    %8240 = vmatpush1.msra.mxu0 0.0
    %8241 = vmatprep.subr.mxu0 0.0
    %8242 = vmatpush1.msra.mxu0 0.0
    %8243 = vmatprep.subr.mxu0 0.0
    %8244 = vmatpush1.msra.mxu0 0.0
    %8245 = vmatprep.subr.mxu0 0.0
    %8246 = vmatpush1.msra.mxu0 0.0
    %8247 = vmatprep.subr.mxu0 0.0
    %8248 = vmatpush1.msra.mxu0 0.0
    %8249 = vmatprep.subr.mxu0 0.0
    %8250 = vmatpush1.msra.mxu0 0.0
    %8251 = vmatprep.subr.mxu0 0.0
    %8252 = vmatpush1.msra.mxu0 0.0
    %8253 = vmatprep.subr.mxu0 0.0
    %8254 = vmatpush1.msra.mxu0 0.0
    %8255 = vmatprep.mubr.f32.mxu0 0.0
    %8256 = vmatmul.mubr.f32.gmra.mrb[0].mxu0 %v7877
    %v8257 = vpop.f32.mrb[0].mxu0
    %v8258 = vadd.f32 0.0, %v8257
    %v8259 = vpop.f32.mrb[0].mxu0
    %8260 = vdwg.mxu0
    %v8261 = vadd.f32 %v8188, %v8258
    %v8262 = vadd.f32 %v8261, %v3034
    %s8263 = scalar_lea.vmem %s22, 12
    %8264 = vst [vmem:[%s8263] sm:$0x3] %v8262
    // Predicated region
    $region94: #{_seq2seq_core.1} parent=1 // pred_check
      _
    $region95: #{_seq2seq_core.1} parent=1 // pred_check_branch
      %8266 = sbr.rel (0) target = $region97
    $region96: #{_seq2seq_core.1} parent=1 // pred_region
      _
    $region97: #{_seq2seq_core.1} parent=1 // pred_fallthru
      _
    // Predicated region
    $region98: #{_seq2seq_core.1} parent=1 // pred_check
      _
    $region99: #{_seq2seq_core.1} parent=1 // pred_check_branch
      %8268 = sbr.rel (0) target = $region101
    $region100: #{_seq2seq_core.1} parent=1 // pred_region
      _
    $region101: #{_seq2seq_core.1} parent=1 // pred_fallthru
      _
    %8269 = vsyncpa [#allocation3], 1

</llo_original>
